<compile_context>
chip_gen: v7x
topology: tpu7x:2x2x1
jax: 0.10.0
libtpu: 0.0.40
codegen_flags: <defaults>
</compile_context>

<pallas_src>
import numpy as np
import jax
import jax.numpy as jnp
from jax import lax
from jax.experimental import pallas as pl
from jax.experimental.pallas import tpu as pltpu

L2_EPS = 1e-10


# ---------------------------------------------------------------------------
# Host-side helper: PyTorch F.interpolate(mode='bilinear', align_corners=False)
# expressed as a dense (Ho*Wo, Hi*Wi) interpolation matrix, so the upsample
# becomes a single MXU matmul inside the kernel.
# ---------------------------------------------------------------------------
def _interp_1d(out_size, in_size, scale):
    dst = np.arange(out_size, dtype=np.float64)
    src = np.maximum((dst + 0.5) / scale - 0.5, 0.0)        # half-pixel + clamp
    i0 = np.minimum(np.floor(src).astype(np.int64), in_size - 1)
    i1 = np.minimum(i0 + 1, in_size - 1)
    lam = src - i0
    u = np.zeros((out_size, in_size), np.float64)
    u[np.arange(out_size), i0] += 1.0 - lam
    u[np.arange(out_size), i1] += lam
    return u


def _bilinear_matrix(ho, wo, hi, wi, scale):
    m = np.kron(_interp_1d(ho, hi, scale), _interp_1d(wo, wi, scale))
    return jnp.asarray(m, jnp.float32)                      # (Ho*Wo, Hi*Wi)


# ---------------------------------------------------------------------------
# Fused Pallas kernel: (upsample) -> L2Norm -> dilated 3x3 conv -> concat
# One grid step == one batch element; all branches fully unrolled (static).
# ---------------------------------------------------------------------------
def _make_fused_kernel(branch_cfgs, H, W):
    n = len(branch_cfgs)
    HW = H * W

    def kernel(*args):
        x_refs = args[0:n]                    # NHWC-flat inputs, (HiWi, Ci)
        m_refs = args[n:2 * n - 1]            # upsample matrices for branches 1..
        w_refs = args[2 * n - 1:3 * n - 1]    # folded conv weights, (9, Co, Ci)
        b_refs = args[3 * n - 1:4 * n - 1]    # biases, (Co, 1)
        o_ref = args[4 * n - 1]               # (Csum, HW) output slab
        pad_refs = args[4 * n:]               # per-branch padded scratch

        for i, cfg in enumerate(branch_cfgs):
            C, d, c_off = cfg["c"], cfg["d"], cfg["off"]
            Hp, Wp = H + 2 * d, W + 2 * d

            # --- bilinear upsample as one matmul (branches 1..) -------------
            xf = x_refs[i][...].astype(jnp.float32)          # (HiWi, C)
            if i != 0:
                xf = jnp.dot(m_refs[i - 1][...], xf,
                             preferred_element_type=jnp.float32)   # (HW, C)

            # --- L2Norm over channels (gamma folded into conv weights) ------
            ss = jnp.sum(xf * xf, axis=-1, keepdims=True)    # (HW, 1)
            xf = xf * (1.0 / (jnp.sqrt(ss) + L2_EPS))        # reciprocal on (HW,1) only

            # --- zero-pad into persistent VMEM scratch -----------------------
            # Interior is fully overwritten every step; only the 2d-wide border
            # strips are (re)zeroed (cheap, and correct under "parallel").
            pad = pad_refs[i]
            zr = jnp.zeros((d, Wp, C), jnp.float32)
            zc = jnp.zeros((H, d, C), jnp.float32)
            pad[pl.ds(0, d), :, :] = zr
            pad[pl.ds(H + d, d), :, :] = zr
            pad[pl.ds(d, H), pl.ds(0, d), :] = zc
            pad[pl.ds(d, H), pl.ds(W + d, d), :] = zc
            pad[pl.ds(d, H), pl.ds(d, W), :] = xf.reshape(H, W, C)

            # --- dilated 3x3 conv: 9 whole-image tap matmuls -----------------
            # Accumulate directly in transposed (Co, HW) form so the final
            # store is lane-dense (256 lanes) and no transpose is needed.
            acc = jnp.zeros((C, HW), jnp.float32) + b_refs[i][...]   # bias once
            for k in range(9):
                ky, kx = divmod(k, 3)
                tap = pad[pl.ds(ky * d, H), pl.ds(kx * d, W), :]     # (H, W, C)
                acc = acc + lax.dot_general(
                    w_refs[i][k],                  # (Co, Ci)
                    tap.reshape(HW, C),            # (HW, Ci)
                    dimension_numbers=(((1,), (1,)), ((), ())),      # NT matmul
                    preferred_element_type=jnp.float32)              # (Co, HW)

            # --- single lane-dense store into the fused-concat output slab --
            o_ref[pl.ds(c_off, C), :] = acc.astype(o_ref.dtype)

    return kernel


# ---------------------------------------------------------------------------
# Module wrapper (deterministic synthetic parameters)
# ---------------------------------------------------------------------------
class HRCSPFPNPallas:
    def __init__(self, in_channels, out_channels, num_outs=5, upscale_factor=None,
                 key=jax.random.PRNGKey(42)):
        assert isinstance(in_channels, list)
        self.in_channels = in_channels
        self.out_channels = out_channels          # unused in forward (as in torch)
        self.num_ins = len(in_channels)
        self.num_outs = num_outs                  # unused in forward (as in torch)
        if upscale_factor is not None:
            self.upscale_factor = upscale_factor
        else:
            self.upscale_factor = [2 ** i for i in range(1, self.num_ins)]
        self.dilations = ([1] + self.upscale_factor)[: self.num_ins]

        # L2Norm weights: per-channel scale, init to 10 (L2Norm(c, 10)).
        self.l2_gamma = [jnp.full((c,), 10.0, jnp.float32) for c in in_channels]

        # fpn_convs: 3x3 dilated conv, C -> C, with bias (norm_cfg=None).
        self.conv_w, self.conv_b = [], []
        keys = jax.random.split(key, 2 * self.num_ins)
        for i, c in enumerate(in_channels):
            fan = 9 * c
            w = jax.random.normal(keys[2 * i], (3, 3, c, c), jnp.float32)
            w = w * jnp.sqrt(2.0 / fan)                       # caffe2_xavier-ish
            b = 0.01 * jax.random.normal(keys[2 * i + 1], (c,), jnp.float32)
            self.conv_w.append(w)                             # HWIO
            self.conv_b.append(b)

        # Kernel-ready parameters: gamma folded into conv weights along c_in,
        # stored pre-transposed as (9 taps, Cout, Cin); bias as (Cout, 1).
        self.w_kernel, self.b_kernel = [], []
        for i, c in enumerate(in_channels):
            wf = self.conv_w[i] * self.l2_gamma[i][None, None, :, None]
            wf = wf.reshape(9, c, c)                          # (tap, ci, co)
            self.w_kernel.append(jnp.transpose(wf, (0, 2, 1)))  # (tap, co, ci)
            self.b_kernel.append(self.conv_b[i].reshape(c, 1))

    def __call__(self, inputs):
        assert len(inputs) == self.num_ins
        N, _, H, W = inputs[0].shape
        HW = H * W
        Csum = sum(self.in_channels)

        branch_cfgs, off = [], 0
        for i, x in enumerate(inputs):
            _, c, hi, wi = x.shape
            if i != 0:
                assert hi * self.upscale_factor[i - 1] == H
                assert wi * self.upscale_factor[i - 1] == W
            branch_cfgs.append(dict(c=c, hi=hi, wi=wi, d=self.dilations[i], off=off))
            off += c

        # NHWC-flat views of the NCHW inputs (cheap XLA transposes).
        xfs = [jnp.transpose(x, (0, 2, 3, 1)).reshape(
                   x.shape[0], x.shape[2] * x.shape[3], x.shape[1])
               for x in inputs]
        # Precomputed bilinear-interpolation matrices (constants).
        ms = [_bilinear_matrix(H, W, cfg["hi"], cfg["wi"], self.upscale_factor[i - 1])
              for i, cfg in enumerate(branch_cfgs) if i != 0]

        in_specs = []
        for cfg in branch_cfgs:
            hw_i = cfg["hi"] * cfg["wi"]
            in_specs.append(pl.BlockSpec((None, hw_i, cfg["c"]), lambda n: (n, 0, 0)))
        for i, cfg in enumerate(branch_cfgs):
            if i == 0:
                continue
            hw_i = cfg["hi"] * cfg["wi"]
            in_specs.append(pl.BlockSpec((HW, hw_i), lambda n: (0, 0)))
        for cfg in branch_cfgs:
            in_specs.append(pl.BlockSpec((9, cfg["c"], cfg["c"]), lambda n: (0, 0, 0)))
        for cfg in branch_cfgs:
            in_specs.append(pl.BlockSpec((cfg["c"], 1), lambda n: (0, 0)))

        out_spec = pl.BlockSpec((None, Csum, HW), lambda n: (n, 0, 0))
        scratch = [pltpu.VMEM((H + 2 * cfg["d"], W + 2 * cfg["d"], cfg["c"]),
                              jnp.float32)
                   for cfg in branch_cfgs]

        kernel = _make_fused_kernel(branch_cfgs, H, W)
        out_flat = pl.pallas_call(
            kernel,
            out_shape=jax.ShapeDtypeStruct((N, Csum, HW), jnp.float32),
            grid_spec=pltpu.PrefetchScalarGridSpec(
                num_scalar_prefetch=0,
                grid=(N,),
                in_specs=in_specs,
                out_specs=out_spec,
                scratch_shapes=scratch),
            compiler_params=pltpu.CompilerParams(
                dimension_semantics=("parallel",)),
        )(*xfs, *ms, *self.w_kernel, *self.b_kernel)

        # Already channel-first; just un-flatten the spatial dim (free reshape).
        return (out_flat.reshape(N, Csum, H, W),)


# ---------------------------------------------------------------------------
# Pure-JAX reference (independent path: gather/lerp bilinear, XLA dilated conv,
# gamma NOT folded) for the correctness check.
# ---------------------------------------------------------------------------
def bilinear_upsample_nhwc(x, scale):
    N, H, W, C = x.shape
    Ho, Wo = H * scale, W * scale

    def src_coords(out_size, in_size, s):
        dst = jnp.arange(out_size, dtype=jnp.float32)
        src = jnp.maximum((dst + 0.5) / s - 0.5, 0.0)
        i0 = jnp.minimum(jnp.floor(src).astype(jnp.int32), in_size - 1)
        i1 = jnp.minimum(i0 + 1, in_size - 1)
        return i0, i1, src - i0.astype(jnp.float32)

    h0, h1, lh = src_coords(Ho, H, scale)
    w0, w1, lw = src_coords(Wo, W, scale)
    top, bot = x[:, h0], x[:, h1]
    rows = top * (1.0 - lh)[None, :, None, None] + bot * lh[None, :, None, None]
    left, right = rows[:, :, w0], rows[:, :, w1]
    return left * (1.0 - lw)[None, None, :, None] + right * lw[None, None, :, None]


def reference_forward(mod, inputs):
    outs = []
    for i, x_nchw in enumerate(inputs):
        x = jnp.transpose(x_nchw, (0, 2, 3, 1))
        if i != 0:
            x = bilinear_upsample_nhwc(x, mod.upscale_factor[i - 1])
        ss = jnp.sum(x * x, axis=-1, keepdims=True)
        xn = x / (jnp.sqrt(ss) + L2_EPS) * mod.l2_gamma[i][None, None, None, :]
        d = mod.dilations[i]
        y = lax.conv_general_dilated(
            xn, mod.conv_w[i], window_strides=(1, 1),
            padding=[(d, d), (d, d)], rhs_dilation=(d, d),
            dimension_numbers=("NHWC", "HWIO", "NHWC"))
        y = y + mod.conv_b[i][None, None, None, :]
        outs.append(y)
    out = jnp.concatenate(outs, axis=-1)
    return (jnp.transpose(out, (0, 3, 1, 2)),)


if __name__ == "__main__":
    key = jax.random.PRNGKey(0)
    in_channels = [4, 8, 16]
    spatial = [(16, 16), (8, 8), (4, 4)]
    N = 2

    keys = jax.random.split(key, len(in_channels))
    inputs = [
        jax.random.normal(keys[i], (N, in_channels[i], *spatial[i]), jnp.float32)
        for i in range(len(in_channels))
    ]

    mod = HRCSPFPNPallas(in_channels, out_channels=32, num_outs=5)

    (out,) = mod(inputs)
    out = jax.block_until_ready(out)

    (ref,) = reference_forward(mod, inputs)
    ref = jax.block_until_ready(ref)

    assert out.shape == (N, sum(in_channels), 16, 16), out.shape
    max_err = float(jnp.max(jnp.abs(out - ref)))
    assert jnp.allclose(out, ref, atol=1e-3, rtol=1e-3), max_err

    print("KERNEL_OK")
</pallas_src>

<mosaic_0001>
module attributes {stable_mosaic.version = 11 : i64} {
  func.func @kernel(%arg0: i32, %arg1: memref<1x256x4xf32, #tpu.memory_space<vmem>>, %arg2: memref<1x64x8xf32, #tpu.memory_space<vmem>>, %arg3: memref<1x16x16xf32, #tpu.memory_space<vmem>>, %arg4: memref<256x64xf32, #tpu.memory_space<vmem>>, %arg5: memref<256x16xf32, #tpu.memory_space<vmem>>, %arg6: memref<9x4x4xf32, #tpu.memory_space<vmem>>, %arg7: memref<9x8x8xf32, #tpu.memory_space<vmem>>, %arg8: memref<9x16x16xf32, #tpu.memory_space<vmem>>, %arg9: memref<4x1xf32, #tpu.memory_space<vmem>>, %arg10: memref<8x1xf32, #tpu.memory_space<vmem>>, %arg11: memref<16x1xf32, #tpu.memory_space<vmem>>, %arg12: memref<1x28x256xf32, #tpu.memory_space<vmem>>, %arg13: memref<18x18x4xf32, #tpu.memory_space<vmem>>, %arg14: memref<20x20x8xf32, #tpu.memory_space<vmem>>, %arg15: memref<24x24x16xf32, #tpu.memory_space<vmem>>) attributes {dimension_semantics = [#tpu.dimension_semantics<parallel>], iteration_bounds = array<i64: 2>, scalar_prefetch = 0 : i64, scratch_operands = 3 : i64, tpu.core_type = #tpu.core_type<tc>, window_params = [{transform_indices = @transform_0, window_bounds = array<i64: 1, 256, 4>}, {transform_indices = @transform_1, window_bounds = array<i64: 1, 64, 8>}, {transform_indices = @transform_2, window_bounds = array<i64: 1, 16, 16>}, {pipeline_mode = #tpu.pipeline_mode<synchronous>, transform_indices = @transform_3, window_bounds = array<i64: 256, 64>}, {pipeline_mode = #tpu.pipeline_mode<synchronous>, transform_indices = @transform_4, window_bounds = array<i64: 256, 16>}, {pipeline_mode = #tpu.pipeline_mode<synchronous>, transform_indices = @transform_5, window_bounds = array<i64: 9, 4, 4>}, {pipeline_mode = #tpu.pipeline_mode<synchronous>, transform_indices = @transform_6, window_bounds = array<i64: 9, 8, 8>}, {pipeline_mode = #tpu.pipeline_mode<synchronous>, transform_indices = @transform_7, window_bounds = array<i64: 9, 16, 16>}, {pipeline_mode = #tpu.pipeline_mode<synchronous>, transform_indices = @transform_8, window_bounds = array<i64: 4, 1>}, {pipeline_mode = #tpu.pipeline_mode<synchronous>, transform_indices = @transform_9, window_bounds = array<i64: 8, 1>}, {pipeline_mode = #tpu.pipeline_mode<synchronous>, transform_indices = @transform_10, window_bounds = array<i64: 16, 1>}, {transform_indices = @transform_11, window_bounds = array<i64: 1, 28, 256>}]} {
    %c0 = arith.constant 0 : index
    %c0_0 = arith.constant 0 : index
    %c0_1 = arith.constant 0 : index
    %0 = vector.load %arg1[%c0, %c0_0, %c0_1] : memref<1x256x4xf32, #tpu.memory_space<vmem>>, vector<1x256x4xf32>
    %1 = vector.shape_cast %0 : vector<1x256x4xf32> to vector<256x4xf32>
    %2 = arith.mulf %1, %1 : vector<256x4xf32>
    %cst = arith.constant dense<0.000000e+00> : vector<256xf32>
    %3 = vector.multi_reduction <add>, %2, %cst [1] : vector<256x4xf32> to vector<256xf32>
    %4 = vector.shape_cast %3 : vector<256xf32> to vector<256x1xf32>
    %5 = math.sqrt %4 : vector<256x1xf32>
    %cst_2 = arith.constant 1.000000e-10 : f32
    %6 = vector.broadcast %cst_2 : f32 to vector<256x1xf32>
    %7 = arith.addf %5, %6 : vector<256x1xf32>
    %cst_3 = arith.constant 1.000000e+00 : f32
    %8 = vector.broadcast %cst_3 : f32 to vector<256x1xf32>
    %9 = arith.divf %8, %7 : vector<256x1xf32>
    %10 = vector.broadcast %9 : vector<256x1xf32> to vector<256x4xf32>
    %11 = arith.mulf %1, %10 : vector<256x4xf32>
    %cst_4 = arith.constant 0.000000e+00 : f32
    %12 = vector.broadcast %cst_4 : f32 to vector<1x18x4xf32>
    %cst_5 = arith.constant 0.000000e+00 : f32
    %13 = vector.broadcast %cst_5 : f32 to vector<16x1x4xf32>
    %c0_6 = arith.constant 0 : index
    %c0_7 = arith.constant 0 : index
    %c0_8 = arith.constant 0 : index
    %14 = vector.load %arg13[%c0_6, %c0_7, %c0_8] : memref<18x18x4xf32, #tpu.memory_space<vmem>>, vector<1x18x4xf32>
    tpu.vector_store %arg13[%c0_6, %c0_7, %c0_8], %12 {strides = array<i32>} : memref<18x18x4xf32, #tpu.memory_space<vmem>>, vector<1x18x4xf32>,
    %c17 = arith.constant 17 : index
    %c0_9 = arith.constant 0 : index
    %c0_10 = arith.constant 0 : index
    %15 = vector.load %arg13[%c17, %c0_9, %c0_10] : memref<18x18x4xf32, #tpu.memory_space<vmem>>, vector<1x18x4xf32>
    tpu.vector_store %arg13[%c17, %c0_9, %c0_10], %12 {strides = array<i32>} : memref<18x18x4xf32, #tpu.memory_space<vmem>>, vector<1x18x4xf32>,
    %c1 = arith.constant 1 : index
    %c0_11 = arith.constant 0 : index
    %c0_12 = arith.constant 0 : index
    %16 = vector.load %arg13[%c1, %c0_11, %c0_12] : memref<18x18x4xf32, #tpu.memory_space<vmem>>, vector<16x1x4xf32>
    tpu.vector_store %arg13[%c1, %c0_11, %c0_12], %13 {strides = array<i32>} : memref<18x18x4xf32, #tpu.memory_space<vmem>>, vector<16x1x4xf32>,
    %c1_13 = arith.constant 1 : index
    %c17_14 = arith.constant 17 : index
    %c0_15 = arith.constant 0 : index
    %17 = vector.load %arg13[%c1_13, %c17_14, %c0_15] : memref<18x18x4xf32, #tpu.memory_space<vmem>>, vector<16x1x4xf32>
    tpu.vector_store %arg13[%c1_13, %c17_14, %c0_15], %13 {strides = array<i32>} : memref<18x18x4xf32, #tpu.memory_space<vmem>>, vector<16x1x4xf32>,
    %18 = vector.shape_cast %11 : vector<256x4xf32> to vector<16x16x4xf32>
    %c1_16 = arith.constant 1 : index
    %c1_17 = arith.constant 1 : index
    %c0_18 = arith.constant 0 : index
    %19 = vector.load %arg13[%c1_16, %c1_17, %c0_18] : memref<18x18x4xf32, #tpu.memory_space<vmem>>, vector<16x16x4xf32>
    tpu.vector_store %arg13[%c1_16, %c1_17, %c0_18], %18 {strides = array<i32>} : memref<18x18x4xf32, #tpu.memory_space<vmem>>, vector<16x16x4xf32>,
    %cst_19 = arith.constant 0.000000e+00 : f32
    %20 = vector.broadcast %cst_19 : f32 to vector<4x256xf32>
    %c0_20 = arith.constant 0 : index
    %c0_21 = arith.constant 0 : index
    %21 = vector.load %arg9[%c0_20, %c0_21] : memref<4x1xf32, #tpu.memory_space<vmem>>, vector<4x1xf32>
    %22 = vector.broadcast %21 : vector<4x1xf32> to vector<4x256xf32>
    %23 = arith.addf %20, %22 : vector<4x256xf32>
    %c0_22 = arith.constant 0 : index
    %c0_23 = arith.constant 0 : index
    %c0_24 = arith.constant 0 : index
    %24 = vector.load %arg13[%c0_22, %c0_23, %c0_24] : memref<18x18x4xf32, #tpu.memory_space<vmem>>, vector<16x16x4xf32>
    %c0_25 = arith.constant 0 : index
    %c0_26 = arith.constant 0 : index
    %c0_27 = arith.constant 0 : index
    %25 = vector.load %arg6[%c0_25, %c0_26, %c0_27] : memref<9x4x4xf32, #tpu.memory_space<vmem>>, vector<1x4x4xf32>
    %26 = vector.shape_cast %25 : vector<1x4x4xf32> to vector<4x4xf32>
    %27 = vector.shape_cast %24 : vector<16x16x4xf32> to vector<256x4xf32>
    %cst_28 = arith.constant dense<0.000000e+00> : vector<4x256xf32>
    %28 = tpu.matmul %26, %27, %cst_28 {dimension_numbers = #tpu.dot_dimension_numbers<[1], [1], [0], [0], [0, 0, 1, 0], [], []>} : vector<4x4xf32>, vector<256x4xf32>, vector<4x256xf32> -> vector<4x256xf32>
    %29 = arith.addf %23, %28 : vector<4x256xf32>
    %c0_29 = arith.constant 0 : index
    %c1_30 = arith.constant 1 : index
    %c0_31 = arith.constant 0 : index
    %30 = vector.load %arg13[%c0_29, %c1_30, %c0_31] : memref<18x18x4xf32, #tpu.memory_space<vmem>>, vector<16x16x4xf32>
    %c1_32 = arith.constant 1 : index
    %c0_33 = arith.constant 0 : index
    %c0_34 = arith.constant 0 : index
    %31 = vector.load %arg6[%c1_32, %c0_33, %c0_34] : memref<9x4x4xf32, #tpu.memory_space<vmem>>, vector<1x4x4xf32>
    %32 = vector.shape_cast %31 : vector<1x4x4xf32> to vector<4x4xf32>
    %33 = vector.shape_cast %30 : vector<16x16x4xf32> to vector<256x4xf32>
    %cst_35 = arith.constant dense<0.000000e+00> : vector<4x256xf32>
    %34 = tpu.matmul %32, %33, %cst_35 {dimension_numbers = #tpu.dot_dimension_numbers<[1], [1], [0], [0], [0, 0, 1, 0], [], []>} : vector<4x4xf32>, vector<256x4xf32>, vector<4x256xf32> -> vector<4x256xf32>
    %35 = arith.addf %29, %34 : vector<4x256xf32>
    %c0_36 = arith.constant 0 : index
    %c2 = arith.constant 2 : index
    %c0_37 = arith.constant 0 : index
    %36 = vector.load %arg13[%c0_36, %c2, %c0_37] : memref<18x18x4xf32, #tpu.memory_space<vmem>>, vector<16x16x4xf32>
    %c2_38 = arith.constant 2 : index
    %c0_39 = arith.constant 0 : index
    %c0_40 = arith.constant 0 : index
    %37 = vector.load %arg6[%c2_38, %c0_39, %c0_40] : memref<9x4x4xf32, #tpu.memory_space<vmem>>, vector<1x4x4xf32>
    %38 = vector.shape_cast %37 : vector<1x4x4xf32> to vector<4x4xf32>
    %39 = vector.shape_cast %36 : vector<16x16x4xf32> to vector<256x4xf32>
    %cst_41 = arith.constant dense<0.000000e+00> : vector<4x256xf32>
    %40 = tpu.matmul %38, %39, %cst_41 {dimension_numbers = #tpu.dot_dimension_numbers<[1], [1], [0], [0], [0, 0, 1, 0], [], []>} : vector<4x4xf32>, vector<256x4xf32>, vector<4x256xf32> -> vector<4x256xf32>
    %41 = arith.addf %35, %40 : vector<4x256xf32>
    %c1_42 = arith.constant 1 : index
    %c0_43 = arith.constant 0 : index
    %c0_44 = arith.constant 0 : index
    %42 = vector.load %arg13[%c1_42, %c0_43, %c0_44] : memref<18x18x4xf32, #tpu.memory_space<vmem>>, vector<16x16x4xf32>
    %c3 = arith.constant 3 : index
    %c0_45 = arith.constant 0 : index
    %c0_46 = arith.constant 0 : index
    %43 = vector.load %arg6[%c3, %c0_45, %c0_46] : memref<9x4x4xf32, #tpu.memory_space<vmem>>, vector<1x4x4xf32>
    %44 = vector.shape_cast %43 : vector<1x4x4xf32> to vector<4x4xf32>
    %45 = vector.shape_cast %42 : vector<16x16x4xf32> to vector<256x4xf32>
    %cst_47 = arith.constant dense<0.000000e+00> : vector<4x256xf32>
    %46 = tpu.matmul %44, %45, %cst_47 {dimension_numbers = #tpu.dot_dimension_numbers<[1], [1], [0], [0], [0, 0, 1, 0], [], []>} : vector<4x4xf32>, vector<256x4xf32>, vector<4x256xf32> -> vector<4x256xf32>
    %47 = arith.addf %41, %46 : vector<4x256xf32>
    %c1_48 = arith.constant 1 : index
    %c1_49 = arith.constant 1 : index
    %c0_50 = arith.constant 0 : index
    %48 = vector.load %arg13[%c1_48, %c1_49, %c0_50] : memref<18x18x4xf32, #tpu.memory_space<vmem>>, vector<16x16x4xf32>
    %c4 = arith.constant 4 : index
    %c0_51 = arith.constant 0 : index
    %c0_52 = arith.constant 0 : index
    %49 = vector.load %arg6[%c4, %c0_51, %c0_52] : memref<9x4x4xf32, #tpu.memory_space<vmem>>, vector<1x4x4xf32>
    %50 = vector.shape_cast %49 : vector<1x4x4xf32> to vector<4x4xf32>
    %51 = vector.shape_cast %48 : vector<16x16x4xf32> to vector<256x4xf32>
    %cst_53 = arith.constant dense<0.000000e+00> : vector<4x256xf32>
    %52 = tpu.matmul %50, %51, %cst_53 {dimension_numbers = #tpu.dot_dimension_numbers<[1], [1], [0], [0], [0, 0, 1, 0], [], []>} : vector<4x4xf32>, vector<256x4xf32>, vector<4x256xf32> -> vector<4x256xf32>
    %53 = arith.addf %47, %52 : vector<4x256xf32>
    %c1_54 = arith.constant 1 : index
    %c2_55 = arith.constant 2 : index
    %c0_56 = arith.constant 0 : index
    %54 = vector.load %arg13[%c1_54, %c2_55, %c0_56] : memref<18x18x4xf32, #tpu.memory_space<vmem>>, vector<16x16x4xf32>
    %c5 = arith.constant 5 : index
    %c0_57 = arith.constant 0 : index
    %c0_58 = arith.constant 0 : index
    %55 = vector.load %arg6[%c5, %c0_57, %c0_58] : memref<9x4x4xf32, #tpu.memory_space<vmem>>, vector<1x4x4xf32>
    %56 = vector.shape_cast %55 : vector<1x4x4xf32> to vector<4x4xf32>
    %57 = vector.shape_cast %54 : vector<16x16x4xf32> to vector<256x4xf32>
    %cst_59 = arith.constant dense<0.000000e+00> : vector<4x256xf32>
    %58 = tpu.matmul %56, %57, %cst_59 {dimension_numbers = #tpu.dot_dimension_numbers<[1], [1], [0], [0], [0, 0, 1, 0], [], []>} : vector<4x4xf32>, vector<256x4xf32>, vector<4x256xf32> -> vector<4x256xf32>
    %59 = arith.addf %53, %58 : vector<4x256xf32>
    %c2_60 = arith.constant 2 : index
    %c0_61 = arith.constant 0 : index
    %c0_62 = arith.constant 0 : index
    %60 = vector.load %arg13[%c2_60, %c0_61, %c0_62] : memref<18x18x4xf32, #tpu.memory_space<vmem>>, vector<16x16x4xf32>
    %c6 = arith.constant 6 : index
    %c0_63 = arith.constant 0 : index
    %c0_64 = arith.constant 0 : index
    %61 = vector.load %arg6[%c6, %c0_63, %c0_64] : memref<9x4x4xf32, #tpu.memory_space<vmem>>, vector<1x4x4xf32>
    %62 = vector.shape_cast %61 : vector<1x4x4xf32> to vector<4x4xf32>
    %63 = vector.shape_cast %60 : vector<16x16x4xf32> to vector<256x4xf32>
    %cst_65 = arith.constant dense<0.000000e+00> : vector<4x256xf32>
    %64 = tpu.matmul %62, %63, %cst_65 {dimension_numbers = #tpu.dot_dimension_numbers<[1], [1], [0], [0], [0, 0, 1, 0], [], []>} : vector<4x4xf32>, vector<256x4xf32>, vector<4x256xf32> -> vector<4x256xf32>
    %65 = arith.addf %59, %64 : vector<4x256xf32>
    %c2_66 = arith.constant 2 : index
    %c1_67 = arith.constant 1 : index
    %c0_68 = arith.constant 0 : index
    %66 = vector.load %arg13[%c2_66, %c1_67, %c0_68] : memref<18x18x4xf32, #tpu.memory_space<vmem>>, vector<16x16x4xf32>
    %c7 = arith.constant 7 : index
    %c0_69 = arith.constant 0 : index
    %c0_70 = arith.constant 0 : index
    %67 = vector.load %arg6[%c7, %c0_69, %c0_70] : memref<9x4x4xf32, #tpu.memory_space<vmem>>, vector<1x4x4xf32>
    %68 = vector.shape_cast %67 : vector<1x4x4xf32> to vector<4x4xf32>
    %69 = vector.shape_cast %66 : vector<16x16x4xf32> to vector<256x4xf32>
    %cst_71 = arith.constant dense<0.000000e+00> : vector<4x256xf32>
    %70 = tpu.matmul %68, %69, %cst_71 {dimension_numbers = #tpu.dot_dimension_numbers<[1], [1], [0], [0], [0, 0, 1, 0], [], []>} : vector<4x4xf32>, vector<256x4xf32>, vector<4x256xf32> -> vector<4x256xf32>
    %71 = arith.addf %65, %70 : vector<4x256xf32>
    %c2_72 = arith.constant 2 : index
    %c2_73 = arith.constant 2 : index
    %c0_74 = arith.constant 0 : index
    %72 = vector.load %arg13[%c2_72, %c2_73, %c0_74] : memref<18x18x4xf32, #tpu.memory_space<vmem>>, vector<16x16x4xf32>
    %c8 = arith.constant 8 : index
    %c0_75 = arith.constant 0 : index
    %c0_76 = arith.constant 0 : index
    %73 = vector.load %arg6[%c8, %c0_75, %c0_76] : memref<9x4x4xf32, #tpu.memory_space<vmem>>, vector<1x4x4xf32>
    %74 = vector.shape_cast %73 : vector<1x4x4xf32> to vector<4x4xf32>
    %75 = vector.shape_cast %72 : vector<16x16x4xf32> to vector<256x4xf32>
    %cst_77 = arith.constant dense<0.000000e+00> : vector<4x256xf32>
    %76 = tpu.matmul %74, %75, %cst_77 {dimension_numbers = #tpu.dot_dimension_numbers<[1], [1], [0], [0], [0, 0, 1, 0], [], []>} : vector<4x4xf32>, vector<256x4xf32>, vector<4x256xf32> -> vector<4x256xf32>
    %77 = arith.addf %71, %76 : vector<4x256xf32>
    %c0_78 = arith.constant 0 : index
    %c0_79 = arith.constant 0 : index
    %c0_80 = arith.constant 0 : index
    %78 = vector.load %arg12[%c0_78, %c0_79, %c0_80] : memref<1x28x256xf32, #tpu.memory_space<vmem>>, vector<1x4x256xf32>
    %79 = vector.shape_cast %78 : vector<1x4x256xf32> to vector<4x256xf32>
    %80 = vector.shape_cast %77 : vector<4x256xf32> to vector<1x4x256xf32>
    tpu.vector_store %arg12[%c0_78, %c0_79, %c0_80], %80 {strides = array<i32>} : memref<1x28x256xf32, #tpu.memory_space<vmem>>, vector<1x4x256xf32>,
    %c0_81 = arith.constant 0 : index
    %c0_82 = arith.constant 0 : index
    %c0_83 = arith.constant 0 : index
    %81 = vector.load %arg2[%c0_81, %c0_82, %c0_83] : memref<1x64x8xf32, #tpu.memory_space<vmem>>, vector<1x64x8xf32>
    %82 = vector.shape_cast %81 : vector<1x64x8xf32> to vector<64x8xf32>
    %c0_84 = arith.constant 0 : index
    %c0_85 = arith.constant 0 : index
    %83 = vector.load %arg4[%c0_84, %c0_85] : memref<256x64xf32, #tpu.memory_space<vmem>>, vector<256x64xf32>
    %cst_86 = arith.constant dense<0.000000e+00> : vector<256x8xf32>
    %84 = tpu.matmul %83, %82, %cst_86 {dimension_numbers = #tpu.dot_dimension_numbers<[1], [0], [0], [1], [0, 0, 1, 1], [], []>} : vector<256x64xf32>, vector<64x8xf32>, vector<256x8xf32> -> vector<256x8xf32>
    %85 = arith.mulf %84, %84 : vector<256x8xf32>
    %cst_87 = arith.constant dense<0.000000e+00> : vector<256xf32>
    %86 = vector.multi_reduction <add>, %85, %cst_87 [1] : vector<256x8xf32> to vector<256xf32>
    %87 = vector.shape_cast %86 : vector<256xf32> to vector<256x1xf32>
    %88 = math.sqrt %87 : vector<256x1xf32>
    %cst_88 = arith.constant 1.000000e-10 : f32
    %89 = vector.broadcast %cst_88 : f32 to vector<256x1xf32>
    %90 = arith.addf %88, %89 : vector<256x1xf32>
    %cst_89 = arith.constant 1.000000e+00 : f32
    %91 = vector.broadcast %cst_89 : f32 to vector<256x1xf32>
    %92 = arith.divf %91, %90 : vector<256x1xf32>
    %93 = vector.broadcast %92 : vector<256x1xf32> to vector<256x8xf32>
    %94 = arith.mulf %84, %93 : vector<256x8xf32>
    %cst_90 = arith.constant 0.000000e+00 : f32
    %95 = vector.broadcast %cst_90 : f32 to vector<2x20x8xf32>
    %cst_91 = arith.constant 0.000000e+00 : f32
    %96 = vector.broadcast %cst_91 : f32 to vector<16x2x8xf32>
    %c0_92 = arith.constant 0 : index
    %c0_93 = arith.constant 0 : index
    %c0_94 = arith.constant 0 : index
    %97 = vector.load %arg14[%c0_92, %c0_93, %c0_94] : memref<20x20x8xf32, #tpu.memory_space<vmem>>, vector<2x20x8xf32>
    tpu.vector_store %arg14[%c0_92, %c0_93, %c0_94], %95 {strides = array<i32>} : memref<20x20x8xf32, #tpu.memory_space<vmem>>, vector<2x20x8xf32>,
    %c18 = arith.constant 18 : index
    %c0_95 = arith.constant 0 : index
    %c0_96 = arith.constant 0 : index
    %98 = vector.load %arg14[%c18, %c0_95, %c0_96] : memref<20x20x8xf32, #tpu.memory_space<vmem>>, vector<2x20x8xf32>
    tpu.vector_store %arg14[%c18, %c0_95, %c0_96], %95 {strides = array<i32>} : memref<20x20x8xf32, #tpu.memory_space<vmem>>, vector<2x20x8xf32>,
    %c2_97 = arith.constant 2 : index
    %c0_98 = arith.constant 0 : index
    %c0_99 = arith.constant 0 : index
    %99 = vector.load %arg14[%c2_97, %c0_98, %c0_99] : memref<20x20x8xf32, #tpu.memory_space<vmem>>, vector<16x2x8xf32>
    tpu.vector_store %arg14[%c2_97, %c0_98, %c0_99], %96 {strides = array<i32>} : memref<20x20x8xf32, #tpu.memory_space<vmem>>, vector<16x2x8xf32>,
    %c2_100 = arith.constant 2 : index
    %c18_101 = arith.constant 18 : index
    %c0_102 = arith.constant 0 : index
    %100 = vector.load %arg14[%c2_100, %c18_101, %c0_102] : memref<20x20x8xf32, #tpu.memory_space<vmem>>, vector<16x2x8xf32>
    tpu.vector_store %arg14[%c2_100, %c18_101, %c0_102], %96 {strides = array<i32>} : memref<20x20x8xf32, #tpu.memory_space<vmem>>, vector<16x2x8xf32>,
    %101 = vector.shape_cast %94 : vector<256x8xf32> to vector<16x16x8xf32>
    %c2_103 = arith.constant 2 : index
    %c2_104 = arith.constant 2 : index
    %c0_105 = arith.constant 0 : index
    %102 = vector.load %arg14[%c2_103, %c2_104, %c0_105] : memref<20x20x8xf32, #tpu.memory_space<vmem>>, vector<16x16x8xf32>
    tpu.vector_store %arg14[%c2_103, %c2_104, %c0_105], %101 {strides = array<i32>} : memref<20x20x8xf32, #tpu.memory_space<vmem>>, vector<16x16x8xf32>,
    %cst_106 = arith.constant 0.000000e+00 : f32
    %103 = vector.broadcast %cst_106 : f32 to vector<8x256xf32>
    %c0_107 = arith.constant 0 : index
    %c0_108 = arith.constant 0 : index
    %104 = vector.load %arg10[%c0_107, %c0_108] : memref<8x1xf32, #tpu.memory_space<vmem>>, vector<8x1xf32>
    %105 = vector.broadcast %104 : vector<8x1xf32> to vector<8x256xf32>
    %106 = arith.addf %103, %105 : vector<8x256xf32>
    %c0_109 = arith.constant 0 : index
    %c0_110 = arith.constant 0 : index
    %c0_111 = arith.constant 0 : index
    %107 = vector.load %arg14[%c0_109, %c0_110, %c0_111] : memref<20x20x8xf32, #tpu.memory_space<vmem>>, vector<16x16x8xf32>
    %c0_112 = arith.constant 0 : index
    %c0_113 = arith.constant 0 : index
    %c0_114 = arith.constant 0 : index
    %108 = vector.load %arg7[%c0_112, %c0_113, %c0_114] : memref<9x8x8xf32, #tpu.memory_space<vmem>>, vector<1x8x8xf32>
    %109 = vector.shape_cast %108 : vector<1x8x8xf32> to vector<8x8xf32>
    %110 = vector.shape_cast %107 : vector<16x16x8xf32> to vector<256x8xf32>
    %cst_115 = arith.constant dense<0.000000e+00> : vector<8x256xf32>
    %111 = tpu.matmul %109, %110, %cst_115 {dimension_numbers = #tpu.dot_dimension_numbers<[1], [1], [0], [0], [0, 0, 1, 0], [], []>} : vector<8x8xf32>, vector<256x8xf32>, vector<8x256xf32> -> vector<8x256xf32>
    %112 = arith.addf %106, %111 : vector<8x256xf32>
    %c0_116 = arith.constant 0 : index
    %c2_117 = arith.constant 2 : index
    %c0_118 = arith.constant 0 : index
    %113 = vector.load %arg14[%c0_116, %c2_117, %c0_118] : memref<20x20x8xf32, #tpu.memory_space<vmem>>, vector<16x16x8xf32>
    %c1_119 = arith.constant 1 : index
    %c0_120 = arith.constant 0 : index
    %c0_121 = arith.constant 0 : index
    %114 = vector.load %arg7[%c1_119, %c0_120, %c0_121] : memref<9x8x8xf32, #tpu.memory_space<vmem>>, vector<1x8x8xf32>
    %115 = vector.shape_cast %114 : vector<1x8x8xf32> to vector<8x8xf32>
    %116 = vector.shape_cast %113 : vector<16x16x8xf32> to vector<256x8xf32>
    %cst_122 = arith.constant dense<0.000000e+00> : vector<8x256xf32>
    %117 = tpu.matmul %115, %116, %cst_122 {dimension_numbers = #tpu.dot_dimension_numbers<[1], [1], [0], [0], [0, 0, 1, 0], [], []>} : vector<8x8xf32>, vector<256x8xf32>, vector<8x256xf32> -> vector<8x256xf32>
    %118 = arith.addf %112, %117 : vector<8x256xf32>
    %c0_123 = arith.constant 0 : index
    %c4_124 = arith.constant 4 : index
    %c0_125 = arith.constant 0 : index
    %119 = vector.load %arg14[%c0_123, %c4_124, %c0_125] : memref<20x20x8xf32, #tpu.memory_space<vmem>>, vector<16x16x8xf32>
    %c2_126 = arith.constant 2 : index
    %c0_127 = arith.constant 0 : index
    %c0_128 = arith.constant 0 : index
    %120 = vector.load %arg7[%c2_126, %c0_127, %c0_128] : memref<9x8x8xf32, #tpu.memory_space<vmem>>, vector<1x8x8xf32>
    %121 = vector.shape_cast %120 : vector<1x8x8xf32> to vector<8x8xf32>
    %122 = vector.shape_cast %119 : vector<16x16x8xf32> to vector<256x8xf32>
    %cst_129 = arith.constant dense<0.000000e+00> : vector<8x256xf32>
    %123 = tpu.matmul %121, %122, %cst_129 {dimension_numbers = #tpu.dot_dimension_numbers<[1], [1], [0], [0], [0, 0, 1, 0], [], []>} : vector<8x8xf32>, vector<256x8xf32>, vector<8x256xf32> -> vector<8x256xf32>
    %124 = arith.addf %118, %123 : vector<8x256xf32>
    %c2_130 = arith.constant 2 : index
    %c0_131 = arith.constant 0 : index
    %c0_132 = arith.constant 0 : index
    %125 = vector.load %arg14[%c2_130, %c0_131, %c0_132] : memref<20x20x8xf32, #tpu.memory_space<vmem>>, vector<16x16x8xf32>
    %c3_133 = arith.constant 3 : index
    %c0_134 = arith.constant 0 : index
    %c0_135 = arith.constant 0 : index
    %126 = vector.load %arg7[%c3_133, %c0_134, %c0_135] : memref<9x8x8xf32, #tpu.memory_space<vmem>>, vector<1x8x8xf32>
    %127 = vector.shape_cast %126 : vector<1x8x8xf32> to vector<8x8xf32>
    %128 = vector.shape_cast %125 : vector<16x16x8xf32> to vector<256x8xf32>
    %cst_136 = arith.constant dense<0.000000e+00> : vector<8x256xf32>
    %129 = tpu.matmul %127, %128, %cst_136 {dimension_numbers = #tpu.dot_dimension_numbers<[1], [1], [0], [0], [0, 0, 1, 0], [], []>} : vector<8x8xf32>, vector<256x8xf32>, vector<8x256xf32> -> vector<8x256xf32>
    %130 = arith.addf %124, %129 : vector<8x256xf32>
    %c2_137 = arith.constant 2 : index
    %c2_138 = arith.constant 2 : index
    %c0_139 = arith.constant 0 : index
    %131 = vector.load %arg14[%c2_137, %c2_138, %c0_139] : memref<20x20x8xf32, #tpu.memory_space<vmem>>, vector<16x16x8xf32>
    %c4_140 = arith.constant 4 : index
    %c0_141 = arith.constant 0 : index
    %c0_142 = arith.constant 0 : index
    %132 = vector.load %arg7[%c4_140, %c0_141, %c0_142] : memref<9x8x8xf32, #tpu.memory_space<vmem>>, vector<1x8x8xf32>
    %133 = vector.shape_cast %132 : vector<1x8x8xf32> to vector<8x8xf32>
    %134 = vector.shape_cast %131 : vector<16x16x8xf32> to vector<256x8xf32>
    %cst_143 = arith.constant dense<0.000000e+00> : vector<8x256xf32>
    %135 = tpu.matmul %133, %134, %cst_143 {dimension_numbers = #tpu.dot_dimension_numbers<[1], [1], [0], [0], [0, 0, 1, 0], [], []>} : vector<8x8xf32>, vector<256x8xf32>, vector<8x256xf32> -> vector<8x256xf32>
    %136 = arith.addf %130, %135 : vector<8x256xf32>
    %c2_144 = arith.constant 2 : index
    %c4_145 = arith.constant 4 : index
    %c0_146 = arith.constant 0 : index
    %137 = vector.load %arg14[%c2_144, %c4_145, %c0_146] : memref<20x20x8xf32, #tpu.memory_space<vmem>>, vector<16x16x8xf32>
    %c5_147 = arith.constant 5 : index
    %c0_148 = arith.constant 0 : index
    %c0_149 = arith.constant 0 : index
    %138 = vector.load %arg7[%c5_147, %c0_148, %c0_149] : memref<9x8x8xf32, #tpu.memory_space<vmem>>, vector<1x8x8xf32>
    %139 = vector.shape_cast %138 : vector<1x8x8xf32> to vector<8x8xf32>
    %140 = vector.shape_cast %137 : vector<16x16x8xf32> to vector<256x8xf32>
    %cst_150 = arith.constant dense<0.000000e+00> : vector<8x256xf32>
    %141 = tpu.matmul %139, %140, %cst_150 {dimension_numbers = #tpu.dot_dimension_numbers<[1], [1], [0], [0], [0, 0, 1, 0], [], []>} : vector<8x8xf32>, vector<256x8xf32>, vector<8x256xf32> -> vector<8x256xf32>
    %142 = arith.addf %136, %141 : vector<8x256xf32>
    %c4_151 = arith.constant 4 : index
    %c0_152 = arith.constant 0 : index
    %c0_153 = arith.constant 0 : index
    %143 = vector.load %arg14[%c4_151, %c0_152, %c0_153] : memref<20x20x8xf32, #tpu.memory_space<vmem>>, vector<16x16x8xf32>
    %c6_154 = arith.constant 6 : index
    %c0_155 = arith.constant 0 : index
    %c0_156 = arith.constant 0 : index
    %144 = vector.load %arg7[%c6_154, %c0_155, %c0_156] : memref<9x8x8xf32, #tpu.memory_space<vmem>>, vector<1x8x8xf32>
    %145 = vector.shape_cast %144 : vector<1x8x8xf32> to vector<8x8xf32>
    %146 = vector.shape_cast %143 : vector<16x16x8xf32> to vector<256x8xf32>
    %cst_157 = arith.constant dense<0.000000e+00> : vector<8x256xf32>
    %147 = tpu.matmul %145, %146, %cst_157 {dimension_numbers = #tpu.dot_dimension_numbers<[1], [1], [0], [0], [0, 0, 1, 0], [], []>} : vector<8x8xf32>, vector<256x8xf32>, vector<8x256xf32> -> vector<8x256xf32>
    %148 = arith.addf %142, %147 : vector<8x256xf32>
    %c4_158 = arith.constant 4 : index
    %c2_159 = arith.constant 2 : index
    %c0_160 = arith.constant 0 : index
    %149 = vector.load %arg14[%c4_158, %c2_159, %c0_160] : memref<20x20x8xf32, #tpu.memory_space<vmem>>, vector<16x16x8xf32>
    %c7_161 = arith.constant 7 : index
    %c0_162 = arith.constant 0 : index
    %c0_163 = arith.constant 0 : index
    %150 = vector.load %arg7[%c7_161, %c0_162, %c0_163] : memref<9x8x8xf32, #tpu.memory_space<vmem>>, vector<1x8x8xf32>
    %151 = vector.shape_cast %150 : vector<1x8x8xf32> to vector<8x8xf32>
    %152 = vector.shape_cast %149 : vector<16x16x8xf32> to vector<256x8xf32>
    %cst_164 = arith.constant dense<0.000000e+00> : vector<8x256xf32>
    %153 = tpu.matmul %151, %152, %cst_164 {dimension_numbers = #tpu.dot_dimension_numbers<[1], [1], [0], [0], [0, 0, 1, 0], [], []>} : vector<8x8xf32>, vector<256x8xf32>, vector<8x256xf32> -> vector<8x256xf32>
    %154 = arith.addf %148, %153 : vector<8x256xf32>
    %c4_165 = arith.constant 4 : index
    %c4_166 = arith.constant 4 : index
    %c0_167 = arith.constant 0 : index
    %155 = vector.load %arg14[%c4_165, %c4_166, %c0_167] : memref<20x20x8xf32, #tpu.memory_space<vmem>>, vector<16x16x8xf32>
    %c8_168 = arith.constant 8 : index
    %c0_169 = arith.constant 0 : index
    %c0_170 = arith.constant 0 : index
    %156 = vector.load %arg7[%c8_168, %c0_169, %c0_170] : memref<9x8x8xf32, #tpu.memory_space<vmem>>, vector<1x8x8xf32>
    %157 = vector.shape_cast %156 : vector<1x8x8xf32> to vector<8x8xf32>
    %158 = vector.shape_cast %155 : vector<16x16x8xf32> to vector<256x8xf32>
    %cst_171 = arith.constant dense<0.000000e+00> : vector<8x256xf32>
    %159 = tpu.matmul %157, %158, %cst_171 {dimension_numbers = #tpu.dot_dimension_numbers<[1], [1], [0], [0], [0, 0, 1, 0], [], []>} : vector<8x8xf32>, vector<256x8xf32>, vector<8x256xf32> -> vector<8x256xf32>
    %160 = arith.addf %154, %159 : vector<8x256xf32>
    %c0_172 = arith.constant 0 : index
    %c4_173 = arith.constant 4 : index
    %c0_174 = arith.constant 0 : index
    %161 = vector.load %arg12[%c0_172, %c4_173, %c0_174] : memref<1x28x256xf32, #tpu.memory_space<vmem>>, vector<1x8x256xf32>
    %162 = vector.shape_cast %161 : vector<1x8x256xf32> to vector<8x256xf32>
    %163 = vector.shape_cast %160 : vector<8x256xf32> to vector<1x8x256xf32>
    tpu.vector_store %arg12[%c0_172, %c4_173, %c0_174], %163 {strides = array<i32>} : memref<1x28x256xf32, #tpu.memory_space<vmem>>, vector<1x8x256xf32>,
    %c0_175 = arith.constant 0 : index
    %c0_176 = arith.constant 0 : index
    %c0_177 = arith.constant 0 : index
    %164 = vector.load %arg3[%c0_175, %c0_176, %c0_177] : memref<1x16x16xf32, #tpu.memory_space<vmem>>, vector<1x16x16xf32>
    %165 = vector.shape_cast %164 : vector<1x16x16xf32> to vector<16x16xf32>
    %c0_178 = arith.constant 0 : index
    %c0_179 = arith.constant 0 : index
    %166 = vector.load %arg5[%c0_178, %c0_179] : memref<256x16xf32, #tpu.memory_space<vmem>>, vector<256x16xf32>
    %cst_180 = arith.constant dense<0.000000e+00> : vector<256x16xf32>
    %167 = tpu.matmul %166, %165, %cst_180 {dimension_numbers = #tpu.dot_dimension_numbers<[1], [0], [0], [1], [0, 0, 1, 1], [], []>} : vector<256x16xf32>, vector<16x16xf32>, vector<256x16xf32> -> vector<256x16xf32>
    %168 = arith.mulf %167, %167 : vector<256x16xf32>
    %cst_181 = arith.constant dense<0.000000e+00> : vector<256xf32>
    %169 = vector.multi_reduction <add>, %168, %cst_181 [1] : vector<256x16xf32> to vector<256xf32>
    %170 = vector.shape_cast %169 : vector<256xf32> to vector<256x1xf32>
    %171 = math.sqrt %170 : vector<256x1xf32>
    %cst_182 = arith.constant 1.000000e-10 : f32
    %172 = vector.broadcast %cst_182 : f32 to vector<256x1xf32>
    %173 = arith.addf %171, %172 : vector<256x1xf32>
    %cst_183 = arith.constant 1.000000e+00 : f32
    %174 = vector.broadcast %cst_183 : f32 to vector<256x1xf32>
    %175 = arith.divf %174, %173 : vector<256x1xf32>
    %176 = vector.broadcast %175 : vector<256x1xf32> to vector<256x16xf32>
    %177 = arith.mulf %167, %176 : vector<256x16xf32>
    %cst_184 = arith.constant 0.000000e+00 : f32
    %178 = vector.broadcast %cst_184 : f32 to vector<4x24x16xf32>
    %cst_185 = arith.constant 0.000000e+00 : f32
    %179 = vector.broadcast %cst_185 : f32 to vector<16x4x16xf32>
    %c0_186 = arith.constant 0 : index
    %c0_187 = arith.constant 0 : index
    %c0_188 = arith.constant 0 : index
    %180 = vector.load %arg15[%c0_186, %c0_187, %c0_188] : memref<24x24x16xf32, #tpu.memory_space<vmem>>, vector<4x24x16xf32>
    tpu.vector_store %arg15[%c0_186, %c0_187, %c0_188], %178 {strides = array<i32>} : memref<24x24x16xf32, #tpu.memory_space<vmem>>, vector<4x24x16xf32>,
    %c20 = arith.constant 20 : index
    %c0_189 = arith.constant 0 : index
    %c0_190 = arith.constant 0 : index
    %181 = vector.load %arg15[%c20, %c0_189, %c0_190] : memref<24x24x16xf32, #tpu.memory_space<vmem>>, vector<4x24x16xf32>
    tpu.vector_store %arg15[%c20, %c0_189, %c0_190], %178 {strides = array<i32>} : memref<24x24x16xf32, #tpu.memory_space<vmem>>, vector<4x24x16xf32>,
    %c4_191 = arith.constant 4 : index
    %c0_192 = arith.constant 0 : index
    %c0_193 = arith.constant 0 : index
    %182 = vector.load %arg15[%c4_191, %c0_192, %c0_193] : memref<24x24x16xf32, #tpu.memory_space<vmem>>, vector<16x4x16xf32>
    tpu.vector_store %arg15[%c4_191, %c0_192, %c0_193], %179 {strides = array<i32>} : memref<24x24x16xf32, #tpu.memory_space<vmem>>, vector<16x4x16xf32>,
    %c4_194 = arith.constant 4 : index
    %c20_195 = arith.constant 20 : index
    %c0_196 = arith.constant 0 : index
    %183 = vector.load %arg15[%c4_194, %c20_195, %c0_196] : memref<24x24x16xf32, #tpu.memory_space<vmem>>, vector<16x4x16xf32>
    tpu.vector_store %arg15[%c4_194, %c20_195, %c0_196], %179 {strides = array<i32>} : memref<24x24x16xf32, #tpu.memory_space<vmem>>, vector<16x4x16xf32>,
    %184 = vector.shape_cast %177 : vector<256x16xf32> to vector<16x16x16xf32>
    %c4_197 = arith.constant 4 : index
    %c4_198 = arith.constant 4 : index
    %c0_199 = arith.constant 0 : index
    %185 = vector.load %arg15[%c4_197, %c4_198, %c0_199] : memref<24x24x16xf32, #tpu.memory_space<vmem>>, vector<16x16x16xf32>
    tpu.vector_store %arg15[%c4_197, %c4_198, %c0_199], %184 {strides = array<i32>} : memref<24x24x16xf32, #tpu.memory_space<vmem>>, vector<16x16x16xf32>,
    %cst_200 = arith.constant 0.000000e+00 : f32
    %186 = vector.broadcast %cst_200 : f32 to vector<16x256xf32>
    %c0_201 = arith.constant 0 : index
    %c0_202 = arith.constant 0 : index
    %187 = vector.load %arg11[%c0_201, %c0_202] : memref<16x1xf32, #tpu.memory_space<vmem>>, vector<16x1xf32>
    %188 = vector.broadcast %187 : vector<16x1xf32> to vector<16x256xf32>
    %189 = arith.addf %186, %188 : vector<16x256xf32>
    %c0_203 = arith.constant 0 : index
    %c0_204 = arith.constant 0 : index
    %c0_205 = arith.constant 0 : index
    %190 = vector.load %arg15[%c0_203, %c0_204, %c0_205] : memref<24x24x16xf32, #tpu.memory_space<vmem>>, vector<16x16x16xf32>
    %c0_206 = arith.constant 0 : index
    %c0_207 = arith.constant 0 : index
    %c0_208 = arith.constant 0 : index
    %191 = vector.load %arg8[%c0_206, %c0_207, %c0_208] : memref<9x16x16xf32, #tpu.memory_space<vmem>>, vector<1x16x16xf32>
    %192 = vector.shape_cast %191 : vector<1x16x16xf32> to vector<16x16xf32>
    %193 = vector.shape_cast %190 : vector<16x16x16xf32> to vector<256x16xf32>
    %cst_209 = arith.constant dense<0.000000e+00> : vector<16x256xf32>
    %194 = tpu.matmul %192, %193, %cst_209 {dimension_numbers = #tpu.dot_dimension_numbers<[1], [1], [0], [0], [0, 0, 1, 0], [], []>} : vector<16x16xf32>, vector<256x16xf32>, vector<16x256xf32> -> vector<16x256xf32>
    %195 = arith.addf %189, %194 : vector<16x256xf32>
    %c0_210 = arith.constant 0 : index
    %c4_211 = arith.constant 4 : index
    %c0_212 = arith.constant 0 : index
    %196 = vector.load %arg15[%c0_210, %c4_211, %c0_212] : memref<24x24x16xf32, #tpu.memory_space<vmem>>, vector<16x16x16xf32>
    %c1_213 = arith.constant 1 : index
    %c0_214 = arith.constant 0 : index
    %c0_215 = arith.constant 0 : index
    %197 = vector.load %arg8[%c1_213, %c0_214, %c0_215] : memref<9x16x16xf32, #tpu.memory_space<vmem>>, vector<1x16x16xf32>
    %198 = vector.shape_cast %197 : vector<1x16x16xf32> to vector<16x16xf32>
    %199 = vector.shape_cast %196 : vector<16x16x16xf32> to vector<256x16xf32>
    %cst_216 = arith.constant dense<0.000000e+00> : vector<16x256xf32>
    %200 = tpu.matmul %198, %199, %cst_216 {dimension_numbers = #tpu.dot_dimension_numbers<[1], [1], [0], [0], [0, 0, 1, 0], [], []>} : vector<16x16xf32>, vector<256x16xf32>, vector<16x256xf32> -> vector<16x256xf32>
    %201 = arith.addf %195, %200 : vector<16x256xf32>
    %c0_217 = arith.constant 0 : index
    %c8_218 = arith.constant 8 : index
    %c0_219 = arith.constant 0 : index
    %202 = vector.load %arg15[%c0_217, %c8_218, %c0_219] : memref<24x24x16xf32, #tpu.memory_space<vmem>>, vector<16x16x16xf32>
    %c2_220 = arith.constant 2 : index
    %c0_221 = arith.constant 0 : index
    %c0_222 = arith.constant 0 : index
    %203 = vector.load %arg8[%c2_220, %c0_221, %c0_222] : memref<9x16x16xf32, #tpu.memory_space<vmem>>, vector<1x16x16xf32>
    %204 = vector.shape_cast %203 : vector<1x16x16xf32> to vector<16x16xf32>
    %205 = vector.shape_cast %202 : vector<16x16x16xf32> to vector<256x16xf32>
    %cst_223 = arith.constant dense<0.000000e+00> : vector<16x256xf32>
    %206 = tpu.matmul %204, %205, %cst_223 {dimension_numbers = #tpu.dot_dimension_numbers<[1], [1], [0], [0], [0, 0, 1, 0], [], []>} : vector<16x16xf32>, vector<256x16xf32>, vector<16x256xf32> -> vector<16x256xf32>
    %207 = arith.addf %201, %206 : vector<16x256xf32>
    %c4_224 = arith.constant 4 : index
    %c0_225 = arith.constant 0 : index
    %c0_226 = arith.constant 0 : index
    %208 = vector.load %arg15[%c4_224, %c0_225, %c0_226] : memref<24x24x16xf32, #tpu.memory_space<vmem>>, vector<16x16x16xf32>
    %c3_227 = arith.constant 3 : index
    %c0_228 = arith.constant 0 : index
    %c0_229 = arith.constant 0 : index
    %209 = vector.load %arg8[%c3_227, %c0_228, %c0_229] : memref<9x16x16xf32, #tpu.memory_space<vmem>>, vector<1x16x16xf32>
    %210 = vector.shape_cast %209 : vector<1x16x16xf32> to vector<16x16xf32>
    %211 = vector.shape_cast %208 : vector<16x16x16xf32> to vector<256x16xf32>
    %cst_230 = arith.constant dense<0.000000e+00> : vector<16x256xf32>
    %212 = tpu.matmul %210, %211, %cst_230 {dimension_numbers = #tpu.dot_dimension_numbers<[1], [1], [0], [0], [0, 0, 1, 0], [], []>} : vector<16x16xf32>, vector<256x16xf32>, vector<16x256xf32> -> vector<16x256xf32>
    %213 = arith.addf %207, %212 : vector<16x256xf32>
    %c4_231 = arith.constant 4 : index
    %c4_232 = arith.constant 4 : index
    %c0_233 = arith.constant 0 : index
    %214 = vector.load %arg15[%c4_231, %c4_232, %c0_233] : memref<24x24x16xf32, #tpu.memory_space<vmem>>, vector<16x16x16xf32>
    %c4_234 = arith.constant 4 : index
    %c0_235 = arith.constant 0 : index
    %c0_236 = arith.constant 0 : index
    %215 = vector.load %arg8[%c4_234, %c0_235, %c0_236] : memref<9x16x16xf32, #tpu.memory_space<vmem>>, vector<1x16x16xf32>
    %216 = vector.shape_cast %215 : vector<1x16x16xf32> to vector<16x16xf32>
    %217 = vector.shape_cast %214 : vector<16x16x16xf32> to vector<256x16xf32>
    %cst_237 = arith.constant dense<0.000000e+00> : vector<16x256xf32>
    %218 = tpu.matmul %216, %217, %cst_237 {dimension_numbers = #tpu.dot_dimension_numbers<[1], [1], [0], [0], [0, 0, 1, 0], [], []>} : vector<16x16xf32>, vector<256x16xf32>, vector<16x256xf32> -> vector<16x256xf32>
    %219 = arith.addf %213, %218 : vector<16x256xf32>
    %c4_238 = arith.constant 4 : index
    %c8_239 = arith.constant 8 : index
    %c0_240 = arith.constant 0 : index
    %220 = vector.load %arg15[%c4_238, %c8_239, %c0_240] : memref<24x24x16xf32, #tpu.memory_space<vmem>>, vector<16x16x16xf32>
    %c5_241 = arith.constant 5 : index
    %c0_242 = arith.constant 0 : index
    %c0_243 = arith.constant 0 : index
    %221 = vector.load %arg8[%c5_241, %c0_242, %c0_243] : memref<9x16x16xf32, #tpu.memory_space<vmem>>, vector<1x16x16xf32>
    %222 = vector.shape_cast %221 : vector<1x16x16xf32> to vector<16x16xf32>
    %223 = vector.shape_cast %220 : vector<16x16x16xf32> to vector<256x16xf32>
    %cst_244 = arith.constant dense<0.000000e+00> : vector<16x256xf32>
    %224 = tpu.matmul %222, %223, %cst_244 {dimension_numbers = #tpu.dot_dimension_numbers<[1], [1], [0], [0], [0, 0, 1, 0], [], []>} : vector<16x16xf32>, vector<256x16xf32>, vector<16x256xf32> -> vector<16x256xf32>
    %225 = arith.addf %219, %224 : vector<16x256xf32>
    %c8_245 = arith.constant 8 : index
    %c0_246 = arith.constant 0 : index
    %c0_247 = arith.constant 0 : index
    %226 = vector.load %arg15[%c8_245, %c0_246, %c0_247] : memref<24x24x16xf32, #tpu.memory_space<vmem>>, vector<16x16x16xf32>
    %c6_248 = arith.constant 6 : index
    %c0_249 = arith.constant 0 : index
    %c0_250 = arith.constant 0 : index
    %227 = vector.load %arg8[%c6_248, %c0_249, %c0_250] : memref<9x16x16xf32, #tpu.memory_space<vmem>>, vector<1x16x16xf32>
    %228 = vector.shape_cast %227 : vector<1x16x16xf32> to vector<16x16xf32>
    %229 = vector.shape_cast %226 : vector<16x16x16xf32> to vector<256x16xf32>
    %cst_251 = arith.constant dense<0.000000e+00> : vector<16x256xf32>
    %230 = tpu.matmul %228, %229, %cst_251 {dimension_numbers = #tpu.dot_dimension_numbers<[1], [1], [0], [0], [0, 0, 1, 0], [], []>} : vector<16x16xf32>, vector<256x16xf32>, vector<16x256xf32> -> vector<16x256xf32>
    %231 = arith.addf %225, %230 : vector<16x256xf32>
    %c8_252 = arith.constant 8 : index
    %c4_253 = arith.constant 4 : index
    %c0_254 = arith.constant 0 : index
    %232 = vector.load %arg15[%c8_252, %c4_253, %c0_254] : memref<24x24x16xf32, #tpu.memory_space<vmem>>, vector<16x16x16xf32>
    %c7_255 = arith.constant 7 : index
    %c0_256 = arith.constant 0 : index
    %c0_257 = arith.constant 0 : index
    %233 = vector.load %arg8[%c7_255, %c0_256, %c0_257] : memref<9x16x16xf32, #tpu.memory_space<vmem>>, vector<1x16x16xf32>
    %234 = vector.shape_cast %233 : vector<1x16x16xf32> to vector<16x16xf32>
    %235 = vector.shape_cast %232 : vector<16x16x16xf32> to vector<256x16xf32>
    %cst_258 = arith.constant dense<0.000000e+00> : vector<16x256xf32>
    %236 = tpu.matmul %234, %235, %cst_258 {dimension_numbers = #tpu.dot_dimension_numbers<[1], [1], [0], [0], [0, 0, 1, 0], [], []>} : vector<16x16xf32>, vector<256x16xf32>, vector<16x256xf32> -> vector<16x256xf32>
    %237 = arith.addf %231, %236 : vector<16x256xf32>
    %c8_259 = arith.constant 8 : index
    %c8_260 = arith.constant 8 : index
    %c0_261 = arith.constant 0 : index
    %238 = vector.load %arg15[%c8_259, %c8_260, %c0_261] : memref<24x24x16xf32, #tpu.memory_space<vmem>>, vector<16x16x16xf32>
    %c8_262 = arith.constant 8 : index
    %c0_263 = arith.constant 0 : index
    %c0_264 = arith.constant 0 : index
    %239 = vector.load %arg8[%c8_262, %c0_263, %c0_264] : memref<9x16x16xf32, #tpu.memory_space<vmem>>, vector<1x16x16xf32>
    %240 = vector.shape_cast %239 : vector<1x16x16xf32> to vector<16x16xf32>
    %241 = vector.shape_cast %238 : vector<16x16x16xf32> to vector<256x16xf32>
    %cst_265 = arith.constant dense<0.000000e+00> : vector<16x256xf32>
    %242 = tpu.matmul %240, %241, %cst_265 {dimension_numbers = #tpu.dot_dimension_numbers<[1], [1], [0], [0], [0, 0, 1, 0], [], []>} : vector<16x16xf32>, vector<256x16xf32>, vector<16x256xf32> -> vector<16x256xf32>
    %243 = arith.addf %237, %242 : vector<16x256xf32>
    %c0_266 = arith.constant 0 : index
    %c12 = arith.constant 12 : index
    %c0_267 = arith.constant 0 : index
    %244 = vector.load %arg12[%c0_266, %c12, %c0_267] : memref<1x28x256xf32, #tpu.memory_space<vmem>>, vector<1x16x256xf32>
    %245 = vector.shape_cast %244 : vector<1x16x256xf32> to vector<16x256xf32>
    %246 = vector.shape_cast %243 : vector<16x256xf32> to vector<1x16x256xf32>
    tpu.vector_store %arg12[%c0_266, %c12, %c0_267], %246 {strides = array<i32>} : memref<1x28x256xf32, #tpu.memory_space<vmem>>, vector<1x16x256xf32>,
    return
  }
  func.func @transform_0(%arg0: i32) -> (i32, i32, i32) {
    %c0_i32 = arith.constant 0 : i32
    %c0_i32_0 = arith.constant 0 : i32
    %c0_i32_1 = arith.constant 0 : i32
    return %arg0, %c0_i32, %c0_i32_0 : i32, i32, i32
  }
  func.func @transform_1(%arg0: i32) -> (i32, i32, i32) {
    %c0_i32 = arith.constant 0 : i32
    %c0_i32_0 = arith.constant 0 : i32
    %c0_i32_1 = arith.constant 0 : i32
    return %arg0, %c0_i32, %c0_i32_0 : i32, i32, i32
  }
  func.func @transform_2(%arg0: i32) -> (i32, i32, i32) {
    %c0_i32 = arith.constant 0 : i32
    %c0_i32_0 = arith.constant 0 : i32
    %c0_i32_1 = arith.constant 0 : i32
    return %arg0, %c0_i32, %c0_i32_0 : i32, i32, i32
  }
  func.func @transform_3(%arg0: i32) -> (i32, i32) {
    %c0_i32 = arith.constant 0 : i32
    %c0_i32_0 = arith.constant 0 : i32
    %c0_i32_1 = arith.constant 0 : i32
    return %c0_i32, %c0_i32_0 : i32, i32
  }
  func.func @transform_4(%arg0: i32) -> (i32, i32) {
    %c0_i32 = arith.constant 0 : i32
    %c0_i32_0 = arith.constant 0 : i32
    %c0_i32_1 = arith.constant 0 : i32
    return %c0_i32, %c0_i32_0 : i32, i32
  }
  func.func @transform_5(%arg0: i32) -> (i32, i32, i32) {
    %c0_i32 = arith.constant 0 : i32
    %c0_i32_0 = arith.constant 0 : i32
    %c0_i32_1 = arith.constant 0 : i32
    %c0_i32_2 = arith.constant 0 : i32
    return %c0_i32, %c0_i32_0, %c0_i32_1 : i32, i32, i32
  }
  func.func @transform_6(%arg0: i32) -> (i32, i32, i32) {
    %c0_i32 = arith.constant 0 : i32
    %c0_i32_0 = arith.constant 0 : i32
    %c0_i32_1 = arith.constant 0 : i32
    %c0_i32_2 = arith.constant 0 : i32
    return %c0_i32, %c0_i32_0, %c0_i32_1 : i32, i32, i32
  }
  func.func @transform_7(%arg0: i32) -> (i32, i32, i32) {
    %c0_i32 = arith.constant 0 : i32
    %c0_i32_0 = arith.constant 0 : i32
    %c0_i32_1 = arith.constant 0 : i32
    %c0_i32_2 = arith.constant 0 : i32
    return %c0_i32, %c0_i32_0, %c0_i32_1 : i32, i32, i32
  }
  func.func @transform_8(%arg0: i32) -> (i32, i32) {
    %c0_i32 = arith.constant 0 : i32
    %c0_i32_0 = arith.constant 0 : i32
    %c0_i32_1 = arith.constant 0 : i32
    return %c0_i32, %c0_i32_0 : i32, i32
  }
  func.func @transform_9(%arg0: i32) -> (i32, i32) {
    %c0_i32 = arith.constant 0 : i32
    %c0_i32_0 = arith.constant 0 : i32
    %c0_i32_1 = arith.constant 0 : i32
    return %c0_i32, %c0_i32_0 : i32, i32
  }
  func.func @transform_10(%arg0: i32) -> (i32, i32) {
    %c0_i32 = arith.constant 0 : i32
    %c0_i32_0 = arith.constant 0 : i32
    %c0_i32_1 = arith.constant 0 : i32
    return %c0_i32, %c0_i32_0 : i32, i32
  }
  func.func @transform_11(%arg0: i32) -> (i32, i32, i32) {
    %c0_i32 = arith.constant 0 : i32
    %c0_i32_0 = arith.constant 0 : i32
    %c0_i32_1 = arith.constant 0 : i32
    return %arg0, %c0_i32, %c0_i32_0 : i32, i32, i32
  }
}

</mosaic_0001>

<llo_original>
// kernel: tpu_custom_call.1
$region0: #{tpu_custom_call.1}
  #allocation0 [shape = 'u32[]', space=smem, size = 0x4, offset = 0x4, fixed_abs, tag = 'smem constant byte address 0x4 - core index']
  #allocation1 [shape = 'u32[144,128]{1,0:T(1,128)}', space=vmem, size = 0x12000, scoped, tag = 'internal scratch']
  #allocation2 [shape = 'f32[18,18,4]{2,1,0:T(8,128)}', space=vmem, size = 0x36000, scoped, tag = 'scratch operand']
  #allocation3 [shape = 'f32[20,20,8]{2,1,0:T(8,128)}', space=vmem, size = 0x3c000, scoped, tag = 'scratch operand']
  #allocation4 [shape = 'f32[24,24,16]{2,1,0:T(8,128)}', space=vmem, size = 0x48000, scoped, tag = 'scratch operand']
  %s0 = inlined_call_operand.vmem [shape: f32[2,256,4], index: 0, kind: input, shape index: {}]
  %s1 = inlined_call_operand.vmem [shape: f32[2,64,8], index: 1, kind: input, shape index: {}]
  %s2 = inlined_call_operand.vmem [shape: f32[2,16,16], index: 2, kind: input, shape index: {}]
  %s3 = inlined_call_operand.vmem [shape: f32[256,64], index: 3, kind: input, shape index: {}]
  %s4 = inlined_call_operand.vmem [shape: f32[256,16], index: 4, kind: input, shape index: {}]
  %s5 = inlined_call_operand.vmem [shape: f32[9,4,4], index: 5, kind: input, shape index: {}]
  %s6 = inlined_call_operand.vmem [shape: f32[9,8,8], index: 6, kind: input, shape index: {}]
  %s7 = inlined_call_operand.vmem [shape: f32[9,16,16], index: 7, kind: input, shape index: {}]
  %s8 = inlined_call_operand.vmem [shape: f32[4,1], index: 8, kind: input, shape index: {}]
  %s9 = inlined_call_operand.vmem [shape: f32[8,1], index: 9, kind: input, shape index: {}]
  %s10 = inlined_call_operand.vmem [shape: f32[16,1], index: 10, kind: input, shape index: {}]
  %s11 = inlined_call_operand.vmem [shape: f32[2,28,256], index: 11, kind: output, shape index: {}]
  %s12 = sld [smem:[#allocation0]]
  $region77: #{tpu_custom_call.1} parent=0
    _
  %s14 = ssub.s32 1, %s12
  %s15 = scalar_select 0, %s14, %s12
  loop: start=0, step=1, limit=4
  $region2: #{tpu_custom_call.1} parent=0 // loop_pre_header
    _
  $region3: #{tpu_custom_call.1} parent=0 // loop_header
    %s17 = sphi 0, %s21
    %p18 = scmp.ge.s32.totalorder %s17, 4
    %s27 = sphi 0, %s29
    %s30 = sphi 0, %s27
    %s31 = sphi 0, %s30
    %s47 = sphi 0, %s31
    %s53 = sphi 0, %s55
    %s56 = sphi 0, %s53
    %s57 = sphi 0, %s56
    %s73 = sphi 0, %s57
    %s79 = sphi 0, %s81
    %s82 = sphi 0, %s79
    %s83 = sphi 0, %s82
    %s99 = sphi 0, %s83
    %s103 = sphi 0, %s103
    %s105 = sphi 0, %s103
    %s106 = sphi 0, %s105
    %s120 = sphi 0, %s106
    %s124 = sphi 0, %s124
    %s126 = sphi 0, %s124
    %s127 = sphi 0, %s126
    %s141 = sphi 0, %s127
    %s145 = sphi 0, %s145
    %s147 = sphi 0, %s145
    %s148 = sphi 0, %s147
    %s162 = sphi 0, %s148
    %s166 = sphi 0, %s166
    %s168 = sphi 0, %s166
    %s169 = sphi 0, %s168
    %s183 = sphi 0, %s169
    %s187 = sphi 0, %s187
    %s189 = sphi 0, %s187
    %s190 = sphi 0, %s189
    %s204 = sphi 0, %s190
    %s208 = sphi 0, %s208
    %s210 = sphi 0, %s208
    %s211 = sphi 0, %s210
    %s225 = sphi 0, %s211
    %s229 = sphi 0, %s229
    %s231 = sphi 0, %s229
    %s232 = sphi 0, %s231
    %s246 = sphi 0, %s232
    %s250 = sphi 0, %s250
    %s252 = sphi 0, %s250
    %s253 = sphi 0, %s252
    %s267 = sphi 0, %s253
    %s273 = sphi 0, %s275
    %s276 = sphi 0, %s273
    %s277 = sphi 0, %s276
    %s293 = sphi 0, %s277
  $region4: #{tpu_custom_call.1} parent=0 // loop_header_branch
    %20 = sbr.rel (%p18) target = $region8
  $region5: #{tpu_custom_call.1} parent=0 // loop_body
    %s22 = ssub.s32 %s17, 1
    %s23 = ssub.s32 %s17, 2
    %s24 = sadd.s32 %s17, 1
    %s25 = ssub.s32 %s17, %s24
    %p26 = scmp.eq.s32.totalorder %s25, 0
    %s28 = sadd.s32 %s27, 1
    %s29 = scalar_select %p26, %s27, %s28
    %p32 = pneg %p26
    %p33 = scmp.eq.s32.totalorder %s17, 1
    %p34 = por %p32, %p33
    %p35 = scmp.ne.s32.totalorder %s27, %s30
    %p36 = scmp.eq.s32.totalorder %s17, 0
    %p37 = por %p35, %p36
    %p38 = scmp.ne.s32.totalorder %s27, %s30
    %p39 = scmp.eq.s32.totalorder %s22, 1
    %p40 = por %p38, %p39
    %p41 = scmp.ne.s32.totalorder %s30, %s31
    %p42 = scmp.eq.s32.totalorder %s22, 0
    %p43 = por %p41, %p42
    %p44 = scmp.ne.s32.totalorder %s30, %s31
    %p45 = scmp.eq.s32.totalorder %s23, 1
    %p46 = por %p44, %p45
    %p48 = scmp.ne.s32.totalorder %s31, %s47
    %p49 = scmp.eq.s32.totalorder %s23, 0
    %p50 = por %p48, %p49
    %s51 = ssub.s32 %s17, %s24
    %p52 = scmp.eq.s32.totalorder %s51, 0
    %s54 = sadd.s32 %s53, 1
    %s55 = scalar_select %p52, %s53, %s54
    %p58 = pneg %p52
    %p59 = scmp.eq.s32.totalorder %s17, 1
    %p60 = por %p58, %p59
    %p61 = scmp.ne.s32.totalorder %s53, %s56
    %p62 = scmp.eq.s32.totalorder %s17, 0
    %p63 = por %p61, %p62
    %p64 = scmp.ne.s32.totalorder %s53, %s56
    %p65 = scmp.eq.s32.totalorder %s22, 1
    %p66 = por %p64, %p65
    %p67 = scmp.ne.s32.totalorder %s56, %s57
    %p68 = scmp.eq.s32.totalorder %s22, 0
    %p69 = por %p67, %p68
    %p70 = scmp.ne.s32.totalorder %s56, %s57
    %p71 = scmp.eq.s32.totalorder %s23, 1
    %p72 = por %p70, %p71
    %p74 = scmp.ne.s32.totalorder %s57, %s73
    %p75 = scmp.eq.s32.totalorder %s23, 0
    %p76 = por %p74, %p75
    %s77 = ssub.s32 %s17, %s24
    %p78 = scmp.eq.s32.totalorder %s77, 0
    %s80 = sadd.s32 %s79, 1
    %s81 = scalar_select %p78, %s79, %s80
    %p84 = pneg %p78
    %p85 = scmp.eq.s32.totalorder %s17, 1
    %p86 = por %p84, %p85
    %p87 = scmp.ne.s32.totalorder %s79, %s82
    %p88 = scmp.eq.s32.totalorder %s17, 0
    %p89 = por %p87, %p88
    %p90 = scmp.ne.s32.totalorder %s79, %s82
    %p91 = scmp.eq.s32.totalorder %s22, 1
    %p92 = por %p90, %p91
    %p93 = scmp.ne.s32.totalorder %s82, %s83
    %p94 = scmp.eq.s32.totalorder %s22, 0
    %p95 = por %p93, %p94
    %p96 = scmp.ne.s32.totalorder %s82, %s83
    %p97 = scmp.eq.s32.totalorder %s23, 1
    %p98 = por %p96, %p97
    %p100 = scmp.ne.s32.totalorder %s83, %s99
    %p101 = scmp.eq.s32.totalorder %s23, 0
    %p102 = por %p100, %p101
    %s104 = sadd.s32 %s103, 1
    %p107 = scmp.eq.s32.totalorder %s17, 1
    %p108 = scmp.ne.s32.totalorder %s103, %s105
    %p109 = scmp.eq.s32.totalorder %s17, 0
    %p110 = por %p108, %p109
    %p111 = scmp.ne.s32.totalorder %s103, %s105
    %p112 = scmp.eq.s32.totalorder %s22, 1
    %p113 = por %p111, %p112
    %p114 = scmp.ne.s32.totalorder %s105, %s106
    %p115 = scmp.eq.s32.totalorder %s22, 0
    %p116 = por %p114, %p115
    %p117 = scmp.ne.s32.totalorder %s105, %s106
    %p118 = scmp.eq.s32.totalorder %s23, 1
    %p119 = por %p117, %p118
    %p121 = scmp.ne.s32.totalorder %s106, %s120
    %p122 = scmp.eq.s32.totalorder %s23, 0
    %p123 = por %p121, %p122
    %s125 = sadd.s32 %s124, 1
    %p128 = scmp.eq.s32.totalorder %s17, 1
    %p129 = scmp.ne.s32.totalorder %s124, %s126
    %p130 = scmp.eq.s32.totalorder %s17, 0
    %p131 = por %p129, %p130
    %p132 = scmp.ne.s32.totalorder %s124, %s126
    %p133 = scmp.eq.s32.totalorder %s22, 1
    %p134 = por %p132, %p133
    %p135 = scmp.ne.s32.totalorder %s126, %s127
    %p136 = scmp.eq.s32.totalorder %s22, 0
    %p137 = por %p135, %p136
    %p138 = scmp.ne.s32.totalorder %s126, %s127
    %p139 = scmp.eq.s32.totalorder %s23, 1
    %p140 = por %p138, %p139
    %p142 = scmp.ne.s32.totalorder %s127, %s141
    %p143 = scmp.eq.s32.totalorder %s23, 0
    %p144 = por %p142, %p143
    %s146 = sadd.s32 %s145, 1
    %p149 = scmp.eq.s32.totalorder %s17, 1
    %p150 = scmp.ne.s32.totalorder %s145, %s147
    %p151 = scmp.eq.s32.totalorder %s17, 0
    %p152 = por %p150, %p151
    %p153 = scmp.ne.s32.totalorder %s145, %s147
    %p154 = scmp.eq.s32.totalorder %s22, 1
    %p155 = por %p153, %p154
    %p156 = scmp.ne.s32.totalorder %s147, %s148
    %p157 = scmp.eq.s32.totalorder %s22, 0
    %p158 = por %p156, %p157
    %p159 = scmp.ne.s32.totalorder %s147, %s148
    %p160 = scmp.eq.s32.totalorder %s23, 1
    %p161 = por %p159, %p160
    %p163 = scmp.ne.s32.totalorder %s148, %s162
    %p164 = scmp.eq.s32.totalorder %s23, 0
    %p165 = por %p163, %p164
    %s167 = sadd.s32 %s166, 1
    %p170 = scmp.eq.s32.totalorder %s17, 1
    %p171 = scmp.ne.s32.totalorder %s166, %s168
    %p172 = scmp.eq.s32.totalorder %s17, 0
    %p173 = por %p171, %p172
    %p174 = scmp.ne.s32.totalorder %s166, %s168
    %p175 = scmp.eq.s32.totalorder %s22, 1
    %p176 = por %p174, %p175
    %p177 = scmp.ne.s32.totalorder %s168, %s169
    %p178 = scmp.eq.s32.totalorder %s22, 0
    %p179 = por %p177, %p178
    %p180 = scmp.ne.s32.totalorder %s168, %s169
    %p181 = scmp.eq.s32.totalorder %s23, 1
    %p182 = por %p180, %p181
    %p184 = scmp.ne.s32.totalorder %s169, %s183
    %p185 = scmp.eq.s32.totalorder %s23, 0
    %p186 = por %p184, %p185
    %s188 = sadd.s32 %s187, 1
    %p191 = scmp.eq.s32.totalorder %s17, 1
    %p192 = scmp.ne.s32.totalorder %s187, %s189
    %p193 = scmp.eq.s32.totalorder %s17, 0
    %p194 = por %p192, %p193
    %p195 = scmp.ne.s32.totalorder %s187, %s189
    %p196 = scmp.eq.s32.totalorder %s22, 1
    %p197 = por %p195, %p196
    %p198 = scmp.ne.s32.totalorder %s189, %s190
    %p199 = scmp.eq.s32.totalorder %s22, 0
    %p200 = por %p198, %p199
    %p201 = scmp.ne.s32.totalorder %s189, %s190
    %p202 = scmp.eq.s32.totalorder %s23, 1
    %p203 = por %p201, %p202
    %p205 = scmp.ne.s32.totalorder %s190, %s204
    %p206 = scmp.eq.s32.totalorder %s23, 0
    %p207 = por %p205, %p206
    %s209 = sadd.s32 %s208, 1
    %p212 = scmp.eq.s32.totalorder %s17, 1
    %p213 = scmp.ne.s32.totalorder %s208, %s210
    %p214 = scmp.eq.s32.totalorder %s17, 0
    %p215 = por %p213, %p214
    %p216 = scmp.ne.s32.totalorder %s208, %s210
    %p217 = scmp.eq.s32.totalorder %s22, 1
    %p218 = por %p216, %p217
    %p219 = scmp.ne.s32.totalorder %s210, %s211
    %p220 = scmp.eq.s32.totalorder %s22, 0
    %p221 = por %p219, %p220
    %p222 = scmp.ne.s32.totalorder %s210, %s211
    %p223 = scmp.eq.s32.totalorder %s23, 1
    %p224 = por %p222, %p223
    %p226 = scmp.ne.s32.totalorder %s211, %s225
    %p227 = scmp.eq.s32.totalorder %s23, 0
    %p228 = por %p226, %p227
    %s230 = sadd.s32 %s229, 1
    %p233 = scmp.eq.s32.totalorder %s17, 1
    %p234 = scmp.ne.s32.totalorder %s229, %s231
    %p235 = scmp.eq.s32.totalorder %s17, 0
    %p236 = por %p234, %p235
    %p237 = scmp.ne.s32.totalorder %s229, %s231
    %p238 = scmp.eq.s32.totalorder %s22, 1
    %p239 = por %p237, %p238
    %p240 = scmp.ne.s32.totalorder %s231, %s232
    %p241 = scmp.eq.s32.totalorder %s22, 0
    %p242 = por %p240, %p241
    %p243 = scmp.ne.s32.totalorder %s231, %s232
    %p244 = scmp.eq.s32.totalorder %s23, 1
    %p245 = por %p243, %p244
    %p247 = scmp.ne.s32.totalorder %s232, %s246
    %p248 = scmp.eq.s32.totalorder %s23, 0
    %p249 = por %p247, %p248
    %s251 = sadd.s32 %s250, 1
    %p254 = scmp.eq.s32.totalorder %s17, 1
    %p255 = scmp.ne.s32.totalorder %s250, %s252
    %p256 = scmp.eq.s32.totalorder %s17, 0
    %p257 = por %p255, %p256
    %p258 = scmp.ne.s32.totalorder %s250, %s252
    %p259 = scmp.eq.s32.totalorder %s22, 1
    %p260 = por %p258, %p259
    %p261 = scmp.ne.s32.totalorder %s252, %s253
    %p262 = scmp.eq.s32.totalorder %s22, 0
    %p263 = por %p261, %p262
    %p264 = scmp.ne.s32.totalorder %s252, %s253
    %p265 = scmp.eq.s32.totalorder %s23, 1
    %p266 = por %p264, %p265
    %p268 = scmp.ne.s32.totalorder %s253, %s267
    %p269 = scmp.eq.s32.totalorder %s23, 0
    %p270 = por %p268, %p269
    %s271 = ssub.s32 %s17, %s24
    %p272 = scmp.eq.s32.totalorder %s271, 0
    %s274 = sadd.s32 %s273, 1
    %s275 = scalar_select %p272, %s273, %s274
    %p278 = pneg %p272
    %p279 = scmp.eq.s32.totalorder %s17, 1
    %p280 = por %p278, %p279
    %p281 = scmp.ne.s32.totalorder %s273, %s276
    %p282 = scmp.eq.s32.totalorder %s17, 0
    %p283 = por %p281, %p282
    %p284 = scmp.ne.s32.totalorder %s273, %s276
    %p285 = scmp.eq.s32.totalorder %s22, 1
    %p286 = por %p284, %p285
    %p287 = scmp.ne.s32.totalorder %s276, %s277
    %p288 = scmp.eq.s32.totalorder %s22, 0
    %p289 = por %p287, %p288
    %p290 = scmp.ne.s32.totalorder %s276, %s277
    %p291 = scmp.eq.s32.totalorder %s23, 1
    %p292 = por %p290, %p291
    %p294 = scmp.ne.s32.totalorder %s277, %s293
    %p295 = scmp.eq.s32.totalorder %s23, 0
    %p296 = por %p294, %p295
    %p297 = scmp.le.s32.totalorder 1, %s17
    %p298 = scmp.lt.s32.totalorder %s17, 3
    %p299 = pnand %p297, %p298
    %p300 = pneg %p299
    // Predicated region
    $region9: #{tpu_custom_call.1} parent=5 // pred_check
      _
    $region10: #{tpu_custom_call.1} parent=5 // pred_check_branch
      %302 = sbr.rel (%p299) target = $region12
    $region11: #{tpu_custom_call.1} parent=5 // pred_region
      %s303 = ssub.s32 %s17, 1
      // Predicated region
      $region13: #{tpu_custom_call.1} parent=11 // pred_check
        %p304 = pneg %p116
      $region14: #{tpu_custom_call.1} parent=11 // pred_check_branch
        %306 = sbr.rel (%p304) target = $region16
      $region15: #{tpu_custom_call.1} parent=11 // pred_region
        _
      $region16: #{tpu_custom_call.1} parent=11 // pred_fallthru
        _
      // Predicated region
      $region17: #{tpu_custom_call.1} parent=11 // pred_check
        %p307 = pneg %p137
      $region18: #{tpu_custom_call.1} parent=11 // pred_check_branch
        %309 = sbr.rel (%p307) target = $region20
      $region19: #{tpu_custom_call.1} parent=11 // pred_region
        _
      $region20: #{tpu_custom_call.1} parent=11 // pred_fallthru
        _
      // Predicated region
      $region21: #{tpu_custom_call.1} parent=11 // pred_check
        %p310 = pneg %p158
      $region22: #{tpu_custom_call.1} parent=11 // pred_check_branch
        %312 = sbr.rel (%p310) target = $region24
      $region23: #{tpu_custom_call.1} parent=11 // pred_region
        _
      $region24: #{tpu_custom_call.1} parent=11 // pred_fallthru
        _
      // Predicated region
      $region25: #{tpu_custom_call.1} parent=11 // pred_check
        %p313 = pneg %p179
      $region26: #{tpu_custom_call.1} parent=11 // pred_check_branch
        %315 = sbr.rel (%p313) target = $region28
      $region27: #{tpu_custom_call.1} parent=11 // pred_region
        _
      $region28: #{tpu_custom_call.1} parent=11 // pred_fallthru
        _
      // Predicated region
      $region29: #{tpu_custom_call.1} parent=11 // pred_check
        %p316 = pneg %p200
      $region30: #{tpu_custom_call.1} parent=11 // pred_check_branch
        %318 = sbr.rel (%p316) target = $region32
      $region31: #{tpu_custom_call.1} parent=11 // pred_region
        _
      $region32: #{tpu_custom_call.1} parent=11 // pred_fallthru
        _
      // Predicated region
      $region33: #{tpu_custom_call.1} parent=11 // pred_check
        %p319 = pneg %p221
      $region34: #{tpu_custom_call.1} parent=11 // pred_check_branch
        %321 = sbr.rel (%p319) target = $region36
      $region35: #{tpu_custom_call.1} parent=11 // pred_region
        _
      $region36: #{tpu_custom_call.1} parent=11 // pred_fallthru
        _
      // Predicated region
      $region37: #{tpu_custom_call.1} parent=11 // pred_check
        %p322 = pneg %p242
      $region38: #{tpu_custom_call.1} parent=11 // pred_check_branch
        %324 = sbr.rel (%p322) target = $region40
      $region39: #{tpu_custom_call.1} parent=11 // pred_region
        _
      $region40: #{tpu_custom_call.1} parent=11 // pred_fallthru
        _
      // Predicated region
      $region41: #{tpu_custom_call.1} parent=11 // pred_check
        %p325 = pneg %p263
      $region42: #{tpu_custom_call.1} parent=11 // pred_check_branch
        %327 = sbr.rel (%p325) target = $region44
      $region43: #{tpu_custom_call.1} parent=11 // pred_region
        _
      $region44: #{tpu_custom_call.1} parent=11 // pred_fallthru
        _
    $region12: #{tpu_custom_call.1} parent=5 // pred_fallthru
      _
    %p328 = scmp.lt.s32.totalorder %s17, 2
    // Predicated region
    $region45: #{tpu_custom_call.1} parent=5 // pred_check
      %p329 = pneg %p328
    $region46: #{tpu_custom_call.1} parent=5 // pred_check_branch
      %331 = sbr.rel (%p329) target = $region48
    $region47: #{tpu_custom_call.1} parent=5 // pred_region
      // Predicated region
      $region49: #{tpu_custom_call.1} parent=47 // pred_check
        %p332 = pneg %p37
      $region50: #{tpu_custom_call.1} parent=47 // pred_check_branch
        %334 = sbr.rel (%p332) target = $region52
      $region51: #{tpu_custom_call.1} parent=47 // pred_region
        %p335 = scmp.lt.s32.totalorder %s17, 1
        %s336 = scalar_select %p335, %s17, 1
        %s337 = smul.addr %s336, 32
        %s338 = smul.addr %s337, 8
        %s339 = scalar_lea.vmem %s0, %s338
      $region52: #{tpu_custom_call.1} parent=47 // pred_fallthru
        _
      // Predicated region
      $region53: #{tpu_custom_call.1} parent=47 // pred_check
        %p340 = pneg %p63
      $region54: #{tpu_custom_call.1} parent=47 // pred_check_branch
        %342 = sbr.rel (%p340) target = $region56
      $region55: #{tpu_custom_call.1} parent=47 // pred_region
        %p343 = scmp.lt.s32.totalorder %s17, 1
        %s344 = scalar_select %p343, %s17, 1
        %s345 = smul.addr %s344, 8
        %s346 = smul.addr %s345, 8
        %s347 = scalar_lea.vmem %s1, %s346
      $region56: #{tpu_custom_call.1} parent=47 // pred_fallthru
        _
      // Predicated region
      $region57: #{tpu_custom_call.1} parent=47 // pred_check
        %p348 = pneg %p89
      $region58: #{tpu_custom_call.1} parent=47 // pred_check_branch
        %350 = sbr.rel (%p348) target = $region60
      $region59: #{tpu_custom_call.1} parent=47 // pred_region
        %p351 = scmp.lt.s32.totalorder %s17, 1
        %s352 = scalar_select %p351, %s17, 1
        %s353 = smul.addr %s352, 2
        %s354 = smul.addr %s353, 8
        %s355 = scalar_lea.vmem %s2, %s354
      $region60: #{tpu_custom_call.1} parent=47 // pred_fallthru
        _
    $region48: #{tpu_custom_call.1} parent=5 // pred_fallthru
      _
    %p356 = scmp.le.s32.totalorder 1, %s17
    %p357 = scmp.lt.s32.totalorder %s17, 3
    %p358 = pnand %p356, %p357
    %p359 = pneg %p358
    // Predicated region
    $region61: #{tpu_custom_call.1} parent=5 // pred_check
      _
    $region62: #{tpu_custom_call.1} parent=5 // pred_check_branch
      %361 = sbr.rel (%p358) target = $region64
    $region63: #{tpu_custom_call.1} parent=5 // pred_region
      %s362 = ssub.s32 %s17, 1
      %p363 = scmp.lt.s32.totalorder %s22, 1
      %s364 = scalar_select %p363, %s22, 1
      %s365 = smul.addr %s364, 32
      %s366 = smul.addr %s365, 8
      %s367 = scalar_lea.vmem %s0, %s366
      %p368 = pneg %p43
      %p369 = pneg %p40
      %p370 = scmp.lt.s32.totalorder %s22, 1
      %s371 = scalar_select %p370, %s22, 1
      %s372 = smul.addr %s371, 8
      %s373 = smul.addr %s372, 8
      %s374 = scalar_lea.vmem %s1, %s373
      %p375 = pneg %p69
      %p376 = pneg %p66
      %p377 = scmp.lt.s32.totalorder %s22, 1
      %s378 = scalar_select %p377, %s22, 1
      %s379 = smul.addr %s378, 2
      %s380 = smul.addr %s379, 8
      %s381 = scalar_lea.vmem %s2, %s380
      %p382 = pneg %p95
      %p383 = pneg %p92
      %p384 = pneg %p116
      %p385 = pneg %p113
      %p386 = pneg %p137
      %p387 = pneg %p134
      %p388 = pneg %p158
      %p389 = pneg %p155
      %p390 = pneg %p179
      %p391 = pneg %p176
      %p392 = pneg %p200
      %p393 = pneg %p197
      %p394 = pneg %p221
      %p395 = pneg %p218
      %p396 = pneg %p242
      %p397 = pneg %p239
      %p398 = pneg %p263
      %p399 = pneg %p260
      %p400 = pneg %p289
      %p401 = pneg %p286
      %p402 = scmp.lt.s32.totalorder %s22, 1
      %s403 = scalar_select %p402, %s22, 1
      %s404 = smul.addr %s403, 8
      %s405 = smul.addr %s404, 8
      %s406 = scalar_lea.vmem %s11, %s405
      %p407 = scmp.lt.s32.totalorder %s22, 1
      %s408 = scalar_select %p407, %s22, 1
      %s409 = smul.addr %s408, 32
      %s410 = smul.addr %s409, 8
      %s411 = scalar_lea.vmem %s0, %s410
      %p412 = scmp.lt.s32.totalorder %s22, 1
      %s413 = scalar_select %p412, %s22, 1
      %s414 = smul.addr %s413, 8
      %s415 = smul.addr %s414, 8
      %s416 = scalar_lea.vmem %s1, %s415
      %p417 = scmp.lt.s32.totalorder %s22, 1
      %s418 = scalar_select %p417, %s22, 1
      %s419 = smul.addr %s418, 2
      %s420 = smul.addr %s419, 8
      %s421 = scalar_lea.vmem %s2, %s420
      %p422 = scmp.lt.s32.totalorder %s22, 1
      %s423 = scalar_select %p422, %s22, 1
      %s424 = smul.addr %s423, 8
      %s425 = smul.addr %s424, 8
      %s426 = scalar_lea.vmem %s11, %s425
      %v427 = vld [vmem:[%s411] sm:$0xff]
      %v428 = vld [vmem:[%s411 + $0x8] sm:$0xff]
      %v429 = vld [vmem:[%s411 + $0x10] sm:$0xff]
      %v430 = vld [vmem:[%s411 + $0x18] sm:$0xff]
      %v431 = vld [vmem:[%s411 + $0x20] sm:$0xff]
      %v432 = vld [vmem:[%s411 + $0x28] sm:$0xff]
      %v433 = vld [vmem:[%s411 + $0x30] sm:$0xff]
      %v434 = vld [vmem:[%s411 + $0x38] sm:$0xff]
      %v435 = vld [vmem:[%s411 + $0x40] sm:$0xff]
      %v436 = vld [vmem:[%s411 + $0x48] sm:$0xff]
      %v437 = vld [vmem:[%s411 + $0x50] sm:$0xff]
      %v438 = vld [vmem:[%s411 + $0x58] sm:$0xff]
      %v439 = vld [vmem:[%s411 + $0x60] sm:$0xff]
      %v440 = vld [vmem:[%s411 + $0x68] sm:$0xff]
      %v441 = vld [vmem:[%s411 + $0x70] sm:$0xff]
      %v442 = vld [vmem:[%s411 + $0x78] sm:$0xff]
      %v443 = vld [vmem:[%s411 + $0x80] sm:$0xff]
      %v444 = vld [vmem:[%s411 + $0x88] sm:$0xff]
      %v445 = vld [vmem:[%s411 + $0x90] sm:$0xff]
      %v446 = vld [vmem:[%s411 + $0x98] sm:$0xff]
      %v447 = vld [vmem:[%s411 + $0xa0] sm:$0xff]
      %v448 = vld [vmem:[%s411 + $0xa8] sm:$0xff]
      %v449 = vld [vmem:[%s411 + $0xb0] sm:$0xff]
      %v450 = vld [vmem:[%s411 + $0xb8] sm:$0xff]
      %v451 = vld [vmem:[%s411 + $0xc0] sm:$0xff]
      %v452 = vld [vmem:[%s411 + $0xc8] sm:$0xff]
      %v453 = vld [vmem:[%s411 + $0xd0] sm:$0xff]
      %v454 = vld [vmem:[%s411 + $0xd8] sm:$0xff]
      %v455 = vld [vmem:[%s411 + $0xe0] sm:$0xff]
      %v456 = vld [vmem:[%s411 + $0xe8] sm:$0xff]
      %v457 = vld [vmem:[%s411 + $0xf0] sm:$0xff]
      %v458 = vld [vmem:[%s411 + $0xf8] sm:$0xff]
      %v459 = vmul.f32 %v427, %v427
      %v460 = vmul.f32 %v428, %v428
      %v461 = vmul.f32 %v429, %v429
      %v462 = vmul.f32 %v430, %v430
      %v463 = vmul.f32 %v431, %v431
      %v464 = vmul.f32 %v432, %v432
      %v465 = vmul.f32 %v433, %v433
      %v466 = vmul.f32 %v434, %v434
      %v467 = vmul.f32 %v435, %v435
      %v468 = vmul.f32 %v436, %v436
      %v469 = vmul.f32 %v437, %v437
      %v470 = vmul.f32 %v438, %v438
      %v471 = vmul.f32 %v439, %v439
      %v472 = vmul.f32 %v440, %v440
      %v473 = vmul.f32 %v441, %v441
      %v474 = vmul.f32 %v442, %v442
      %v475 = vmul.f32 %v443, %v443
      %v476 = vmul.f32 %v444, %v444
      %v477 = vmul.f32 %v445, %v445
      %v478 = vmul.f32 %v446, %v446
      %v479 = vmul.f32 %v447, %v447
      %v480 = vmul.f32 %v448, %v448
      %v481 = vmul.f32 %v449, %v449
      %v482 = vmul.f32 %v450, %v450
      %v483 = vmul.f32 %v451, %v451
      %v484 = vmul.f32 %v452, %v452
      %v485 = vmul.f32 %v453, %v453
      %v486 = vmul.f32 %v454, %v454
      %v487 = vmul.f32 %v455, %v455
      %v488 = vmul.f32 %v456, %v456
      %v489 = vmul.f32 %v457, %v457
      %v490 = vmul.f32 %v458, %v458
      %vm491 = vcmask 31744
      %v492 = vsel %vm491, %v459, 0.0
      %493 = vadd.xlane.f32.xlu0 %v492
      %v494 = vpop.xlane.xlu0 %493
      %v495 = vsel %vm491, %v460, 0.0
      %496 = vadd.xlane.f32.xlu0 %v495
      %v497 = vpop.xlane.xlu0 %496
      %v498 = vsel %vm491, %v461, 0.0
      %499 = vadd.xlane.f32.xlu0 %v498
      %v500 = vpop.xlane.xlu0 %499
      %v501 = vsel %vm491, %v462, 0.0
      %502 = vadd.xlane.f32.xlu0 %v501
      %v503 = vpop.xlane.xlu0 %502
      %v504 = vsel %vm491, %v463, 0.0
      %505 = vadd.xlane.f32.xlu0 %v504
      %v506 = vpop.xlane.xlu0 %505
      %v507 = vsel %vm491, %v464, 0.0
      %508 = vadd.xlane.f32.xlu0 %v507
      %v509 = vpop.xlane.xlu0 %508
      %v510 = vsel %vm491, %v465, 0.0
      %511 = vadd.xlane.f32.xlu0 %v510
      %v512 = vpop.xlane.xlu0 %511
      %v513 = vsel %vm491, %v466, 0.0
      %514 = vadd.xlane.f32.xlu0 %v513
      %v515 = vpop.xlane.xlu0 %514
      %v516 = vsel %vm491, %v467, 0.0
      %517 = vadd.xlane.f32.xlu0 %v516
      %v518 = vpop.xlane.xlu0 %517
      %v519 = vsel %vm491, %v468, 0.0
      %520 = vadd.xlane.f32.xlu0 %v519
      %v521 = vpop.xlane.xlu0 %520
      %v522 = vsel %vm491, %v469, 0.0
      %523 = vadd.xlane.f32.xlu0 %v522
      %v524 = vpop.xlane.xlu0 %523
      %v525 = vsel %vm491, %v470, 0.0
      %526 = vadd.xlane.f32.xlu0 %v525
      %v527 = vpop.xlane.xlu0 %526
      %v528 = vsel %vm491, %v471, 0.0
      %529 = vadd.xlane.f32.xlu0 %v528
      %v530 = vpop.xlane.xlu0 %529
      %v531 = vsel %vm491, %v472, 0.0
      %532 = vadd.xlane.f32.xlu0 %v531
      %v533 = vpop.xlane.xlu0 %532
      %v534 = vsel %vm491, %v473, 0.0
      %535 = vadd.xlane.f32.xlu0 %v534
      %v536 = vpop.xlane.xlu0 %535
      %v537 = vsel %vm491, %v474, 0.0
      %538 = vadd.xlane.f32.xlu0 %v537
      %v539 = vpop.xlane.xlu0 %538
      %v540 = vsel %vm491, %v475, 0.0
      %541 = vadd.xlane.f32.xlu0 %v540
      %v542 = vpop.xlane.xlu0 %541
      %v543 = vsel %vm491, %v476, 0.0
      %544 = vadd.xlane.f32.xlu0 %v543
      %v545 = vpop.xlane.xlu0 %544
      %v546 = vsel %vm491, %v477, 0.0
      %547 = vadd.xlane.f32.xlu0 %v546
      %v548 = vpop.xlane.xlu0 %547
      %v549 = vsel %vm491, %v478, 0.0
      %550 = vadd.xlane.f32.xlu0 %v549
      %v551 = vpop.xlane.xlu0 %550
      %v552 = vsel %vm491, %v479, 0.0
      %553 = vadd.xlane.f32.xlu0 %v552
      %v554 = vpop.xlane.xlu0 %553
      %v555 = vsel %vm491, %v480, 0.0
      %556 = vadd.xlane.f32.xlu0 %v555
      %v557 = vpop.xlane.xlu0 %556
      %v558 = vsel %vm491, %v481, 0.0
      %559 = vadd.xlane.f32.xlu0 %v558
      %v560 = vpop.xlane.xlu0 %559
      %v561 = vsel %vm491, %v482, 0.0
      %562 = vadd.xlane.f32.xlu0 %v561
      %v563 = vpop.xlane.xlu0 %562
      %v564 = vsel %vm491, %v483, 0.0
      %565 = vadd.xlane.f32.xlu0 %v564
      %v566 = vpop.xlane.xlu0 %565
      %v567 = vsel %vm491, %v484, 0.0
      %568 = vadd.xlane.f32.xlu0 %v567
      %v569 = vpop.xlane.xlu0 %568
      %v570 = vsel %vm491, %v485, 0.0
      %571 = vadd.xlane.f32.xlu0 %v570
      %v572 = vpop.xlane.xlu0 %571
      %v573 = vsel %vm491, %v486, 0.0
      %574 = vadd.xlane.f32.xlu0 %v573
      %v575 = vpop.xlane.xlu0 %574
      %v576 = vsel %vm491, %v487, 0.0
      %577 = vadd.xlane.f32.xlu0 %v576
      %v578 = vpop.xlane.xlu0 %577
      %v579 = vsel %vm491, %v488, 0.0
      %580 = vadd.xlane.f32.xlu0 %v579
      %v581 = vpop.xlane.xlu0 %580
      %v582 = vsel %vm491, %v489, 0.0
      %583 = vadd.xlane.f32.xlu0 %v582
      %v584 = vpop.xlane.xlu0 %583
      %v585 = vsel %vm491, %v490, 0.0
      %586 = vadd.xlane.f32.xlu0 %v585
      %v587 = vpop.xlane.xlu0 %586
      %v588 = vrsqrt.pop %v494
      %v589 = vmul.f32 %v494, %v588
      %vm590 = vcmp.eq.f32.partialorder %v494, inf
      %v591 = vsel %vm590, %v494, %v589
      %vm592 = vcmp.eq.f32.partialorder %v494, 0.0
      %v593 = vand.u32 %v494, 2147483648
      %v594 = vsel %vm592, %v593, %v591
      %v595 = vrsqrt.pop %v497
      %v596 = vmul.f32 %v497, %v595
      %vm597 = vcmp.eq.f32.partialorder %v497, inf
      %v598 = vsel %vm597, %v497, %v596
      %vm599 = vcmp.eq.f32.partialorder %v497, 0.0
      %v600 = vand.u32 %v497, 2147483648
      %v601 = vsel %vm599, %v600, %v598
      %v602 = vrsqrt.pop %v500
      %v603 = vmul.f32 %v500, %v602
      %vm604 = vcmp.eq.f32.partialorder %v500, inf
      %v605 = vsel %vm604, %v500, %v603
      %vm606 = vcmp.eq.f32.partialorder %v500, 0.0
      %v607 = vand.u32 %v500, 2147483648
      %v608 = vsel %vm606, %v607, %v605
      %v609 = vrsqrt.pop %v503
      %v610 = vmul.f32 %v503, %v609
      %vm611 = vcmp.eq.f32.partialorder %v503, inf
      %v612 = vsel %vm611, %v503, %v610
      %vm613 = vcmp.eq.f32.partialorder %v503, 0.0
      %v614 = vand.u32 %v503, 2147483648
      %v615 = vsel %vm613, %v614, %v612
      %v616 = vrsqrt.pop %v506
      %v617 = vmul.f32 %v506, %v616
      %vm618 = vcmp.eq.f32.partialorder %v506, inf
      %v619 = vsel %vm618, %v506, %v617
      %vm620 = vcmp.eq.f32.partialorder %v506, 0.0
      %v621 = vand.u32 %v506, 2147483648
      %v622 = vsel %vm620, %v621, %v619
      %v623 = vrsqrt.pop %v509
      %v624 = vmul.f32 %v509, %v623
      %vm625 = vcmp.eq.f32.partialorder %v509, inf
      %v626 = vsel %vm625, %v509, %v624
      %vm627 = vcmp.eq.f32.partialorder %v509, 0.0
      %v628 = vand.u32 %v509, 2147483648
      %v629 = vsel %vm627, %v628, %v626
      %v630 = vrsqrt.pop %v512
      %v631 = vmul.f32 %v512, %v630
      %vm632 = vcmp.eq.f32.partialorder %v512, inf
      %v633 = vsel %vm632, %v512, %v631
      %vm634 = vcmp.eq.f32.partialorder %v512, 0.0
      %v635 = vand.u32 %v512, 2147483648
      %v636 = vsel %vm634, %v635, %v633
      %v637 = vrsqrt.pop %v515
      %v638 = vmul.f32 %v515, %v637
      %vm639 = vcmp.eq.f32.partialorder %v515, inf
      %v640 = vsel %vm639, %v515, %v638
      %vm641 = vcmp.eq.f32.partialorder %v515, 0.0
      %v642 = vand.u32 %v515, 2147483648
      %v643 = vsel %vm641, %v642, %v640
      %v644 = vrsqrt.pop %v518
      %v645 = vmul.f32 %v518, %v644
      %vm646 = vcmp.eq.f32.partialorder %v518, inf
      %v647 = vsel %vm646, %v518, %v645
      %vm648 = vcmp.eq.f32.partialorder %v518, 0.0
      %v649 = vand.u32 %v518, 2147483648
      %v650 = vsel %vm648, %v649, %v647
      %v651 = vrsqrt.pop %v521
      %v652 = vmul.f32 %v521, %v651
      %vm653 = vcmp.eq.f32.partialorder %v521, inf
      %v654 = vsel %vm653, %v521, %v652
      %vm655 = vcmp.eq.f32.partialorder %v521, 0.0
      %v656 = vand.u32 %v521, 2147483648
      %v657 = vsel %vm655, %v656, %v654
      %v658 = vrsqrt.pop %v524
      %v659 = vmul.f32 %v524, %v658
      %vm660 = vcmp.eq.f32.partialorder %v524, inf
      %v661 = vsel %vm660, %v524, %v659
      %vm662 = vcmp.eq.f32.partialorder %v524, 0.0
      %v663 = vand.u32 %v524, 2147483648
      %v664 = vsel %vm662, %v663, %v661
      %v665 = vrsqrt.pop %v527
      %v666 = vmul.f32 %v527, %v665
      %vm667 = vcmp.eq.f32.partialorder %v527, inf
      %v668 = vsel %vm667, %v527, %v666
      %vm669 = vcmp.eq.f32.partialorder %v527, 0.0
      %v670 = vand.u32 %v527, 2147483648
      %v671 = vsel %vm669, %v670, %v668
      %v672 = vrsqrt.pop %v530
      %v673 = vmul.f32 %v530, %v672
      %vm674 = vcmp.eq.f32.partialorder %v530, inf
      %v675 = vsel %vm674, %v530, %v673
      %vm676 = vcmp.eq.f32.partialorder %v530, 0.0
      %v677 = vand.u32 %v530, 2147483648
      %v678 = vsel %vm676, %v677, %v675
      %v679 = vrsqrt.pop %v533
      %v680 = vmul.f32 %v533, %v679
      %vm681 = vcmp.eq.f32.partialorder %v533, inf
      %v682 = vsel %vm681, %v533, %v680
      %vm683 = vcmp.eq.f32.partialorder %v533, 0.0
      %v684 = vand.u32 %v533, 2147483648
      %v685 = vsel %vm683, %v684, %v682
      %v686 = vrsqrt.pop %v536
      %v687 = vmul.f32 %v536, %v686
      %vm688 = vcmp.eq.f32.partialorder %v536, inf
      %v689 = vsel %vm688, %v536, %v687
      %vm690 = vcmp.eq.f32.partialorder %v536, 0.0
      %v691 = vand.u32 %v536, 2147483648
      %v692 = vsel %vm690, %v691, %v689
      %v693 = vrsqrt.pop %v539
      %v694 = vmul.f32 %v539, %v693
      %vm695 = vcmp.eq.f32.partialorder %v539, inf
      %v696 = vsel %vm695, %v539, %v694
      %vm697 = vcmp.eq.f32.partialorder %v539, 0.0
      %v698 = vand.u32 %v539, 2147483648
      %v699 = vsel %vm697, %v698, %v696
      %v700 = vrsqrt.pop %v542
      %v701 = vmul.f32 %v542, %v700
      %vm702 = vcmp.eq.f32.partialorder %v542, inf
      %v703 = vsel %vm702, %v542, %v701
      %vm704 = vcmp.eq.f32.partialorder %v542, 0.0
      %v705 = vand.u32 %v542, 2147483648
      %v706 = vsel %vm704, %v705, %v703
      %v707 = vrsqrt.pop %v545
      %v708 = vmul.f32 %v545, %v707
      %vm709 = vcmp.eq.f32.partialorder %v545, inf
      %v710 = vsel %vm709, %v545, %v708
      %vm711 = vcmp.eq.f32.partialorder %v545, 0.0
      %v712 = vand.u32 %v545, 2147483648
      %v713 = vsel %vm711, %v712, %v710
      %v714 = vrsqrt.pop %v548
      %v715 = vmul.f32 %v548, %v714
      %vm716 = vcmp.eq.f32.partialorder %v548, inf
      %v717 = vsel %vm716, %v548, %v715
      %vm718 = vcmp.eq.f32.partialorder %v548, 0.0
      %v719 = vand.u32 %v548, 2147483648
      %v720 = vsel %vm718, %v719, %v717
      %v721 = vrsqrt.pop %v551
      %v722 = vmul.f32 %v551, %v721
      %vm723 = vcmp.eq.f32.partialorder %v551, inf
      %v724 = vsel %vm723, %v551, %v722
      %vm725 = vcmp.eq.f32.partialorder %v551, 0.0
      %v726 = vand.u32 %v551, 2147483648
      %v727 = vsel %vm725, %v726, %v724
      %v728 = vrsqrt.pop %v554
      %v729 = vmul.f32 %v554, %v728
      %vm730 = vcmp.eq.f32.partialorder %v554, inf
      %v731 = vsel %vm730, %v554, %v729
      %vm732 = vcmp.eq.f32.partialorder %v554, 0.0
      %v733 = vand.u32 %v554, 2147483648
      %v734 = vsel %vm732, %v733, %v731
      %v735 = vrsqrt.pop %v557
      %v736 = vmul.f32 %v557, %v735
      %vm737 = vcmp.eq.f32.partialorder %v557, inf
      %v738 = vsel %vm737, %v557, %v736
      %vm739 = vcmp.eq.f32.partialorder %v557, 0.0
      %v740 = vand.u32 %v557, 2147483648
      %v741 = vsel %vm739, %v740, %v738
      %v742 = vrsqrt.pop %v560
      %v743 = vmul.f32 %v560, %v742
      %vm744 = vcmp.eq.f32.partialorder %v560, inf
      %v745 = vsel %vm744, %v560, %v743
      %vm746 = vcmp.eq.f32.partialorder %v560, 0.0
      %v747 = vand.u32 %v560, 2147483648
      %v748 = vsel %vm746, %v747, %v745
      %v749 = vrsqrt.pop %v563
      %v750 = vmul.f32 %v563, %v749
      %vm751 = vcmp.eq.f32.partialorder %v563, inf
      %v752 = vsel %vm751, %v563, %v750
      %vm753 = vcmp.eq.f32.partialorder %v563, 0.0
      %v754 = vand.u32 %v563, 2147483648
      %v755 = vsel %vm753, %v754, %v752
      %v756 = vrsqrt.pop %v566
      %v757 = vmul.f32 %v566, %v756
      %vm758 = vcmp.eq.f32.partialorder %v566, inf
      %v759 = vsel %vm758, %v566, %v757
      %vm760 = vcmp.eq.f32.partialorder %v566, 0.0
      %v761 = vand.u32 %v566, 2147483648
      %v762 = vsel %vm760, %v761, %v759
      %v763 = vrsqrt.pop %v569
      %v764 = vmul.f32 %v569, %v763
      %vm765 = vcmp.eq.f32.partialorder %v569, inf
      %v766 = vsel %vm765, %v569, %v764
      %vm767 = vcmp.eq.f32.partialorder %v569, 0.0
      %v768 = vand.u32 %v569, 2147483648
      %v769 = vsel %vm767, %v768, %v766
      %v770 = vrsqrt.pop %v572
      %v771 = vmul.f32 %v572, %v770
      %vm772 = vcmp.eq.f32.partialorder %v572, inf
      %v773 = vsel %vm772, %v572, %v771
      %vm774 = vcmp.eq.f32.partialorder %v572, 0.0
      %v775 = vand.u32 %v572, 2147483648
      %v776 = vsel %vm774, %v775, %v773
      %v777 = vrsqrt.pop %v575
      %v778 = vmul.f32 %v575, %v777
      %vm779 = vcmp.eq.f32.partialorder %v575, inf
      %v780 = vsel %vm779, %v575, %v778
      %vm781 = vcmp.eq.f32.partialorder %v575, 0.0
      %v782 = vand.u32 %v575, 2147483648
      %v783 = vsel %vm781, %v782, %v780
      %v784 = vrsqrt.pop %v578
      %v785 = vmul.f32 %v578, %v784
      %vm786 = vcmp.eq.f32.partialorder %v578, inf
      %v787 = vsel %vm786, %v578, %v785
      %vm788 = vcmp.eq.f32.partialorder %v578, 0.0
      %v789 = vand.u32 %v578, 2147483648
      %v790 = vsel %vm788, %v789, %v787
      %v791 = vrsqrt.pop %v581
      %v792 = vmul.f32 %v581, %v791
      %vm793 = vcmp.eq.f32.partialorder %v581, inf
      %v794 = vsel %vm793, %v581, %v792
      %vm795 = vcmp.eq.f32.partialorder %v581, 0.0
      %v796 = vand.u32 %v581, 2147483648
      %v797 = vsel %vm795, %v796, %v794
      %v798 = vrsqrt.pop %v584
      %v799 = vmul.f32 %v584, %v798
      %vm800 = vcmp.eq.f32.partialorder %v584, inf
      %v801 = vsel %vm800, %v584, %v799
      %vm802 = vcmp.eq.f32.partialorder %v584, 0.0
      %v803 = vand.u32 %v584, 2147483648
      %v804 = vsel %vm802, %v803, %v801
      %v805 = vrsqrt.pop %v587
      %v806 = vmul.f32 %v587, %v805
      %vm807 = vcmp.eq.f32.partialorder %v587, inf
      %v808 = vsel %vm807, %v587, %v806
      %vm809 = vcmp.eq.f32.partialorder %v587, 0.0
      %v810 = vand.u32 %v587, 2147483648
      %v811 = vsel %vm809, %v810, %v808
      %v812 = vadd.f32 %v594, 1e-10
      %v813 = vadd.f32 %v601, 1e-10
      %v814 = vadd.f32 %v608, 1e-10
      %v815 = vadd.f32 %v615, 1e-10
      %v816 = vadd.f32 %v622, 1e-10
      %v817 = vadd.f32 %v629, 1e-10
      %v818 = vadd.f32 %v636, 1e-10
      %v819 = vadd.f32 %v643, 1e-10
      %v820 = vadd.f32 %v650, 1e-10
      %v821 = vadd.f32 %v657, 1e-10
      %v822 = vadd.f32 %v664, 1e-10
      %v823 = vadd.f32 %v671, 1e-10
      %v824 = vadd.f32 %v678, 1e-10
      %v825 = vadd.f32 %v685, 1e-10
      %v826 = vadd.f32 %v692, 1e-10
      %v827 = vadd.f32 %v699, 1e-10
      %v828 = vadd.f32 %v706, 1e-10
      %v829 = vadd.f32 %v713, 1e-10
      %v830 = vadd.f32 %v720, 1e-10
      %v831 = vadd.f32 %v727, 1e-10
      %v832 = vadd.f32 %v734, 1e-10
      %v833 = vadd.f32 %v741, 1e-10
      %v834 = vadd.f32 %v748, 1e-10
      %v835 = vadd.f32 %v755, 1e-10
      %v836 = vadd.f32 %v762, 1e-10
      %v837 = vadd.f32 %v769, 1e-10
      %v838 = vadd.f32 %v776, 1e-10
      %v839 = vadd.f32 %v783, 1e-10
      %v840 = vadd.f32 %v790, 1e-10
      %v841 = vadd.f32 %v797, 1e-10
      %v842 = vadd.f32 %v804, 1e-10
      %v843 = vadd.f32 %v811, 1e-10
      %v844 = vrcp.pop %v812
      %v845 = vmul.f32 1.0, %v844
      %v846 = vrcp.pop %v813
      %v847 = vmul.f32 1.0, %v846
      %v848 = vrcp.pop %v814
      %v849 = vmul.f32 1.0, %v848
      %v850 = vrcp.pop %v815
      %v851 = vmul.f32 1.0, %v850
      %v852 = vrcp.pop %v816
      %v853 = vmul.f32 1.0, %v852
      %v854 = vrcp.pop %v817
      %v855 = vmul.f32 1.0, %v854
      %v856 = vrcp.pop %v818
      %v857 = vmul.f32 1.0, %v856
      %v858 = vrcp.pop %v819
      %v859 = vmul.f32 1.0, %v858
      %v860 = vrcp.pop %v820
      %v861 = vmul.f32 1.0, %v860
      %v862 = vrcp.pop %v821
      %v863 = vmul.f32 1.0, %v862
      %v864 = vrcp.pop %v822
      %v865 = vmul.f32 1.0, %v864
      %v866 = vrcp.pop %v823
      %v867 = vmul.f32 1.0, %v866
      %v868 = vrcp.pop %v824
      %v869 = vmul.f32 1.0, %v868
      %v870 = vrcp.pop %v825
      %v871 = vmul.f32 1.0, %v870
      %v872 = vrcp.pop %v826
      %v873 = vmul.f32 1.0, %v872
      %v874 = vrcp.pop %v827
      %v875 = vmul.f32 1.0, %v874
      %v876 = vrcp.pop %v828
      %v877 = vmul.f32 1.0, %v876
      %v878 = vrcp.pop %v829
      %v879 = vmul.f32 1.0, %v878
      %v880 = vrcp.pop %v830
      %v881 = vmul.f32 1.0, %v880
      %v882 = vrcp.pop %v831
      %v883 = vmul.f32 1.0, %v882
      %v884 = vrcp.pop %v832
      %v885 = vmul.f32 1.0, %v884
      %v886 = vrcp.pop %v833
      %v887 = vmul.f32 1.0, %v886
      %v888 = vrcp.pop %v834
      %v889 = vmul.f32 1.0, %v888
      %v890 = vrcp.pop %v835
      %v891 = vmul.f32 1.0, %v890
      %v892 = vrcp.pop %v836
      %v893 = vmul.f32 1.0, %v892
      %v894 = vrcp.pop %v837
      %v895 = vmul.f32 1.0, %v894
      %v896 = vrcp.pop %v838
      %v897 = vmul.f32 1.0, %v896
      %v898 = vrcp.pop %v839
      %v899 = vmul.f32 1.0, %v898
      %v900 = vrcp.pop %v840
      %v901 = vmul.f32 1.0, %v900
      %v902 = vrcp.pop %v841
      %v903 = vmul.f32 1.0, %v902
      %v904 = vrcp.pop %v842
      %v905 = vmul.f32 1.0, %v904
      %v906 = vrcp.pop %v843
      %v907 = vmul.f32 1.0, %v906
      %v908 = vmul.f32 %v427, %v845
      %v909 = vmul.f32 %v428, %v847
      %v910 = vmul.f32 %v429, %v849
      %v911 = vmul.f32 %v430, %v851
      %v912 = vmul.f32 %v431, %v853
      %v913 = vmul.f32 %v432, %v855
      %v914 = vmul.f32 %v433, %v857
      %v915 = vmul.f32 %v434, %v859
      %v916 = vmul.f32 %v435, %v861
      %v917 = vmul.f32 %v436, %v863
      %v918 = vmul.f32 %v437, %v865
      %v919 = vmul.f32 %v438, %v867
      %v920 = vmul.f32 %v439, %v869
      %v921 = vmul.f32 %v440, %v871
      %v922 = vmul.f32 %v441, %v873
      %v923 = vmul.f32 %v442, %v875
      %v924 = vmul.f32 %v443, %v877
      %v925 = vmul.f32 %v444, %v879
      %v926 = vmul.f32 %v445, %v881
      %v927 = vmul.f32 %v446, %v883
      %v928 = vmul.f32 %v447, %v885
      %v929 = vmul.f32 %v448, %v887
      %v930 = vmul.f32 %v449, %v889
      %v931 = vmul.f32 %v450, %v891
      %v932 = vmul.f32 %v451, %v893
      %v933 = vmul.f32 %v452, %v895
      %v934 = vmul.f32 %v453, %v897
      %v935 = vmul.f32 %v454, %v899
      %v936 = vmul.f32 %v455, %v901
      %v937 = vmul.f32 %v456, %v903
      %v938 = vmul.f32 %v457, %v905
      %v939 = vmul.f32 %v458, %v907
      %940 = vst.msk [vmem:[#allocation2] sm:$0xff] %vm491, 0.0
      %941 = vst.msk [vmem:[#allocation2 + $0x8] sm:$0xff] %vm491, 0.0
      %vm942 = vcmask 25600
      %943 = vst.msk [vmem:[#allocation2 + $0x10] sm:$0x3] %vm942, 0.0
      %s944 = scalar_lea.vmem [#allocation2], 408
      %945 = vst.msk [vmem:[%s944] sm:$0xff] %vm491, 0.0
      %946 = vst.msk [vmem:[%s944 + $0x8] sm:$0xff] %vm491, 0.0
      %947 = vst.msk [vmem:[%s944 + $0x10] sm:$0x3] %vm942, 0.0
      %s948 = scalar_lea.vmem [#allocation2], 24
      %vm949 = vcmask 24576
      %950 = vst.msk [vmem:[%s948] sm:$0x1] %vm949, 0.0
      %951 = vst.msk [vmem:[%s948 + $0x18] sm:$0x1] %vm949, 0.0
      %952 = vst.msk [vmem:[%s948 + $0x30] sm:$0x1] %vm949, 0.0
      %953 = vst.msk [vmem:[%s948 + $0x48] sm:$0x1] %vm949, 0.0
      %954 = vst.msk [vmem:[%s948 + $0x60] sm:$0x1] %vm949, 0.0
      %955 = vst.msk [vmem:[%s948 + $0x78] sm:$0x1] %vm949, 0.0
      %956 = vst.msk [vmem:[%s948 + $0x90] sm:$0x1] %vm949, 0.0
      %957 = vst.msk [vmem:[%s948 + $0xa8] sm:$0x1] %vm949, 0.0
      %958 = vst.msk [vmem:[%s948 + $0xc0] sm:$0x1] %vm949, 0.0
      %959 = vst.msk [vmem:[%s948 + $0xd8] sm:$0x1] %vm949, 0.0
      %960 = vst.msk [vmem:[%s948 + $0xf0] sm:$0x1] %vm949, 0.0
      %961 = vst.msk [vmem:[%s948 + $0x108] sm:$0x1] %vm949, 0.0
      %962 = vst.msk [vmem:[%s948 + $0x120] sm:$0x1] %vm949, 0.0
      %963 = vst.msk [vmem:[%s948 + $0x138] sm:$0x1] %vm949, 0.0
      %964 = vst.msk [vmem:[%s948 + $0x150] sm:$0x1] %vm949, 0.0
      %965 = vst.msk [vmem:[%s948 + $0x168] sm:$0x1] %vm949, 0.0
      %966 = vst.msk [vmem:[%s948 + $0x11] sm:$0x1] %vm949, 0.0
      %967 = vst.msk [vmem:[%s948 + $0x29] sm:$0x1] %vm949, 0.0
      %968 = vst.msk [vmem:[%s948 + $0x41] sm:$0x1] %vm949, 0.0
      %969 = vst.msk [vmem:[%s948 + $0x59] sm:$0x1] %vm949, 0.0
      %970 = vst.msk [vmem:[%s948 + $0x71] sm:$0x1] %vm949, 0.0
      %971 = vst.msk [vmem:[%s948 + $0x89] sm:$0x1] %vm949, 0.0
      %972 = vst.msk [vmem:[%s948 + $0xa1] sm:$0x1] %vm949, 0.0
      %973 = vst.msk [vmem:[%s948 + $0xb9] sm:$0x1] %vm949, 0.0
      %974 = vst.msk [vmem:[%s948 + $0xd1] sm:$0x1] %vm949, 0.0
      %975 = vst.msk [vmem:[%s948 + $0xe9] sm:$0x1] %vm949, 0.0
      %976 = vst.msk [vmem:[%s948 + $0x101] sm:$0x1] %vm949, 0.0
      %977 = vst.msk [vmem:[%s948 + $0x119] sm:$0x1] %vm949, 0.0
      %978 = vst.msk [vmem:[%s948 + $0x131] sm:$0x1] %vm949, 0.0
      %979 = vst.msk [vmem:[%s948 + $0x149] sm:$0x1] %vm949, 0.0
      %980 = vst.msk [vmem:[%s948 + $0x161] sm:$0x1] %vm949, 0.0
      %981 = vst.msk [vmem:[%s948 + $0x179] sm:$0x1] %vm949, 0.0
      %982 = vst.msk [vmem:[%s948 + $0x1] sm:$0xff] %vm491, %v908
      %983 = vst.msk [vmem:[%s948 + $0x9] sm:$0xff] %vm491, %v909
      %984 = vst.msk [vmem:[%s948 + $0x19] sm:$0xff] %vm491, %v910
      %985 = vst.msk [vmem:[%s948 + $0x21] sm:$0xff] %vm491, %v911
      %986 = vst.msk [vmem:[%s948 + $0x31] sm:$0xff] %vm491, %v912
      %987 = vst.msk [vmem:[%s948 + $0x39] sm:$0xff] %vm491, %v913
      %988 = vst.msk [vmem:[%s948 + $0x49] sm:$0xff] %vm491, %v914
      %989 = vst.msk [vmem:[%s948 + $0x51] sm:$0xff] %vm491, %v915
      %990 = vst.msk [vmem:[%s948 + $0x61] sm:$0xff] %vm491, %v916
      %991 = vst.msk [vmem:[%s948 + $0x69] sm:$0xff] %vm491, %v917
      %992 = vst.msk [vmem:[%s948 + $0x79] sm:$0xff] %vm491, %v918
      %993 = vst.msk [vmem:[%s948 + $0x81] sm:$0xff] %vm491, %v919
      %994 = vst.msk [vmem:[%s948 + $0x91] sm:$0xff] %vm491, %v920
      %995 = vst.msk [vmem:[%s948 + $0x99] sm:$0xff] %vm491, %v921
      %996 = vst.msk [vmem:[%s948 + $0xa9] sm:$0xff] %vm491, %v922
      %997 = vst.msk [vmem:[%s948 + $0xb1] sm:$0xff] %vm491, %v923
      %998 = vst.msk [vmem:[%s948 + $0xc1] sm:$0xff] %vm491, %v924
      %999 = vst.msk [vmem:[%s948 + $0xc9] sm:$0xff] %vm491, %v925
      %1000 = vst.msk [vmem:[%s948 + $0xd9] sm:$0xff] %vm491, %v926
      %1001 = vst.msk [vmem:[%s948 + $0xe1] sm:$0xff] %vm491, %v927
      %1002 = vst.msk [vmem:[%s948 + $0xf1] sm:$0xff] %vm491, %v928
      %1003 = vst.msk [vmem:[%s948 + $0xf9] sm:$0xff] %vm491, %v929
      %1004 = vst.msk [vmem:[%s948 + $0x109] sm:$0xff] %vm491, %v930
      %1005 = vst.msk [vmem:[%s948 + $0x111] sm:$0xff] %vm491, %v931
      %1006 = vst.msk [vmem:[%s948 + $0x121] sm:$0xff] %vm491, %v932
      %1007 = vst.msk [vmem:[%s948 + $0x129] sm:$0xff] %vm491, %v933
      %1008 = vst.msk [vmem:[%s948 + $0x139] sm:$0xff] %vm491, %v934
      %1009 = vst.msk [vmem:[%s948 + $0x141] sm:$0xff] %vm491, %v935
      %1010 = vst.msk [vmem:[%s948 + $0x151] sm:$0xff] %vm491, %v936
      %1011 = vst.msk [vmem:[%s948 + $0x159] sm:$0xff] %vm491, %v937
      %1012 = vst.msk [vmem:[%s948 + $0x169] sm:$0xff] %vm491, %v938
      %1013 = vst.msk [vmem:[%s948 + $0x171] sm:$0xff] %vm491, %v939
      %v1014 = vld [vmem:[%s8] sm:$0xf]
      %1016 = vset.pattern.permute.xlu0 0
      %1017 = vperm.xlu0 %1016, %v1014
      %v1018 = vpop.permute.xlu0 %1017
      %v1020 = vadd.f32 %v1018, 0.0
      %v1021 = vld [vmem:[#allocation2] sm:$0xff]
      %v1022 = vld [vmem:[#allocation2 + $0x8] sm:$0xff]
      %v1023 = vld [vmem:[#allocation2 + $0x18] sm:$0xff]
      %v1024 = vld [vmem:[#allocation2 + $0x20] sm:$0xff]
      %v1025 = vld [vmem:[#allocation2 + $0x30] sm:$0xff]
      %v1026 = vld [vmem:[#allocation2 + $0x38] sm:$0xff]
      %v1027 = vld [vmem:[#allocation2 + $0x48] sm:$0xff]
      %v1028 = vld [vmem:[#allocation2 + $0x50] sm:$0xff]
      %v1029 = vld [vmem:[#allocation2 + $0x60] sm:$0xff]
      %v1030 = vld [vmem:[#allocation2 + $0x68] sm:$0xff]
      %v1031 = vld [vmem:[#allocation2 + $0x78] sm:$0xff]
      %v1032 = vld [vmem:[#allocation2 + $0x80] sm:$0xff]
      %v1033 = vld [vmem:[#allocation2 + $0x90] sm:$0xff]
      %v1034 = vld [vmem:[#allocation2 + $0x98] sm:$0xff]
      %v1035 = vld [vmem:[#allocation2 + $0xa8] sm:$0xff]
      %v1036 = vld [vmem:[#allocation2 + $0xb0] sm:$0xff]
      %v1037 = vld [vmem:[#allocation2 + $0xc0] sm:$0xff]
      %v1038 = vld [vmem:[#allocation2 + $0xc8] sm:$0xff]
      %v1039 = vld [vmem:[#allocation2 + $0xd8] sm:$0xff]
      %v1040 = vld [vmem:[#allocation2 + $0xe0] sm:$0xff]
      %v1041 = vld [vmem:[#allocation2 + $0xf0] sm:$0xff]
      %v1042 = vld [vmem:[#allocation2 + $0xf8] sm:$0xff]
      %v1043 = vld [vmem:[#allocation2 + $0x108] sm:$0xff]
      %v1044 = vld [vmem:[#allocation2 + $0x110] sm:$0xff]
      %v1045 = vld [vmem:[#allocation2 + $0x120] sm:$0xff]
      %v1046 = vld [vmem:[#allocation2 + $0x128] sm:$0xff]
      %v1047 = vld [vmem:[#allocation2 + $0x138] sm:$0xff]
      %v1048 = vld [vmem:[#allocation2 + $0x140] sm:$0xff]
      %v1049 = vld [vmem:[#allocation2 + $0x150] sm:$0xff]
      %v1050 = vld [vmem:[#allocation2 + $0x158] sm:$0xff]
      %v1051 = vld [vmem:[#allocation2 + $0x168] sm:$0xff]
      %v1052 = vld [vmem:[#allocation2 + $0x170] sm:$0xff]
      %v1053 = vld [vmem:[%s5] sm:$0xf]
      %v1055 = vsel %vm491, %v1053, 0
      %v1058 = vsel %vm491, %v1021, 0
      %v1061 = vsel %vm491, %v1022, 0
      %v1064 = vsel %vm491, %v1023, 0
      %v1067 = vsel %vm491, %v1024, 0
      %v1070 = vsel %vm491, %v1025, 0
      %v1073 = vsel %vm491, %v1026, 0
      %v1076 = vsel %vm491, %v1027, 0
      %v1079 = vsel %vm491, %v1028, 0
      %v1082 = vsel %vm491, %v1029, 0
      %v1085 = vsel %vm491, %v1030, 0
      %v1088 = vsel %vm491, %v1031, 0
      %v1091 = vsel %vm491, %v1032, 0
      %v1094 = vsel %vm491, %v1033, 0
      %v1097 = vsel %vm491, %v1034, 0
      %v1100 = vsel %vm491, %v1035, 0
      %v1103 = vsel %vm491, %v1036, 0
      %v1106 = vsel %vm491, %v1037, 0
      %v1109 = vsel %vm491, %v1038, 0
      %v1112 = vsel %vm491, %v1039, 0
      %v1115 = vsel %vm491, %v1040, 0
      %v1118 = vsel %vm491, %v1041, 0
      %v1121 = vsel %vm491, %v1042, 0
      %v1124 = vsel %vm491, %v1043, 0
      %v1127 = vsel %vm491, %v1044, 0
      %v1130 = vsel %vm491, %v1045, 0
      %v1133 = vsel %vm491, %v1046, 0
      %v1136 = vsel %vm491, %v1047, 0
      %v1139 = vsel %vm491, %v1048, 0
      %v1142 = vsel %vm491, %v1049, 0
      %v1145 = vsel %vm491, %v1050, 0
      %v1148 = vsel %vm491, %v1051, 0
      %v1151 = vsel %vm491, %v1052, 0
      %1153 = vmatprep.subr.mxu0 0.0
      %1154 = vmatpush1.xpose.msra.mxu0 %v1058
      %1155 = vmatprep.subr.mxu0 0.0
      %1156 = vmatpush1.xpose.msra.mxu0 %v1061
      %1157 = vmatprep.subr.mxu0 0.0
      %1158 = vmatpush1.xpose.msra.mxu0 %v1064
      %1159 = vmatprep.subr.mxu0 0.0
      %1160 = vmatpush1.xpose.msra.mxu0 %v1067
      %1161 = vmatprep.subr.mxu0 0.0
      %1162 = vmatpush1.xpose.msra.mxu0 %v1070
      %1163 = vmatprep.subr.mxu0 0.0
      %1164 = vmatpush1.xpose.msra.mxu0 %v1073
      %1165 = vmatprep.subr.mxu0 0.0
      %1166 = vmatpush1.xpose.msra.mxu0 %v1076
      %1167 = vmatprep.subr.mxu0 0.0
      %1168 = vmatpush1.xpose.msra.mxu0 %v1079
      %1169 = vmatprep.subr.mxu0 0.0
      %1170 = vmatpush1.xpose.msra.mxu0 %v1082
      %1171 = vmatprep.subr.mxu0 0.0
      %1172 = vmatpush1.xpose.msra.mxu0 %v1085
      %1173 = vmatprep.subr.mxu0 0.0
      %1174 = vmatpush1.xpose.msra.mxu0 %v1088
      %1175 = vmatprep.subr.mxu0 0.0
      %1176 = vmatpush1.xpose.msra.mxu0 %v1091
      %1177 = vmatprep.subr.mxu0 0.0
      %1178 = vmatpush1.xpose.msra.mxu0 %v1094
      %1179 = vmatprep.subr.mxu0 0.0
      %1180 = vmatpush1.xpose.msra.mxu0 %v1097
      %1181 = vmatprep.subr.mxu0 0.0
      %1182 = vmatpush1.xpose.msra.mxu0 %v1100
      %1183 = vmatprep.subr.mxu0 0.0
      %1184 = vmatpush1.xpose.msra.mxu0 %v1103
      %1185 = vmatprep.subr.mxu0 0.0
      %1186 = vmatpush1.xpose.msra.mxu0 %v1106
      %1187 = vmatprep.subr.mxu0 0.0
      %1188 = vmatpush1.xpose.msra.mxu0 %v1109
      %1189 = vmatprep.subr.mxu0 0.0
      %1190 = vmatpush1.xpose.msra.mxu0 %v1112
      %1191 = vmatprep.subr.mxu0 0.0
      %1192 = vmatpush1.xpose.msra.mxu0 %v1115
      %1193 = vmatprep.subr.mxu0 0.0
      %1194 = vmatpush1.xpose.msra.mxu0 %v1118
      %1195 = vmatprep.subr.mxu0 0.0
      %1196 = vmatpush1.xpose.msra.mxu0 %v1121
      %1197 = vmatprep.subr.mxu0 0.0
      %1198 = vmatpush1.xpose.msra.mxu0 %v1124
      %1199 = vmatprep.subr.mxu0 0.0
      %1200 = vmatpush1.xpose.msra.mxu0 %v1127
      %1201 = vmatprep.subr.mxu0 0.0
      %1202 = vmatpush1.xpose.msra.mxu0 %v1130
      %1203 = vmatprep.subr.mxu0 0.0
      %1204 = vmatpush1.xpose.msra.mxu0 %v1133
      %1205 = vmatprep.subr.mxu0 0.0
      %1206 = vmatpush1.xpose.msra.mxu0 %v1136
      %1207 = vmatprep.subr.mxu0 0.0
      %1208 = vmatpush1.xpose.msra.mxu0 %v1139
      %1209 = vmatprep.subr.mxu0 0.0
      %1210 = vmatpush1.xpose.msra.mxu0 %v1142
      %1211 = vmatprep.subr.mxu0 0.0
      %1212 = vmatpush1.xpose.msra.mxu0 %v1145
      %1213 = vmatprep.subr.mxu0 0.0
      %1214 = vmatpush1.xpose.msra.mxu0 %v1148
      %1215 = vmatprep.subr.mxu0 0.0
      %1216 = vmatpush1.xpose.msra.mxu0 %v1151
      %1217 = vmatprep.mubr.f32.mxu0 0.0
      %1218 = vmatmul.mubr.f32.gmra.mrb[0].mxu0 %v1055
      %v1219 = vpop.f32.mrb[0].mxu0
      %v1220 = vadd.f32 0.0, %v1219
      %v1221 = vpop.f32.mrb[0].mxu0
      %v1222 = vadd.f32 0.0, %v1221
      %1223 = vdwg.mxu0
      %v1224 = vadd.f32 %v1020, %v1220
      %v1225 = vadd.f32 %v1020, %v1222
      %v1226 = vld [vmem:[#allocation2 + $0x1] sm:$0xff]
      %v1227 = vld [vmem:[#allocation2 + $0x9] sm:$0xff]
      %v1228 = vld [vmem:[#allocation2 + $0x19] sm:$0xff]
      %v1229 = vld [vmem:[#allocation2 + $0x21] sm:$0xff]
      %v1230 = vld [vmem:[#allocation2 + $0x31] sm:$0xff]
      %v1231 = vld [vmem:[#allocation2 + $0x39] sm:$0xff]
      %v1232 = vld [vmem:[#allocation2 + $0x49] sm:$0xff]
      %v1233 = vld [vmem:[#allocation2 + $0x51] sm:$0xff]
      %v1234 = vld [vmem:[#allocation2 + $0x61] sm:$0xff]
      %v1235 = vld [vmem:[#allocation2 + $0x69] sm:$0xff]
      %v1236 = vld [vmem:[#allocation2 + $0x79] sm:$0xff]
      %v1237 = vld [vmem:[#allocation2 + $0x81] sm:$0xff]
      %v1238 = vld [vmem:[#allocation2 + $0x91] sm:$0xff]
      %v1239 = vld [vmem:[#allocation2 + $0x99] sm:$0xff]
      %v1240 = vld [vmem:[#allocation2 + $0xa9] sm:$0xff]
      %v1241 = vld [vmem:[#allocation2 + $0xb1] sm:$0xff]
      %v1242 = vld [vmem:[#allocation2 + $0xc1] sm:$0xff]
      %v1243 = vld [vmem:[#allocation2 + $0xc9] sm:$0xff]
      %v1244 = vld [vmem:[#allocation2 + $0xd9] sm:$0xff]
      %v1245 = vld [vmem:[#allocation2 + $0xe1] sm:$0xff]
      %v1246 = vld [vmem:[#allocation2 + $0xf1] sm:$0xff]
      %v1247 = vld [vmem:[#allocation2 + $0xf9] sm:$0xff]
      %v1248 = vld [vmem:[#allocation2 + $0x109] sm:$0xff]
      %v1249 = vld [vmem:[#allocation2 + $0x111] sm:$0xff]
      %v1250 = vld [vmem:[#allocation2 + $0x121] sm:$0xff]
      %v1251 = vld [vmem:[#allocation2 + $0x129] sm:$0xff]
      %v1252 = vld [vmem:[#allocation2 + $0x139] sm:$0xff]
      %v1253 = vld [vmem:[#allocation2 + $0x141] sm:$0xff]
      %v1254 = vld [vmem:[#allocation2 + $0x151] sm:$0xff]
      %v1255 = vld [vmem:[#allocation2 + $0x159] sm:$0xff]
      %v1256 = vld [vmem:[#allocation2 + $0x169] sm:$0xff]
      %v1257 = vld [vmem:[#allocation2 + $0x171] sm:$0xff]
      %s1258 = scalar_lea.vmem %s5, 4
      %v1259 = vld [vmem:[%s1258] sm:$0xf]
      %v1261 = vsel %vm491, %v1259, 0
      %v1264 = vsel %vm491, %v1226, 0
      %v1267 = vsel %vm491, %v1227, 0
      %v1270 = vsel %vm491, %v1228, 0
      %v1273 = vsel %vm491, %v1229, 0
      %v1276 = vsel %vm491, %v1230, 0
      %v1279 = vsel %vm491, %v1231, 0
      %v1282 = vsel %vm491, %v1232, 0
      %v1285 = vsel %vm491, %v1233, 0
      %v1288 = vsel %vm491, %v1234, 0
      %v1291 = vsel %vm491, %v1235, 0
      %v1294 = vsel %vm491, %v1236, 0
      %v1297 = vsel %vm491, %v1237, 0
      %v1300 = vsel %vm491, %v1238, 0
      %v1303 = vsel %vm491, %v1239, 0
      %v1306 = vsel %vm491, %v1240, 0
      %v1309 = vsel %vm491, %v1241, 0
      %v1312 = vsel %vm491, %v1242, 0
      %v1315 = vsel %vm491, %v1243, 0
      %v1318 = vsel %vm491, %v1244, 0
      %v1321 = vsel %vm491, %v1245, 0
      %v1324 = vsel %vm491, %v1246, 0
      %v1327 = vsel %vm491, %v1247, 0
      %v1330 = vsel %vm491, %v1248, 0
      %v1333 = vsel %vm491, %v1249, 0
      %v1336 = vsel %vm491, %v1250, 0
      %v1339 = vsel %vm491, %v1251, 0
      %v1342 = vsel %vm491, %v1252, 0
      %v1345 = vsel %vm491, %v1253, 0
      %v1348 = vsel %vm491, %v1254, 0
      %v1351 = vsel %vm491, %v1255, 0
      %v1354 = vsel %vm491, %v1256, 0
      %v1357 = vsel %vm491, %v1257, 0
      %1359 = vmatprep.subr.mxu0 0.0
      %1360 = vmatpush1.xpose.msra.mxu0 %v1264
      %1361 = vmatprep.subr.mxu0 0.0
      %1362 = vmatpush1.xpose.msra.mxu0 %v1267
      %1363 = vmatprep.subr.mxu0 0.0
      %1364 = vmatpush1.xpose.msra.mxu0 %v1270
      %1365 = vmatprep.subr.mxu0 0.0
      %1366 = vmatpush1.xpose.msra.mxu0 %v1273
      %1367 = vmatprep.subr.mxu0 0.0
      %1368 = vmatpush1.xpose.msra.mxu0 %v1276
      %1369 = vmatprep.subr.mxu0 0.0
      %1370 = vmatpush1.xpose.msra.mxu0 %v1279
      %1371 = vmatprep.subr.mxu0 0.0
      %1372 = vmatpush1.xpose.msra.mxu0 %v1282
      %1373 = vmatprep.subr.mxu0 0.0
      %1374 = vmatpush1.xpose.msra.mxu0 %v1285
      %1375 = vmatprep.subr.mxu0 0.0
      %1376 = vmatpush1.xpose.msra.mxu0 %v1288
      %1377 = vmatprep.subr.mxu0 0.0
      %1378 = vmatpush1.xpose.msra.mxu0 %v1291
      %1379 = vmatprep.subr.mxu0 0.0
      %1380 = vmatpush1.xpose.msra.mxu0 %v1294
      %1381 = vmatprep.subr.mxu0 0.0
      %1382 = vmatpush1.xpose.msra.mxu0 %v1297
      %1383 = vmatprep.subr.mxu0 0.0
      %1384 = vmatpush1.xpose.msra.mxu0 %v1300
      %1385 = vmatprep.subr.mxu0 0.0
      %1386 = vmatpush1.xpose.msra.mxu0 %v1303
      %1387 = vmatprep.subr.mxu0 0.0
      %1388 = vmatpush1.xpose.msra.mxu0 %v1306
      %1389 = vmatprep.subr.mxu0 0.0
      %1390 = vmatpush1.xpose.msra.mxu0 %v1309
      %1391 = vmatprep.subr.mxu0 0.0
      %1392 = vmatpush1.xpose.msra.mxu0 %v1312
      %1393 = vmatprep.subr.mxu0 0.0
      %1394 = vmatpush1.xpose.msra.mxu0 %v1315
      %1395 = vmatprep.subr.mxu0 0.0
      %1396 = vmatpush1.xpose.msra.mxu0 %v1318
      %1397 = vmatprep.subr.mxu0 0.0
      %1398 = vmatpush1.xpose.msra.mxu0 %v1321
      %1399 = vmatprep.subr.mxu0 0.0
      %1400 = vmatpush1.xpose.msra.mxu0 %v1324
      %1401 = vmatprep.subr.mxu0 0.0
      %1402 = vmatpush1.xpose.msra.mxu0 %v1327
      %1403 = vmatprep.subr.mxu0 0.0
      %1404 = vmatpush1.xpose.msra.mxu0 %v1330
      %1405 = vmatprep.subr.mxu0 0.0
      %1406 = vmatpush1.xpose.msra.mxu0 %v1333
      %1407 = vmatprep.subr.mxu0 0.0
      %1408 = vmatpush1.xpose.msra.mxu0 %v1336
      %1409 = vmatprep.subr.mxu0 0.0
      %1410 = vmatpush1.xpose.msra.mxu0 %v1339
      %1411 = vmatprep.subr.mxu0 0.0
      %1412 = vmatpush1.xpose.msra.mxu0 %v1342
      %1413 = vmatprep.subr.mxu0 0.0
      %1414 = vmatpush1.xpose.msra.mxu0 %v1345
      %1415 = vmatprep.subr.mxu0 0.0
      %1416 = vmatpush1.xpose.msra.mxu0 %v1348
      %1417 = vmatprep.subr.mxu0 0.0
      %1418 = vmatpush1.xpose.msra.mxu0 %v1351
      %1419 = vmatprep.subr.mxu0 0.0
      %1420 = vmatpush1.xpose.msra.mxu0 %v1354
      %1421 = vmatprep.subr.mxu0 0.0
      %1422 = vmatpush1.xpose.msra.mxu0 %v1357
      %1423 = vmatprep.mubr.f32.mxu0 0.0
      %1424 = vmatmul.mubr.f32.gmra.mrb[0].mxu0 %v1261
      %v1425 = vpop.f32.mrb[0].mxu0
      %v1426 = vadd.f32 0.0, %v1425
      %v1427 = vpop.f32.mrb[0].mxu0
      %v1428 = vadd.f32 0.0, %v1427
      %1429 = vdwg.mxu0
      %v1430 = vadd.f32 %v1224, %v1426
      %v1431 = vadd.f32 %v1225, %v1428
      %v1432 = vld [vmem:[#allocation2 + $0x2] sm:$0xff]
      %v1433 = vld [vmem:[#allocation2 + $0xa] sm:$0xff]
      %v1434 = vld [vmem:[#allocation2 + $0x1a] sm:$0xff]
      %v1435 = vld [vmem:[#allocation2 + $0x22] sm:$0xff]
      %v1436 = vld [vmem:[#allocation2 + $0x32] sm:$0xff]
      %v1437 = vld [vmem:[#allocation2 + $0x3a] sm:$0xff]
      %v1438 = vld [vmem:[#allocation2 + $0x4a] sm:$0xff]
      %v1439 = vld [vmem:[#allocation2 + $0x52] sm:$0xff]
      %v1440 = vld [vmem:[#allocation2 + $0x62] sm:$0xff]
      %v1441 = vld [vmem:[#allocation2 + $0x6a] sm:$0xff]
      %v1442 = vld [vmem:[#allocation2 + $0x7a] sm:$0xff]
      %v1443 = vld [vmem:[#allocation2 + $0x82] sm:$0xff]
      %v1444 = vld [vmem:[#allocation2 + $0x92] sm:$0xff]
      %v1445 = vld [vmem:[#allocation2 + $0x9a] sm:$0xff]
      %v1446 = vld [vmem:[#allocation2 + $0xaa] sm:$0xff]
      %v1447 = vld [vmem:[#allocation2 + $0xb2] sm:$0xff]
      %v1448 = vld [vmem:[#allocation2 + $0xc2] sm:$0xff]
      %v1449 = vld [vmem:[#allocation2 + $0xca] sm:$0xff]
      %v1450 = vld [vmem:[#allocation2 + $0xda] sm:$0xff]
      %v1451 = vld [vmem:[#allocation2 + $0xe2] sm:$0xff]
      %v1452 = vld [vmem:[#allocation2 + $0xf2] sm:$0xff]
      %v1453 = vld [vmem:[#allocation2 + $0xfa] sm:$0xff]
      %v1454 = vld [vmem:[#allocation2 + $0x10a] sm:$0xff]
      %v1455 = vld [vmem:[#allocation2 + $0x112] sm:$0xff]
      %v1456 = vld [vmem:[#allocation2 + $0x122] sm:$0xff]
      %v1457 = vld [vmem:[#allocation2 + $0x12a] sm:$0xff]
      %v1458 = vld [vmem:[#allocation2 + $0x13a] sm:$0xff]
      %v1459 = vld [vmem:[#allocation2 + $0x142] sm:$0xff]
      %v1460 = vld [vmem:[#allocation2 + $0x152] sm:$0xff]
      %v1461 = vld [vmem:[#allocation2 + $0x15a] sm:$0xff]
      %v1462 = vld [vmem:[#allocation2 + $0x16a] sm:$0xff]
      %v1463 = vld [vmem:[#allocation2 + $0x172] sm:$0xff]
      %s1464 = scalar_lea.vmem %s5, 8
      %v1465 = vld [vmem:[%s1464] sm:$0xf]
      %v1467 = vsel %vm491, %v1465, 0
      %v1470 = vsel %vm491, %v1432, 0
      %v1473 = vsel %vm491, %v1433, 0
      %v1476 = vsel %vm491, %v1434, 0
      %v1479 = vsel %vm491, %v1435, 0
      %v1482 = vsel %vm491, %v1436, 0
      %v1485 = vsel %vm491, %v1437, 0
      %v1488 = vsel %vm491, %v1438, 0
      %v1491 = vsel %vm491, %v1439, 0
      %v1494 = vsel %vm491, %v1440, 0
      %v1497 = vsel %vm491, %v1441, 0
      %v1500 = vsel %vm491, %v1442, 0
      %v1503 = vsel %vm491, %v1443, 0
      %v1506 = vsel %vm491, %v1444, 0
      %v1509 = vsel %vm491, %v1445, 0
      %v1512 = vsel %vm491, %v1446, 0
      %v1515 = vsel %vm491, %v1447, 0
      %v1518 = vsel %vm491, %v1448, 0
      %v1521 = vsel %vm491, %v1449, 0
      %v1524 = vsel %vm491, %v1450, 0
      %v1527 = vsel %vm491, %v1451, 0
      %v1530 = vsel %vm491, %v1452, 0
      %v1533 = vsel %vm491, %v1453, 0
      %v1536 = vsel %vm491, %v1454, 0
      %v1539 = vsel %vm491, %v1455, 0
      %v1542 = vsel %vm491, %v1456, 0
      %v1545 = vsel %vm491, %v1457, 0
      %v1548 = vsel %vm491, %v1458, 0
      %v1551 = vsel %vm491, %v1459, 0
      %v1554 = vsel %vm491, %v1460, 0
      %v1557 = vsel %vm491, %v1461, 0
      %v1560 = vsel %vm491, %v1462, 0
      %v1563 = vsel %vm491, %v1463, 0
      %1565 = vmatprep.subr.mxu0 0.0
      %1566 = vmatpush1.xpose.msra.mxu0 %v1470
      %1567 = vmatprep.subr.mxu0 0.0
      %1568 = vmatpush1.xpose.msra.mxu0 %v1473
      %1569 = vmatprep.subr.mxu0 0.0
      %1570 = vmatpush1.xpose.msra.mxu0 %v1476
      %1571 = vmatprep.subr.mxu0 0.0
      %1572 = vmatpush1.xpose.msra.mxu0 %v1479
      %1573 = vmatprep.subr.mxu0 0.0
      %1574 = vmatpush1.xpose.msra.mxu0 %v1482
      %1575 = vmatprep.subr.mxu0 0.0
      %1576 = vmatpush1.xpose.msra.mxu0 %v1485
      %1577 = vmatprep.subr.mxu0 0.0
      %1578 = vmatpush1.xpose.msra.mxu0 %v1488
      %1579 = vmatprep.subr.mxu0 0.0
      %1580 = vmatpush1.xpose.msra.mxu0 %v1491
      %1581 = vmatprep.subr.mxu0 0.0
      %1582 = vmatpush1.xpose.msra.mxu0 %v1494
      %1583 = vmatprep.subr.mxu0 0.0
      %1584 = vmatpush1.xpose.msra.mxu0 %v1497
      %1585 = vmatprep.subr.mxu0 0.0
      %1586 = vmatpush1.xpose.msra.mxu0 %v1500
      %1587 = vmatprep.subr.mxu0 0.0
      %1588 = vmatpush1.xpose.msra.mxu0 %v1503
      %1589 = vmatprep.subr.mxu0 0.0
      %1590 = vmatpush1.xpose.msra.mxu0 %v1506
      %1591 = vmatprep.subr.mxu0 0.0
      %1592 = vmatpush1.xpose.msra.mxu0 %v1509
      %1593 = vmatprep.subr.mxu0 0.0
      %1594 = vmatpush1.xpose.msra.mxu0 %v1512
      %1595 = vmatprep.subr.mxu0 0.0
      %1596 = vmatpush1.xpose.msra.mxu0 %v1515
      %1597 = vmatprep.subr.mxu0 0.0
      %1598 = vmatpush1.xpose.msra.mxu0 %v1518
      %1599 = vmatprep.subr.mxu0 0.0
      %1600 = vmatpush1.xpose.msra.mxu0 %v1521
      %1601 = vmatprep.subr.mxu0 0.0
      %1602 = vmatpush1.xpose.msra.mxu0 %v1524
      %1603 = vmatprep.subr.mxu0 0.0
      %1604 = vmatpush1.xpose.msra.mxu0 %v1527
      %1605 = vmatprep.subr.mxu0 0.0
      %1606 = vmatpush1.xpose.msra.mxu0 %v1530
      %1607 = vmatprep.subr.mxu0 0.0
      %1608 = vmatpush1.xpose.msra.mxu0 %v1533
      %1609 = vmatprep.subr.mxu0 0.0
      %1610 = vmatpush1.xpose.msra.mxu0 %v1536
      %1611 = vmatprep.subr.mxu0 0.0
      %1612 = vmatpush1.xpose.msra.mxu0 %v1539
      %1613 = vmatprep.subr.mxu0 0.0
      %1614 = vmatpush1.xpose.msra.mxu0 %v1542
      %1615 = vmatprep.subr.mxu0 0.0
      %1616 = vmatpush1.xpose.msra.mxu0 %v1545
      %1617 = vmatprep.subr.mxu0 0.0
      %1618 = vmatpush1.xpose.msra.mxu0 %v1548
      %1619 = vmatprep.subr.mxu0 0.0
      %1620 = vmatpush1.xpose.msra.mxu0 %v1551
      %1621 = vmatprep.subr.mxu0 0.0
      %1622 = vmatpush1.xpose.msra.mxu0 %v1554
      %1623 = vmatprep.subr.mxu0 0.0
      %1624 = vmatpush1.xpose.msra.mxu0 %v1557
      %1625 = vmatprep.subr.mxu0 0.0
      %1626 = vmatpush1.xpose.msra.mxu0 %v1560
      %1627 = vmatprep.subr.mxu0 0.0
      %1628 = vmatpush1.xpose.msra.mxu0 %v1563
      %1629 = vmatprep.mubr.f32.mxu0 0.0
      %1630 = vmatmul.mubr.f32.gmra.mrb[0].mxu0 %v1467
      %v1631 = vpop.f32.mrb[0].mxu0
      %v1632 = vadd.f32 0.0, %v1631
      %v1633 = vpop.f32.mrb[0].mxu0
      %v1634 = vadd.f32 0.0, %v1633
      %1635 = vdwg.mxu0
      %v1636 = vadd.f32 %v1430, %v1632
      %v1637 = vadd.f32 %v1431, %v1634
      %v1638 = vld [vmem:[%s948] sm:$0xff]
      %v1639 = vld [vmem:[%s948 + $0x8] sm:$0xff]
      %v1640 = vld [vmem:[%s948 + $0x18] sm:$0xff]
      %v1641 = vld [vmem:[%s948 + $0x20] sm:$0xff]
      %v1642 = vld [vmem:[%s948 + $0x30] sm:$0xff]
      %v1643 = vld [vmem:[%s948 + $0x38] sm:$0xff]
      %v1644 = vld [vmem:[%s948 + $0x48] sm:$0xff]
      %v1645 = vld [vmem:[%s948 + $0x50] sm:$0xff]
      %v1646 = vld [vmem:[%s948 + $0x60] sm:$0xff]
      %v1647 = vld [vmem:[%s948 + $0x68] sm:$0xff]
      %v1648 = vld [vmem:[%s948 + $0x78] sm:$0xff]
      %v1649 = vld [vmem:[%s948 + $0x80] sm:$0xff]
      %v1650 = vld [vmem:[%s948 + $0x90] sm:$0xff]
      %v1651 = vld [vmem:[%s948 + $0x98] sm:$0xff]
      %v1652 = vld [vmem:[%s948 + $0xa8] sm:$0xff]
      %v1653 = vld [vmem:[%s948 + $0xb0] sm:$0xff]
      %v1654 = vld [vmem:[%s948 + $0xc0] sm:$0xff]
      %v1655 = vld [vmem:[%s948 + $0xc8] sm:$0xff]
      %v1656 = vld [vmem:[%s948 + $0xd8] sm:$0xff]
      %v1657 = vld [vmem:[%s948 + $0xe0] sm:$0xff]
      %v1658 = vld [vmem:[%s948 + $0xf0] sm:$0xff]
      %v1659 = vld [vmem:[%s948 + $0xf8] sm:$0xff]
      %v1660 = vld [vmem:[%s948 + $0x108] sm:$0xff]
      %v1661 = vld [vmem:[%s948 + $0x110] sm:$0xff]
      %v1662 = vld [vmem:[%s948 + $0x120] sm:$0xff]
      %v1663 = vld [vmem:[%s948 + $0x128] sm:$0xff]
      %v1664 = vld [vmem:[%s948 + $0x138] sm:$0xff]
      %v1665 = vld [vmem:[%s948 + $0x140] sm:$0xff]
      %v1666 = vld [vmem:[%s948 + $0x150] sm:$0xff]
      %v1667 = vld [vmem:[%s948 + $0x158] sm:$0xff]
      %v1668 = vld [vmem:[%s948 + $0x168] sm:$0xff]
      %v1669 = vld [vmem:[%s948 + $0x170] sm:$0xff]
      %s1670 = scalar_lea.vmem %s5, 12
      %v1671 = vld [vmem:[%s1670] sm:$0xf]
      %v1673 = vsel %vm491, %v1671, 0
      %v1676 = vsel %vm491, %v1638, 0
      %v1679 = vsel %vm491, %v1639, 0
      %v1682 = vsel %vm491, %v1640, 0
      %v1685 = vsel %vm491, %v1641, 0
      %v1688 = vsel %vm491, %v1642, 0
      %v1691 = vsel %vm491, %v1643, 0
      %v1694 = vsel %vm491, %v1644, 0
      %v1697 = vsel %vm491, %v1645, 0
      %v1700 = vsel %vm491, %v1646, 0
      %v1703 = vsel %vm491, %v1647, 0
      %v1706 = vsel %vm491, %v1648, 0
      %v1709 = vsel %vm491, %v1649, 0
      %v1712 = vsel %vm491, %v1650, 0
      %v1715 = vsel %vm491, %v1651, 0
      %v1718 = vsel %vm491, %v1652, 0
      %v1721 = vsel %vm491, %v1653, 0
      %v1724 = vsel %vm491, %v1654, 0
      %v1727 = vsel %vm491, %v1655, 0
      %v1730 = vsel %vm491, %v1656, 0
      %v1733 = vsel %vm491, %v1657, 0
      %v1736 = vsel %vm491, %v1658, 0
      %v1739 = vsel %vm491, %v1659, 0
      %v1742 = vsel %vm491, %v1660, 0
      %v1745 = vsel %vm491, %v1661, 0
      %v1748 = vsel %vm491, %v1662, 0
      %v1751 = vsel %vm491, %v1663, 0
      %v1754 = vsel %vm491, %v1664, 0
      %v1757 = vsel %vm491, %v1665, 0
      %v1760 = vsel %vm491, %v1666, 0
      %v1763 = vsel %vm491, %v1667, 0
      %v1766 = vsel %vm491, %v1668, 0
      %v1769 = vsel %vm491, %v1669, 0
      %1771 = vmatprep.subr.mxu0 0.0
      %1772 = vmatpush1.xpose.msra.mxu0 %v1676
      %1773 = vmatprep.subr.mxu0 0.0
      %1774 = vmatpush1.xpose.msra.mxu0 %v1679
      %1775 = vmatprep.subr.mxu0 0.0
      %1776 = vmatpush1.xpose.msra.mxu0 %v1682
      %1777 = vmatprep.subr.mxu0 0.0
      %1778 = vmatpush1.xpose.msra.mxu0 %v1685
      %1779 = vmatprep.subr.mxu0 0.0
      %1780 = vmatpush1.xpose.msra.mxu0 %v1688
      %1781 = vmatprep.subr.mxu0 0.0
      %1782 = vmatpush1.xpose.msra.mxu0 %v1691
      %1783 = vmatprep.subr.mxu0 0.0
      %1784 = vmatpush1.xpose.msra.mxu0 %v1694
      %1785 = vmatprep.subr.mxu0 0.0
      %1786 = vmatpush1.xpose.msra.mxu0 %v1697
      %1787 = vmatprep.subr.mxu0 0.0
      %1788 = vmatpush1.xpose.msra.mxu0 %v1700
      %1789 = vmatprep.subr.mxu0 0.0
      %1790 = vmatpush1.xpose.msra.mxu0 %v1703
      %1791 = vmatprep.subr.mxu0 0.0
      %1792 = vmatpush1.xpose.msra.mxu0 %v1706
      %1793 = vmatprep.subr.mxu0 0.0
      %1794 = vmatpush1.xpose.msra.mxu0 %v1709
      %1795 = vmatprep.subr.mxu0 0.0
      %1796 = vmatpush1.xpose.msra.mxu0 %v1712
      %1797 = vmatprep.subr.mxu0 0.0
      %1798 = vmatpush1.xpose.msra.mxu0 %v1715
      %1799 = vmatprep.subr.mxu0 0.0
      %1800 = vmatpush1.xpose.msra.mxu0 %v1718
      %1801 = vmatprep.subr.mxu0 0.0
      %1802 = vmatpush1.xpose.msra.mxu0 %v1721
      %1803 = vmatprep.subr.mxu0 0.0
      %1804 = vmatpush1.xpose.msra.mxu0 %v1724
      %1805 = vmatprep.subr.mxu0 0.0
      %1806 = vmatpush1.xpose.msra.mxu0 %v1727
      %1807 = vmatprep.subr.mxu0 0.0
      %1808 = vmatpush1.xpose.msra.mxu0 %v1730
      %1809 = vmatprep.subr.mxu0 0.0
      %1810 = vmatpush1.xpose.msra.mxu0 %v1733
      %1811 = vmatprep.subr.mxu0 0.0
      %1812 = vmatpush1.xpose.msra.mxu0 %v1736
      %1813 = vmatprep.subr.mxu0 0.0
      %1814 = vmatpush1.xpose.msra.mxu0 %v1739
      %1815 = vmatprep.subr.mxu0 0.0
      %1816 = vmatpush1.xpose.msra.mxu0 %v1742
      %1817 = vmatprep.subr.mxu0 0.0
      %1818 = vmatpush1.xpose.msra.mxu0 %v1745
      %1819 = vmatprep.subr.mxu0 0.0
      %1820 = vmatpush1.xpose.msra.mxu0 %v1748
      %1821 = vmatprep.subr.mxu0 0.0
      %1822 = vmatpush1.xpose.msra.mxu0 %v1751
      %1823 = vmatprep.subr.mxu0 0.0
      %1824 = vmatpush1.xpose.msra.mxu0 %v1754
      %1825 = vmatprep.subr.mxu0 0.0
      %1826 = vmatpush1.xpose.msra.mxu0 %v1757
      %1827 = vmatprep.subr.mxu0 0.0
      %1828 = vmatpush1.xpose.msra.mxu0 %v1760
      %1829 = vmatprep.subr.mxu0 0.0
      %1830 = vmatpush1.xpose.msra.mxu0 %v1763
      %1831 = vmatprep.subr.mxu0 0.0
      %1832 = vmatpush1.xpose.msra.mxu0 %v1766
      %1833 = vmatprep.subr.mxu0 0.0
      %1834 = vmatpush1.xpose.msra.mxu0 %v1769
      %1835 = vmatprep.mubr.f32.mxu0 0.0
      %1836 = vmatmul.mubr.f32.gmra.mrb[0].mxu0 %v1673
      %v1837 = vpop.f32.mrb[0].mxu0
      %v1838 = vadd.f32 0.0, %v1837
      %v1839 = vpop.f32.mrb[0].mxu0
      %v1840 = vadd.f32 0.0, %v1839
      %1841 = vdwg.mxu0
      %v1842 = vadd.f32 %v1636, %v1838
      %v1843 = vadd.f32 %v1637, %v1840
      %v1844 = vld [vmem:[%s948 + $0x1] sm:$0xff]
      %v1845 = vld [vmem:[%s948 + $0x9] sm:$0xff]
      %v1846 = vld [vmem:[%s948 + $0x19] sm:$0xff]
      %v1847 = vld [vmem:[%s948 + $0x21] sm:$0xff]
      %v1848 = vld [vmem:[%s948 + $0x31] sm:$0xff]
      %v1849 = vld [vmem:[%s948 + $0x39] sm:$0xff]
      %v1850 = vld [vmem:[%s948 + $0x49] sm:$0xff]
      %v1851 = vld [vmem:[%s948 + $0x51] sm:$0xff]
      %v1852 = vld [vmem:[%s948 + $0x61] sm:$0xff]
      %v1853 = vld [vmem:[%s948 + $0x69] sm:$0xff]
      %v1854 = vld [vmem:[%s948 + $0x79] sm:$0xff]
      %v1855 = vld [vmem:[%s948 + $0x81] sm:$0xff]
      %v1856 = vld [vmem:[%s948 + $0x91] sm:$0xff]
      %v1857 = vld [vmem:[%s948 + $0x99] sm:$0xff]
      %v1858 = vld [vmem:[%s948 + $0xa9] sm:$0xff]
      %v1859 = vld [vmem:[%s948 + $0xb1] sm:$0xff]
      %v1860 = vld [vmem:[%s948 + $0xc1] sm:$0xff]
      %v1861 = vld [vmem:[%s948 + $0xc9] sm:$0xff]
      %v1862 = vld [vmem:[%s948 + $0xd9] sm:$0xff]
      %v1863 = vld [vmem:[%s948 + $0xe1] sm:$0xff]
      %v1864 = vld [vmem:[%s948 + $0xf1] sm:$0xff]
      %v1865 = vld [vmem:[%s948 + $0xf9] sm:$0xff]
      %v1866 = vld [vmem:[%s948 + $0x109] sm:$0xff]
      %v1867 = vld [vmem:[%s948 + $0x111] sm:$0xff]
      %v1868 = vld [vmem:[%s948 + $0x121] sm:$0xff]
      %v1869 = vld [vmem:[%s948 + $0x129] sm:$0xff]
      %v1870 = vld [vmem:[%s948 + $0x139] sm:$0xff]
      %v1871 = vld [vmem:[%s948 + $0x141] sm:$0xff]
      %v1872 = vld [vmem:[%s948 + $0x151] sm:$0xff]
      %v1873 = vld [vmem:[%s948 + $0x159] sm:$0xff]
      %v1874 = vld [vmem:[%s948 + $0x169] sm:$0xff]
      %v1875 = vld [vmem:[%s948 + $0x171] sm:$0xff]
      %s1876 = scalar_lea.vmem %s5, 16
      %v1877 = vld [vmem:[%s1876] sm:$0xf]
      %v1879 = vsel %vm491, %v1877, 0
      %v1882 = vsel %vm491, %v1844, 0
      %v1885 = vsel %vm491, %v1845, 0
      %v1888 = vsel %vm491, %v1846, 0
      %v1891 = vsel %vm491, %v1847, 0
      %v1894 = vsel %vm491, %v1848, 0
      %v1897 = vsel %vm491, %v1849, 0
      %v1900 = vsel %vm491, %v1850, 0
      %v1903 = vsel %vm491, %v1851, 0
      %v1906 = vsel %vm491, %v1852, 0
      %v1909 = vsel %vm491, %v1853, 0
      %v1912 = vsel %vm491, %v1854, 0
      %v1915 = vsel %vm491, %v1855, 0
      %v1918 = vsel %vm491, %v1856, 0
      %v1921 = vsel %vm491, %v1857, 0
      %v1924 = vsel %vm491, %v1858, 0
      %v1927 = vsel %vm491, %v1859, 0
      %v1930 = vsel %vm491, %v1860, 0
      %v1933 = vsel %vm491, %v1861, 0
      %v1936 = vsel %vm491, %v1862, 0
      %v1939 = vsel %vm491, %v1863, 0
      %v1942 = vsel %vm491, %v1864, 0
      %v1945 = vsel %vm491, %v1865, 0
      %v1948 = vsel %vm491, %v1866, 0
      %v1951 = vsel %vm491, %v1867, 0
      %v1954 = vsel %vm491, %v1868, 0
      %v1957 = vsel %vm491, %v1869, 0
      %v1960 = vsel %vm491, %v1870, 0
      %v1963 = vsel %vm491, %v1871, 0
      %v1966 = vsel %vm491, %v1872, 0
      %v1969 = vsel %vm491, %v1873, 0
      %v1972 = vsel %vm491, %v1874, 0
      %v1975 = vsel %vm491, %v1875, 0
      %1977 = vmatprep.subr.mxu0 0.0
      %1978 = vmatpush1.xpose.msra.mxu0 %v1882
      %1979 = vmatprep.subr.mxu0 0.0
      %1980 = vmatpush1.xpose.msra.mxu0 %v1885
      %1981 = vmatprep.subr.mxu0 0.0
      %1982 = vmatpush1.xpose.msra.mxu0 %v1888
      %1983 = vmatprep.subr.mxu0 0.0
      %1984 = vmatpush1.xpose.msra.mxu0 %v1891
      %1985 = vmatprep.subr.mxu0 0.0
      %1986 = vmatpush1.xpose.msra.mxu0 %v1894
      %1987 = vmatprep.subr.mxu0 0.0
      %1988 = vmatpush1.xpose.msra.mxu0 %v1897
      %1989 = vmatprep.subr.mxu0 0.0
      %1990 = vmatpush1.xpose.msra.mxu0 %v1900
      %1991 = vmatprep.subr.mxu0 0.0
      %1992 = vmatpush1.xpose.msra.mxu0 %v1903
      %1993 = vmatprep.subr.mxu0 0.0
      %1994 = vmatpush1.xpose.msra.mxu0 %v1906
      %1995 = vmatprep.subr.mxu0 0.0
      %1996 = vmatpush1.xpose.msra.mxu0 %v1909
      %1997 = vmatprep.subr.mxu0 0.0
      %1998 = vmatpush1.xpose.msra.mxu0 %v1912
      %1999 = vmatprep.subr.mxu0 0.0
      %2000 = vmatpush1.xpose.msra.mxu0 %v1915
      %2001 = vmatprep.subr.mxu0 0.0
      %2002 = vmatpush1.xpose.msra.mxu0 %v1918
      %2003 = vmatprep.subr.mxu0 0.0
      %2004 = vmatpush1.xpose.msra.mxu0 %v1921
      %2005 = vmatprep.subr.mxu0 0.0
      %2006 = vmatpush1.xpose.msra.mxu0 %v1924
      %2007 = vmatprep.subr.mxu0 0.0
      %2008 = vmatpush1.xpose.msra.mxu0 %v1927
      %2009 = vmatprep.subr.mxu0 0.0
      %2010 = vmatpush1.xpose.msra.mxu0 %v1930
      %2011 = vmatprep.subr.mxu0 0.0
      %2012 = vmatpush1.xpose.msra.mxu0 %v1933
      %2013 = vmatprep.subr.mxu0 0.0
      %2014 = vmatpush1.xpose.msra.mxu0 %v1936
      %2015 = vmatprep.subr.mxu0 0.0
      %2016 = vmatpush1.xpose.msra.mxu0 %v1939
      %2017 = vmatprep.subr.mxu0 0.0
      %2018 = vmatpush1.xpose.msra.mxu0 %v1942
      %2019 = vmatprep.subr.mxu0 0.0
      %2020 = vmatpush1.xpose.msra.mxu0 %v1945
      %2021 = vmatprep.subr.mxu0 0.0
      %2022 = vmatpush1.xpose.msra.mxu0 %v1948
      %2023 = vmatprep.subr.mxu0 0.0
      %2024 = vmatpush1.xpose.msra.mxu0 %v1951
      %2025 = vmatprep.subr.mxu0 0.0
      %2026 = vmatpush1.xpose.msra.mxu0 %v1954
      %2027 = vmatprep.subr.mxu0 0.0
      %2028 = vmatpush1.xpose.msra.mxu0 %v1957
      %2029 = vmatprep.subr.mxu0 0.0
      %2030 = vmatpush1.xpose.msra.mxu0 %v1960
      %2031 = vmatprep.subr.mxu0 0.0
      %2032 = vmatpush1.xpose.msra.mxu0 %v1963
      %2033 = vmatprep.subr.mxu0 0.0
      %2034 = vmatpush1.xpose.msra.mxu0 %v1966
      %2035 = vmatprep.subr.mxu0 0.0
      %2036 = vmatpush1.xpose.msra.mxu0 %v1969
      %2037 = vmatprep.subr.mxu0 0.0
      %2038 = vmatpush1.xpose.msra.mxu0 %v1972
      %2039 = vmatprep.subr.mxu0 0.0
      %2040 = vmatpush1.xpose.msra.mxu0 %v1975
      %2041 = vmatprep.mubr.f32.mxu0 0.0
      %2042 = vmatmul.mubr.f32.gmra.mrb[0].mxu0 %v1879
      %v2043 = vpop.f32.mrb[0].mxu0
      %v2044 = vadd.f32 0.0, %v2043
      %v2045 = vpop.f32.mrb[0].mxu0
      %v2046 = vadd.f32 0.0, %v2045
      %2047 = vdwg.mxu0
      %v2048 = vadd.f32 %v1842, %v2044
      %v2049 = vadd.f32 %v1843, %v2046
      %v2050 = vld [vmem:[%s948 + $0x2] sm:$0xff]
      %v2051 = vld [vmem:[%s948 + $0xa] sm:$0xff]
      %v2052 = vld [vmem:[%s948 + $0x1a] sm:$0xff]
      %v2053 = vld [vmem:[%s948 + $0x22] sm:$0xff]
      %v2054 = vld [vmem:[%s948 + $0x32] sm:$0xff]
      %v2055 = vld [vmem:[%s948 + $0x3a] sm:$0xff]
      %v2056 = vld [vmem:[%s948 + $0x4a] sm:$0xff]
      %v2057 = vld [vmem:[%s948 + $0x52] sm:$0xff]
      %v2058 = vld [vmem:[%s948 + $0x62] sm:$0xff]
      %v2059 = vld [vmem:[%s948 + $0x6a] sm:$0xff]
      %v2060 = vld [vmem:[%s948 + $0x7a] sm:$0xff]
      %v2061 = vld [vmem:[%s948 + $0x82] sm:$0xff]
      %v2062 = vld [vmem:[%s948 + $0x92] sm:$0xff]
      %v2063 = vld [vmem:[%s948 + $0x9a] sm:$0xff]
      %v2064 = vld [vmem:[%s948 + $0xaa] sm:$0xff]
      %v2065 = vld [vmem:[%s948 + $0xb2] sm:$0xff]
      %v2066 = vld [vmem:[%s948 + $0xc2] sm:$0xff]
      %v2067 = vld [vmem:[%s948 + $0xca] sm:$0xff]
      %v2068 = vld [vmem:[%s948 + $0xda] sm:$0xff]
      %v2069 = vld [vmem:[%s948 + $0xe2] sm:$0xff]
      %v2070 = vld [vmem:[%s948 + $0xf2] sm:$0xff]
      %v2071 = vld [vmem:[%s948 + $0xfa] sm:$0xff]
      %v2072 = vld [vmem:[%s948 + $0x10a] sm:$0xff]
      %v2073 = vld [vmem:[%s948 + $0x112] sm:$0xff]
      %v2074 = vld [vmem:[%s948 + $0x122] sm:$0xff]
      %v2075 = vld [vmem:[%s948 + $0x12a] sm:$0xff]
      %v2076 = vld [vmem:[%s948 + $0x13a] sm:$0xff]
      %v2077 = vld [vmem:[%s948 + $0x142] sm:$0xff]
      %v2078 = vld [vmem:[%s948 + $0x152] sm:$0xff]
      %v2079 = vld [vmem:[%s948 + $0x15a] sm:$0xff]
      %v2080 = vld [vmem:[%s948 + $0x16a] sm:$0xff]
      %v2081 = vld [vmem:[%s948 + $0x172] sm:$0xff]
      %s2082 = scalar_lea.vmem %s5, 20
      %v2083 = vld [vmem:[%s2082] sm:$0xf]
      %v2085 = vsel %vm491, %v2083, 0
      %v2088 = vsel %vm491, %v2050, 0
      %v2091 = vsel %vm491, %v2051, 0
      %v2094 = vsel %vm491, %v2052, 0
      %v2097 = vsel %vm491, %v2053, 0
      %v2100 = vsel %vm491, %v2054, 0
      %v2103 = vsel %vm491, %v2055, 0
      %v2106 = vsel %vm491, %v2056, 0
      %v2109 = vsel %vm491, %v2057, 0
      %v2112 = vsel %vm491, %v2058, 0
      %v2115 = vsel %vm491, %v2059, 0
      %v2118 = vsel %vm491, %v2060, 0
      %v2121 = vsel %vm491, %v2061, 0
      %v2124 = vsel %vm491, %v2062, 0
      %v2127 = vsel %vm491, %v2063, 0
      %v2130 = vsel %vm491, %v2064, 0
      %v2133 = vsel %vm491, %v2065, 0
      %v2136 = vsel %vm491, %v2066, 0
      %v2139 = vsel %vm491, %v2067, 0
      %v2142 = vsel %vm491, %v2068, 0
      %v2145 = vsel %vm491, %v2069, 0
      %v2148 = vsel %vm491, %v2070, 0
      %v2151 = vsel %vm491, %v2071, 0
      %v2154 = vsel %vm491, %v2072, 0
      %v2157 = vsel %vm491, %v2073, 0
      %v2160 = vsel %vm491, %v2074, 0
      %v2163 = vsel %vm491, %v2075, 0
      %v2166 = vsel %vm491, %v2076, 0
      %v2169 = vsel %vm491, %v2077, 0
      %v2172 = vsel %vm491, %v2078, 0
      %v2175 = vsel %vm491, %v2079, 0
      %v2178 = vsel %vm491, %v2080, 0
      %v2181 = vsel %vm491, %v2081, 0
      %2183 = vmatprep.subr.mxu0 0.0
      %2184 = vmatpush1.xpose.msra.mxu0 %v2088
      %2185 = vmatprep.subr.mxu0 0.0
      %2186 = vmatpush1.xpose.msra.mxu0 %v2091
      %2187 = vmatprep.subr.mxu0 0.0
      %2188 = vmatpush1.xpose.msra.mxu0 %v2094
      %2189 = vmatprep.subr.mxu0 0.0
      %2190 = vmatpush1.xpose.msra.mxu0 %v2097
      %2191 = vmatprep.subr.mxu0 0.0
      %2192 = vmatpush1.xpose.msra.mxu0 %v2100
      %2193 = vmatprep.subr.mxu0 0.0
      %2194 = vmatpush1.xpose.msra.mxu0 %v2103
      %2195 = vmatprep.subr.mxu0 0.0
      %2196 = vmatpush1.xpose.msra.mxu0 %v2106
      %2197 = vmatprep.subr.mxu0 0.0
      %2198 = vmatpush1.xpose.msra.mxu0 %v2109
      %2199 = vmatprep.subr.mxu0 0.0
      %2200 = vmatpush1.xpose.msra.mxu0 %v2112
      %2201 = vmatprep.subr.mxu0 0.0
      %2202 = vmatpush1.xpose.msra.mxu0 %v2115
      %2203 = vmatprep.subr.mxu0 0.0
      %2204 = vmatpush1.xpose.msra.mxu0 %v2118
      %2205 = vmatprep.subr.mxu0 0.0
      %2206 = vmatpush1.xpose.msra.mxu0 %v2121
      %2207 = vmatprep.subr.mxu0 0.0
      %2208 = vmatpush1.xpose.msra.mxu0 %v2124
      %2209 = vmatprep.subr.mxu0 0.0
      %2210 = vmatpush1.xpose.msra.mxu0 %v2127
      %2211 = vmatprep.subr.mxu0 0.0
      %2212 = vmatpush1.xpose.msra.mxu0 %v2130
      %2213 = vmatprep.subr.mxu0 0.0
      %2214 = vmatpush1.xpose.msra.mxu0 %v2133
      %2215 = vmatprep.subr.mxu0 0.0
      %2216 = vmatpush1.xpose.msra.mxu0 %v2136
      %2217 = vmatprep.subr.mxu0 0.0
      %2218 = vmatpush1.xpose.msra.mxu0 %v2139
      %2219 = vmatprep.subr.mxu0 0.0
      %2220 = vmatpush1.xpose.msra.mxu0 %v2142
      %2221 = vmatprep.subr.mxu0 0.0
      %2222 = vmatpush1.xpose.msra.mxu0 %v2145
      %2223 = vmatprep.subr.mxu0 0.0
      %2224 = vmatpush1.xpose.msra.mxu0 %v2148
      %2225 = vmatprep.subr.mxu0 0.0
      %2226 = vmatpush1.xpose.msra.mxu0 %v2151
      %2227 = vmatprep.subr.mxu0 0.0
      %2228 = vmatpush1.xpose.msra.mxu0 %v2154
      %2229 = vmatprep.subr.mxu0 0.0
      %2230 = vmatpush1.xpose.msra.mxu0 %v2157
      %2231 = vmatprep.subr.mxu0 0.0
      %2232 = vmatpush1.xpose.msra.mxu0 %v2160
      %2233 = vmatprep.subr.mxu0 0.0
      %2234 = vmatpush1.xpose.msra.mxu0 %v2163
      %2235 = vmatprep.subr.mxu0 0.0
      %2236 = vmatpush1.xpose.msra.mxu0 %v2166
      %2237 = vmatprep.subr.mxu0 0.0
      %2238 = vmatpush1.xpose.msra.mxu0 %v2169
      %2239 = vmatprep.subr.mxu0 0.0
      %2240 = vmatpush1.xpose.msra.mxu0 %v2172
      %2241 = vmatprep.subr.mxu0 0.0
      %2242 = vmatpush1.xpose.msra.mxu0 %v2175
      %2243 = vmatprep.subr.mxu0 0.0
      %2244 = vmatpush1.xpose.msra.mxu0 %v2178
      %2245 = vmatprep.subr.mxu0 0.0
      %2246 = vmatpush1.xpose.msra.mxu0 %v2181
      %2247 = vmatprep.mubr.f32.mxu0 0.0
      %2248 = vmatmul.mubr.f32.gmra.mrb[0].mxu0 %v2085
      %v2249 = vpop.f32.mrb[0].mxu0
      %v2250 = vadd.f32 0.0, %v2249
      %v2251 = vpop.f32.mrb[0].mxu0
      %v2252 = vadd.f32 0.0, %v2251
      %2253 = vdwg.mxu0
      %v2254 = vadd.f32 %v2048, %v2250
      %v2255 = vadd.f32 %v2049, %v2252
      %s2256 = scalar_lea.vmem [#allocation2], 48
      %v2257 = vld [vmem:[%s2256] sm:$0xff]
      %v2258 = vld [vmem:[%s2256 + $0x8] sm:$0xff]
      %v2259 = vld [vmem:[%s2256 + $0x18] sm:$0xff]
      %v2260 = vld [vmem:[%s2256 + $0x20] sm:$0xff]
      %v2261 = vld [vmem:[%s2256 + $0x30] sm:$0xff]
      %v2262 = vld [vmem:[%s2256 + $0x38] sm:$0xff]
      %v2263 = vld [vmem:[%s2256 + $0x48] sm:$0xff]
      %v2264 = vld [vmem:[%s2256 + $0x50] sm:$0xff]
      %v2265 = vld [vmem:[%s2256 + $0x60] sm:$0xff]
      %v2266 = vld [vmem:[%s2256 + $0x68] sm:$0xff]
      %v2267 = vld [vmem:[%s2256 + $0x78] sm:$0xff]
      %v2268 = vld [vmem:[%s2256 + $0x80] sm:$0xff]
      %v2269 = vld [vmem:[%s2256 + $0x90] sm:$0xff]
      %v2270 = vld [vmem:[%s2256 + $0x98] sm:$0xff]
      %v2271 = vld [vmem:[%s2256 + $0xa8] sm:$0xff]
      %v2272 = vld [vmem:[%s2256 + $0xb0] sm:$0xff]
      %v2273 = vld [vmem:[%s2256 + $0xc0] sm:$0xff]
      %v2274 = vld [vmem:[%s2256 + $0xc8] sm:$0xff]
      %v2275 = vld [vmem:[%s2256 + $0xd8] sm:$0xff]
      %v2276 = vld [vmem:[%s2256 + $0xe0] sm:$0xff]
      %v2277 = vld [vmem:[%s2256 + $0xf0] sm:$0xff]
      %v2278 = vld [vmem:[%s2256 + $0xf8] sm:$0xff]
      %v2279 = vld [vmem:[%s2256 + $0x108] sm:$0xff]
      %v2280 = vld [vmem:[%s2256 + $0x110] sm:$0xff]
      %v2281 = vld [vmem:[%s2256 + $0x120] sm:$0xff]
      %v2282 = vld [vmem:[%s2256 + $0x128] sm:$0xff]
      %v2283 = vld [vmem:[%s2256 + $0x138] sm:$0xff]
      %v2284 = vld [vmem:[%s2256 + $0x140] sm:$0xff]
      %v2285 = vld [vmem:[%s2256 + $0x150] sm:$0xff]
      %v2286 = vld [vmem:[%s2256 + $0x158] sm:$0xff]
      %v2287 = vld [vmem:[%s2256 + $0x168] sm:$0xff]
      %v2288 = vld [vmem:[%s2256 + $0x170] sm:$0xff]
      %s2289 = scalar_lea.vmem %s5, 24
      %v2290 = vld [vmem:[%s2289] sm:$0xf]
      %v2292 = vsel %vm491, %v2290, 0
      %v2295 = vsel %vm491, %v2257, 0
      %v2298 = vsel %vm491, %v2258, 0
      %v2301 = vsel %vm491, %v2259, 0
      %v2304 = vsel %vm491, %v2260, 0
      %v2307 = vsel %vm491, %v2261, 0
      %v2310 = vsel %vm491, %v2262, 0
      %v2313 = vsel %vm491, %v2263, 0
      %v2316 = vsel %vm491, %v2264, 0
      %v2319 = vsel %vm491, %v2265, 0
      %v2322 = vsel %vm491, %v2266, 0
      %v2325 = vsel %vm491, %v2267, 0
      %v2328 = vsel %vm491, %v2268, 0
      %v2331 = vsel %vm491, %v2269, 0
      %v2334 = vsel %vm491, %v2270, 0
      %v2337 = vsel %vm491, %v2271, 0
      %v2340 = vsel %vm491, %v2272, 0
      %v2343 = vsel %vm491, %v2273, 0
      %v2346 = vsel %vm491, %v2274, 0
      %v2349 = vsel %vm491, %v2275, 0
      %v2352 = vsel %vm491, %v2276, 0
      %v2355 = vsel %vm491, %v2277, 0
      %v2358 = vsel %vm491, %v2278, 0
      %v2361 = vsel %vm491, %v2279, 0
      %v2364 = vsel %vm491, %v2280, 0
      %v2367 = vsel %vm491, %v2281, 0
      %v2370 = vsel %vm491, %v2282, 0
      %v2373 = vsel %vm491, %v2283, 0
      %v2376 = vsel %vm491, %v2284, 0
      %v2379 = vsel %vm491, %v2285, 0
      %v2382 = vsel %vm491, %v2286, 0
      %v2385 = vsel %vm491, %v2287, 0
      %v2388 = vsel %vm491, %v2288, 0
      %2390 = vmatprep.subr.mxu0 0.0
      %2391 = vmatpush1.xpose.msra.mxu0 %v2295
      %2392 = vmatprep.subr.mxu0 0.0
      %2393 = vmatpush1.xpose.msra.mxu0 %v2298
      %2394 = vmatprep.subr.mxu0 0.0
      %2395 = vmatpush1.xpose.msra.mxu0 %v2301
      %2396 = vmatprep.subr.mxu0 0.0
      %2397 = vmatpush1.xpose.msra.mxu0 %v2304
      %2398 = vmatprep.subr.mxu0 0.0
      %2399 = vmatpush1.xpose.msra.mxu0 %v2307
      %2400 = vmatprep.subr.mxu0 0.0
      %2401 = vmatpush1.xpose.msra.mxu0 %v2310
      %2402 = vmatprep.subr.mxu0 0.0
      %2403 = vmatpush1.xpose.msra.mxu0 %v2313
      %2404 = vmatprep.subr.mxu0 0.0
      %2405 = vmatpush1.xpose.msra.mxu0 %v2316
      %2406 = vmatprep.subr.mxu0 0.0
      %2407 = vmatpush1.xpose.msra.mxu0 %v2319
      %2408 = vmatprep.subr.mxu0 0.0
      %2409 = vmatpush1.xpose.msra.mxu0 %v2322
      %2410 = vmatprep.subr.mxu0 0.0
      %2411 = vmatpush1.xpose.msra.mxu0 %v2325
      %2412 = vmatprep.subr.mxu0 0.0
      %2413 = vmatpush1.xpose.msra.mxu0 %v2328
      %2414 = vmatprep.subr.mxu0 0.0
      %2415 = vmatpush1.xpose.msra.mxu0 %v2331
      %2416 = vmatprep.subr.mxu0 0.0
      %2417 = vmatpush1.xpose.msra.mxu0 %v2334
      %2418 = vmatprep.subr.mxu0 0.0
      %2419 = vmatpush1.xpose.msra.mxu0 %v2337
      %2420 = vmatprep.subr.mxu0 0.0
      %2421 = vmatpush1.xpose.msra.mxu0 %v2340
      %2422 = vmatprep.subr.mxu0 0.0
      %2423 = vmatpush1.xpose.msra.mxu0 %v2343
      %2424 = vmatprep.subr.mxu0 0.0
      %2425 = vmatpush1.xpose.msra.mxu0 %v2346
      %2426 = vmatprep.subr.mxu0 0.0
      %2427 = vmatpush1.xpose.msra.mxu0 %v2349
      %2428 = vmatprep.subr.mxu0 0.0
      %2429 = vmatpush1.xpose.msra.mxu0 %v2352
      %2430 = vmatprep.subr.mxu0 0.0
      %2431 = vmatpush1.xpose.msra.mxu0 %v2355
      %2432 = vmatprep.subr.mxu0 0.0
      %2433 = vmatpush1.xpose.msra.mxu0 %v2358
      %2434 = vmatprep.subr.mxu0 0.0
      %2435 = vmatpush1.xpose.msra.mxu0 %v2361
      %2436 = vmatprep.subr.mxu0 0.0
      %2437 = vmatpush1.xpose.msra.mxu0 %v2364
      %2438 = vmatprep.subr.mxu0 0.0
      %2439 = vmatpush1.xpose.msra.mxu0 %v2367
      %2440 = vmatprep.subr.mxu0 0.0
      %2441 = vmatpush1.xpose.msra.mxu0 %v2370
      %2442 = vmatprep.subr.mxu0 0.0
      %2443 = vmatpush1.xpose.msra.mxu0 %v2373
      %2444 = vmatprep.subr.mxu0 0.0
      %2445 = vmatpush1.xpose.msra.mxu0 %v2376
      %2446 = vmatprep.subr.mxu0 0.0
      %2447 = vmatpush1.xpose.msra.mxu0 %v2379
      %2448 = vmatprep.subr.mxu0 0.0
      %2449 = vmatpush1.xpose.msra.mxu0 %v2382
      %2450 = vmatprep.subr.mxu0 0.0
      %2451 = vmatpush1.xpose.msra.mxu0 %v2385
      %2452 = vmatprep.subr.mxu0 0.0
      %2453 = vmatpush1.xpose.msra.mxu0 %v2388
      %2454 = vmatprep.mubr.f32.mxu0 0.0
      %2455 = vmatmul.mubr.f32.gmra.mrb[0].mxu0 %v2292
      %v2456 = vpop.f32.mrb[0].mxu0
      %v2457 = vadd.f32 0.0, %v2456
      %v2458 = vpop.f32.mrb[0].mxu0
      %v2459 = vadd.f32 0.0, %v2458
      %2460 = vdwg.mxu0
      %v2461 = vadd.f32 %v2254, %v2457
      %v2462 = vadd.f32 %v2255, %v2459
      %v2463 = vld [vmem:[%s2256 + $0x1] sm:$0xff]
      %v2464 = vld [vmem:[%s2256 + $0x9] sm:$0xff]
      %v2465 = vld [vmem:[%s2256 + $0x19] sm:$0xff]
      %v2466 = vld [vmem:[%s2256 + $0x21] sm:$0xff]
      %v2467 = vld [vmem:[%s2256 + $0x31] sm:$0xff]
      %v2468 = vld [vmem:[%s2256 + $0x39] sm:$0xff]
      %v2469 = vld [vmem:[%s2256 + $0x49] sm:$0xff]
      %v2470 = vld [vmem:[%s2256 + $0x51] sm:$0xff]
      %v2471 = vld [vmem:[%s2256 + $0x61] sm:$0xff]
      %v2472 = vld [vmem:[%s2256 + $0x69] sm:$0xff]
      %v2473 = vld [vmem:[%s2256 + $0x79] sm:$0xff]
      %v2474 = vld [vmem:[%s2256 + $0x81] sm:$0xff]
      %v2475 = vld [vmem:[%s2256 + $0x91] sm:$0xff]
      %v2476 = vld [vmem:[%s2256 + $0x99] sm:$0xff]
      %v2477 = vld [vmem:[%s2256 + $0xa9] sm:$0xff]
      %v2478 = vld [vmem:[%s2256 + $0xb1] sm:$0xff]
      %v2479 = vld [vmem:[%s2256 + $0xc1] sm:$0xff]
      %v2480 = vld [vmem:[%s2256 + $0xc9] sm:$0xff]
      %v2481 = vld [vmem:[%s2256 + $0xd9] sm:$0xff]
      %v2482 = vld [vmem:[%s2256 + $0xe1] sm:$0xff]
      %v2483 = vld [vmem:[%s2256 + $0xf1] sm:$0xff]
      %v2484 = vld [vmem:[%s2256 + $0xf9] sm:$0xff]
      %v2485 = vld [vmem:[%s2256 + $0x109] sm:$0xff]
      %v2486 = vld [vmem:[%s2256 + $0x111] sm:$0xff]
      %v2487 = vld [vmem:[%s2256 + $0x121] sm:$0xff]
      %v2488 = vld [vmem:[%s2256 + $0x129] sm:$0xff]
      %v2489 = vld [vmem:[%s2256 + $0x139] sm:$0xff]
      %v2490 = vld [vmem:[%s2256 + $0x141] sm:$0xff]
      %v2491 = vld [vmem:[%s2256 + $0x151] sm:$0xff]
      %v2492 = vld [vmem:[%s2256 + $0x159] sm:$0xff]
      %v2493 = vld [vmem:[%s2256 + $0x169] sm:$0xff]
      %v2494 = vld [vmem:[%s2256 + $0x171] sm:$0xff]
      %s2495 = scalar_lea.vmem %s5, 28
      %v2496 = vld [vmem:[%s2495] sm:$0xf]
      %v2498 = vsel %vm491, %v2496, 0
      %v2501 = vsel %vm491, %v2463, 0
      %v2504 = vsel %vm491, %v2464, 0
      %v2507 = vsel %vm491, %v2465, 0
      %v2510 = vsel %vm491, %v2466, 0
      %v2513 = vsel %vm491, %v2467, 0
      %v2516 = vsel %vm491, %v2468, 0
      %v2519 = vsel %vm491, %v2469, 0
      %v2522 = vsel %vm491, %v2470, 0
      %v2525 = vsel %vm491, %v2471, 0
      %v2528 = vsel %vm491, %v2472, 0
      %v2531 = vsel %vm491, %v2473, 0
      %v2534 = vsel %vm491, %v2474, 0
      %v2537 = vsel %vm491, %v2475, 0
      %v2540 = vsel %vm491, %v2476, 0
      %v2543 = vsel %vm491, %v2477, 0
      %v2546 = vsel %vm491, %v2478, 0
      %v2549 = vsel %vm491, %v2479, 0
      %v2552 = vsel %vm491, %v2480, 0
      %v2555 = vsel %vm491, %v2481, 0
      %v2558 = vsel %vm491, %v2482, 0
      %v2561 = vsel %vm491, %v2483, 0
      %v2564 = vsel %vm491, %v2484, 0
      %v2567 = vsel %vm491, %v2485, 0
      %v2570 = vsel %vm491, %v2486, 0
      %v2573 = vsel %vm491, %v2487, 0
      %v2576 = vsel %vm491, %v2488, 0
      %v2579 = vsel %vm491, %v2489, 0
      %v2582 = vsel %vm491, %v2490, 0
      %v2585 = vsel %vm491, %v2491, 0
      %v2588 = vsel %vm491, %v2492, 0
      %v2591 = vsel %vm491, %v2493, 0
      %v2594 = vsel %vm491, %v2494, 0
      %2596 = vmatprep.subr.mxu0 0.0
      %2597 = vmatpush1.xpose.msra.mxu0 %v2501
      %2598 = vmatprep.subr.mxu0 0.0
      %2599 = vmatpush1.xpose.msra.mxu0 %v2504
      %2600 = vmatprep.subr.mxu0 0.0
      %2601 = vmatpush1.xpose.msra.mxu0 %v2507
      %2602 = vmatprep.subr.mxu0 0.0
      %2603 = vmatpush1.xpose.msra.mxu0 %v2510
      %2604 = vmatprep.subr.mxu0 0.0
      %2605 = vmatpush1.xpose.msra.mxu0 %v2513
      %2606 = vmatprep.subr.mxu0 0.0
      %2607 = vmatpush1.xpose.msra.mxu0 %v2516
      %2608 = vmatprep.subr.mxu0 0.0
      %2609 = vmatpush1.xpose.msra.mxu0 %v2519
      %2610 = vmatprep.subr.mxu0 0.0
      %2611 = vmatpush1.xpose.msra.mxu0 %v2522
      %2612 = vmatprep.subr.mxu0 0.0
      %2613 = vmatpush1.xpose.msra.mxu0 %v2525
      %2614 = vmatprep.subr.mxu0 0.0
      %2615 = vmatpush1.xpose.msra.mxu0 %v2528
      %2616 = vmatprep.subr.mxu0 0.0
      %2617 = vmatpush1.xpose.msra.mxu0 %v2531
      %2618 = vmatprep.subr.mxu0 0.0
      %2619 = vmatpush1.xpose.msra.mxu0 %v2534
      %2620 = vmatprep.subr.mxu0 0.0
      %2621 = vmatpush1.xpose.msra.mxu0 %v2537
      %2622 = vmatprep.subr.mxu0 0.0
      %2623 = vmatpush1.xpose.msra.mxu0 %v2540
      %2624 = vmatprep.subr.mxu0 0.0
      %2625 = vmatpush1.xpose.msra.mxu0 %v2543
      %2626 = vmatprep.subr.mxu0 0.0
      %2627 = vmatpush1.xpose.msra.mxu0 %v2546
      %2628 = vmatprep.subr.mxu0 0.0
      %2629 = vmatpush1.xpose.msra.mxu0 %v2549
      %2630 = vmatprep.subr.mxu0 0.0
      %2631 = vmatpush1.xpose.msra.mxu0 %v2552
      %2632 = vmatprep.subr.mxu0 0.0
      %2633 = vmatpush1.xpose.msra.mxu0 %v2555
      %2634 = vmatprep.subr.mxu0 0.0
      %2635 = vmatpush1.xpose.msra.mxu0 %v2558
      %2636 = vmatprep.subr.mxu0 0.0
      %2637 = vmatpush1.xpose.msra.mxu0 %v2561
      %2638 = vmatprep.subr.mxu0 0.0
      %2639 = vmatpush1.xpose.msra.mxu0 %v2564
      %2640 = vmatprep.subr.mxu0 0.0
      %2641 = vmatpush1.xpose.msra.mxu0 %v2567
      %2642 = vmatprep.subr.mxu0 0.0
      %2643 = vmatpush1.xpose.msra.mxu0 %v2570
      %2644 = vmatprep.subr.mxu0 0.0
      %2645 = vmatpush1.xpose.msra.mxu0 %v2573
      %2646 = vmatprep.subr.mxu0 0.0
      %2647 = vmatpush1.xpose.msra.mxu0 %v2576
      %2648 = vmatprep.subr.mxu0 0.0
      %2649 = vmatpush1.xpose.msra.mxu0 %v2579
      %2650 = vmatprep.subr.mxu0 0.0
      %2651 = vmatpush1.xpose.msra.mxu0 %v2582
      %2652 = vmatprep.subr.mxu0 0.0
      %2653 = vmatpush1.xpose.msra.mxu0 %v2585
      %2654 = vmatprep.subr.mxu0 0.0
      %2655 = vmatpush1.xpose.msra.mxu0 %v2588
      %2656 = vmatprep.subr.mxu0 0.0
      %2657 = vmatpush1.xpose.msra.mxu0 %v2591
      %2658 = vmatprep.subr.mxu0 0.0
      %2659 = vmatpush1.xpose.msra.mxu0 %v2594
      %2660 = vmatprep.mubr.f32.mxu0 0.0
      %2661 = vmatmul.mubr.f32.gmra.mrb[0].mxu0 %v2498
      %v2662 = vpop.f32.mrb[0].mxu0
      %v2663 = vadd.f32 0.0, %v2662
      %v2664 = vpop.f32.mrb[0].mxu0
      %v2665 = vadd.f32 0.0, %v2664
      %2666 = vdwg.mxu0
      %v2667 = vadd.f32 %v2461, %v2663
      %v2668 = vadd.f32 %v2462, %v2665
      %v2669 = vld [vmem:[%s2256 + $0x2] sm:$0xff]
      %v2670 = vld [vmem:[%s2256 + $0xa] sm:$0xff]
      %v2671 = vld [vmem:[%s2256 + $0x1a] sm:$0xff]
      %v2672 = vld [vmem:[%s2256 + $0x22] sm:$0xff]
      %v2673 = vld [vmem:[%s2256 + $0x32] sm:$0xff]
      %v2674 = vld [vmem:[%s2256 + $0x3a] sm:$0xff]
      %v2675 = vld [vmem:[%s2256 + $0x4a] sm:$0xff]
      %v2676 = vld [vmem:[%s2256 + $0x52] sm:$0xff]
      %v2677 = vld [vmem:[%s2256 + $0x62] sm:$0xff]
      %v2678 = vld [vmem:[%s2256 + $0x6a] sm:$0xff]
      %v2679 = vld [vmem:[%s2256 + $0x7a] sm:$0xff]
      %v2680 = vld [vmem:[%s2256 + $0x82] sm:$0xff]
      %v2681 = vld [vmem:[%s2256 + $0x92] sm:$0xff]
      %v2682 = vld [vmem:[%s2256 + $0x9a] sm:$0xff]
      %v2683 = vld [vmem:[%s2256 + $0xaa] sm:$0xff]
      %v2684 = vld [vmem:[%s2256 + $0xb2] sm:$0xff]
      %v2685 = vld [vmem:[%s2256 + $0xc2] sm:$0xff]
      %v2686 = vld [vmem:[%s2256 + $0xca] sm:$0xff]
      %v2687 = vld [vmem:[%s2256 + $0xda] sm:$0xff]
      %v2688 = vld [vmem:[%s2256 + $0xe2] sm:$0xff]
      %v2689 = vld [vmem:[%s2256 + $0xf2] sm:$0xff]
      %v2690 = vld [vmem:[%s2256 + $0xfa] sm:$0xff]
      %v2691 = vld [vmem:[%s2256 + $0x10a] sm:$0xff]
      %v2692 = vld [vmem:[%s2256 + $0x112] sm:$0xff]
      %v2693 = vld [vmem:[%s2256 + $0x122] sm:$0xff]
      %v2694 = vld [vmem:[%s2256 + $0x12a] sm:$0xff]
      %v2695 = vld [vmem:[%s2256 + $0x13a] sm:$0xff]
      %v2696 = vld [vmem:[%s2256 + $0x142] sm:$0xff]
      %v2697 = vld [vmem:[%s2256 + $0x152] sm:$0xff]
      %v2698 = vld [vmem:[%s2256 + $0x15a] sm:$0xff]
      %v2699 = vld [vmem:[%s2256 + $0x16a] sm:$0xff]
      %v2700 = vld [vmem:[%s2256 + $0x172] sm:$0xff]
      %s2701 = scalar_lea.vmem %s5, 32
      %v2702 = vld [vmem:[%s2701] sm:$0xf]
      %v2704 = vsel %vm491, %v2702, 0
      %v2707 = vsel %vm491, %v2669, 0
      %v2710 = vsel %vm491, %v2670, 0
      %v2713 = vsel %vm491, %v2671, 0
      %v2716 = vsel %vm491, %v2672, 0
      %v2719 = vsel %vm491, %v2673, 0
      %v2722 = vsel %vm491, %v2674, 0
      %v2725 = vsel %vm491, %v2675, 0
      %v2728 = vsel %vm491, %v2676, 0
      %v2731 = vsel %vm491, %v2677, 0
      %v2734 = vsel %vm491, %v2678, 0
      %v2737 = vsel %vm491, %v2679, 0
      %v2740 = vsel %vm491, %v2680, 0
      %v2743 = vsel %vm491, %v2681, 0
      %v2746 = vsel %vm491, %v2682, 0
      %v2749 = vsel %vm491, %v2683, 0
      %v2752 = vsel %vm491, %v2684, 0
      %v2755 = vsel %vm491, %v2685, 0
      %v2758 = vsel %vm491, %v2686, 0
      %v2761 = vsel %vm491, %v2687, 0
      %v2764 = vsel %vm491, %v2688, 0
      %v2767 = vsel %vm491, %v2689, 0
      %v2770 = vsel %vm491, %v2690, 0
      %v2773 = vsel %vm491, %v2691, 0
      %v2776 = vsel %vm491, %v2692, 0
      %v2779 = vsel %vm491, %v2693, 0
      %v2782 = vsel %vm491, %v2694, 0
      %v2785 = vsel %vm491, %v2695, 0
      %v2788 = vsel %vm491, %v2696, 0
      %v2791 = vsel %vm491, %v2697, 0
      %v2794 = vsel %vm491, %v2698, 0
      %v2797 = vsel %vm491, %v2699, 0
      %v2800 = vsel %vm491, %v2700, 0
      %2802 = vmatprep.subr.mxu0 0.0
      %2803 = vmatpush1.xpose.msra.mxu0 %v2707
      %2804 = vmatprep.subr.mxu0 0.0
      %2805 = vmatpush1.xpose.msra.mxu0 %v2710
      %2806 = vmatprep.subr.mxu0 0.0
      %2807 = vmatpush1.xpose.msra.mxu0 %v2713
      %2808 = vmatprep.subr.mxu0 0.0
      %2809 = vmatpush1.xpose.msra.mxu0 %v2716
      %2810 = vmatprep.subr.mxu0 0.0
      %2811 = vmatpush1.xpose.msra.mxu0 %v2719
      %2812 = vmatprep.subr.mxu0 0.0
      %2813 = vmatpush1.xpose.msra.mxu0 %v2722
      %2814 = vmatprep.subr.mxu0 0.0
      %2815 = vmatpush1.xpose.msra.mxu0 %v2725
      %2816 = vmatprep.subr.mxu0 0.0
      %2817 = vmatpush1.xpose.msra.mxu0 %v2728
      %2818 = vmatprep.subr.mxu0 0.0
      %2819 = vmatpush1.xpose.msra.mxu0 %v2731
      %2820 = vmatprep.subr.mxu0 0.0
      %2821 = vmatpush1.xpose.msra.mxu0 %v2734
      %2822 = vmatprep.subr.mxu0 0.0
      %2823 = vmatpush1.xpose.msra.mxu0 %v2737
      %2824 = vmatprep.subr.mxu0 0.0
      %2825 = vmatpush1.xpose.msra.mxu0 %v2740
      %2826 = vmatprep.subr.mxu0 0.0
      %2827 = vmatpush1.xpose.msra.mxu0 %v2743
      %2828 = vmatprep.subr.mxu0 0.0
      %2829 = vmatpush1.xpose.msra.mxu0 %v2746
      %2830 = vmatprep.subr.mxu0 0.0
      %2831 = vmatpush1.xpose.msra.mxu0 %v2749
      %2832 = vmatprep.subr.mxu0 0.0
      %2833 = vmatpush1.xpose.msra.mxu0 %v2752
      %2834 = vmatprep.subr.mxu0 0.0
      %2835 = vmatpush1.xpose.msra.mxu0 %v2755
      %2836 = vmatprep.subr.mxu0 0.0
      %2837 = vmatpush1.xpose.msra.mxu0 %v2758
      %2838 = vmatprep.subr.mxu0 0.0
      %2839 = vmatpush1.xpose.msra.mxu0 %v2761
      %2840 = vmatprep.subr.mxu0 0.0
      %2841 = vmatpush1.xpose.msra.mxu0 %v2764
      %2842 = vmatprep.subr.mxu0 0.0
      %2843 = vmatpush1.xpose.msra.mxu0 %v2767
      %2844 = vmatprep.subr.mxu0 0.0
      %2845 = vmatpush1.xpose.msra.mxu0 %v2770
      %2846 = vmatprep.subr.mxu0 0.0
      %2847 = vmatpush1.xpose.msra.mxu0 %v2773
      %2848 = vmatprep.subr.mxu0 0.0
      %2849 = vmatpush1.xpose.msra.mxu0 %v2776
      %2850 = vmatprep.subr.mxu0 0.0
      %2851 = vmatpush1.xpose.msra.mxu0 %v2779
      %2852 = vmatprep.subr.mxu0 0.0
      %2853 = vmatpush1.xpose.msra.mxu0 %v2782
      %2854 = vmatprep.subr.mxu0 0.0
      %2855 = vmatpush1.xpose.msra.mxu0 %v2785
      %2856 = vmatprep.subr.mxu0 0.0
      %2857 = vmatpush1.xpose.msra.mxu0 %v2788
      %2858 = vmatprep.subr.mxu0 0.0
      %2859 = vmatpush1.xpose.msra.mxu0 %v2791
      %2860 = vmatprep.subr.mxu0 0.0
      %2861 = vmatpush1.xpose.msra.mxu0 %v2794
      %2862 = vmatprep.subr.mxu0 0.0
      %2863 = vmatpush1.xpose.msra.mxu0 %v2797
      %2864 = vmatprep.subr.mxu0 0.0
      %2865 = vmatpush1.xpose.msra.mxu0 %v2800
      %2866 = vmatprep.mubr.f32.mxu0 0.0
      %2867 = vmatmul.mubr.f32.gmra.mrb[0].mxu0 %v2704
      %v2868 = vpop.f32.mrb[0].mxu0
      %v2869 = vadd.f32 0.0, %v2868
      %v2870 = vpop.f32.mrb[0].mxu0
      %v2871 = vadd.f32 0.0, %v2870
      %2872 = vdwg.mxu0
      %v2873 = vadd.f32 %v2667, %v2869
      %v2874 = vadd.f32 %v2668, %v2871
      %2875 = vst [vmem:[%s426] sm:$0xf] %v2873
      %2876 = vst [vmem:[%s426 + $0x8] sm:$0xf] %v2874
      %v2877 = vld [vmem:[%s416] sm:$0xff]
      %v2878 = vld [vmem:[%s416 + $0x8] sm:$0xff]
      %v2879 = vld [vmem:[%s416 + $0x10] sm:$0xff]
      %v2880 = vld [vmem:[%s416 + $0x18] sm:$0xff]
      %v2881 = vld [vmem:[%s416 + $0x20] sm:$0xff]
      %v2882 = vld [vmem:[%s416 + $0x28] sm:$0xff]
      %v2883 = vld [vmem:[%s416 + $0x30] sm:$0xff]
      %v2884 = vld [vmem:[%s416 + $0x38] sm:$0xff]
      %v2885 = vld [vmem:[%s3] sm:$0xff]
      %v2886 = vld [vmem:[%s3 + $0x8] sm:$0xff]
      %v2887 = vld [vmem:[%s3 + $0x10] sm:$0xff]
      %v2888 = vld [vmem:[%s3 + $0x18] sm:$0xff]
      %v2889 = vld [vmem:[%s3 + $0x20] sm:$0xff]
      %v2890 = vld [vmem:[%s3 + $0x28] sm:$0xff]
      %v2891 = vld [vmem:[%s3 + $0x30] sm:$0xff]
      %v2892 = vld [vmem:[%s3 + $0x38] sm:$0xff]
      %v2893 = vld [vmem:[%s3 + $0x40] sm:$0xff]
      %v2894 = vld [vmem:[%s3 + $0x48] sm:$0xff]
      %v2895 = vld [vmem:[%s3 + $0x50] sm:$0xff]
      %v2896 = vld [vmem:[%s3 + $0x58] sm:$0xff]
      %v2897 = vld [vmem:[%s3 + $0x60] sm:$0xff]
      %v2898 = vld [vmem:[%s3 + $0x68] sm:$0xff]
      %v2899 = vld [vmem:[%s3 + $0x70] sm:$0xff]
      %v2900 = vld [vmem:[%s3 + $0x78] sm:$0xff]
      %v2901 = vld [vmem:[%s3 + $0x80] sm:$0xff]
      %v2902 = vld [vmem:[%s3 + $0x88] sm:$0xff]
      %v2903 = vld [vmem:[%s3 + $0x90] sm:$0xff]
      %v2904 = vld [vmem:[%s3 + $0x98] sm:$0xff]
      %v2905 = vld [vmem:[%s3 + $0xa0] sm:$0xff]
      %v2906 = vld [vmem:[%s3 + $0xa8] sm:$0xff]
      %v2907 = vld [vmem:[%s3 + $0xb0] sm:$0xff]
      %v2908 = vld [vmem:[%s3 + $0xb8] sm:$0xff]
      %v2909 = vld [vmem:[%s3 + $0xc0] sm:$0xff]
      %v2910 = vld [vmem:[%s3 + $0xc8] sm:$0xff]
      %v2911 = vld [vmem:[%s3 + $0xd0] sm:$0xff]
      %v2912 = vld [vmem:[%s3 + $0xd8] sm:$0xff]
      %v2913 = vld [vmem:[%s3 + $0xe0] sm:$0xff]
      %v2914 = vld [vmem:[%s3 + $0xe8] sm:$0xff]
      %v2915 = vld [vmem:[%s3 + $0xf0] sm:$0xff]
      %v2916 = vld [vmem:[%s3 + $0xf8] sm:$0xff]
      %vm2917 = vcmask 523264
      %v2919 = vsel %vm2917, %v2885, 0
      %v2922 = vsel %vm2917, %v2886, 0
      %v2925 = vsel %vm2917, %v2887, 0
      %v2928 = vsel %vm2917, %v2888, 0
      %v2931 = vsel %vm2917, %v2889, 0
      %v2934 = vsel %vm2917, %v2890, 0
      %v2937 = vsel %vm2917, %v2891, 0
      %v2940 = vsel %vm2917, %v2892, 0
      %v2943 = vsel %vm2917, %v2893, 0
      %v2946 = vsel %vm2917, %v2894, 0
      %v2949 = vsel %vm2917, %v2895, 0
      %v2952 = vsel %vm2917, %v2896, 0
      %v2955 = vsel %vm2917, %v2897, 0
      %v2958 = vsel %vm2917, %v2898, 0
      %v2961 = vsel %vm2917, %v2899, 0
      %v2964 = vsel %vm2917, %v2900, 0
      %v2967 = vsel %vm2917, %v2901, 0
      %v2970 = vsel %vm2917, %v2902, 0
      %v2973 = vsel %vm2917, %v2903, 0
      %v2976 = vsel %vm2917, %v2904, 0
      %v2979 = vsel %vm2917, %v2905, 0
      %v2982 = vsel %vm2917, %v2906, 0
      %v2985 = vsel %vm2917, %v2907, 0
      %v2988 = vsel %vm2917, %v2908, 0
      %v2991 = vsel %vm2917, %v2909, 0
      %v2994 = vsel %vm2917, %v2910, 0
      %v2997 = vsel %vm2917, %v2911, 0
      %v3000 = vsel %vm2917, %v2912, 0
      %v3003 = vsel %vm2917, %v2913, 0
      %v3006 = vsel %vm2917, %v2914, 0
      %v3009 = vsel %vm2917, %v2915, 0
      %v3012 = vsel %vm2917, %v2916, 0
      %3014 = vmatprep.subr.mxu0 0.0
      %3015 = vmatpush1.msra.mxu0 %v2877
      %3016 = vmatprep.subr.mxu0 0.0
      %3017 = vmatpush1.msra.mxu0 %v2878
      %3018 = vmatprep.subr.mxu0 0.0
      %3019 = vmatpush1.msra.mxu0 %v2879
      %3020 = vmatprep.subr.mxu0 0.0
      %3021 = vmatpush1.msra.mxu0 %v2880
      %3022 = vmatprep.subr.mxu0 0.0
      %3023 = vmatpush1.msra.mxu0 %v2881
      %3024 = vmatprep.subr.mxu0 0.0
      %3025 = vmatpush1.msra.mxu0 %v2882
      %3026 = vmatprep.subr.mxu0 0.0
      %3027 = vmatpush1.msra.mxu0 %v2883
      %3028 = vmatprep.subr.mxu0 0.0
      %3029 = vmatpush1.msra.mxu0 %v2884
      %3030 = vmatprep.subr.mxu0 0.0
      %3031 = vmatpush1.msra.mxu0 0.0
      %3032 = vmatprep.subr.mxu0 0.0
      %3033 = vmatpush1.msra.mxu0 0.0
      %3034 = vmatprep.subr.mxu0 0.0
      %3035 = vmatpush1.msra.mxu0 0.0
      %3036 = vmatprep.subr.mxu0 0.0
      %3037 = vmatpush1.msra.mxu0 0.0
      %3038 = vmatprep.subr.mxu0 0.0
      %3039 = vmatpush1.msra.mxu0 0.0
      %3040 = vmatprep.subr.mxu0 0.0
      %3041 = vmatpush1.msra.mxu0 0.0
      %3042 = vmatprep.subr.mxu0 0.0
      %3043 = vmatpush1.msra.mxu0 0.0
      %3044 = vmatprep.subr.mxu0 0.0
      %3045 = vmatpush1.msra.mxu0 0.0
      %3046 = vmatprep.subr.mxu0 0.0
      %3047 = vmatpush1.msra.mxu0 0.0
      %3048 = vmatprep.subr.mxu0 0.0
      %3049 = vmatpush1.msra.mxu0 0.0
      %3050 = vmatprep.subr.mxu0 0.0
      %3051 = vmatpush1.msra.mxu0 0.0
      %3052 = vmatprep.subr.mxu0 0.0
      %3053 = vmatpush1.msra.mxu0 0.0
      %3054 = vmatprep.subr.mxu0 0.0
      %3055 = vmatpush1.msra.mxu0 0.0
      %3056 = vmatprep.subr.mxu0 0.0
      %3057 = vmatpush1.msra.mxu0 0.0
      %3058 = vmatprep.subr.mxu0 0.0
      %3059 = vmatpush1.msra.mxu0 0.0
      %3060 = vmatprep.subr.mxu0 0.0
      %3061 = vmatpush1.msra.mxu0 0.0
      %3062 = vmatprep.subr.mxu0 0.0
      %3063 = vmatpush1.msra.mxu0 0.0
      %3064 = vmatprep.subr.mxu0 0.0
      %3065 = vmatpush1.msra.mxu0 0.0
      %3066 = vmatprep.subr.mxu0 0.0
      %3067 = vmatpush1.msra.mxu0 0.0
      %3068 = vmatprep.subr.mxu0 0.0
      %3069 = vmatpush1.msra.mxu0 0.0
      %3070 = vmatprep.subr.mxu0 0.0
      %3071 = vmatpush1.msra.mxu0 0.0
      %3072 = vmatprep.subr.mxu0 0.0
      %3073 = vmatpush1.msra.mxu0 0.0
      %3074 = vmatprep.subr.mxu0 0.0
      %3075 = vmatpush1.msra.mxu0 0.0
      %3076 = vmatprep.subr.mxu0 0.0
      %3077 = vmatpush1.msra.mxu0 0.0
      %3078 = vmatprep.mubr.f32.mxu0 0.0
      %3079 = vmatmul.mubr.f32.gmra.mrb[0].mxu0 %v2919
      %v3080 = vpop.f32.mrb[0].mxu0
      %v3081 = vadd.f32 0.0, %v3080
      %v3082 = vpop.f32.mrb[0].mxu0
      %3083 = vmatprep.mubr.f32.mxu0 0.0
      %3084 = vmatmul.mubr.f32.gmra.mrb[0].mxu0 %v2922
      %v3085 = vpop.f32.mrb[0].mxu0
      %v3086 = vadd.f32 0.0, %v3085
      %v3087 = vpop.f32.mrb[0].mxu0
      %3088 = vmatprep.mubr.f32.mxu0 0.0
      %3089 = vmatmul.mubr.f32.gmra.mrb[0].mxu0 %v2925
      %v3090 = vpop.f32.mrb[0].mxu0
      %v3091 = vadd.f32 0.0, %v3090
      %v3092 = vpop.f32.mrb[0].mxu0
      %3093 = vmatprep.mubr.f32.mxu0 0.0
      %3094 = vmatmul.mubr.f32.gmra.mrb[0].mxu0 %v2928
      %v3095 = vpop.f32.mrb[0].mxu0
      %v3096 = vadd.f32 0.0, %v3095
      %v3097 = vpop.f32.mrb[0].mxu0
      %3098 = vmatprep.mubr.f32.mxu0 0.0
      %3099 = vmatmul.mubr.f32.gmra.mrb[0].mxu0 %v2931
      %v3100 = vpop.f32.mrb[0].mxu0
      %v3101 = vadd.f32 0.0, %v3100
      %v3102 = vpop.f32.mrb[0].mxu0
      %3103 = vmatprep.mubr.f32.mxu0 0.0
      %3104 = vmatmul.mubr.f32.gmra.mrb[0].mxu0 %v2934
      %v3105 = vpop.f32.mrb[0].mxu0
      %v3106 = vadd.f32 0.0, %v3105
      %v3107 = vpop.f32.mrb[0].mxu0
      %3108 = vmatprep.mubr.f32.mxu0 0.0
      %3109 = vmatmul.mubr.f32.gmra.mrb[0].mxu0 %v2937
      %v3110 = vpop.f32.mrb[0].mxu0
      %v3111 = vadd.f32 0.0, %v3110
      %v3112 = vpop.f32.mrb[0].mxu0
      %3113 = vmatprep.mubr.f32.mxu0 0.0
      %3114 = vmatmul.mubr.f32.gmra.mrb[0].mxu0 %v2940
      %v3115 = vpop.f32.mrb[0].mxu0
      %v3116 = vadd.f32 0.0, %v3115
      %v3117 = vpop.f32.mrb[0].mxu0
      %3118 = vmatprep.mubr.f32.mxu0 0.0
      %3119 = vmatmul.mubr.f32.gmra.mrb[0].mxu0 %v2943
      %v3120 = vpop.f32.mrb[0].mxu0
      %v3121 = vadd.f32 0.0, %v3120
      %v3122 = vpop.f32.mrb[0].mxu0
      %3123 = vmatprep.mubr.f32.mxu0 0.0
      %3124 = vmatmul.mubr.f32.gmra.mrb[0].mxu0 %v2946
      %v3125 = vpop.f32.mrb[0].mxu0
      %v3126 = vadd.f32 0.0, %v3125
      %v3127 = vpop.f32.mrb[0].mxu0
      %3128 = vmatprep.mubr.f32.mxu0 0.0
      %3129 = vmatmul.mubr.f32.gmra.mrb[0].mxu0 %v2949
      %v3130 = vpop.f32.mrb[0].mxu0
      %v3131 = vadd.f32 0.0, %v3130
      %v3132 = vpop.f32.mrb[0].mxu0
      %3133 = vmatprep.mubr.f32.mxu0 0.0
      %3134 = vmatmul.mubr.f32.gmra.mrb[0].mxu0 %v2952
      %v3135 = vpop.f32.mrb[0].mxu0
      %v3136 = vadd.f32 0.0, %v3135
      %v3137 = vpop.f32.mrb[0].mxu0
      %3138 = vmatprep.mubr.f32.mxu0 0.0
      %3139 = vmatmul.mubr.f32.gmra.mrb[0].mxu0 %v2955
      %v3140 = vpop.f32.mrb[0].mxu0
      %v3141 = vadd.f32 0.0, %v3140
      %v3142 = vpop.f32.mrb[0].mxu0
      %3143 = vmatprep.mubr.f32.mxu0 0.0
      %3144 = vmatmul.mubr.f32.gmra.mrb[0].mxu0 %v2958
      %v3145 = vpop.f32.mrb[0].mxu0
      %v3146 = vadd.f32 0.0, %v3145
      %v3147 = vpop.f32.mrb[0].mxu0
      %3148 = vmatprep.mubr.f32.mxu0 0.0
      %3149 = vmatmul.mubr.f32.gmra.mrb[0].mxu0 %v2961
      %v3150 = vpop.f32.mrb[0].mxu0
      %v3151 = vadd.f32 0.0, %v3150
      %v3152 = vpop.f32.mrb[0].mxu0
      %3153 = vmatprep.mubr.f32.mxu0 0.0
      %3154 = vmatmul.mubr.f32.gmra.mrb[0].mxu0 %v2964
      %v3155 = vpop.f32.mrb[0].mxu0
      %v3156 = vadd.f32 0.0, %v3155
      %v3157 = vpop.f32.mrb[0].mxu0
      %3158 = vmatprep.mubr.f32.mxu0 0.0
      %3159 = vmatmul.mubr.f32.gmra.mrb[0].mxu0 %v2967
      %v3160 = vpop.f32.mrb[0].mxu0
      %v3161 = vadd.f32 0.0, %v3160
      %v3162 = vpop.f32.mrb[0].mxu0
      %3163 = vmatprep.mubr.f32.mxu0 0.0
      %3164 = vmatmul.mubr.f32.gmra.mrb[0].mxu0 %v2970
      %v3165 = vpop.f32.mrb[0].mxu0
      %v3166 = vadd.f32 0.0, %v3165
      %v3167 = vpop.f32.mrb[0].mxu0
      %3168 = vmatprep.mubr.f32.mxu0 0.0
      %3169 = vmatmul.mubr.f32.gmra.mrb[0].mxu0 %v2973
      %v3170 = vpop.f32.mrb[0].mxu0
      %v3171 = vadd.f32 0.0, %v3170
      %v3172 = vpop.f32.mrb[0].mxu0
      %3173 = vmatprep.mubr.f32.mxu0 0.0
      %3174 = vmatmul.mubr.f32.gmra.mrb[0].mxu0 %v2976
      %v3175 = vpop.f32.mrb[0].mxu0
      %v3176 = vadd.f32 0.0, %v3175
      %v3177 = vpop.f32.mrb[0].mxu0
      %3178 = vmatprep.mubr.f32.mxu0 0.0
      %3179 = vmatmul.mubr.f32.gmra.mrb[0].mxu0 %v2979
      %v3180 = vpop.f32.mrb[0].mxu0
      %v3181 = vadd.f32 0.0, %v3180
      %v3182 = vpop.f32.mrb[0].mxu0
      %3183 = vmatprep.mubr.f32.mxu0 0.0
      %3184 = vmatmul.mubr.f32.gmra.mrb[0].mxu0 %v2982
      %v3185 = vpop.f32.mrb[0].mxu0
      %v3186 = vadd.f32 0.0, %v3185
      %v3187 = vpop.f32.mrb[0].mxu0
      %3188 = vmatprep.mubr.f32.mxu0 0.0
      %3189 = vmatmul.mubr.f32.gmra.mrb[0].mxu0 %v2985
      %v3190 = vpop.f32.mrb[0].mxu0
      %v3191 = vadd.f32 0.0, %v3190
      %v3192 = vpop.f32.mrb[0].mxu0
      %3193 = vmatprep.mubr.f32.mxu0 0.0
      %3194 = vmatmul.mubr.f32.gmra.mrb[0].mxu0 %v2988
      %v3195 = vpop.f32.mrb[0].mxu0
      %v3196 = vadd.f32 0.0, %v3195
      %v3197 = vpop.f32.mrb[0].mxu0
      %3198 = vmatprep.mubr.f32.mxu0 0.0
      %3199 = vmatmul.mubr.f32.gmra.mrb[0].mxu0 %v2991
      %v3200 = vpop.f32.mrb[0].mxu0
      %v3201 = vadd.f32 0.0, %v3200
      %v3202 = vpop.f32.mrb[0].mxu0
      %3203 = vmatprep.mubr.f32.mxu0 0.0
      %3204 = vmatmul.mubr.f32.gmra.mrb[0].mxu0 %v2994
      %v3205 = vpop.f32.mrb[0].mxu0
      %v3206 = vadd.f32 0.0, %v3205
      %v3207 = vpop.f32.mrb[0].mxu0
      %3208 = vmatprep.mubr.f32.mxu0 0.0
      %3209 = vmatmul.mubr.f32.gmra.mrb[0].mxu0 %v2997
      %v3210 = vpop.f32.mrb[0].mxu0
      %v3211 = vadd.f32 0.0, %v3210
      %v3212 = vpop.f32.mrb[0].mxu0
      %3213 = vmatprep.mubr.f32.mxu0 0.0
      %3214 = vmatmul.mubr.f32.gmra.mrb[0].mxu0 %v3000
      %v3215 = vpop.f32.mrb[0].mxu0
      %v3216 = vadd.f32 0.0, %v3215
      %v3217 = vpop.f32.mrb[0].mxu0
      %3218 = vmatprep.mubr.f32.mxu0 0.0
      %3219 = vmatmul.mubr.f32.gmra.mrb[0].mxu0 %v3003
      %v3220 = vpop.f32.mrb[0].mxu0
      %v3221 = vadd.f32 0.0, %v3220
      %v3222 = vpop.f32.mrb[0].mxu0
      %3223 = vmatprep.mubr.f32.mxu0 0.0
      %3224 = vmatmul.mubr.f32.gmra.mrb[0].mxu0 %v3006
      %v3225 = vpop.f32.mrb[0].mxu0
      %v3226 = vadd.f32 0.0, %v3225
      %v3227 = vpop.f32.mrb[0].mxu0
      %3228 = vmatprep.mubr.f32.mxu0 0.0
      %3229 = vmatmul.mubr.f32.gmra.mrb[0].mxu0 %v3009
      %v3230 = vpop.f32.mrb[0].mxu0
      %v3231 = vadd.f32 0.0, %v3230
      %v3232 = vpop.f32.mrb[0].mxu0
      %3233 = vmatprep.mubr.f32.mxu0 0.0
      %3234 = vmatmul.mubr.f32.gmra.mrb[0].mxu0 %v3012
      %v3235 = vpop.f32.mrb[0].mxu0
      %v3236 = vadd.f32 0.0, %v3235
      %v3237 = vpop.f32.mrb[0].mxu0
      %3238 = vdwg.mxu0
      %v3239 = vmul.f32 %v3081, %v3081
      %v3240 = vmul.f32 %v3086, %v3086
      %v3241 = vmul.f32 %v3091, %v3091
      %v3242 = vmul.f32 %v3096, %v3096
      %v3243 = vmul.f32 %v3101, %v3101
      %v3244 = vmul.f32 %v3106, %v3106
      %v3245 = vmul.f32 %v3111, %v3111
      %v3246 = vmul.f32 %v3116, %v3116
      %v3247 = vmul.f32 %v3121, %v3121
      %v3248 = vmul.f32 %v3126, %v3126
      %v3249 = vmul.f32 %v3131, %v3131
      %v3250 = vmul.f32 %v3136, %v3136
      %v3251 = vmul.f32 %v3141, %v3141
      %v3252 = vmul.f32 %v3146, %v3146
      %v3253 = vmul.f32 %v3151, %v3151
      %v3254 = vmul.f32 %v3156, %v3156
      %v3255 = vmul.f32 %v3161, %v3161
      %v3256 = vmul.f32 %v3166, %v3166
      %v3257 = vmul.f32 %v3171, %v3171
      %v3258 = vmul.f32 %v3176, %v3176
      %v3259 = vmul.f32 %v3181, %v3181
      %v3260 = vmul.f32 %v3186, %v3186
      %v3261 = vmul.f32 %v3191, %v3191
      %v3262 = vmul.f32 %v3196, %v3196
      %v3263 = vmul.f32 %v3201, %v3201
      %v3264 = vmul.f32 %v3206, %v3206
      %v3265 = vmul.f32 %v3211, %v3211
      %v3266 = vmul.f32 %v3216, %v3216
      %v3267 = vmul.f32 %v3221, %v3221
      %v3268 = vmul.f32 %v3226, %v3226
      %v3269 = vmul.f32 %v3231, %v3231
      %v3270 = vmul.f32 %v3236, %v3236
      %vm3271 = vcmask 64512
      %v3272 = vsel %vm3271, %v3239, 0.0
      %3273 = vadd.xlane.f32.xlu0 %v3272
      %v3274 = vpop.xlane.xlu0 %3273
      %v3275 = vsel %vm3271, %v3240, 0.0
      %3276 = vadd.xlane.f32.xlu0 %v3275
      %v3277 = vpop.xlane.xlu0 %3276
      %v3278 = vsel %vm3271, %v3241, 0.0
      %3279 = vadd.xlane.f32.xlu0 %v3278
      %v3280 = vpop.xlane.xlu0 %3279
      %v3281 = vsel %vm3271, %v3242, 0.0
      %3282 = vadd.xlane.f32.xlu0 %v3281
      %v3283 = vpop.xlane.xlu0 %3282
      %v3284 = vsel %vm3271, %v3243, 0.0
      %3285 = vadd.xlane.f32.xlu0 %v3284
      %v3286 = vpop.xlane.xlu0 %3285
      %v3287 = vsel %vm3271, %v3244, 0.0
      %3288 = vadd.xlane.f32.xlu0 %v3287
      %v3289 = vpop.xlane.xlu0 %3288
      %v3290 = vsel %vm3271, %v3245, 0.0
      %3291 = vadd.xlane.f32.xlu0 %v3290
      %v3292 = vpop.xlane.xlu0 %3291
      %v3293 = vsel %vm3271, %v3246, 0.0
      %3294 = vadd.xlane.f32.xlu0 %v3293
      %v3295 = vpop.xlane.xlu0 %3294
      %v3296 = vsel %vm3271, %v3247, 0.0
      %3297 = vadd.xlane.f32.xlu0 %v3296
      %v3298 = vpop.xlane.xlu0 %3297
      %v3299 = vsel %vm3271, %v3248, 0.0
      %3300 = vadd.xlane.f32.xlu0 %v3299
      %v3301 = vpop.xlane.xlu0 %3300
      %v3302 = vsel %vm3271, %v3249, 0.0
      %3303 = vadd.xlane.f32.xlu0 %v3302
      %v3304 = vpop.xlane.xlu0 %3303
      %v3305 = vsel %vm3271, %v3250, 0.0
      %3306 = vadd.xlane.f32.xlu0 %v3305
      %v3307 = vpop.xlane.xlu0 %3306
      %v3308 = vsel %vm3271, %v3251, 0.0
      %3309 = vadd.xlane.f32.xlu0 %v3308
      %v3310 = vpop.xlane.xlu0 %3309
      %v3311 = vsel %vm3271, %v3252, 0.0
      %3312 = vadd.xlane.f32.xlu0 %v3311
      %v3313 = vpop.xlane.xlu0 %3312
      %v3314 = vsel %vm3271, %v3253, 0.0
      %3315 = vadd.xlane.f32.xlu0 %v3314
      %v3316 = vpop.xlane.xlu0 %3315
      %v3317 = vsel %vm3271, %v3254, 0.0
      %3318 = vadd.xlane.f32.xlu0 %v3317
      %v3319 = vpop.xlane.xlu0 %3318
      %v3320 = vsel %vm3271, %v3255, 0.0
      %3321 = vadd.xlane.f32.xlu0 %v3320
      %v3322 = vpop.xlane.xlu0 %3321
      %v3323 = vsel %vm3271, %v3256, 0.0
      %3324 = vadd.xlane.f32.xlu0 %v3323
      %v3325 = vpop.xlane.xlu0 %3324
      %v3326 = vsel %vm3271, %v3257, 0.0
      %3327 = vadd.xlane.f32.xlu0 %v3326
      %v3328 = vpop.xlane.xlu0 %3327
      %v3329 = vsel %vm3271, %v3258, 0.0
      %3330 = vadd.xlane.f32.xlu0 %v3329
      %v3331 = vpop.xlane.xlu0 %3330
      %v3332 = vsel %vm3271, %v3259, 0.0
      %3333 = vadd.xlane.f32.xlu0 %v3332
      %v3334 = vpop.xlane.xlu0 %3333
      %v3335 = vsel %vm3271, %v3260, 0.0
      %3336 = vadd.xlane.f32.xlu0 %v3335
      %v3337 = vpop.xlane.xlu0 %3336
      %v3338 = vsel %vm3271, %v3261, 0.0
      %3339 = vadd.xlane.f32.xlu0 %v3338
      %v3340 = vpop.xlane.xlu0 %3339
      %v3341 = vsel %vm3271, %v3262, 0.0
      %3342 = vadd.xlane.f32.xlu0 %v3341
      %v3343 = vpop.xlane.xlu0 %3342
      %v3344 = vsel %vm3271, %v3263, 0.0
      %3345 = vadd.xlane.f32.xlu0 %v3344
      %v3346 = vpop.xlane.xlu0 %3345
      %v3347 = vsel %vm3271, %v3264, 0.0
      %3348 = vadd.xlane.f32.xlu0 %v3347
      %v3349 = vpop.xlane.xlu0 %3348
      %v3350 = vsel %vm3271, %v3265, 0.0
      %3351 = vadd.xlane.f32.xlu0 %v3350
      %v3352 = vpop.xlane.xlu0 %3351
      %v3353 = vsel %vm3271, %v3266, 0.0
      %3354 = vadd.xlane.f32.xlu0 %v3353
      %v3355 = vpop.xlane.xlu0 %3354
      %v3356 = vsel %vm3271, %v3267, 0.0
      %3357 = vadd.xlane.f32.xlu0 %v3356
      %v3358 = vpop.xlane.xlu0 %3357
      %v3359 = vsel %vm3271, %v3268, 0.0
      %3360 = vadd.xlane.f32.xlu0 %v3359
      %v3361 = vpop.xlane.xlu0 %3360
      %v3362 = vsel %vm3271, %v3269, 0.0
      %3363 = vadd.xlane.f32.xlu0 %v3362
      %v3364 = vpop.xlane.xlu0 %3363
      %v3365 = vsel %vm3271, %v3270, 0.0
      %3366 = vadd.xlane.f32.xlu0 %v3365
      %v3367 = vpop.xlane.xlu0 %3366
      %v3368 = vrsqrt.pop %v3274
      %v3369 = vmul.f32 %v3274, %v3368
      %vm3370 = vcmp.eq.f32.partialorder %v3274, inf
      %v3371 = vsel %vm3370, %v3274, %v3369
      %vm3372 = vcmp.eq.f32.partialorder %v3274, 0.0
      %v3373 = vand.u32 %v3274, 2147483648
      %v3374 = vsel %vm3372, %v3373, %v3371
      %v3375 = vrsqrt.pop %v3277
      %v3376 = vmul.f32 %v3277, %v3375
      %vm3377 = vcmp.eq.f32.partialorder %v3277, inf
      %v3378 = vsel %vm3377, %v3277, %v3376
      %vm3379 = vcmp.eq.f32.partialorder %v3277, 0.0
      %v3380 = vand.u32 %v3277, 2147483648
      %v3381 = vsel %vm3379, %v3380, %v3378
      %v3382 = vrsqrt.pop %v3280
      %v3383 = vmul.f32 %v3280, %v3382
      %vm3384 = vcmp.eq.f32.partialorder %v3280, inf
      %v3385 = vsel %vm3384, %v3280, %v3383
      %vm3386 = vcmp.eq.f32.partialorder %v3280, 0.0
      %v3387 = vand.u32 %v3280, 2147483648
      %v3388 = vsel %vm3386, %v3387, %v3385
      %v3389 = vrsqrt.pop %v3283
      %v3390 = vmul.f32 %v3283, %v3389
      %vm3391 = vcmp.eq.f32.partialorder %v3283, inf
      %v3392 = vsel %vm3391, %v3283, %v3390
      %vm3393 = vcmp.eq.f32.partialorder %v3283, 0.0
      %v3394 = vand.u32 %v3283, 2147483648
      %v3395 = vsel %vm3393, %v3394, %v3392
      %v3396 = vrsqrt.pop %v3286
      %v3397 = vmul.f32 %v3286, %v3396
      %vm3398 = vcmp.eq.f32.partialorder %v3286, inf
      %v3399 = vsel %vm3398, %v3286, %v3397
      %vm3400 = vcmp.eq.f32.partialorder %v3286, 0.0
      %v3401 = vand.u32 %v3286, 2147483648
      %v3402 = vsel %vm3400, %v3401, %v3399
      %v3403 = vrsqrt.pop %v3289
      %v3404 = vmul.f32 %v3289, %v3403
      %vm3405 = vcmp.eq.f32.partialorder %v3289, inf
      %v3406 = vsel %vm3405, %v3289, %v3404
      %vm3407 = vcmp.eq.f32.partialorder %v3289, 0.0
      %v3408 = vand.u32 %v3289, 2147483648
      %v3409 = vsel %vm3407, %v3408, %v3406
      %v3410 = vrsqrt.pop %v3292
      %v3411 = vmul.f32 %v3292, %v3410
      %vm3412 = vcmp.eq.f32.partialorder %v3292, inf
      %v3413 = vsel %vm3412, %v3292, %v3411
      %vm3414 = vcmp.eq.f32.partialorder %v3292, 0.0
      %v3415 = vand.u32 %v3292, 2147483648
      %v3416 = vsel %vm3414, %v3415, %v3413
      %v3417 = vrsqrt.pop %v3295
      %v3418 = vmul.f32 %v3295, %v3417
      %vm3419 = vcmp.eq.f32.partialorder %v3295, inf
      %v3420 = vsel %vm3419, %v3295, %v3418
      %vm3421 = vcmp.eq.f32.partialorder %v3295, 0.0
      %v3422 = vand.u32 %v3295, 2147483648
      %v3423 = vsel %vm3421, %v3422, %v3420
      %v3424 = vrsqrt.pop %v3298
      %v3425 = vmul.f32 %v3298, %v3424
      %vm3426 = vcmp.eq.f32.partialorder %v3298, inf
      %v3427 = vsel %vm3426, %v3298, %v3425
      %vm3428 = vcmp.eq.f32.partialorder %v3298, 0.0
      %v3429 = vand.u32 %v3298, 2147483648
      %v3430 = vsel %vm3428, %v3429, %v3427
      %v3431 = vrsqrt.pop %v3301
      %v3432 = vmul.f32 %v3301, %v3431
      %vm3433 = vcmp.eq.f32.partialorder %v3301, inf
      %v3434 = vsel %vm3433, %v3301, %v3432
      %vm3435 = vcmp.eq.f32.partialorder %v3301, 0.0
      %v3436 = vand.u32 %v3301, 2147483648
      %v3437 = vsel %vm3435, %v3436, %v3434
      %v3438 = vrsqrt.pop %v3304
      %v3439 = vmul.f32 %v3304, %v3438
      %vm3440 = vcmp.eq.f32.partialorder %v3304, inf
      %v3441 = vsel %vm3440, %v3304, %v3439
      %vm3442 = vcmp.eq.f32.partialorder %v3304, 0.0
      %v3443 = vand.u32 %v3304, 2147483648
      %v3444 = vsel %vm3442, %v3443, %v3441
      %v3445 = vrsqrt.pop %v3307
      %v3446 = vmul.f32 %v3307, %v3445
      %vm3447 = vcmp.eq.f32.partialorder %v3307, inf
      %v3448 = vsel %vm3447, %v3307, %v3446
      %vm3449 = vcmp.eq.f32.partialorder %v3307, 0.0
      %v3450 = vand.u32 %v3307, 2147483648
      %v3451 = vsel %vm3449, %v3450, %v3448
      %v3452 = vrsqrt.pop %v3310
      %v3453 = vmul.f32 %v3310, %v3452
      %vm3454 = vcmp.eq.f32.partialorder %v3310, inf
      %v3455 = vsel %vm3454, %v3310, %v3453
      %vm3456 = vcmp.eq.f32.partialorder %v3310, 0.0
      %v3457 = vand.u32 %v3310, 2147483648
      %v3458 = vsel %vm3456, %v3457, %v3455
      %v3459 = vrsqrt.pop %v3313
      %v3460 = vmul.f32 %v3313, %v3459
      %vm3461 = vcmp.eq.f32.partialorder %v3313, inf
      %v3462 = vsel %vm3461, %v3313, %v3460
      %vm3463 = vcmp.eq.f32.partialorder %v3313, 0.0
      %v3464 = vand.u32 %v3313, 2147483648
      %v3465 = vsel %vm3463, %v3464, %v3462
      %v3466 = vrsqrt.pop %v3316
      %v3467 = vmul.f32 %v3316, %v3466
      %vm3468 = vcmp.eq.f32.partialorder %v3316, inf
      %v3469 = vsel %vm3468, %v3316, %v3467
      %vm3470 = vcmp.eq.f32.partialorder %v3316, 0.0
      %v3471 = vand.u32 %v3316, 2147483648
      %v3472 = vsel %vm3470, %v3471, %v3469
      %v3473 = vrsqrt.pop %v3319
      %v3474 = vmul.f32 %v3319, %v3473
      %vm3475 = vcmp.eq.f32.partialorder %v3319, inf
      %v3476 = vsel %vm3475, %v3319, %v3474
      %vm3477 = vcmp.eq.f32.partialorder %v3319, 0.0
      %v3478 = vand.u32 %v3319, 2147483648
      %v3479 = vsel %vm3477, %v3478, %v3476
      %v3480 = vrsqrt.pop %v3322
      %v3481 = vmul.f32 %v3322, %v3480
      %vm3482 = vcmp.eq.f32.partialorder %v3322, inf
      %v3483 = vsel %vm3482, %v3322, %v3481
      %vm3484 = vcmp.eq.f32.partialorder %v3322, 0.0
      %v3485 = vand.u32 %v3322, 2147483648
      %v3486 = vsel %vm3484, %v3485, %v3483
      %v3487 = vrsqrt.pop %v3325
      %v3488 = vmul.f32 %v3325, %v3487
      %vm3489 = vcmp.eq.f32.partialorder %v3325, inf
      %v3490 = vsel %vm3489, %v3325, %v3488
      %vm3491 = vcmp.eq.f32.partialorder %v3325, 0.0
      %v3492 = vand.u32 %v3325, 2147483648
      %v3493 = vsel %vm3491, %v3492, %v3490
      %v3494 = vrsqrt.pop %v3328
      %v3495 = vmul.f32 %v3328, %v3494
      %vm3496 = vcmp.eq.f32.partialorder %v3328, inf
      %v3497 = vsel %vm3496, %v3328, %v3495
      %vm3498 = vcmp.eq.f32.partialorder %v3328, 0.0
      %v3499 = vand.u32 %v3328, 2147483648
      %v3500 = vsel %vm3498, %v3499, %v3497
      %v3501 = vrsqrt.pop %v3331
      %v3502 = vmul.f32 %v3331, %v3501
      %vm3503 = vcmp.eq.f32.partialorder %v3331, inf
      %v3504 = vsel %vm3503, %v3331, %v3502
      %vm3505 = vcmp.eq.f32.partialorder %v3331, 0.0
      %v3506 = vand.u32 %v3331, 2147483648
      %v3507 = vsel %vm3505, %v3506, %v3504
      %v3508 = vrsqrt.pop %v3334
      %v3509 = vmul.f32 %v3334, %v3508
      %vm3510 = vcmp.eq.f32.partialorder %v3334, inf
      %v3511 = vsel %vm3510, %v3334, %v3509
      %vm3512 = vcmp.eq.f32.partialorder %v3334, 0.0
      %v3513 = vand.u32 %v3334, 2147483648
      %v3514 = vsel %vm3512, %v3513, %v3511
      %v3515 = vrsqrt.pop %v3337
      %v3516 = vmul.f32 %v3337, %v3515
      %vm3517 = vcmp.eq.f32.partialorder %v3337, inf
      %v3518 = vsel %vm3517, %v3337, %v3516
      %vm3519 = vcmp.eq.f32.partialorder %v3337, 0.0
      %v3520 = vand.u32 %v3337, 2147483648
      %v3521 = vsel %vm3519, %v3520, %v3518
      %v3522 = vrsqrt.pop %v3340
      %v3523 = vmul.f32 %v3340, %v3522
      %vm3524 = vcmp.eq.f32.partialorder %v3340, inf
      %v3525 = vsel %vm3524, %v3340, %v3523
      %vm3526 = vcmp.eq.f32.partialorder %v3340, 0.0
      %v3527 = vand.u32 %v3340, 2147483648
      %v3528 = vsel %vm3526, %v3527, %v3525
      %v3529 = vrsqrt.pop %v3343
      %v3530 = vmul.f32 %v3343, %v3529
      %vm3531 = vcmp.eq.f32.partialorder %v3343, inf
      %v3532 = vsel %vm3531, %v3343, %v3530
      %vm3533 = vcmp.eq.f32.partialorder %v3343, 0.0
      %v3534 = vand.u32 %v3343, 2147483648
      %v3535 = vsel %vm3533, %v3534, %v3532
      %v3536 = vrsqrt.pop %v3346
      %v3537 = vmul.f32 %v3346, %v3536
      %vm3538 = vcmp.eq.f32.partialorder %v3346, inf
      %v3539 = vsel %vm3538, %v3346, %v3537
      %vm3540 = vcmp.eq.f32.partialorder %v3346, 0.0
      %v3541 = vand.u32 %v3346, 2147483648
      %v3542 = vsel %vm3540, %v3541, %v3539
      %v3543 = vrsqrt.pop %v3349
      %v3544 = vmul.f32 %v3349, %v3543
      %vm3545 = vcmp.eq.f32.partialorder %v3349, inf
      %v3546 = vsel %vm3545, %v3349, %v3544
      %vm3547 = vcmp.eq.f32.partialorder %v3349, 0.0
      %v3548 = vand.u32 %v3349, 2147483648
      %v3549 = vsel %vm3547, %v3548, %v3546
      %v3550 = vrsqrt.pop %v3352
      %v3551 = vmul.f32 %v3352, %v3550
      %vm3552 = vcmp.eq.f32.partialorder %v3352, inf
      %v3553 = vsel %vm3552, %v3352, %v3551
      %vm3554 = vcmp.eq.f32.partialorder %v3352, 0.0
      %v3555 = vand.u32 %v3352, 2147483648
      %v3556 = vsel %vm3554, %v3555, %v3553
      %v3557 = vrsqrt.pop %v3355
      %v3558 = vmul.f32 %v3355, %v3557
      %vm3559 = vcmp.eq.f32.partialorder %v3355, inf
      %v3560 = vsel %vm3559, %v3355, %v3558
      %vm3561 = vcmp.eq.f32.partialorder %v3355, 0.0
      %v3562 = vand.u32 %v3355, 2147483648
      %v3563 = vsel %vm3561, %v3562, %v3560
      %v3564 = vrsqrt.pop %v3358
      %v3565 = vmul.f32 %v3358, %v3564
      %vm3566 = vcmp.eq.f32.partialorder %v3358, inf
      %v3567 = vsel %vm3566, %v3358, %v3565
      %vm3568 = vcmp.eq.f32.partialorder %v3358, 0.0
      %v3569 = vand.u32 %v3358, 2147483648
      %v3570 = vsel %vm3568, %v3569, %v3567
      %v3571 = vrsqrt.pop %v3361
      %v3572 = vmul.f32 %v3361, %v3571
      %vm3573 = vcmp.eq.f32.partialorder %v3361, inf
      %v3574 = vsel %vm3573, %v3361, %v3572
      %vm3575 = vcmp.eq.f32.partialorder %v3361, 0.0
      %v3576 = vand.u32 %v3361, 2147483648
      %v3577 = vsel %vm3575, %v3576, %v3574
      %v3578 = vrsqrt.pop %v3364
      %v3579 = vmul.f32 %v3364, %v3578
      %vm3580 = vcmp.eq.f32.partialorder %v3364, inf
      %v3581 = vsel %vm3580, %v3364, %v3579
      %vm3582 = vcmp.eq.f32.partialorder %v3364, 0.0
      %v3583 = vand.u32 %v3364, 2147483648
      %v3584 = vsel %vm3582, %v3583, %v3581
      %v3585 = vrsqrt.pop %v3367
      %v3586 = vmul.f32 %v3367, %v3585
      %vm3587 = vcmp.eq.f32.partialorder %v3367, inf
      %v3588 = vsel %vm3587, %v3367, %v3586
      %vm3589 = vcmp.eq.f32.partialorder %v3367, 0.0
      %v3590 = vand.u32 %v3367, 2147483648
      %v3591 = vsel %vm3589, %v3590, %v3588
      %v3592 = vadd.f32 %v3374, 1e-10
      %v3593 = vadd.f32 %v3381, 1e-10
      %v3594 = vadd.f32 %v3388, 1e-10
      %v3595 = vadd.f32 %v3395, 1e-10
      %v3596 = vadd.f32 %v3402, 1e-10
      %v3597 = vadd.f32 %v3409, 1e-10
      %v3598 = vadd.f32 %v3416, 1e-10
      %v3599 = vadd.f32 %v3423, 1e-10
      %v3600 = vadd.f32 %v3430, 1e-10
      %v3601 = vadd.f32 %v3437, 1e-10
      %v3602 = vadd.f32 %v3444, 1e-10
      %v3603 = vadd.f32 %v3451, 1e-10
      %v3604 = vadd.f32 %v3458, 1e-10
      %v3605 = vadd.f32 %v3465, 1e-10
      %v3606 = vadd.f32 %v3472, 1e-10
      %v3607 = vadd.f32 %v3479, 1e-10
      %v3608 = vadd.f32 %v3486, 1e-10
      %v3609 = vadd.f32 %v3493, 1e-10
      %v3610 = vadd.f32 %v3500, 1e-10
      %v3611 = vadd.f32 %v3507, 1e-10
      %v3612 = vadd.f32 %v3514, 1e-10
      %v3613 = vadd.f32 %v3521, 1e-10
      %v3614 = vadd.f32 %v3528, 1e-10
      %v3615 = vadd.f32 %v3535, 1e-10
      %v3616 = vadd.f32 %v3542, 1e-10
      %v3617 = vadd.f32 %v3549, 1e-10
      %v3618 = vadd.f32 %v3556, 1e-10
      %v3619 = vadd.f32 %v3563, 1e-10
      %v3620 = vadd.f32 %v3570, 1e-10
      %v3621 = vadd.f32 %v3577, 1e-10
      %v3622 = vadd.f32 %v3584, 1e-10
      %v3623 = vadd.f32 %v3591, 1e-10
      %v3624 = vrcp.pop %v3592
      %v3625 = vmul.f32 1.0, %v3624
      %v3626 = vrcp.pop %v3593
      %v3627 = vmul.f32 1.0, %v3626
      %v3628 = vrcp.pop %v3594
      %v3629 = vmul.f32 1.0, %v3628
      %v3630 = vrcp.pop %v3595
      %v3631 = vmul.f32 1.0, %v3630
      %v3632 = vrcp.pop %v3596
      %v3633 = vmul.f32 1.0, %v3632
      %v3634 = vrcp.pop %v3597
      %v3635 = vmul.f32 1.0, %v3634
      %v3636 = vrcp.pop %v3598
      %v3637 = vmul.f32 1.0, %v3636
      %v3638 = vrcp.pop %v3599
      %v3639 = vmul.f32 1.0, %v3638
      %v3640 = vrcp.pop %v3600
      %v3641 = vmul.f32 1.0, %v3640
      %v3642 = vrcp.pop %v3601
      %v3643 = vmul.f32 1.0, %v3642
      %v3644 = vrcp.pop %v3602
      %v3645 = vmul.f32 1.0, %v3644
      %v3646 = vrcp.pop %v3603
      %v3647 = vmul.f32 1.0, %v3646
      %v3648 = vrcp.pop %v3604
      %v3649 = vmul.f32 1.0, %v3648
      %v3650 = vrcp.pop %v3605
      %v3651 = vmul.f32 1.0, %v3650
      %v3652 = vrcp.pop %v3606
      %v3653 = vmul.f32 1.0, %v3652
      %v3654 = vrcp.pop %v3607
      %v3655 = vmul.f32 1.0, %v3654
      %v3656 = vrcp.pop %v3608
      %v3657 = vmul.f32 1.0, %v3656
      %v3658 = vrcp.pop %v3609
      %v3659 = vmul.f32 1.0, %v3658
      %v3660 = vrcp.pop %v3610
      %v3661 = vmul.f32 1.0, %v3660
      %v3662 = vrcp.pop %v3611
      %v3663 = vmul.f32 1.0, %v3662
      %v3664 = vrcp.pop %v3612
      %v3665 = vmul.f32 1.0, %v3664
      %v3666 = vrcp.pop %v3613
      %v3667 = vmul.f32 1.0, %v3666
      %v3668 = vrcp.pop %v3614
      %v3669 = vmul.f32 1.0, %v3668
      %v3670 = vrcp.pop %v3615
      %v3671 = vmul.f32 1.0, %v3670
      %v3672 = vrcp.pop %v3616
      %v3673 = vmul.f32 1.0, %v3672
      %v3674 = vrcp.pop %v3617
      %v3675 = vmul.f32 1.0, %v3674
      %v3676 = vrcp.pop %v3618
      %v3677 = vmul.f32 1.0, %v3676
      %v3678 = vrcp.pop %v3619
      %v3679 = vmul.f32 1.0, %v3678
      %v3680 = vrcp.pop %v3620
      %v3681 = vmul.f32 1.0, %v3680
      %v3682 = vrcp.pop %v3621
      %v3683 = vmul.f32 1.0, %v3682
      %v3684 = vrcp.pop %v3622
      %v3685 = vmul.f32 1.0, %v3684
      %v3686 = vrcp.pop %v3623
      %v3687 = vmul.f32 1.0, %v3686
      %v3688 = vmul.f32 %v3081, %v3625
      %v3689 = vmul.f32 %v3086, %v3627
      %v3690 = vmul.f32 %v3091, %v3629
      %v3691 = vmul.f32 %v3096, %v3631
      %v3692 = vmul.f32 %v3101, %v3633
      %v3693 = vmul.f32 %v3106, %v3635
      %v3694 = vmul.f32 %v3111, %v3637
      %v3695 = vmul.f32 %v3116, %v3639
      %v3696 = vmul.f32 %v3121, %v3641
      %v3697 = vmul.f32 %v3126, %v3643
      %v3698 = vmul.f32 %v3131, %v3645
      %v3699 = vmul.f32 %v3136, %v3647
      %v3700 = vmul.f32 %v3141, %v3649
      %v3701 = vmul.f32 %v3146, %v3651
      %v3702 = vmul.f32 %v3151, %v3653
      %v3703 = vmul.f32 %v3156, %v3655
      %v3704 = vmul.f32 %v3161, %v3657
      %v3705 = vmul.f32 %v3166, %v3659
      %v3706 = vmul.f32 %v3171, %v3661
      %v3707 = vmul.f32 %v3176, %v3663
      %v3708 = vmul.f32 %v3181, %v3665
      %v3709 = vmul.f32 %v3186, %v3667
      %v3710 = vmul.f32 %v3191, %v3669
      %v3711 = vmul.f32 %v3196, %v3671
      %v3712 = vmul.f32 %v3201, %v3673
      %v3713 = vmul.f32 %v3206, %v3675
      %v3714 = vmul.f32 %v3211, %v3677
      %v3715 = vmul.f32 %v3216, %v3679
      %v3716 = vmul.f32 %v3221, %v3681
      %v3717 = vmul.f32 %v3226, %v3683
      %v3718 = vmul.f32 %v3231, %v3685
      %v3719 = vmul.f32 %v3236, %v3687
      %3720 = vst.msk [vmem:[#allocation3] sm:$0xff] %vm3271, 0.0
      %3721 = vst.msk [vmem:[#allocation3 + $0x8] sm:$0xff] %vm3271, 0.0
      %vm3722 = vcmask 60416
      %3723 = vst.msk [vmem:[#allocation3 + $0x10] sm:$0xf] %vm3722, 0.0
      %3724 = vst.msk [vmem:[#allocation3 + $0x18] sm:$0xff] %vm3271, 0.0
      %3725 = vst.msk [vmem:[#allocation3 + $0x20] sm:$0xff] %vm3271, 0.0
      %3726 = vst.msk [vmem:[#allocation3 + $0x28] sm:$0xf] %vm3722, 0.0
      %s3727 = scalar_lea.vmem [#allocation3], 432
      %3728 = vst.msk [vmem:[%s3727] sm:$0xff] %vm3271, 0.0
      %3729 = vst.msk [vmem:[%s3727 + $0x8] sm:$0xff] %vm3271, 0.0
      %3730 = vst.msk [vmem:[%s3727 + $0x10] sm:$0xf] %vm3722, 0.0
      %3731 = vst.msk [vmem:[%s3727 + $0x18] sm:$0xff] %vm3271, 0.0
      %3732 = vst.msk [vmem:[%s3727 + $0x20] sm:$0xff] %vm3271, 0.0
      %3733 = vst.msk [vmem:[%s3727 + $0x28] sm:$0xf] %vm3722, 0.0
      %s3734 = scalar_lea.vmem [#allocation3], 48
      %vm3735 = vcmask 58368
      %3736 = vst.msk [vmem:[%s3734] sm:$0x3] %vm3735, 0.0
      %3737 = vst.msk [vmem:[%s3734 + $0x18] sm:$0x3] %vm3735, 0.0
      %3738 = vst.msk [vmem:[%s3734 + $0x30] sm:$0x3] %vm3735, 0.0
      %3739 = vst.msk [vmem:[%s3734 + $0x48] sm:$0x3] %vm3735, 0.0
      %3740 = vst.msk [vmem:[%s3734 + $0x60] sm:$0x3] %vm3735, 0.0
      %3741 = vst.msk [vmem:[%s3734 + $0x78] sm:$0x3] %vm3735, 0.0
      %3742 = vst.msk [vmem:[%s3734 + $0x90] sm:$0x3] %vm3735, 0.0
      %3743 = vst.msk [vmem:[%s3734 + $0xa8] sm:$0x3] %vm3735, 0.0
      %3744 = vst.msk [vmem:[%s3734 + $0xc0] sm:$0x3] %vm3735, 0.0
      %3745 = vst.msk [vmem:[%s3734 + $0xd8] sm:$0x3] %vm3735, 0.0
      %3746 = vst.msk [vmem:[%s3734 + $0xf0] sm:$0x3] %vm3735, 0.0
      %3747 = vst.msk [vmem:[%s3734 + $0x108] sm:$0x3] %vm3735, 0.0
      %3748 = vst.msk [vmem:[%s3734 + $0x120] sm:$0x3] %vm3735, 0.0
      %3749 = vst.msk [vmem:[%s3734 + $0x138] sm:$0x3] %vm3735, 0.0
      %3750 = vst.msk [vmem:[%s3734 + $0x150] sm:$0x3] %vm3735, 0.0
      %3751 = vst.msk [vmem:[%s3734 + $0x168] sm:$0x3] %vm3735, 0.0
      %3752 = vst.msk [vmem:[%s3734 + $0x12] sm:$0x3] %vm3735, 0.0
      %3753 = vst.msk [vmem:[%s3734 + $0x2a] sm:$0x3] %vm3735, 0.0
      %3754 = vst.msk [vmem:[%s3734 + $0x42] sm:$0x3] %vm3735, 0.0
      %3755 = vst.msk [vmem:[%s3734 + $0x5a] sm:$0x3] %vm3735, 0.0
      %3756 = vst.msk [vmem:[%s3734 + $0x72] sm:$0x3] %vm3735, 0.0
      %3757 = vst.msk [vmem:[%s3734 + $0x8a] sm:$0x3] %vm3735, 0.0
      %3758 = vst.msk [vmem:[%s3734 + $0xa2] sm:$0x3] %vm3735, 0.0
      %3759 = vst.msk [vmem:[%s3734 + $0xba] sm:$0x3] %vm3735, 0.0
      %3760 = vst.msk [vmem:[%s3734 + $0xd2] sm:$0x3] %vm3735, 0.0
      %3761 = vst.msk [vmem:[%s3734 + $0xea] sm:$0x3] %vm3735, 0.0
      %3762 = vst.msk [vmem:[%s3734 + $0x102] sm:$0x3] %vm3735, 0.0
      %3763 = vst.msk [vmem:[%s3734 + $0x11a] sm:$0x3] %vm3735, 0.0
      %3764 = vst.msk [vmem:[%s3734 + $0x132] sm:$0x3] %vm3735, 0.0
      %3765 = vst.msk [vmem:[%s3734 + $0x14a] sm:$0x3] %vm3735, 0.0
      %3766 = vst.msk [vmem:[%s3734 + $0x162] sm:$0x3] %vm3735, 0.0
      %3767 = vst.msk [vmem:[%s3734 + $0x17a] sm:$0x3] %vm3735, 0.0
      %3768 = vst.msk [vmem:[%s3734 + $0x2] sm:$0xff] %vm3271, %v3688
      %3769 = vst.msk [vmem:[%s3734 + $0xa] sm:$0xff] %vm3271, %v3689
      %3770 = vst.msk [vmem:[%s3734 + $0x1a] sm:$0xff] %vm3271, %v3690
      %3771 = vst.msk [vmem:[%s3734 + $0x22] sm:$0xff] %vm3271, %v3691
      %3772 = vst.msk [vmem:[%s3734 + $0x32] sm:$0xff] %vm3271, %v3692
      %3773 = vst.msk [vmem:[%s3734 + $0x3a] sm:$0xff] %vm3271, %v3693
      %3774 = vst.msk [vmem:[%s3734 + $0x4a] sm:$0xff] %vm3271, %v3694
      %3775 = vst.msk [vmem:[%s3734 + $0x52] sm:$0xff] %vm3271, %v3695
      %3776 = vst.msk [vmem:[%s3734 + $0x62] sm:$0xff] %vm3271, %v3696
      %3777 = vst.msk [vmem:[%s3734 + $0x6a] sm:$0xff] %vm3271, %v3697
      %3778 = vst.msk [vmem:[%s3734 + $0x7a] sm:$0xff] %vm3271, %v3698
      %3779 = vst.msk [vmem:[%s3734 + $0x82] sm:$0xff] %vm3271, %v3699
      %3780 = vst.msk [vmem:[%s3734 + $0x92] sm:$0xff] %vm3271, %v3700
      %3781 = vst.msk [vmem:[%s3734 + $0x9a] sm:$0xff] %vm3271, %v3701
      %3782 = vst.msk [vmem:[%s3734 + $0xaa] sm:$0xff] %vm3271, %v3702
      %3783 = vst.msk [vmem:[%s3734 + $0xb2] sm:$0xff] %vm3271, %v3703
      %3784 = vst.msk [vmem:[%s3734 + $0xc2] sm:$0xff] %vm3271, %v3704
      %3785 = vst.msk [vmem:[%s3734 + $0xca] sm:$0xff] %vm3271, %v3705
      %3786 = vst.msk [vmem:[%s3734 + $0xda] sm:$0xff] %vm3271, %v3706
      %3787 = vst.msk [vmem:[%s3734 + $0xe2] sm:$0xff] %vm3271, %v3707
      %3788 = vst.msk [vmem:[%s3734 + $0xf2] sm:$0xff] %vm3271, %v3708
      %3789 = vst.msk [vmem:[%s3734 + $0xfa] sm:$0xff] %vm3271, %v3709
      %3790 = vst.msk [vmem:[%s3734 + $0x10a] sm:$0xff] %vm3271, %v3710
      %3791 = vst.msk [vmem:[%s3734 + $0x112] sm:$0xff] %vm3271, %v3711
      %3792 = vst.msk [vmem:[%s3734 + $0x122] sm:$0xff] %vm3271, %v3712
      %3793 = vst.msk [vmem:[%s3734 + $0x12a] sm:$0xff] %vm3271, %v3713
      %3794 = vst.msk [vmem:[%s3734 + $0x13a] sm:$0xff] %vm3271, %v3714
      %3795 = vst.msk [vmem:[%s3734 + $0x142] sm:$0xff] %vm3271, %v3715
      %3796 = vst.msk [vmem:[%s3734 + $0x152] sm:$0xff] %vm3271, %v3716
      %3797 = vst.msk [vmem:[%s3734 + $0x15a] sm:$0xff] %vm3271, %v3717
      %3798 = vst.msk [vmem:[%s3734 + $0x16a] sm:$0xff] %vm3271, %v3718
      %3799 = vst.msk [vmem:[%s3734 + $0x172] sm:$0xff] %vm3271, %v3719
      %v3800 = vld [vmem:[%s9] sm:$0xff]
      %3802 = vset.pattern.permute.xlu0 0
      %3803 = vperm.xlu0 %3802, %v3800
      %v3804 = vpop.permute.xlu0 %3803
      %v3806 = vadd.f32 %v3804, 0.0
      %v3807 = vld [vmem:[#allocation3] sm:$0xff]
      %v3808 = vld [vmem:[#allocation3 + $0x8] sm:$0xff]
      %v3809 = vld [vmem:[#allocation3 + $0x18] sm:$0xff]
      %v3810 = vld [vmem:[#allocation3 + $0x20] sm:$0xff]
      %v3811 = vld [vmem:[#allocation3 + $0x30] sm:$0xff]
      %v3812 = vld [vmem:[#allocation3 + $0x38] sm:$0xff]
      %v3813 = vld [vmem:[#allocation3 + $0x48] sm:$0xff]
      %v3814 = vld [vmem:[#allocation3 + $0x50] sm:$0xff]
      %v3815 = vld [vmem:[#allocation3 + $0x60] sm:$0xff]
      %v3816 = vld [vmem:[#allocation3 + $0x68] sm:$0xff]
      %v3817 = vld [vmem:[#allocation3 + $0x78] sm:$0xff]
      %v3818 = vld [vmem:[#allocation3 + $0x80] sm:$0xff]
      %v3819 = vld [vmem:[#allocation3 + $0x90] sm:$0xff]
      %v3820 = vld [vmem:[#allocation3 + $0x98] sm:$0xff]
      %v3821 = vld [vmem:[#allocation3 + $0xa8] sm:$0xff]
      %v3822 = vld [vmem:[#allocation3 + $0xb0] sm:$0xff]
      %v3823 = vld [vmem:[#allocation3 + $0xc0] sm:$0xff]
      %v3824 = vld [vmem:[#allocation3 + $0xc8] sm:$0xff]
      %v3825 = vld [vmem:[#allocation3 + $0xd8] sm:$0xff]
      %v3826 = vld [vmem:[#allocation3 + $0xe0] sm:$0xff]
      %v3827 = vld [vmem:[#allocation3 + $0xf0] sm:$0xff]
      %v3828 = vld [vmem:[#allocation3 + $0xf8] sm:$0xff]
      %v3829 = vld [vmem:[#allocation3 + $0x108] sm:$0xff]
      %v3830 = vld [vmem:[#allocation3 + $0x110] sm:$0xff]
      %v3831 = vld [vmem:[#allocation3 + $0x120] sm:$0xff]
      %v3832 = vld [vmem:[#allocation3 + $0x128] sm:$0xff]
      %v3833 = vld [vmem:[#allocation3 + $0x138] sm:$0xff]
      %v3834 = vld [vmem:[#allocation3 + $0x140] sm:$0xff]
      %v3835 = vld [vmem:[#allocation3 + $0x150] sm:$0xff]
      %v3836 = vld [vmem:[#allocation3 + $0x158] sm:$0xff]
      %v3837 = vld [vmem:[#allocation3 + $0x168] sm:$0xff]
      %v3838 = vld [vmem:[#allocation3 + $0x170] sm:$0xff]
      %v3839 = vld [vmem:[%s6] sm:$0xff]
      %v3841 = vsel %vm3271, %v3839, 0
      %v3844 = vsel %vm3271, %v3807, 0
      %v3847 = vsel %vm3271, %v3808, 0
      %v3850 = vsel %vm3271, %v3809, 0
      %v3853 = vsel %vm3271, %v3810, 0
      %v3856 = vsel %vm3271, %v3811, 0
      %v3859 = vsel %vm3271, %v3812, 0
      %v3862 = vsel %vm3271, %v3813, 0
      %v3865 = vsel %vm3271, %v3814, 0
      %v3868 = vsel %vm3271, %v3815, 0
      %v3871 = vsel %vm3271, %v3816, 0
      %v3874 = vsel %vm3271, %v3817, 0
      %v3877 = vsel %vm3271, %v3818, 0
      %v3880 = vsel %vm3271, %v3819, 0
      %v3883 = vsel %vm3271, %v3820, 0
      %v3886 = vsel %vm3271, %v3821, 0
      %v3889 = vsel %vm3271, %v3822, 0
      %v3892 = vsel %vm3271, %v3823, 0
      %v3895 = vsel %vm3271, %v3824, 0
      %v3898 = vsel %vm3271, %v3825, 0
      %v3901 = vsel %vm3271, %v3826, 0
      %v3904 = vsel %vm3271, %v3827, 0
      %v3907 = vsel %vm3271, %v3828, 0
      %v3910 = vsel %vm3271, %v3829, 0
      %v3913 = vsel %vm3271, %v3830, 0
      %v3916 = vsel %vm3271, %v3831, 0
      %v3919 = vsel %vm3271, %v3832, 0
      %v3922 = vsel %vm3271, %v3833, 0
      %v3925 = vsel %vm3271, %v3834, 0
      %v3928 = vsel %vm3271, %v3835, 0
      %v3931 = vsel %vm3271, %v3836, 0
      %v3934 = vsel %vm3271, %v3837, 0
      %v3937 = vsel %vm3271, %v3838, 0
      %3939 = vmatprep.subr.mxu0 0.0
      %3940 = vmatpush1.xpose.msra.mxu0 %v3844
      %3941 = vmatprep.subr.mxu0 0.0
      %3942 = vmatpush1.xpose.msra.mxu0 %v3847
      %3943 = vmatprep.subr.mxu0 0.0
      %3944 = vmatpush1.xpose.msra.mxu0 %v3850
      %3945 = vmatprep.subr.mxu0 0.0
      %3946 = vmatpush1.xpose.msra.mxu0 %v3853
      %3947 = vmatprep.subr.mxu0 0.0
      %3948 = vmatpush1.xpose.msra.mxu0 %v3856
      %3949 = vmatprep.subr.mxu0 0.0
      %3950 = vmatpush1.xpose.msra.mxu0 %v3859
      %3951 = vmatprep.subr.mxu0 0.0
      %3952 = vmatpush1.xpose.msra.mxu0 %v3862
      %3953 = vmatprep.subr.mxu0 0.0
      %3954 = vmatpush1.xpose.msra.mxu0 %v3865
      %3955 = vmatprep.subr.mxu0 0.0
      %3956 = vmatpush1.xpose.msra.mxu0 %v3868
      %3957 = vmatprep.subr.mxu0 0.0
      %3958 = vmatpush1.xpose.msra.mxu0 %v3871
      %3959 = vmatprep.subr.mxu0 0.0
      %3960 = vmatpush1.xpose.msra.mxu0 %v3874
      %3961 = vmatprep.subr.mxu0 0.0
      %3962 = vmatpush1.xpose.msra.mxu0 %v3877
      %3963 = vmatprep.subr.mxu0 0.0
      %3964 = vmatpush1.xpose.msra.mxu0 %v3880
      %3965 = vmatprep.subr.mxu0 0.0
      %3966 = vmatpush1.xpose.msra.mxu0 %v3883
      %3967 = vmatprep.subr.mxu0 0.0
      %3968 = vmatpush1.xpose.msra.mxu0 %v3886
      %3969 = vmatprep.subr.mxu0 0.0
      %3970 = vmatpush1.xpose.msra.mxu0 %v3889
      %3971 = vmatprep.subr.mxu0 0.0
      %3972 = vmatpush1.xpose.msra.mxu0 %v3892
      %3973 = vmatprep.subr.mxu0 0.0
      %3974 = vmatpush1.xpose.msra.mxu0 %v3895
      %3975 = vmatprep.subr.mxu0 0.0
      %3976 = vmatpush1.xpose.msra.mxu0 %v3898
      %3977 = vmatprep.subr.mxu0 0.0
      %3978 = vmatpush1.xpose.msra.mxu0 %v3901
      %3979 = vmatprep.subr.mxu0 0.0
      %3980 = vmatpush1.xpose.msra.mxu0 %v3904
      %3981 = vmatprep.subr.mxu0 0.0
      %3982 = vmatpush1.xpose.msra.mxu0 %v3907
      %3983 = vmatprep.subr.mxu0 0.0
      %3984 = vmatpush1.xpose.msra.mxu0 %v3910
      %3985 = vmatprep.subr.mxu0 0.0
      %3986 = vmatpush1.xpose.msra.mxu0 %v3913
      %3987 = vmatprep.subr.mxu0 0.0
      %3988 = vmatpush1.xpose.msra.mxu0 %v3916
      %3989 = vmatprep.subr.mxu0 0.0
      %3990 = vmatpush1.xpose.msra.mxu0 %v3919
      %3991 = vmatprep.subr.mxu0 0.0
      %3992 = vmatpush1.xpose.msra.mxu0 %v3922
      %3993 = vmatprep.subr.mxu0 0.0
      %3994 = vmatpush1.xpose.msra.mxu0 %v3925
      %3995 = vmatprep.subr.mxu0 0.0
      %3996 = vmatpush1.xpose.msra.mxu0 %v3928
      %3997 = vmatprep.subr.mxu0 0.0
      %3998 = vmatpush1.xpose.msra.mxu0 %v3931
      %3999 = vmatprep.subr.mxu0 0.0
      %4000 = vmatpush1.xpose.msra.mxu0 %v3934
      %4001 = vmatprep.subr.mxu0 0.0
      %4002 = vmatpush1.xpose.msra.mxu0 %v3937
      %4003 = vmatprep.mubr.f32.mxu0 0.0
      %4004 = vmatmul.mubr.f32.gmra.mrb[0].mxu0 %v3841
      %v4005 = vpop.f32.mrb[0].mxu0
      %v4006 = vadd.f32 0.0, %v4005
      %v4007 = vpop.f32.mrb[0].mxu0
      %v4008 = vadd.f32 0.0, %v4007
      %4009 = vdwg.mxu0
      %v4010 = vadd.f32 %v3806, %v4006
      %v4011 = vadd.f32 %v3806, %v4008
      %v4012 = vld [vmem:[#allocation3 + $0x2] sm:$0xff]
      %v4013 = vld [vmem:[#allocation3 + $0xa] sm:$0xff]
      %v4014 = vld [vmem:[#allocation3 + $0x1a] sm:$0xff]
      %v4015 = vld [vmem:[#allocation3 + $0x22] sm:$0xff]
      %v4016 = vld [vmem:[#allocation3 + $0x32] sm:$0xff]
      %v4017 = vld [vmem:[#allocation3 + $0x3a] sm:$0xff]
      %v4018 = vld [vmem:[#allocation3 + $0x4a] sm:$0xff]
      %v4019 = vld [vmem:[#allocation3 + $0x52] sm:$0xff]
      %v4020 = vld [vmem:[#allocation3 + $0x62] sm:$0xff]
      %v4021 = vld [vmem:[#allocation3 + $0x6a] sm:$0xff]
      %v4022 = vld [vmem:[#allocation3 + $0x7a] sm:$0xff]
      %v4023 = vld [vmem:[#allocation3 + $0x82] sm:$0xff]
      %v4024 = vld [vmem:[#allocation3 + $0x92] sm:$0xff]
      %v4025 = vld [vmem:[#allocation3 + $0x9a] sm:$0xff]
      %v4026 = vld [vmem:[#allocation3 + $0xaa] sm:$0xff]
      %v4027 = vld [vmem:[#allocation3 + $0xb2] sm:$0xff]
      %v4028 = vld [vmem:[#allocation3 + $0xc2] sm:$0xff]
      %v4029 = vld [vmem:[#allocation3 + $0xca] sm:$0xff]
      %v4030 = vld [vmem:[#allocation3 + $0xda] sm:$0xff]
      %v4031 = vld [vmem:[#allocation3 + $0xe2] sm:$0xff]
      %v4032 = vld [vmem:[#allocation3 + $0xf2] sm:$0xff]
      %v4033 = vld [vmem:[#allocation3 + $0xfa] sm:$0xff]
      %v4034 = vld [vmem:[#allocation3 + $0x10a] sm:$0xff]
      %v4035 = vld [vmem:[#allocation3 + $0x112] sm:$0xff]
      %v4036 = vld [vmem:[#allocation3 + $0x122] sm:$0xff]
      %v4037 = vld [vmem:[#allocation3 + $0x12a] sm:$0xff]
      %v4038 = vld [vmem:[#allocation3 + $0x13a] sm:$0xff]
      %v4039 = vld [vmem:[#allocation3 + $0x142] sm:$0xff]
      %v4040 = vld [vmem:[#allocation3 + $0x152] sm:$0xff]
      %v4041 = vld [vmem:[#allocation3 + $0x15a] sm:$0xff]
      %v4042 = vld [vmem:[#allocation3 + $0x16a] sm:$0xff]
      %v4043 = vld [vmem:[#allocation3 + $0x172] sm:$0xff]
      %s4044 = scalar_lea.vmem %s6, 8
      %v4045 = vld [vmem:[%s4044] sm:$0xff]
      %v4047 = vsel %vm3271, %v4045, 0
      %v4050 = vsel %vm3271, %v4012, 0
      %v4053 = vsel %vm3271, %v4013, 0
      %v4056 = vsel %vm3271, %v4014, 0
      %v4059 = vsel %vm3271, %v4015, 0
      %v4062 = vsel %vm3271, %v4016, 0
      %v4065 = vsel %vm3271, %v4017, 0
      %v4068 = vsel %vm3271, %v4018, 0
      %v4071 = vsel %vm3271, %v4019, 0
      %v4074 = vsel %vm3271, %v4020, 0
      %v4077 = vsel %vm3271, %v4021, 0
      %v4080 = vsel %vm3271, %v4022, 0
      %v4083 = vsel %vm3271, %v4023, 0
      %v4086 = vsel %vm3271, %v4024, 0
      %v4089 = vsel %vm3271, %v4025, 0
      %v4092 = vsel %vm3271, %v4026, 0
      %v4095 = vsel %vm3271, %v4027, 0
      %v4098 = vsel %vm3271, %v4028, 0
      %v4101 = vsel %vm3271, %v4029, 0
      %v4104 = vsel %vm3271, %v4030, 0
      %v4107 = vsel %vm3271, %v4031, 0
      %v4110 = vsel %vm3271, %v4032, 0
      %v4113 = vsel %vm3271, %v4033, 0
      %v4116 = vsel %vm3271, %v4034, 0
      %v4119 = vsel %vm3271, %v4035, 0
      %v4122 = vsel %vm3271, %v4036, 0
      %v4125 = vsel %vm3271, %v4037, 0
      %v4128 = vsel %vm3271, %v4038, 0
      %v4131 = vsel %vm3271, %v4039, 0
      %v4134 = vsel %vm3271, %v4040, 0
      %v4137 = vsel %vm3271, %v4041, 0
      %v4140 = vsel %vm3271, %v4042, 0
      %v4143 = vsel %vm3271, %v4043, 0
      %4145 = vmatprep.subr.mxu0 0.0
      %4146 = vmatpush1.xpose.msra.mxu0 %v4050
      %4147 = vmatprep.subr.mxu0 0.0
      %4148 = vmatpush1.xpose.msra.mxu0 %v4053
      %4149 = vmatprep.subr.mxu0 0.0
      %4150 = vmatpush1.xpose.msra.mxu0 %v4056
      %4151 = vmatprep.subr.mxu0 0.0
      %4152 = vmatpush1.xpose.msra.mxu0 %v4059
      %4153 = vmatprep.subr.mxu0 0.0
      %4154 = vmatpush1.xpose.msra.mxu0 %v4062
      %4155 = vmatprep.subr.mxu0 0.0
      %4156 = vmatpush1.xpose.msra.mxu0 %v4065
      %4157 = vmatprep.subr.mxu0 0.0
      %4158 = vmatpush1.xpose.msra.mxu0 %v4068
      %4159 = vmatprep.subr.mxu0 0.0
      %4160 = vmatpush1.xpose.msra.mxu0 %v4071
      %4161 = vmatprep.subr.mxu0 0.0
      %4162 = vmatpush1.xpose.msra.mxu0 %v4074
      %4163 = vmatprep.subr.mxu0 0.0
      %4164 = vmatpush1.xpose.msra.mxu0 %v4077
      %4165 = vmatprep.subr.mxu0 0.0
      %4166 = vmatpush1.xpose.msra.mxu0 %v4080
      %4167 = vmatprep.subr.mxu0 0.0
      %4168 = vmatpush1.xpose.msra.mxu0 %v4083
      %4169 = vmatprep.subr.mxu0 0.0
      %4170 = vmatpush1.xpose.msra.mxu0 %v4086
      %4171 = vmatprep.subr.mxu0 0.0
      %4172 = vmatpush1.xpose.msra.mxu0 %v4089
      %4173 = vmatprep.subr.mxu0 0.0
      %4174 = vmatpush1.xpose.msra.mxu0 %v4092
      %4175 = vmatprep.subr.mxu0 0.0
      %4176 = vmatpush1.xpose.msra.mxu0 %v4095
      %4177 = vmatprep.subr.mxu0 0.0
      %4178 = vmatpush1.xpose.msra.mxu0 %v4098
      %4179 = vmatprep.subr.mxu0 0.0
      %4180 = vmatpush1.xpose.msra.mxu0 %v4101
      %4181 = vmatprep.subr.mxu0 0.0
      %4182 = vmatpush1.xpose.msra.mxu0 %v4104
      %4183 = vmatprep.subr.mxu0 0.0
      %4184 = vmatpush1.xpose.msra.mxu0 %v4107
      %4185 = vmatprep.subr.mxu0 0.0
      %4186 = vmatpush1.xpose.msra.mxu0 %v4110
      %4187 = vmatprep.subr.mxu0 0.0
      %4188 = vmatpush1.xpose.msra.mxu0 %v4113
      %4189 = vmatprep.subr.mxu0 0.0
      %4190 = vmatpush1.xpose.msra.mxu0 %v4116
      %4191 = vmatprep.subr.mxu0 0.0
      %4192 = vmatpush1.xpose.msra.mxu0 %v4119
      %4193 = vmatprep.subr.mxu0 0.0
      %4194 = vmatpush1.xpose.msra.mxu0 %v4122
      %4195 = vmatprep.subr.mxu0 0.0
      %4196 = vmatpush1.xpose.msra.mxu0 %v4125
      %4197 = vmatprep.subr.mxu0 0.0
      %4198 = vmatpush1.xpose.msra.mxu0 %v4128
      %4199 = vmatprep.subr.mxu0 0.0
      %4200 = vmatpush1.xpose.msra.mxu0 %v4131
      %4201 = vmatprep.subr.mxu0 0.0
      %4202 = vmatpush1.xpose.msra.mxu0 %v4134
      %4203 = vmatprep.subr.mxu0 0.0
      %4204 = vmatpush1.xpose.msra.mxu0 %v4137
      %4205 = vmatprep.subr.mxu0 0.0
      %4206 = vmatpush1.xpose.msra.mxu0 %v4140
      %4207 = vmatprep.subr.mxu0 0.0
      %4208 = vmatpush1.xpose.msra.mxu0 %v4143
      %4209 = vmatprep.mubr.f32.mxu0 0.0
      %4210 = vmatmul.mubr.f32.gmra.mrb[0].mxu0 %v4047
      %v4211 = vpop.f32.mrb[0].mxu0
      %v4212 = vadd.f32 0.0, %v4211
      %v4213 = vpop.f32.mrb[0].mxu0
      %v4214 = vadd.f32 0.0, %v4213
      %4215 = vdwg.mxu0
      %v4216 = vadd.f32 %v4010, %v4212
      %v4217 = vadd.f32 %v4011, %v4214
      %v4218 = vld [vmem:[#allocation3 + $0x4] sm:$0xff]
      %v4219 = vld [vmem:[#allocation3 + $0xc] sm:$0xff]
      %v4220 = vld [vmem:[#allocation3 + $0x1c] sm:$0xff]
      %v4221 = vld [vmem:[#allocation3 + $0x24] sm:$0xff]
      %v4222 = vld [vmem:[#allocation3 + $0x34] sm:$0xff]
      %v4223 = vld [vmem:[#allocation3 + $0x3c] sm:$0xff]
      %v4224 = vld [vmem:[#allocation3 + $0x4c] sm:$0xff]
      %v4225 = vld [vmem:[#allocation3 + $0x54] sm:$0xff]
      %v4226 = vld [vmem:[#allocation3 + $0x64] sm:$0xff]
      %v4227 = vld [vmem:[#allocation3 + $0x6c] sm:$0xff]
      %v4228 = vld [vmem:[#allocation3 + $0x7c] sm:$0xff]
      %v4229 = vld [vmem:[#allocation3 + $0x84] sm:$0xff]
      %v4230 = vld [vmem:[#allocation3 + $0x94] sm:$0xff]
      %v4231 = vld [vmem:[#allocation3 + $0x9c] sm:$0xff]
      %v4232 = vld [vmem:[#allocation3 + $0xac] sm:$0xff]
      %v4233 = vld [vmem:[#allocation3 + $0xb4] sm:$0xff]
      %v4234 = vld [vmem:[#allocation3 + $0xc4] sm:$0xff]
      %v4235 = vld [vmem:[#allocation3 + $0xcc] sm:$0xff]
      %v4236 = vld [vmem:[#allocation3 + $0xdc] sm:$0xff]
      %v4237 = vld [vmem:[#allocation3 + $0xe4] sm:$0xff]
      %v4238 = vld [vmem:[#allocation3 + $0xf4] sm:$0xff]
      %v4239 = vld [vmem:[#allocation3 + $0xfc] sm:$0xff]
      %v4240 = vld [vmem:[#allocation3 + $0x10c] sm:$0xff]
      %v4241 = vld [vmem:[#allocation3 + $0x114] sm:$0xff]
      %v4242 = vld [vmem:[#allocation3 + $0x124] sm:$0xff]
      %v4243 = vld [vmem:[#allocation3 + $0x12c] sm:$0xff]
      %v4244 = vld [vmem:[#allocation3 + $0x13c] sm:$0xff]
      %v4245 = vld [vmem:[#allocation3 + $0x144] sm:$0xff]
      %v4246 = vld [vmem:[#allocation3 + $0x154] sm:$0xff]
      %v4247 = vld [vmem:[#allocation3 + $0x15c] sm:$0xff]
      %v4248 = vld [vmem:[#allocation3 + $0x16c] sm:$0xff]
      %v4249 = vld [vmem:[#allocation3 + $0x174] sm:$0xff]
      %s4250 = scalar_lea.vmem %s6, 16
      %v4251 = vld [vmem:[%s4250] sm:$0xff]
      %v4253 = vsel %vm3271, %v4251, 0
      %v4256 = vsel %vm3271, %v4218, 0
      %v4259 = vsel %vm3271, %v4219, 0
      %v4262 = vsel %vm3271, %v4220, 0
      %v4265 = vsel %vm3271, %v4221, 0
      %v4268 = vsel %vm3271, %v4222, 0
      %v4271 = vsel %vm3271, %v4223, 0
      %v4274 = vsel %vm3271, %v4224, 0
      %v4277 = vsel %vm3271, %v4225, 0
      %v4280 = vsel %vm3271, %v4226, 0
      %v4283 = vsel %vm3271, %v4227, 0
      %v4286 = vsel %vm3271, %v4228, 0
      %v4289 = vsel %vm3271, %v4229, 0
      %v4292 = vsel %vm3271, %v4230, 0
      %v4295 = vsel %vm3271, %v4231, 0
      %v4298 = vsel %vm3271, %v4232, 0
      %v4301 = vsel %vm3271, %v4233, 0
      %v4304 = vsel %vm3271, %v4234, 0
      %v4307 = vsel %vm3271, %v4235, 0
      %v4310 = vsel %vm3271, %v4236, 0
      %v4313 = vsel %vm3271, %v4237, 0
      %v4316 = vsel %vm3271, %v4238, 0
      %v4319 = vsel %vm3271, %v4239, 0
      %v4322 = vsel %vm3271, %v4240, 0
      %v4325 = vsel %vm3271, %v4241, 0
      %v4328 = vsel %vm3271, %v4242, 0
      %v4331 = vsel %vm3271, %v4243, 0
      %v4334 = vsel %vm3271, %v4244, 0
      %v4337 = vsel %vm3271, %v4245, 0
      %v4340 = vsel %vm3271, %v4246, 0
      %v4343 = vsel %vm3271, %v4247, 0
      %v4346 = vsel %vm3271, %v4248, 0
      %v4349 = vsel %vm3271, %v4249, 0
      %4351 = vmatprep.subr.mxu0 0.0
      %4352 = vmatpush1.xpose.msra.mxu0 %v4256
      %4353 = vmatprep.subr.mxu0 0.0
      %4354 = vmatpush1.xpose.msra.mxu0 %v4259
      %4355 = vmatprep.subr.mxu0 0.0
      %4356 = vmatpush1.xpose.msra.mxu0 %v4262
      %4357 = vmatprep.subr.mxu0 0.0
      %4358 = vmatpush1.xpose.msra.mxu0 %v4265
      %4359 = vmatprep.subr.mxu0 0.0
      %4360 = vmatpush1.xpose.msra.mxu0 %v4268
      %4361 = vmatprep.subr.mxu0 0.0
      %4362 = vmatpush1.xpose.msra.mxu0 %v4271
      %4363 = vmatprep.subr.mxu0 0.0
      %4364 = vmatpush1.xpose.msra.mxu0 %v4274
      %4365 = vmatprep.subr.mxu0 0.0
      %4366 = vmatpush1.xpose.msra.mxu0 %v4277
      %4367 = vmatprep.subr.mxu0 0.0
      %4368 = vmatpush1.xpose.msra.mxu0 %v4280
      %4369 = vmatprep.subr.mxu0 0.0
      %4370 = vmatpush1.xpose.msra.mxu0 %v4283
      %4371 = vmatprep.subr.mxu0 0.0
      %4372 = vmatpush1.xpose.msra.mxu0 %v4286
      %4373 = vmatprep.subr.mxu0 0.0
      %4374 = vmatpush1.xpose.msra.mxu0 %v4289
      %4375 = vmatprep.subr.mxu0 0.0
      %4376 = vmatpush1.xpose.msra.mxu0 %v4292
      %4377 = vmatprep.subr.mxu0 0.0
      %4378 = vmatpush1.xpose.msra.mxu0 %v4295
      %4379 = vmatprep.subr.mxu0 0.0
      %4380 = vmatpush1.xpose.msra.mxu0 %v4298
      %4381 = vmatprep.subr.mxu0 0.0
      %4382 = vmatpush1.xpose.msra.mxu0 %v4301
      %4383 = vmatprep.subr.mxu0 0.0
      %4384 = vmatpush1.xpose.msra.mxu0 %v4304
      %4385 = vmatprep.subr.mxu0 0.0
      %4386 = vmatpush1.xpose.msra.mxu0 %v4307
      %4387 = vmatprep.subr.mxu0 0.0
      %4388 = vmatpush1.xpose.msra.mxu0 %v4310
      %4389 = vmatprep.subr.mxu0 0.0
      %4390 = vmatpush1.xpose.msra.mxu0 %v4313
      %4391 = vmatprep.subr.mxu0 0.0
      %4392 = vmatpush1.xpose.msra.mxu0 %v4316
      %4393 = vmatprep.subr.mxu0 0.0
      %4394 = vmatpush1.xpose.msra.mxu0 %v4319
      %4395 = vmatprep.subr.mxu0 0.0
      %4396 = vmatpush1.xpose.msra.mxu0 %v4322
      %4397 = vmatprep.subr.mxu0 0.0
      %4398 = vmatpush1.xpose.msra.mxu0 %v4325
      %4399 = vmatprep.subr.mxu0 0.0
      %4400 = vmatpush1.xpose.msra.mxu0 %v4328
      %4401 = vmatprep.subr.mxu0 0.0
      %4402 = vmatpush1.xpose.msra.mxu0 %v4331
      %4403 = vmatprep.subr.mxu0 0.0
      %4404 = vmatpush1.xpose.msra.mxu0 %v4334
      %4405 = vmatprep.subr.mxu0 0.0
      %4406 = vmatpush1.xpose.msra.mxu0 %v4337
      %4407 = vmatprep.subr.mxu0 0.0
      %4408 = vmatpush1.xpose.msra.mxu0 %v4340
      %4409 = vmatprep.subr.mxu0 0.0
      %4410 = vmatpush1.xpose.msra.mxu0 %v4343
      %4411 = vmatprep.subr.mxu0 0.0
      %4412 = vmatpush1.xpose.msra.mxu0 %v4346
      %4413 = vmatprep.subr.mxu0 0.0
      %4414 = vmatpush1.xpose.msra.mxu0 %v4349
      %4415 = vmatprep.mubr.f32.mxu0 0.0
      %4416 = vmatmul.mubr.f32.gmra.mrb[0].mxu0 %v4253
      %v4417 = vpop.f32.mrb[0].mxu0
      %v4418 = vadd.f32 0.0, %v4417
      %v4419 = vpop.f32.mrb[0].mxu0
      %v4420 = vadd.f32 0.0, %v4419
      %4421 = vdwg.mxu0
      %v4422 = vadd.f32 %v4216, %v4418
      %v4423 = vadd.f32 %v4217, %v4420
      %v4424 = vld [vmem:[%s3734] sm:$0xff]
      %v4425 = vld [vmem:[%s3734 + $0x8] sm:$0xff]
      %v4426 = vld [vmem:[%s3734 + $0x18] sm:$0xff]
      %v4427 = vld [vmem:[%s3734 + $0x20] sm:$0xff]
      %v4428 = vld [vmem:[%s3734 + $0x30] sm:$0xff]
      %v4429 = vld [vmem:[%s3734 + $0x38] sm:$0xff]
      %v4430 = vld [vmem:[%s3734 + $0x48] sm:$0xff]
      %v4431 = vld [vmem:[%s3734 + $0x50] sm:$0xff]
      %v4432 = vld [vmem:[%s3734 + $0x60] sm:$0xff]
      %v4433 = vld [vmem:[%s3734 + $0x68] sm:$0xff]
      %v4434 = vld [vmem:[%s3734 + $0x78] sm:$0xff]
      %v4435 = vld [vmem:[%s3734 + $0x80] sm:$0xff]
      %v4436 = vld [vmem:[%s3734 + $0x90] sm:$0xff]
      %v4437 = vld [vmem:[%s3734 + $0x98] sm:$0xff]
      %v4438 = vld [vmem:[%s3734 + $0xa8] sm:$0xff]
      %v4439 = vld [vmem:[%s3734 + $0xb0] sm:$0xff]
      %v4440 = vld [vmem:[%s3734 + $0xc0] sm:$0xff]
      %v4441 = vld [vmem:[%s3734 + $0xc8] sm:$0xff]
      %v4442 = vld [vmem:[%s3734 + $0xd8] sm:$0xff]
      %v4443 = vld [vmem:[%s3734 + $0xe0] sm:$0xff]
      %v4444 = vld [vmem:[%s3734 + $0xf0] sm:$0xff]
      %v4445 = vld [vmem:[%s3734 + $0xf8] sm:$0xff]
      %v4446 = vld [vmem:[%s3734 + $0x108] sm:$0xff]
      %v4447 = vld [vmem:[%s3734 + $0x110] sm:$0xff]
      %v4448 = vld [vmem:[%s3734 + $0x120] sm:$0xff]
      %v4449 = vld [vmem:[%s3734 + $0x128] sm:$0xff]
      %v4450 = vld [vmem:[%s3734 + $0x138] sm:$0xff]
      %v4451 = vld [vmem:[%s3734 + $0x140] sm:$0xff]
      %v4452 = vld [vmem:[%s3734 + $0x150] sm:$0xff]
      %v4453 = vld [vmem:[%s3734 + $0x158] sm:$0xff]
      %v4454 = vld [vmem:[%s3734 + $0x168] sm:$0xff]
      %v4455 = vld [vmem:[%s3734 + $0x170] sm:$0xff]
      %s4456 = scalar_lea.vmem %s6, 24
      %v4457 = vld [vmem:[%s4456] sm:$0xff]
      %v4459 = vsel %vm3271, %v4457, 0
      %v4462 = vsel %vm3271, %v4424, 0
      %v4465 = vsel %vm3271, %v4425, 0
      %v4468 = vsel %vm3271, %v4426, 0
      %v4471 = vsel %vm3271, %v4427, 0
      %v4474 = vsel %vm3271, %v4428, 0
      %v4477 = vsel %vm3271, %v4429, 0
      %v4480 = vsel %vm3271, %v4430, 0
      %v4483 = vsel %vm3271, %v4431, 0
      %v4486 = vsel %vm3271, %v4432, 0
      %v4489 = vsel %vm3271, %v4433, 0
      %v4492 = vsel %vm3271, %v4434, 0
      %v4495 = vsel %vm3271, %v4435, 0
      %v4498 = vsel %vm3271, %v4436, 0
      %v4501 = vsel %vm3271, %v4437, 0
      %v4504 = vsel %vm3271, %v4438, 0
      %v4507 = vsel %vm3271, %v4439, 0
      %v4510 = vsel %vm3271, %v4440, 0
      %v4513 = vsel %vm3271, %v4441, 0
      %v4516 = vsel %vm3271, %v4442, 0
      %v4519 = vsel %vm3271, %v4443, 0
      %v4522 = vsel %vm3271, %v4444, 0
      %v4525 = vsel %vm3271, %v4445, 0
      %v4528 = vsel %vm3271, %v4446, 0
      %v4531 = vsel %vm3271, %v4447, 0
      %v4534 = vsel %vm3271, %v4448, 0
      %v4537 = vsel %vm3271, %v4449, 0
      %v4540 = vsel %vm3271, %v4450, 0
      %v4543 = vsel %vm3271, %v4451, 0
      %v4546 = vsel %vm3271, %v4452, 0
      %v4549 = vsel %vm3271, %v4453, 0
      %v4552 = vsel %vm3271, %v4454, 0
      %v4555 = vsel %vm3271, %v4455, 0
      %4557 = vmatprep.subr.mxu0 0.0
      %4558 = vmatpush1.xpose.msra.mxu0 %v4462
      %4559 = vmatprep.subr.mxu0 0.0
      %4560 = vmatpush1.xpose.msra.mxu0 %v4465
      %4561 = vmatprep.subr.mxu0 0.0
      %4562 = vmatpush1.xpose.msra.mxu0 %v4468
      %4563 = vmatprep.subr.mxu0 0.0
      %4564 = vmatpush1.xpose.msra.mxu0 %v4471
      %4565 = vmatprep.subr.mxu0 0.0
      %4566 = vmatpush1.xpose.msra.mxu0 %v4474
      %4567 = vmatprep.subr.mxu0 0.0
      %4568 = vmatpush1.xpose.msra.mxu0 %v4477
      %4569 = vmatprep.subr.mxu0 0.0
      %4570 = vmatpush1.xpose.msra.mxu0 %v4480
      %4571 = vmatprep.subr.mxu0 0.0
      %4572 = vmatpush1.xpose.msra.mxu0 %v4483
      %4573 = vmatprep.subr.mxu0 0.0
      %4574 = vmatpush1.xpose.msra.mxu0 %v4486
      %4575 = vmatprep.subr.mxu0 0.0
      %4576 = vmatpush1.xpose.msra.mxu0 %v4489
      %4577 = vmatprep.subr.mxu0 0.0
      %4578 = vmatpush1.xpose.msra.mxu0 %v4492
      %4579 = vmatprep.subr.mxu0 0.0
      %4580 = vmatpush1.xpose.msra.mxu0 %v4495
      %4581 = vmatprep.subr.mxu0 0.0
      %4582 = vmatpush1.xpose.msra.mxu0 %v4498
      %4583 = vmatprep.subr.mxu0 0.0
      %4584 = vmatpush1.xpose.msra.mxu0 %v4501
      %4585 = vmatprep.subr.mxu0 0.0
      %4586 = vmatpush1.xpose.msra.mxu0 %v4504
      %4587 = vmatprep.subr.mxu0 0.0
      %4588 = vmatpush1.xpose.msra.mxu0 %v4507
      %4589 = vmatprep.subr.mxu0 0.0
      %4590 = vmatpush1.xpose.msra.mxu0 %v4510
      %4591 = vmatprep.subr.mxu0 0.0
      %4592 = vmatpush1.xpose.msra.mxu0 %v4513
      %4593 = vmatprep.subr.mxu0 0.0
      %4594 = vmatpush1.xpose.msra.mxu0 %v4516
      %4595 = vmatprep.subr.mxu0 0.0
      %4596 = vmatpush1.xpose.msra.mxu0 %v4519
      %4597 = vmatprep.subr.mxu0 0.0
      %4598 = vmatpush1.xpose.msra.mxu0 %v4522
      %4599 = vmatprep.subr.mxu0 0.0
      %4600 = vmatpush1.xpose.msra.mxu0 %v4525
      %4601 = vmatprep.subr.mxu0 0.0
      %4602 = vmatpush1.xpose.msra.mxu0 %v4528
      %4603 = vmatprep.subr.mxu0 0.0
      %4604 = vmatpush1.xpose.msra.mxu0 %v4531
      %4605 = vmatprep.subr.mxu0 0.0
      %4606 = vmatpush1.xpose.msra.mxu0 %v4534
      %4607 = vmatprep.subr.mxu0 0.0
      %4608 = vmatpush1.xpose.msra.mxu0 %v4537
      %4609 = vmatprep.subr.mxu0 0.0
      %4610 = vmatpush1.xpose.msra.mxu0 %v4540
      %4611 = vmatprep.subr.mxu0 0.0
      %4612 = vmatpush1.xpose.msra.mxu0 %v4543
      %4613 = vmatprep.subr.mxu0 0.0
      %4614 = vmatpush1.xpose.msra.mxu0 %v4546
      %4615 = vmatprep.subr.mxu0 0.0
      %4616 = vmatpush1.xpose.msra.mxu0 %v4549
      %4617 = vmatprep.subr.mxu0 0.0
      %4618 = vmatpush1.xpose.msra.mxu0 %v4552
      %4619 = vmatprep.subr.mxu0 0.0
      %4620 = vmatpush1.xpose.msra.mxu0 %v4555
      %4621 = vmatprep.mubr.f32.mxu0 0.0
      %4622 = vmatmul.mubr.f32.gmra.mrb[0].mxu0 %v4459
      %v4623 = vpop.f32.mrb[0].mxu0
      %v4624 = vadd.f32 0.0, %v4623
      %v4625 = vpop.f32.mrb[0].mxu0
      %v4626 = vadd.f32 0.0, %v4625
      %4627 = vdwg.mxu0
      %v4628 = vadd.f32 %v4422, %v4624
      %v4629 = vadd.f32 %v4423, %v4626
      %v4630 = vld [vmem:[%s3734 + $0x2] sm:$0xff]
      %v4631 = vld [vmem:[%s3734 + $0xa] sm:$0xff]
      %v4632 = vld [vmem:[%s3734 + $0x1a] sm:$0xff]
      %v4633 = vld [vmem:[%s3734 + $0x22] sm:$0xff]
      %v4634 = vld [vmem:[%s3734 + $0x32] sm:$0xff]
      %v4635 = vld [vmem:[%s3734 + $0x3a] sm:$0xff]
      %v4636 = vld [vmem:[%s3734 + $0x4a] sm:$0xff]
      %v4637 = vld [vmem:[%s3734 + $0x52] sm:$0xff]
      %v4638 = vld [vmem:[%s3734 + $0x62] sm:$0xff]
      %v4639 = vld [vmem:[%s3734 + $0x6a] sm:$0xff]
      %v4640 = vld [vmem:[%s3734 + $0x7a] sm:$0xff]
      %v4641 = vld [vmem:[%s3734 + $0x82] sm:$0xff]
      %v4642 = vld [vmem:[%s3734 + $0x92] sm:$0xff]
      %v4643 = vld [vmem:[%s3734 + $0x9a] sm:$0xff]
      %v4644 = vld [vmem:[%s3734 + $0xaa] sm:$0xff]
      %v4645 = vld [vmem:[%s3734 + $0xb2] sm:$0xff]
      %v4646 = vld [vmem:[%s3734 + $0xc2] sm:$0xff]
      %v4647 = vld [vmem:[%s3734 + $0xca] sm:$0xff]
      %v4648 = vld [vmem:[%s3734 + $0xda] sm:$0xff]
      %v4649 = vld [vmem:[%s3734 + $0xe2] sm:$0xff]
      %v4650 = vld [vmem:[%s3734 + $0xf2] sm:$0xff]
      %v4651 = vld [vmem:[%s3734 + $0xfa] sm:$0xff]
      %v4652 = vld [vmem:[%s3734 + $0x10a] sm:$0xff]
      %v4653 = vld [vmem:[%s3734 + $0x112] sm:$0xff]
      %v4654 = vld [vmem:[%s3734 + $0x122] sm:$0xff]
      %v4655 = vld [vmem:[%s3734 + $0x12a] sm:$0xff]
      %v4656 = vld [vmem:[%s3734 + $0x13a] sm:$0xff]
      %v4657 = vld [vmem:[%s3734 + $0x142] sm:$0xff]
      %v4658 = vld [vmem:[%s3734 + $0x152] sm:$0xff]
      %v4659 = vld [vmem:[%s3734 + $0x15a] sm:$0xff]
      %v4660 = vld [vmem:[%s3734 + $0x16a] sm:$0xff]
      %v4661 = vld [vmem:[%s3734 + $0x172] sm:$0xff]
      %s4662 = scalar_lea.vmem %s6, 32
      %v4663 = vld [vmem:[%s4662] sm:$0xff]
      %v4665 = vsel %vm3271, %v4663, 0
      %v4668 = vsel %vm3271, %v4630, 0
      %v4671 = vsel %vm3271, %v4631, 0
      %v4674 = vsel %vm3271, %v4632, 0
      %v4677 = vsel %vm3271, %v4633, 0
      %v4680 = vsel %vm3271, %v4634, 0
      %v4683 = vsel %vm3271, %v4635, 0
      %v4686 = vsel %vm3271, %v4636, 0
      %v4689 = vsel %vm3271, %v4637, 0
      %v4692 = vsel %vm3271, %v4638, 0
      %v4695 = vsel %vm3271, %v4639, 0
      %v4698 = vsel %vm3271, %v4640, 0
      %v4701 = vsel %vm3271, %v4641, 0
      %v4704 = vsel %vm3271, %v4642, 0
      %v4707 = vsel %vm3271, %v4643, 0
      %v4710 = vsel %vm3271, %v4644, 0
      %v4713 = vsel %vm3271, %v4645, 0
      %v4716 = vsel %vm3271, %v4646, 0
      %v4719 = vsel %vm3271, %v4647, 0
      %v4722 = vsel %vm3271, %v4648, 0
      %v4725 = vsel %vm3271, %v4649, 0
      %v4728 = vsel %vm3271, %v4650, 0
      %v4731 = vsel %vm3271, %v4651, 0
      %v4734 = vsel %vm3271, %v4652, 0
      %v4737 = vsel %vm3271, %v4653, 0
      %v4740 = vsel %vm3271, %v4654, 0
      %v4743 = vsel %vm3271, %v4655, 0
      %v4746 = vsel %vm3271, %v4656, 0
      %v4749 = vsel %vm3271, %v4657, 0
      %v4752 = vsel %vm3271, %v4658, 0
      %v4755 = vsel %vm3271, %v4659, 0
      %v4758 = vsel %vm3271, %v4660, 0
      %v4761 = vsel %vm3271, %v4661, 0
      %4763 = vmatprep.subr.mxu0 0.0
      %4764 = vmatpush1.xpose.msra.mxu0 %v4668
      %4765 = vmatprep.subr.mxu0 0.0
      %4766 = vmatpush1.xpose.msra.mxu0 %v4671
      %4767 = vmatprep.subr.mxu0 0.0
      %4768 = vmatpush1.xpose.msra.mxu0 %v4674
      %4769 = vmatprep.subr.mxu0 0.0
      %4770 = vmatpush1.xpose.msra.mxu0 %v4677
      %4771 = vmatprep.subr.mxu0 0.0
      %4772 = vmatpush1.xpose.msra.mxu0 %v4680
      %4773 = vmatprep.subr.mxu0 0.0
      %4774 = vmatpush1.xpose.msra.mxu0 %v4683
      %4775 = vmatprep.subr.mxu0 0.0
      %4776 = vmatpush1.xpose.msra.mxu0 %v4686
      %4777 = vmatprep.subr.mxu0 0.0
      %4778 = vmatpush1.xpose.msra.mxu0 %v4689
      %4779 = vmatprep.subr.mxu0 0.0
      %4780 = vmatpush1.xpose.msra.mxu0 %v4692
      %4781 = vmatprep.subr.mxu0 0.0
      %4782 = vmatpush1.xpose.msra.mxu0 %v4695
      %4783 = vmatprep.subr.mxu0 0.0
      %4784 = vmatpush1.xpose.msra.mxu0 %v4698
      %4785 = vmatprep.subr.mxu0 0.0
      %4786 = vmatpush1.xpose.msra.mxu0 %v4701
      %4787 = vmatprep.subr.mxu0 0.0
      %4788 = vmatpush1.xpose.msra.mxu0 %v4704
      %4789 = vmatprep.subr.mxu0 0.0
      %4790 = vmatpush1.xpose.msra.mxu0 %v4707
      %4791 = vmatprep.subr.mxu0 0.0
      %4792 = vmatpush1.xpose.msra.mxu0 %v4710
      %4793 = vmatprep.subr.mxu0 0.0
      %4794 = vmatpush1.xpose.msra.mxu0 %v4713
      %4795 = vmatprep.subr.mxu0 0.0
      %4796 = vmatpush1.xpose.msra.mxu0 %v4716
      %4797 = vmatprep.subr.mxu0 0.0
      %4798 = vmatpush1.xpose.msra.mxu0 %v4719
      %4799 = vmatprep.subr.mxu0 0.0
      %4800 = vmatpush1.xpose.msra.mxu0 %v4722
      %4801 = vmatprep.subr.mxu0 0.0
      %4802 = vmatpush1.xpose.msra.mxu0 %v4725
      %4803 = vmatprep.subr.mxu0 0.0
      %4804 = vmatpush1.xpose.msra.mxu0 %v4728
      %4805 = vmatprep.subr.mxu0 0.0
      %4806 = vmatpush1.xpose.msra.mxu0 %v4731
      %4807 = vmatprep.subr.mxu0 0.0
      %4808 = vmatpush1.xpose.msra.mxu0 %v4734
      %4809 = vmatprep.subr.mxu0 0.0
      %4810 = vmatpush1.xpose.msra.mxu0 %v4737
      %4811 = vmatprep.subr.mxu0 0.0
      %4812 = vmatpush1.xpose.msra.mxu0 %v4740
      %4813 = vmatprep.subr.mxu0 0.0
      %4814 = vmatpush1.xpose.msra.mxu0 %v4743
      %4815 = vmatprep.subr.mxu0 0.0
      %4816 = vmatpush1.xpose.msra.mxu0 %v4746
      %4817 = vmatprep.subr.mxu0 0.0
      %4818 = vmatpush1.xpose.msra.mxu0 %v4749
      %4819 = vmatprep.subr.mxu0 0.0
      %4820 = vmatpush1.xpose.msra.mxu0 %v4752
      %4821 = vmatprep.subr.mxu0 0.0
      %4822 = vmatpush1.xpose.msra.mxu0 %v4755
      %4823 = vmatprep.subr.mxu0 0.0
      %4824 = vmatpush1.xpose.msra.mxu0 %v4758
      %4825 = vmatprep.subr.mxu0 0.0
      %4826 = vmatpush1.xpose.msra.mxu0 %v4761
      %4827 = vmatprep.mubr.f32.mxu0 0.0
      %4828 = vmatmul.mubr.f32.gmra.mrb[0].mxu0 %v4665
      %v4829 = vpop.f32.mrb[0].mxu0
      %v4830 = vadd.f32 0.0, %v4829
      %v4831 = vpop.f32.mrb[0].mxu0
      %v4832 = vadd.f32 0.0, %v4831
      %4833 = vdwg.mxu0
      %v4834 = vadd.f32 %v4628, %v4830
      %v4835 = vadd.f32 %v4629, %v4832
      %v4836 = vld [vmem:[%s3734 + $0x4] sm:$0xff]
      %v4837 = vld [vmem:[%s3734 + $0xc] sm:$0xff]
      %v4838 = vld [vmem:[%s3734 + $0x1c] sm:$0xff]
      %v4839 = vld [vmem:[%s3734 + $0x24] sm:$0xff]
      %v4840 = vld [vmem:[%s3734 + $0x34] sm:$0xff]
      %v4841 = vld [vmem:[%s3734 + $0x3c] sm:$0xff]
      %v4842 = vld [vmem:[%s3734 + $0x4c] sm:$0xff]
      %v4843 = vld [vmem:[%s3734 + $0x54] sm:$0xff]
      %v4844 = vld [vmem:[%s3734 + $0x64] sm:$0xff]
      %v4845 = vld [vmem:[%s3734 + $0x6c] sm:$0xff]
      %v4846 = vld [vmem:[%s3734 + $0x7c] sm:$0xff]
      %v4847 = vld [vmem:[%s3734 + $0x84] sm:$0xff]
      %v4848 = vld [vmem:[%s3734 + $0x94] sm:$0xff]
      %v4849 = vld [vmem:[%s3734 + $0x9c] sm:$0xff]
      %v4850 = vld [vmem:[%s3734 + $0xac] sm:$0xff]
      %v4851 = vld [vmem:[%s3734 + $0xb4] sm:$0xff]
      %v4852 = vld [vmem:[%s3734 + $0xc4] sm:$0xff]
      %v4853 = vld [vmem:[%s3734 + $0xcc] sm:$0xff]
      %v4854 = vld [vmem:[%s3734 + $0xdc] sm:$0xff]
      %v4855 = vld [vmem:[%s3734 + $0xe4] sm:$0xff]
      %v4856 = vld [vmem:[%s3734 + $0xf4] sm:$0xff]
      %v4857 = vld [vmem:[%s3734 + $0xfc] sm:$0xff]
      %v4858 = vld [vmem:[%s3734 + $0x10c] sm:$0xff]
      %v4859 = vld [vmem:[%s3734 + $0x114] sm:$0xff]
      %v4860 = vld [vmem:[%s3734 + $0x124] sm:$0xff]
      %v4861 = vld [vmem:[%s3734 + $0x12c] sm:$0xff]
      %v4862 = vld [vmem:[%s3734 + $0x13c] sm:$0xff]
      %v4863 = vld [vmem:[%s3734 + $0x144] sm:$0xff]
      %v4864 = vld [vmem:[%s3734 + $0x154] sm:$0xff]
      %v4865 = vld [vmem:[%s3734 + $0x15c] sm:$0xff]
      %v4866 = vld [vmem:[%s3734 + $0x16c] sm:$0xff]
      %v4867 = vld [vmem:[%s3734 + $0x174] sm:$0xff]
      %s4868 = scalar_lea.vmem %s6, 40
      %v4869 = vld [vmem:[%s4868] sm:$0xff]
      %v4871 = vsel %vm3271, %v4869, 0
      %v4874 = vsel %vm3271, %v4836, 0
      %v4877 = vsel %vm3271, %v4837, 0
      %v4880 = vsel %vm3271, %v4838, 0
      %v4883 = vsel %vm3271, %v4839, 0
      %v4886 = vsel %vm3271, %v4840, 0
      %v4889 = vsel %vm3271, %v4841, 0
      %v4892 = vsel %vm3271, %v4842, 0
      %v4895 = vsel %vm3271, %v4843, 0
      %v4898 = vsel %vm3271, %v4844, 0
      %v4901 = vsel %vm3271, %v4845, 0
      %v4904 = vsel %vm3271, %v4846, 0
      %v4907 = vsel %vm3271, %v4847, 0
      %v4910 = vsel %vm3271, %v4848, 0
      %v4913 = vsel %vm3271, %v4849, 0
      %v4916 = vsel %vm3271, %v4850, 0
      %v4919 = vsel %vm3271, %v4851, 0
      %v4922 = vsel %vm3271, %v4852, 0
      %v4925 = vsel %vm3271, %v4853, 0
      %v4928 = vsel %vm3271, %v4854, 0
      %v4931 = vsel %vm3271, %v4855, 0
      %v4934 = vsel %vm3271, %v4856, 0
      %v4937 = vsel %vm3271, %v4857, 0
      %v4940 = vsel %vm3271, %v4858, 0
      %v4943 = vsel %vm3271, %v4859, 0
      %v4946 = vsel %vm3271, %v4860, 0
      %v4949 = vsel %vm3271, %v4861, 0
      %v4952 = vsel %vm3271, %v4862, 0
      %v4955 = vsel %vm3271, %v4863, 0
      %v4958 = vsel %vm3271, %v4864, 0
      %v4961 = vsel %vm3271, %v4865, 0
      %v4964 = vsel %vm3271, %v4866, 0
      %v4967 = vsel %vm3271, %v4867, 0
      %4969 = vmatprep.subr.mxu0 0.0
      %4970 = vmatpush1.xpose.msra.mxu0 %v4874
      %4971 = vmatprep.subr.mxu0 0.0
      %4972 = vmatpush1.xpose.msra.mxu0 %v4877
      %4973 = vmatprep.subr.mxu0 0.0
      %4974 = vmatpush1.xpose.msra.mxu0 %v4880
      %4975 = vmatprep.subr.mxu0 0.0
      %4976 = vmatpush1.xpose.msra.mxu0 %v4883
      %4977 = vmatprep.subr.mxu0 0.0
      %4978 = vmatpush1.xpose.msra.mxu0 %v4886
      %4979 = vmatprep.subr.mxu0 0.0
      %4980 = vmatpush1.xpose.msra.mxu0 %v4889
      %4981 = vmatprep.subr.mxu0 0.0
      %4982 = vmatpush1.xpose.msra.mxu0 %v4892
      %4983 = vmatprep.subr.mxu0 0.0
      %4984 = vmatpush1.xpose.msra.mxu0 %v4895
      %4985 = vmatprep.subr.mxu0 0.0
      %4986 = vmatpush1.xpose.msra.mxu0 %v4898
      %4987 = vmatprep.subr.mxu0 0.0
      %4988 = vmatpush1.xpose.msra.mxu0 %v4901
      %4989 = vmatprep.subr.mxu0 0.0
      %4990 = vmatpush1.xpose.msra.mxu0 %v4904
      %4991 = vmatprep.subr.mxu0 0.0
      %4992 = vmatpush1.xpose.msra.mxu0 %v4907
      %4993 = vmatprep.subr.mxu0 0.0
      %4994 = vmatpush1.xpose.msra.mxu0 %v4910
      %4995 = vmatprep.subr.mxu0 0.0
      %4996 = vmatpush1.xpose.msra.mxu0 %v4913
      %4997 = vmatprep.subr.mxu0 0.0
      %4998 = vmatpush1.xpose.msra.mxu0 %v4916
      %4999 = vmatprep.subr.mxu0 0.0
      %5000 = vmatpush1.xpose.msra.mxu0 %v4919
      %5001 = vmatprep.subr.mxu0 0.0
      %5002 = vmatpush1.xpose.msra.mxu0 %v4922
      %5003 = vmatprep.subr.mxu0 0.0
      %5004 = vmatpush1.xpose.msra.mxu0 %v4925
      %5005 = vmatprep.subr.mxu0 0.0
      %5006 = vmatpush1.xpose.msra.mxu0 %v4928
      %5007 = vmatprep.subr.mxu0 0.0
      %5008 = vmatpush1.xpose.msra.mxu0 %v4931
      %5009 = vmatprep.subr.mxu0 0.0
      %5010 = vmatpush1.xpose.msra.mxu0 %v4934
      %5011 = vmatprep.subr.mxu0 0.0
      %5012 = vmatpush1.xpose.msra.mxu0 %v4937
      %5013 = vmatprep.subr.mxu0 0.0
      %5014 = vmatpush1.xpose.msra.mxu0 %v4940
      %5015 = vmatprep.subr.mxu0 0.0
      %5016 = vmatpush1.xpose.msra.mxu0 %v4943
      %5017 = vmatprep.subr.mxu0 0.0
      %5018 = vmatpush1.xpose.msra.mxu0 %v4946
      %5019 = vmatprep.subr.mxu0 0.0
      %5020 = vmatpush1.xpose.msra.mxu0 %v4949
      %5021 = vmatprep.subr.mxu0 0.0
      %5022 = vmatpush1.xpose.msra.mxu0 %v4952
      %5023 = vmatprep.subr.mxu0 0.0
      %5024 = vmatpush1.xpose.msra.mxu0 %v4955
      %5025 = vmatprep.subr.mxu0 0.0
      %5026 = vmatpush1.xpose.msra.mxu0 %v4958
      %5027 = vmatprep.subr.mxu0 0.0
      %5028 = vmatpush1.xpose.msra.mxu0 %v4961
      %5029 = vmatprep.subr.mxu0 0.0
      %5030 = vmatpush1.xpose.msra.mxu0 %v4964
      %5031 = vmatprep.subr.mxu0 0.0
      %5032 = vmatpush1.xpose.msra.mxu0 %v4967
      %5033 = vmatprep.mubr.f32.mxu0 0.0
      %5034 = vmatmul.mubr.f32.gmra.mrb[0].mxu0 %v4871
      %v5035 = vpop.f32.mrb[0].mxu0
      %v5036 = vadd.f32 0.0, %v5035
      %v5037 = vpop.f32.mrb[0].mxu0
      %v5038 = vadd.f32 0.0, %v5037
      %5039 = vdwg.mxu0
      %v5040 = vadd.f32 %v4834, %v5036
      %v5041 = vadd.f32 %v4835, %v5038
      %s5042 = scalar_lea.vmem [#allocation3], 96
      %v5043 = vld [vmem:[%s5042] sm:$0xff]
      %v5044 = vld [vmem:[%s5042 + $0x8] sm:$0xff]
      %v5045 = vld [vmem:[%s5042 + $0x18] sm:$0xff]
      %v5046 = vld [vmem:[%s5042 + $0x20] sm:$0xff]
      %v5047 = vld [vmem:[%s5042 + $0x30] sm:$0xff]
      %v5048 = vld [vmem:[%s5042 + $0x38] sm:$0xff]
      %v5049 = vld [vmem:[%s5042 + $0x48] sm:$0xff]
      %v5050 = vld [vmem:[%s5042 + $0x50] sm:$0xff]
      %v5051 = vld [vmem:[%s5042 + $0x60] sm:$0xff]
      %v5052 = vld [vmem:[%s5042 + $0x68] sm:$0xff]
      %v5053 = vld [vmem:[%s5042 + $0x78] sm:$0xff]
      %v5054 = vld [vmem:[%s5042 + $0x80] sm:$0xff]
      %v5055 = vld [vmem:[%s5042 + $0x90] sm:$0xff]
      %v5056 = vld [vmem:[%s5042 + $0x98] sm:$0xff]
      %v5057 = vld [vmem:[%s5042 + $0xa8] sm:$0xff]
      %v5058 = vld [vmem:[%s5042 + $0xb0] sm:$0xff]
      %v5059 = vld [vmem:[%s5042 + $0xc0] sm:$0xff]
      %v5060 = vld [vmem:[%s5042 + $0xc8] sm:$0xff]
      %v5061 = vld [vmem:[%s5042 + $0xd8] sm:$0xff]
      %v5062 = vld [vmem:[%s5042 + $0xe0] sm:$0xff]
      %v5063 = vld [vmem:[%s5042 + $0xf0] sm:$0xff]
      %v5064 = vld [vmem:[%s5042 + $0xf8] sm:$0xff]
      %v5065 = vld [vmem:[%s5042 + $0x108] sm:$0xff]
      %v5066 = vld [vmem:[%s5042 + $0x110] sm:$0xff]
      %v5067 = vld [vmem:[%s5042 + $0x120] sm:$0xff]
      %v5068 = vld [vmem:[%s5042 + $0x128] sm:$0xff]
      %v5069 = vld [vmem:[%s5042 + $0x138] sm:$0xff]
      %v5070 = vld [vmem:[%s5042 + $0x140] sm:$0xff]
      %v5071 = vld [vmem:[%s5042 + $0x150] sm:$0xff]
      %v5072 = vld [vmem:[%s5042 + $0x158] sm:$0xff]
      %v5073 = vld [vmem:[%s5042 + $0x168] sm:$0xff]
      %v5074 = vld [vmem:[%s5042 + $0x170] sm:$0xff]
      %s5075 = scalar_lea.vmem %s6, 48
      %v5076 = vld [vmem:[%s5075] sm:$0xff]
      %v5078 = vsel %vm3271, %v5076, 0
      %v5081 = vsel %vm3271, %v5043, 0
      %v5084 = vsel %vm3271, %v5044, 0
      %v5087 = vsel %vm3271, %v5045, 0
      %v5090 = vsel %vm3271, %v5046, 0
      %v5093 = vsel %vm3271, %v5047, 0
      %v5096 = vsel %vm3271, %v5048, 0
      %v5099 = vsel %vm3271, %v5049, 0
      %v5102 = vsel %vm3271, %v5050, 0
      %v5105 = vsel %vm3271, %v5051, 0
      %v5108 = vsel %vm3271, %v5052, 0
      %v5111 = vsel %vm3271, %v5053, 0
      %v5114 = vsel %vm3271, %v5054, 0
      %v5117 = vsel %vm3271, %v5055, 0
      %v5120 = vsel %vm3271, %v5056, 0
      %v5123 = vsel %vm3271, %v5057, 0
      %v5126 = vsel %vm3271, %v5058, 0
      %v5129 = vsel %vm3271, %v5059, 0
      %v5132 = vsel %vm3271, %v5060, 0
      %v5135 = vsel %vm3271, %v5061, 0
      %v5138 = vsel %vm3271, %v5062, 0
      %v5141 = vsel %vm3271, %v5063, 0
      %v5144 = vsel %vm3271, %v5064, 0
      %v5147 = vsel %vm3271, %v5065, 0
      %v5150 = vsel %vm3271, %v5066, 0
      %v5153 = vsel %vm3271, %v5067, 0
      %v5156 = vsel %vm3271, %v5068, 0
      %v5159 = vsel %vm3271, %v5069, 0
      %v5162 = vsel %vm3271, %v5070, 0
      %v5165 = vsel %vm3271, %v5071, 0
      %v5168 = vsel %vm3271, %v5072, 0
      %v5171 = vsel %vm3271, %v5073, 0
      %v5174 = vsel %vm3271, %v5074, 0
      %5176 = vmatprep.subr.mxu0 0.0
      %5177 = vmatpush1.xpose.msra.mxu0 %v5081
      %5178 = vmatprep.subr.mxu0 0.0
      %5179 = vmatpush1.xpose.msra.mxu0 %v5084
      %5180 = vmatprep.subr.mxu0 0.0
      %5181 = vmatpush1.xpose.msra.mxu0 %v5087
      %5182 = vmatprep.subr.mxu0 0.0
      %5183 = vmatpush1.xpose.msra.mxu0 %v5090
      %5184 = vmatprep.subr.mxu0 0.0
      %5185 = vmatpush1.xpose.msra.mxu0 %v5093
      %5186 = vmatprep.subr.mxu0 0.0
      %5187 = vmatpush1.xpose.msra.mxu0 %v5096
      %5188 = vmatprep.subr.mxu0 0.0
      %5189 = vmatpush1.xpose.msra.mxu0 %v5099
      %5190 = vmatprep.subr.mxu0 0.0
      %5191 = vmatpush1.xpose.msra.mxu0 %v5102
      %5192 = vmatprep.subr.mxu0 0.0
      %5193 = vmatpush1.xpose.msra.mxu0 %v5105
      %5194 = vmatprep.subr.mxu0 0.0
      %5195 = vmatpush1.xpose.msra.mxu0 %v5108
      %5196 = vmatprep.subr.mxu0 0.0
      %5197 = vmatpush1.xpose.msra.mxu0 %v5111
      %5198 = vmatprep.subr.mxu0 0.0
      %5199 = vmatpush1.xpose.msra.mxu0 %v5114
      %5200 = vmatprep.subr.mxu0 0.0
      %5201 = vmatpush1.xpose.msra.mxu0 %v5117
      %5202 = vmatprep.subr.mxu0 0.0
      %5203 = vmatpush1.xpose.msra.mxu0 %v5120
      %5204 = vmatprep.subr.mxu0 0.0
      %5205 = vmatpush1.xpose.msra.mxu0 %v5123
      %5206 = vmatprep.subr.mxu0 0.0
      %5207 = vmatpush1.xpose.msra.mxu0 %v5126
      %5208 = vmatprep.subr.mxu0 0.0
      %5209 = vmatpush1.xpose.msra.mxu0 %v5129
      %5210 = vmatprep.subr.mxu0 0.0
      %5211 = vmatpush1.xpose.msra.mxu0 %v5132
      %5212 = vmatprep.subr.mxu0 0.0
      %5213 = vmatpush1.xpose.msra.mxu0 %v5135
      %5214 = vmatprep.subr.mxu0 0.0
      %5215 = vmatpush1.xpose.msra.mxu0 %v5138
      %5216 = vmatprep.subr.mxu0 0.0
      %5217 = vmatpush1.xpose.msra.mxu0 %v5141
      %5218 = vmatprep.subr.mxu0 0.0
      %5219 = vmatpush1.xpose.msra.mxu0 %v5144
      %5220 = vmatprep.subr.mxu0 0.0
      %5221 = vmatpush1.xpose.msra.mxu0 %v5147
      %5222 = vmatprep.subr.mxu0 0.0
      %5223 = vmatpush1.xpose.msra.mxu0 %v5150
      %5224 = vmatprep.subr.mxu0 0.0
      %5225 = vmatpush1.xpose.msra.mxu0 %v5153
      %5226 = vmatprep.subr.mxu0 0.0
      %5227 = vmatpush1.xpose.msra.mxu0 %v5156
      %5228 = vmatprep.subr.mxu0 0.0
      %5229 = vmatpush1.xpose.msra.mxu0 %v5159
      %5230 = vmatprep.subr.mxu0 0.0
      %5231 = vmatpush1.xpose.msra.mxu0 %v5162
      %5232 = vmatprep.subr.mxu0 0.0
      %5233 = vmatpush1.xpose.msra.mxu0 %v5165
      %5234 = vmatprep.subr.mxu0 0.0
      %5235 = vmatpush1.xpose.msra.mxu0 %v5168
      %5236 = vmatprep.subr.mxu0 0.0
      %5237 = vmatpush1.xpose.msra.mxu0 %v5171
      %5238 = vmatprep.subr.mxu0 0.0
      %5239 = vmatpush1.xpose.msra.mxu0 %v5174
      %5240 = vmatprep.mubr.f32.mxu0 0.0
      %5241 = vmatmul.mubr.f32.gmra.mrb[0].mxu0 %v5078
      %v5242 = vpop.f32.mrb[0].mxu0
      %v5243 = vadd.f32 0.0, %v5242
      %v5244 = vpop.f32.mrb[0].mxu0
      %v5245 = vadd.f32 0.0, %v5244
      %5246 = vdwg.mxu0
      %v5247 = vadd.f32 %v5040, %v5243
      %v5248 = vadd.f32 %v5041, %v5245
      %v5249 = vld [vmem:[%s5042 + $0x2] sm:$0xff]
      %v5250 = vld [vmem:[%s5042 + $0xa] sm:$0xff]
      %v5251 = vld [vmem:[%s5042 + $0x1a] sm:$0xff]
      %v5252 = vld [vmem:[%s5042 + $0x22] sm:$0xff]
      %v5253 = vld [vmem:[%s5042 + $0x32] sm:$0xff]
      %v5254 = vld [vmem:[%s5042 + $0x3a] sm:$0xff]
      %v5255 = vld [vmem:[%s5042 + $0x4a] sm:$0xff]
      %v5256 = vld [vmem:[%s5042 + $0x52] sm:$0xff]
      %v5257 = vld [vmem:[%s5042 + $0x62] sm:$0xff]
      %v5258 = vld [vmem:[%s5042 + $0x6a] sm:$0xff]
      %v5259 = vld [vmem:[%s5042 + $0x7a] sm:$0xff]
      %v5260 = vld [vmem:[%s5042 + $0x82] sm:$0xff]
      %v5261 = vld [vmem:[%s5042 + $0x92] sm:$0xff]
      %v5262 = vld [vmem:[%s5042 + $0x9a] sm:$0xff]
      %v5263 = vld [vmem:[%s5042 + $0xaa] sm:$0xff]
      %v5264 = vld [vmem:[%s5042 + $0xb2] sm:$0xff]
      %v5265 = vld [vmem:[%s5042 + $0xc2] sm:$0xff]
      %v5266 = vld [vmem:[%s5042 + $0xca] sm:$0xff]
      %v5267 = vld [vmem:[%s5042 + $0xda] sm:$0xff]
      %v5268 = vld [vmem:[%s5042 + $0xe2] sm:$0xff]
      %v5269 = vld [vmem:[%s5042 + $0xf2] sm:$0xff]
      %v5270 = vld [vmem:[%s5042 + $0xfa] sm:$0xff]
      %v5271 = vld [vmem:[%s5042 + $0x10a] sm:$0xff]
      %v5272 = vld [vmem:[%s5042 + $0x112] sm:$0xff]
      %v5273 = vld [vmem:[%s5042 + $0x122] sm:$0xff]
      %v5274 = vld [vmem:[%s5042 + $0x12a] sm:$0xff]
      %v5275 = vld [vmem:[%s5042 + $0x13a] sm:$0xff]
      %v5276 = vld [vmem:[%s5042 + $0x142] sm:$0xff]
      %v5277 = vld [vmem:[%s5042 + $0x152] sm:$0xff]
      %v5278 = vld [vmem:[%s5042 + $0x15a] sm:$0xff]
      %v5279 = vld [vmem:[%s5042 + $0x16a] sm:$0xff]
      %v5280 = vld [vmem:[%s5042 + $0x172] sm:$0xff]
      %s5281 = scalar_lea.vmem %s6, 56
      %v5282 = vld [vmem:[%s5281] sm:$0xff]
      %v5284 = vsel %vm3271, %v5282, 0
      %v5287 = vsel %vm3271, %v5249, 0
      %v5290 = vsel %vm3271, %v5250, 0
      %v5293 = vsel %vm3271, %v5251, 0
      %v5296 = vsel %vm3271, %v5252, 0
      %v5299 = vsel %vm3271, %v5253, 0
      %v5302 = vsel %vm3271, %v5254, 0
      %v5305 = vsel %vm3271, %v5255, 0
      %v5308 = vsel %vm3271, %v5256, 0
      %v5311 = vsel %vm3271, %v5257, 0
      %v5314 = vsel %vm3271, %v5258, 0
      %v5317 = vsel %vm3271, %v5259, 0
      %v5320 = vsel %vm3271, %v5260, 0
      %v5323 = vsel %vm3271, %v5261, 0
      %v5326 = vsel %vm3271, %v5262, 0
      %v5329 = vsel %vm3271, %v5263, 0
      %v5332 = vsel %vm3271, %v5264, 0
      %v5335 = vsel %vm3271, %v5265, 0
      %v5338 = vsel %vm3271, %v5266, 0
      %v5341 = vsel %vm3271, %v5267, 0
      %v5344 = vsel %vm3271, %v5268, 0
      %v5347 = vsel %vm3271, %v5269, 0
      %v5350 = vsel %vm3271, %v5270, 0
      %v5353 = vsel %vm3271, %v5271, 0
      %v5356 = vsel %vm3271, %v5272, 0
      %v5359 = vsel %vm3271, %v5273, 0
      %v5362 = vsel %vm3271, %v5274, 0
      %v5365 = vsel %vm3271, %v5275, 0
      %v5368 = vsel %vm3271, %v5276, 0
      %v5371 = vsel %vm3271, %v5277, 0
      %v5374 = vsel %vm3271, %v5278, 0
      %v5377 = vsel %vm3271, %v5279, 0
      %v5380 = vsel %vm3271, %v5280, 0
      %5382 = vmatprep.subr.mxu0 0.0
      %5383 = vmatpush1.xpose.msra.mxu0 %v5287
      %5384 = vmatprep.subr.mxu0 0.0
      %5385 = vmatpush1.xpose.msra.mxu0 %v5290
      %5386 = vmatprep.subr.mxu0 0.0
      %5387 = vmatpush1.xpose.msra.mxu0 %v5293
      %5388 = vmatprep.subr.mxu0 0.0
      %5389 = vmatpush1.xpose.msra.mxu0 %v5296
      %5390 = vmatprep.subr.mxu0 0.0
      %5391 = vmatpush1.xpose.msra.mxu0 %v5299
      %5392 = vmatprep.subr.mxu0 0.0
      %5393 = vmatpush1.xpose.msra.mxu0 %v5302
      %5394 = vmatprep.subr.mxu0 0.0
      %5395 = vmatpush1.xpose.msra.mxu0 %v5305
      %5396 = vmatprep.subr.mxu0 0.0
      %5397 = vmatpush1.xpose.msra.mxu0 %v5308
      %5398 = vmatprep.subr.mxu0 0.0
      %5399 = vmatpush1.xpose.msra.mxu0 %v5311
      %5400 = vmatprep.subr.mxu0 0.0
      %5401 = vmatpush1.xpose.msra.mxu0 %v5314
      %5402 = vmatprep.subr.mxu0 0.0
      %5403 = vmatpush1.xpose.msra.mxu0 %v5317
      %5404 = vmatprep.subr.mxu0 0.0
      %5405 = vmatpush1.xpose.msra.mxu0 %v5320
      %5406 = vmatprep.subr.mxu0 0.0
      %5407 = vmatpush1.xpose.msra.mxu0 %v5323
      %5408 = vmatprep.subr.mxu0 0.0
      %5409 = vmatpush1.xpose.msra.mxu0 %v5326
      %5410 = vmatprep.subr.mxu0 0.0
      %5411 = vmatpush1.xpose.msra.mxu0 %v5329
      %5412 = vmatprep.subr.mxu0 0.0
      %5413 = vmatpush1.xpose.msra.mxu0 %v5332
      %5414 = vmatprep.subr.mxu0 0.0
      %5415 = vmatpush1.xpose.msra.mxu0 %v5335
      %5416 = vmatprep.subr.mxu0 0.0
      %5417 = vmatpush1.xpose.msra.mxu0 %v5338
      %5418 = vmatprep.subr.mxu0 0.0
      %5419 = vmatpush1.xpose.msra.mxu0 %v5341
      %5420 = vmatprep.subr.mxu0 0.0
      %5421 = vmatpush1.xpose.msra.mxu0 %v5344
      %5422 = vmatprep.subr.mxu0 0.0
      %5423 = vmatpush1.xpose.msra.mxu0 %v5347
      %5424 = vmatprep.subr.mxu0 0.0
      %5425 = vmatpush1.xpose.msra.mxu0 %v5350
      %5426 = vmatprep.subr.mxu0 0.0
      %5427 = vmatpush1.xpose.msra.mxu0 %v5353
      %5428 = vmatprep.subr.mxu0 0.0
      %5429 = vmatpush1.xpose.msra.mxu0 %v5356
      %5430 = vmatprep.subr.mxu0 0.0
      %5431 = vmatpush1.xpose.msra.mxu0 %v5359
      %5432 = vmatprep.subr.mxu0 0.0
      %5433 = vmatpush1.xpose.msra.mxu0 %v5362
      %5434 = vmatprep.subr.mxu0 0.0
      %5435 = vmatpush1.xpose.msra.mxu0 %v5365
      %5436 = vmatprep.subr.mxu0 0.0
      %5437 = vmatpush1.xpose.msra.mxu0 %v5368
      %5438 = vmatprep.subr.mxu0 0.0
      %5439 = vmatpush1.xpose.msra.mxu0 %v5371
      %5440 = vmatprep.subr.mxu0 0.0
      %5441 = vmatpush1.xpose.msra.mxu0 %v5374
      %5442 = vmatprep.subr.mxu0 0.0
      %5443 = vmatpush1.xpose.msra.mxu0 %v5377
      %5444 = vmatprep.subr.mxu0 0.0
      %5445 = vmatpush1.xpose.msra.mxu0 %v5380
      %5446 = vmatprep.mubr.f32.mxu0 0.0
      %5447 = vmatmul.mubr.f32.gmra.mrb[0].mxu0 %v5284
      %v5448 = vpop.f32.mrb[0].mxu0
      %v5449 = vadd.f32 0.0, %v5448
      %v5450 = vpop.f32.mrb[0].mxu0
      %v5451 = vadd.f32 0.0, %v5450
      %5452 = vdwg.mxu0
      %v5453 = vadd.f32 %v5247, %v5449
      %v5454 = vadd.f32 %v5248, %v5451
      %v5455 = vld [vmem:[%s5042 + $0x4] sm:$0xff]
      %v5456 = vld [vmem:[%s5042 + $0xc] sm:$0xff]
      %v5457 = vld [vmem:[%s5042 + $0x1c] sm:$0xff]
      %v5458 = vld [vmem:[%s5042 + $0x24] sm:$0xff]
      %v5459 = vld [vmem:[%s5042 + $0x34] sm:$0xff]
      %v5460 = vld [vmem:[%s5042 + $0x3c] sm:$0xff]
      %v5461 = vld [vmem:[%s5042 + $0x4c] sm:$0xff]
      %v5462 = vld [vmem:[%s5042 + $0x54] sm:$0xff]
      %v5463 = vld [vmem:[%s5042 + $0x64] sm:$0xff]
      %v5464 = vld [vmem:[%s5042 + $0x6c] sm:$0xff]
      %v5465 = vld [vmem:[%s5042 + $0x7c] sm:$0xff]
      %v5466 = vld [vmem:[%s5042 + $0x84] sm:$0xff]
      %v5467 = vld [vmem:[%s5042 + $0x94] sm:$0xff]
      %v5468 = vld [vmem:[%s5042 + $0x9c] sm:$0xff]
      %v5469 = vld [vmem:[%s5042 + $0xac] sm:$0xff]
      %v5470 = vld [vmem:[%s5042 + $0xb4] sm:$0xff]
      %v5471 = vld [vmem:[%s5042 + $0xc4] sm:$0xff]
      %v5472 = vld [vmem:[%s5042 + $0xcc] sm:$0xff]
      %v5473 = vld [vmem:[%s5042 + $0xdc] sm:$0xff]
      %v5474 = vld [vmem:[%s5042 + $0xe4] sm:$0xff]
      %v5475 = vld [vmem:[%s5042 + $0xf4] sm:$0xff]
      %v5476 = vld [vmem:[%s5042 + $0xfc] sm:$0xff]
      %v5477 = vld [vmem:[%s5042 + $0x10c] sm:$0xff]
      %v5478 = vld [vmem:[%s5042 + $0x114] sm:$0xff]
      %v5479 = vld [vmem:[%s5042 + $0x124] sm:$0xff]
      %v5480 = vld [vmem:[%s5042 + $0x12c] sm:$0xff]
      %v5481 = vld [vmem:[%s5042 + $0x13c] sm:$0xff]
      %v5482 = vld [vmem:[%s5042 + $0x144] sm:$0xff]
      %v5483 = vld [vmem:[%s5042 + $0x154] sm:$0xff]
      %v5484 = vld [vmem:[%s5042 + $0x15c] sm:$0xff]
      %v5485 = vld [vmem:[%s5042 + $0x16c] sm:$0xff]
      %v5486 = vld [vmem:[%s5042 + $0x174] sm:$0xff]
      %s5487 = scalar_lea.vmem %s6, 64
      %v5488 = vld [vmem:[%s5487] sm:$0xff]
      %v5490 = vsel %vm3271, %v5488, 0
      %v5493 = vsel %vm3271, %v5455, 0
      %v5496 = vsel %vm3271, %v5456, 0
      %v5499 = vsel %vm3271, %v5457, 0
      %v5502 = vsel %vm3271, %v5458, 0
      %v5505 = vsel %vm3271, %v5459, 0
      %v5508 = vsel %vm3271, %v5460, 0
      %v5511 = vsel %vm3271, %v5461, 0
      %v5514 = vsel %vm3271, %v5462, 0
      %v5517 = vsel %vm3271, %v5463, 0
      %v5520 = vsel %vm3271, %v5464, 0
      %v5523 = vsel %vm3271, %v5465, 0
      %v5526 = vsel %vm3271, %v5466, 0
      %v5529 = vsel %vm3271, %v5467, 0
      %v5532 = vsel %vm3271, %v5468, 0
      %v5535 = vsel %vm3271, %v5469, 0
      %v5538 = vsel %vm3271, %v5470, 0
      %v5541 = vsel %vm3271, %v5471, 0
      %v5544 = vsel %vm3271, %v5472, 0
      %v5547 = vsel %vm3271, %v5473, 0
      %v5550 = vsel %vm3271, %v5474, 0
      %v5553 = vsel %vm3271, %v5475, 0
      %v5556 = vsel %vm3271, %v5476, 0
      %v5559 = vsel %vm3271, %v5477, 0
      %v5562 = vsel %vm3271, %v5478, 0
      %v5565 = vsel %vm3271, %v5479, 0
      %v5568 = vsel %vm3271, %v5480, 0
      %v5571 = vsel %vm3271, %v5481, 0
      %v5574 = vsel %vm3271, %v5482, 0
      %v5577 = vsel %vm3271, %v5483, 0
      %v5580 = vsel %vm3271, %v5484, 0
      %v5583 = vsel %vm3271, %v5485, 0
      %v5586 = vsel %vm3271, %v5486, 0
      %5588 = vmatprep.subr.mxu0 0.0
      %5589 = vmatpush1.xpose.msra.mxu0 %v5493
      %5590 = vmatprep.subr.mxu0 0.0
      %5591 = vmatpush1.xpose.msra.mxu0 %v5496
      %5592 = vmatprep.subr.mxu0 0.0
      %5593 = vmatpush1.xpose.msra.mxu0 %v5499
      %5594 = vmatprep.subr.mxu0 0.0
      %5595 = vmatpush1.xpose.msra.mxu0 %v5502
      %5596 = vmatprep.subr.mxu0 0.0
      %5597 = vmatpush1.xpose.msra.mxu0 %v5505
      %5598 = vmatprep.subr.mxu0 0.0
      %5599 = vmatpush1.xpose.msra.mxu0 %v5508
      %5600 = vmatprep.subr.mxu0 0.0
      %5601 = vmatpush1.xpose.msra.mxu0 %v5511
      %5602 = vmatprep.subr.mxu0 0.0
      %5603 = vmatpush1.xpose.msra.mxu0 %v5514
      %5604 = vmatprep.subr.mxu0 0.0
      %5605 = vmatpush1.xpose.msra.mxu0 %v5517
      %5606 = vmatprep.subr.mxu0 0.0
      %5607 = vmatpush1.xpose.msra.mxu0 %v5520
      %5608 = vmatprep.subr.mxu0 0.0
      %5609 = vmatpush1.xpose.msra.mxu0 %v5523
      %5610 = vmatprep.subr.mxu0 0.0
      %5611 = vmatpush1.xpose.msra.mxu0 %v5526
      %5612 = vmatprep.subr.mxu0 0.0
      %5613 = vmatpush1.xpose.msra.mxu0 %v5529
      %5614 = vmatprep.subr.mxu0 0.0
      %5615 = vmatpush1.xpose.msra.mxu0 %v5532
      %5616 = vmatprep.subr.mxu0 0.0
      %5617 = vmatpush1.xpose.msra.mxu0 %v5535
      %5618 = vmatprep.subr.mxu0 0.0
      %5619 = vmatpush1.xpose.msra.mxu0 %v5538
      %5620 = vmatprep.subr.mxu0 0.0
      %5621 = vmatpush1.xpose.msra.mxu0 %v5541
      %5622 = vmatprep.subr.mxu0 0.0
      %5623 = vmatpush1.xpose.msra.mxu0 %v5544
      %5624 = vmatprep.subr.mxu0 0.0
      %5625 = vmatpush1.xpose.msra.mxu0 %v5547
      %5626 = vmatprep.subr.mxu0 0.0
      %5627 = vmatpush1.xpose.msra.mxu0 %v5550
      %5628 = vmatprep.subr.mxu0 0.0
      %5629 = vmatpush1.xpose.msra.mxu0 %v5553
      %5630 = vmatprep.subr.mxu0 0.0
      %5631 = vmatpush1.xpose.msra.mxu0 %v5556
      %5632 = vmatprep.subr.mxu0 0.0
      %5633 = vmatpush1.xpose.msra.mxu0 %v5559
      %5634 = vmatprep.subr.mxu0 0.0
      %5635 = vmatpush1.xpose.msra.mxu0 %v5562
      %5636 = vmatprep.subr.mxu0 0.0
      %5637 = vmatpush1.xpose.msra.mxu0 %v5565
      %5638 = vmatprep.subr.mxu0 0.0
      %5639 = vmatpush1.xpose.msra.mxu0 %v5568
      %5640 = vmatprep.subr.mxu0 0.0
      %5641 = vmatpush1.xpose.msra.mxu0 %v5571
      %5642 = vmatprep.subr.mxu0 0.0
      %5643 = vmatpush1.xpose.msra.mxu0 %v5574
      %5644 = vmatprep.subr.mxu0 0.0
      %5645 = vmatpush1.xpose.msra.mxu0 %v5577
      %5646 = vmatprep.subr.mxu0 0.0
      %5647 = vmatpush1.xpose.msra.mxu0 %v5580
      %5648 = vmatprep.subr.mxu0 0.0
      %5649 = vmatpush1.xpose.msra.mxu0 %v5583
      %5650 = vmatprep.subr.mxu0 0.0
      %5651 = vmatpush1.xpose.msra.mxu0 %v5586
      %5652 = vmatprep.mubr.f32.mxu0 0.0
      %5653 = vmatmul.mubr.f32.gmra.mrb[0].mxu0 %v5490
      %v5654 = vpop.f32.mrb[0].mxu0
      %v5655 = vadd.f32 0.0, %v5654
      %v5656 = vpop.f32.mrb[0].mxu0
      %v5657 = vadd.f32 0.0, %v5656
      %5658 = vdwg.mxu0
      %v5659 = vadd.f32 %v5453, %v5655
      %v5660 = vadd.f32 %v5454, %v5657
      %v5663 = vrot.slane %v5659, 4
      %v5664 = vrot.slane %v5660, 4
      %5667 = vst [vmem:[%s426] sm:$0xf0] %v5663
      %5668 = vst [vmem:[%s426 + $0x8] sm:$0xf0] %v5664
      %5669 = vst [vmem:[%s426 + $0x10] sm:$0xf] %v5663
      %5670 = vst [vmem:[%s426 + $0x18] sm:$0xf] %v5664
      %v5671 = vld [vmem:[%s421] sm:$0xff]
      %v5672 = vld [vmem:[%s421 + $0x8] sm:$0xff]
      %v5673 = vld [vmem:[%s4] sm:$0xff]
      %v5674 = vld [vmem:[%s4 + $0x8] sm:$0xff]
      %v5675 = vld [vmem:[%s4 + $0x10] sm:$0xff]
      %v5676 = vld [vmem:[%s4 + $0x18] sm:$0xff]
      %v5677 = vld [vmem:[%s4 + $0x20] sm:$0xff]
      %v5678 = vld [vmem:[%s4 + $0x28] sm:$0xff]
      %v5679 = vld [vmem:[%s4 + $0x30] sm:$0xff]
      %v5680 = vld [vmem:[%s4 + $0x38] sm:$0xff]
      %v5681 = vld [vmem:[%s4 + $0x40] sm:$0xff]
      %v5682 = vld [vmem:[%s4 + $0x48] sm:$0xff]
      %v5683 = vld [vmem:[%s4 + $0x50] sm:$0xff]
      %v5684 = vld [vmem:[%s4 + $0x58] sm:$0xff]
      %v5685 = vld [vmem:[%s4 + $0x60] sm:$0xff]
      %v5686 = vld [vmem:[%s4 + $0x68] sm:$0xff]
      %v5687 = vld [vmem:[%s4 + $0x70] sm:$0xff]
      %v5688 = vld [vmem:[%s4 + $0x78] sm:$0xff]
      %v5689 = vld [vmem:[%s4 + $0x80] sm:$0xff]
      %v5690 = vld [vmem:[%s4 + $0x88] sm:$0xff]
      %v5691 = vld [vmem:[%s4 + $0x90] sm:$0xff]
      %v5692 = vld [vmem:[%s4 + $0x98] sm:$0xff]
      %v5693 = vld [vmem:[%s4 + $0xa0] sm:$0xff]
      %v5694 = vld [vmem:[%s4 + $0xa8] sm:$0xff]
      %v5695 = vld [vmem:[%s4 + $0xb0] sm:$0xff]
      %v5696 = vld [vmem:[%s4 + $0xb8] sm:$0xff]
      %v5697 = vld [vmem:[%s4 + $0xc0] sm:$0xff]
      %v5698 = vld [vmem:[%s4 + $0xc8] sm:$0xff]
      %v5699 = vld [vmem:[%s4 + $0xd0] sm:$0xff]
      %v5700 = vld [vmem:[%s4 + $0xd8] sm:$0xff]
      %v5701 = vld [vmem:[%s4 + $0xe0] sm:$0xff]
      %v5702 = vld [vmem:[%s4 + $0xe8] sm:$0xff]
      %v5703 = vld [vmem:[%s4 + $0xf0] sm:$0xff]
      %v5704 = vld [vmem:[%s4 + $0xf8] sm:$0xff]
      %vm5705 = vcmask 130048
      %v5707 = vsel %vm5705, %v5673, 0
      %v5710 = vsel %vm5705, %v5674, 0
      %v5713 = vsel %vm5705, %v5675, 0
      %v5716 = vsel %vm5705, %v5676, 0
      %v5719 = vsel %vm5705, %v5677, 0
      %v5722 = vsel %vm5705, %v5678, 0
      %v5725 = vsel %vm5705, %v5679, 0
      %v5728 = vsel %vm5705, %v5680, 0
      %v5731 = vsel %vm5705, %v5681, 0
      %v5734 = vsel %vm5705, %v5682, 0
      %v5737 = vsel %vm5705, %v5683, 0
      %v5740 = vsel %vm5705, %v5684, 0
      %v5743 = vsel %vm5705, %v5685, 0
      %v5746 = vsel %vm5705, %v5686, 0
      %v5749 = vsel %vm5705, %v5687, 0
      %v5752 = vsel %vm5705, %v5688, 0
      %v5755 = vsel %vm5705, %v5689, 0
      %v5758 = vsel %vm5705, %v5690, 0
      %v5761 = vsel %vm5705, %v5691, 0
      %v5764 = vsel %vm5705, %v5692, 0
      %v5767 = vsel %vm5705, %v5693, 0
      %v5770 = vsel %vm5705, %v5694, 0
      %v5773 = vsel %vm5705, %v5695, 0
      %v5776 = vsel %vm5705, %v5696, 0
      %v5779 = vsel %vm5705, %v5697, 0
      %v5782 = vsel %vm5705, %v5698, 0
      %v5785 = vsel %vm5705, %v5699, 0
      %v5788 = vsel %vm5705, %v5700, 0
      %v5791 = vsel %vm5705, %v5701, 0
      %v5794 = vsel %vm5705, %v5702, 0
      %v5797 = vsel %vm5705, %v5703, 0
      %v5800 = vsel %vm5705, %v5704, 0
      %5802 = vmatprep.subr.mxu0 0.0
      %5803 = vmatpush1.msra.mxu0 %v5671
      %5804 = vmatprep.subr.mxu0 0.0
      %5805 = vmatpush1.msra.mxu0 %v5672
      %5806 = vmatprep.subr.mxu0 0.0
      %5807 = vmatpush1.msra.mxu0 0.0
      %5808 = vmatprep.subr.mxu0 0.0
      %5809 = vmatpush1.msra.mxu0 0.0
      %5810 = vmatprep.subr.mxu0 0.0
      %5811 = vmatpush1.msra.mxu0 0.0
      %5812 = vmatprep.subr.mxu0 0.0
      %5813 = vmatpush1.msra.mxu0 0.0
      %5814 = vmatprep.subr.mxu0 0.0
      %5815 = vmatpush1.msra.mxu0 0.0
      %5816 = vmatprep.subr.mxu0 0.0
      %5817 = vmatpush1.msra.mxu0 0.0
      %5818 = vmatprep.subr.mxu0 0.0
      %5819 = vmatpush1.msra.mxu0 0.0
      %5820 = vmatprep.subr.mxu0 0.0
      %5821 = vmatpush1.msra.mxu0 0.0
      %5822 = vmatprep.subr.mxu0 0.0
      %5823 = vmatpush1.msra.mxu0 0.0
      %5824 = vmatprep.subr.mxu0 0.0
      %5825 = vmatpush1.msra.mxu0 0.0
      %5826 = vmatprep.subr.mxu0 0.0
      %5827 = vmatpush1.msra.mxu0 0.0
      %5828 = vmatprep.subr.mxu0 0.0
      %5829 = vmatpush1.msra.mxu0 0.0
      %5830 = vmatprep.subr.mxu0 0.0
      %5831 = vmatpush1.msra.mxu0 0.0
      %5832 = vmatprep.subr.mxu0 0.0
      %5833 = vmatpush1.msra.mxu0 0.0
      %5834 = vmatprep.subr.mxu0 0.0
      %5835 = vmatpush1.msra.mxu0 0.0
      %5836 = vmatprep.subr.mxu0 0.0
      %5837 = vmatpush1.msra.mxu0 0.0
      %5838 = vmatprep.subr.mxu0 0.0
      %5839 = vmatpush1.msra.mxu0 0.0
      %5840 = vmatprep.subr.mxu0 0.0
      %5841 = vmatpush1.msra.mxu0 0.0
      %5842 = vmatprep.subr.mxu0 0.0
      %5843 = vmatpush1.msra.mxu0 0.0
      %5844 = vmatprep.subr.mxu0 0.0
      %5845 = vmatpush1.msra.mxu0 0.0
      %5846 = vmatprep.subr.mxu0 0.0
      %5847 = vmatpush1.msra.mxu0 0.0
      %5848 = vmatprep.subr.mxu0 0.0
      %5849 = vmatpush1.msra.mxu0 0.0
      %5850 = vmatprep.subr.mxu0 0.0
      %5851 = vmatpush1.msra.mxu0 0.0
      %5852 = vmatprep.subr.mxu0 0.0
      %5853 = vmatpush1.msra.mxu0 0.0
      %5854 = vmatprep.subr.mxu0 0.0
      %5855 = vmatpush1.msra.mxu0 0.0
      %5856 = vmatprep.subr.mxu0 0.0
      %5857 = vmatpush1.msra.mxu0 0.0
      %5858 = vmatprep.subr.mxu0 0.0
      %5859 = vmatpush1.msra.mxu0 0.0
      %5860 = vmatprep.subr.mxu0 0.0
      %5861 = vmatpush1.msra.mxu0 0.0
      %5862 = vmatprep.subr.mxu0 0.0
      %5863 = vmatpush1.msra.mxu0 0.0
      %5864 = vmatprep.subr.mxu0 0.0
      %5865 = vmatpush1.msra.mxu0 0.0
      %5866 = vmatprep.mubr.f32.mxu0 0.0
      %5867 = vmatmul.mubr.f32.gmra.mrb[0].mxu0 %v5707
      %v5868 = vpop.f32.mrb[0].mxu0
      %v5869 = vadd.f32 0.0, %v5868
      %v5870 = vpop.f32.mrb[0].mxu0
      %5871 = vmatprep.mubr.f32.mxu0 0.0
      %5872 = vmatmul.mubr.f32.gmra.mrb[0].mxu0 %v5710
      %v5873 = vpop.f32.mrb[0].mxu0
      %v5874 = vadd.f32 0.0, %v5873
      %v5875 = vpop.f32.mrb[0].mxu0
      %5876 = vmatprep.mubr.f32.mxu0 0.0
      %5877 = vmatmul.mubr.f32.gmra.mrb[0].mxu0 %v5713
      %v5878 = vpop.f32.mrb[0].mxu0
      %v5879 = vadd.f32 0.0, %v5878
      %v5880 = vpop.f32.mrb[0].mxu0
      %5881 = vmatprep.mubr.f32.mxu0 0.0
      %5882 = vmatmul.mubr.f32.gmra.mrb[0].mxu0 %v5716
      %v5883 = vpop.f32.mrb[0].mxu0
      %v5884 = vadd.f32 0.0, %v5883
      %v5885 = vpop.f32.mrb[0].mxu0
      %5886 = vmatprep.mubr.f32.mxu0 0.0
      %5887 = vmatmul.mubr.f32.gmra.mrb[0].mxu0 %v5719
      %v5888 = vpop.f32.mrb[0].mxu0
      %v5889 = vadd.f32 0.0, %v5888
      %v5890 = vpop.f32.mrb[0].mxu0
      %5891 = vmatprep.mubr.f32.mxu0 0.0
      %5892 = vmatmul.mubr.f32.gmra.mrb[0].mxu0 %v5722
      %v5893 = vpop.f32.mrb[0].mxu0
      %v5894 = vadd.f32 0.0, %v5893
      %v5895 = vpop.f32.mrb[0].mxu0
      %5896 = vmatprep.mubr.f32.mxu0 0.0
      %5897 = vmatmul.mubr.f32.gmra.mrb[0].mxu0 %v5725
      %v5898 = vpop.f32.mrb[0].mxu0
      %v5899 = vadd.f32 0.0, %v5898
      %v5900 = vpop.f32.mrb[0].mxu0
      %5901 = vmatprep.mubr.f32.mxu0 0.0
      %5902 = vmatmul.mubr.f32.gmra.mrb[0].mxu0 %v5728
      %v5903 = vpop.f32.mrb[0].mxu0
      %v5904 = vadd.f32 0.0, %v5903
      %v5905 = vpop.f32.mrb[0].mxu0
      %5906 = vmatprep.mubr.f32.mxu0 0.0
      %5907 = vmatmul.mubr.f32.gmra.mrb[0].mxu0 %v5731
      %v5908 = vpop.f32.mrb[0].mxu0
      %v5909 = vadd.f32 0.0, %v5908
      %v5910 = vpop.f32.mrb[0].mxu0
      %5911 = vmatprep.mubr.f32.mxu0 0.0
      %5912 = vmatmul.mubr.f32.gmra.mrb[0].mxu0 %v5734
      %v5913 = vpop.f32.mrb[0].mxu0
      %v5914 = vadd.f32 0.0, %v5913
      %v5915 = vpop.f32.mrb[0].mxu0
      %5916 = vmatprep.mubr.f32.mxu0 0.0
      %5917 = vmatmul.mubr.f32.gmra.mrb[0].mxu0 %v5737
      %v5918 = vpop.f32.mrb[0].mxu0
      %v5919 = vadd.f32 0.0, %v5918
      %v5920 = vpop.f32.mrb[0].mxu0
      %5921 = vmatprep.mubr.f32.mxu0 0.0
      %5922 = vmatmul.mubr.f32.gmra.mrb[0].mxu0 %v5740
      %v5923 = vpop.f32.mrb[0].mxu0
      %v5924 = vadd.f32 0.0, %v5923
      %v5925 = vpop.f32.mrb[0].mxu0
      %5926 = vmatprep.mubr.f32.mxu0 0.0
      %5927 = vmatmul.mubr.f32.gmra.mrb[0].mxu0 %v5743
      %v5928 = vpop.f32.mrb[0].mxu0
      %v5929 = vadd.f32 0.0, %v5928
      %v5930 = vpop.f32.mrb[0].mxu0
      %5931 = vmatprep.mubr.f32.mxu0 0.0
      %5932 = vmatmul.mubr.f32.gmra.mrb[0].mxu0 %v5746
      %v5933 = vpop.f32.mrb[0].mxu0
      %v5934 = vadd.f32 0.0, %v5933
      %v5935 = vpop.f32.mrb[0].mxu0
      %5936 = vmatprep.mubr.f32.mxu0 0.0
      %5937 = vmatmul.mubr.f32.gmra.mrb[0].mxu0 %v5749
      %v5938 = vpop.f32.mrb[0].mxu0
      %v5939 = vadd.f32 0.0, %v5938
      %v5940 = vpop.f32.mrb[0].mxu0
      %5941 = vmatprep.mubr.f32.mxu0 0.0
      %5942 = vmatmul.mubr.f32.gmra.mrb[0].mxu0 %v5752
      %v5943 = vpop.f32.mrb[0].mxu0
      %v5944 = vadd.f32 0.0, %v5943
      %v5945 = vpop.f32.mrb[0].mxu0
      %5946 = vmatprep.mubr.f32.mxu0 0.0
      %5947 = vmatmul.mubr.f32.gmra.mrb[0].mxu0 %v5755
      %v5948 = vpop.f32.mrb[0].mxu0
      %v5949 = vadd.f32 0.0, %v5948
      %v5950 = vpop.f32.mrb[0].mxu0
      %5951 = vmatprep.mubr.f32.mxu0 0.0
      %5952 = vmatmul.mubr.f32.gmra.mrb[0].mxu0 %v5758
      %v5953 = vpop.f32.mrb[0].mxu0
      %v5954 = vadd.f32 0.0, %v5953
      %v5955 = vpop.f32.mrb[0].mxu0
      %5956 = vmatprep.mubr.f32.mxu0 0.0
      %5957 = vmatmul.mubr.f32.gmra.mrb[0].mxu0 %v5761
      %v5958 = vpop.f32.mrb[0].mxu0
      %v5959 = vadd.f32 0.0, %v5958
      %v5960 = vpop.f32.mrb[0].mxu0
      %5961 = vmatprep.mubr.f32.mxu0 0.0
      %5962 = vmatmul.mubr.f32.gmra.mrb[0].mxu0 %v5764
      %v5963 = vpop.f32.mrb[0].mxu0
      %v5964 = vadd.f32 0.0, %v5963
      %v5965 = vpop.f32.mrb[0].mxu0
      %5966 = vmatprep.mubr.f32.mxu0 0.0
      %5967 = vmatmul.mubr.f32.gmra.mrb[0].mxu0 %v5767
      %v5968 = vpop.f32.mrb[0].mxu0
      %v5969 = vadd.f32 0.0, %v5968
      %v5970 = vpop.f32.mrb[0].mxu0
      %5971 = vmatprep.mubr.f32.mxu0 0.0
      %5972 = vmatmul.mubr.f32.gmra.mrb[0].mxu0 %v5770
      %v5973 = vpop.f32.mrb[0].mxu0
      %v5974 = vadd.f32 0.0, %v5973
      %v5975 = vpop.f32.mrb[0].mxu0
      %5976 = vmatprep.mubr.f32.mxu0 0.0
      %5977 = vmatmul.mubr.f32.gmra.mrb[0].mxu0 %v5773
      %v5978 = vpop.f32.mrb[0].mxu0
      %v5979 = vadd.f32 0.0, %v5978
      %v5980 = vpop.f32.mrb[0].mxu0
      %5981 = vmatprep.mubr.f32.mxu0 0.0
      %5982 = vmatmul.mubr.f32.gmra.mrb[0].mxu0 %v5776
      %v5983 = vpop.f32.mrb[0].mxu0
      %v5984 = vadd.f32 0.0, %v5983
      %v5985 = vpop.f32.mrb[0].mxu0
      %5986 = vmatprep.mubr.f32.mxu0 0.0
      %5987 = vmatmul.mubr.f32.gmra.mrb[0].mxu0 %v5779
      %v5988 = vpop.f32.mrb[0].mxu0
      %v5989 = vadd.f32 0.0, %v5988
      %v5990 = vpop.f32.mrb[0].mxu0
      %5991 = vmatprep.mubr.f32.mxu0 0.0
      %5992 = vmatmul.mubr.f32.gmra.mrb[0].mxu0 %v5782
      %v5993 = vpop.f32.mrb[0].mxu0
      %v5994 = vadd.f32 0.0, %v5993
      %v5995 = vpop.f32.mrb[0].mxu0
      %5996 = vmatprep.mubr.f32.mxu0 0.0
      %5997 = vmatmul.mubr.f32.gmra.mrb[0].mxu0 %v5785
      %v5998 = vpop.f32.mrb[0].mxu0
      %v5999 = vadd.f32 0.0, %v5998
      %v6000 = vpop.f32.mrb[0].mxu0
      %6001 = vmatprep.mubr.f32.mxu0 0.0
      %6002 = vmatmul.mubr.f32.gmra.mrb[0].mxu0 %v5788
      %v6003 = vpop.f32.mrb[0].mxu0
      %v6004 = vadd.f32 0.0, %v6003
      %v6005 = vpop.f32.mrb[0].mxu0
      %6006 = vmatprep.mubr.f32.mxu0 0.0
      %6007 = vmatmul.mubr.f32.gmra.mrb[0].mxu0 %v5791
      %v6008 = vpop.f32.mrb[0].mxu0
      %v6009 = vadd.f32 0.0, %v6008
      %v6010 = vpop.f32.mrb[0].mxu0
      %6011 = vmatprep.mubr.f32.mxu0 0.0
      %6012 = vmatmul.mubr.f32.gmra.mrb[0].mxu0 %v5794
      %v6013 = vpop.f32.mrb[0].mxu0
      %v6014 = vadd.f32 0.0, %v6013
      %v6015 = vpop.f32.mrb[0].mxu0
      %6016 = vmatprep.mubr.f32.mxu0 0.0
      %6017 = vmatmul.mubr.f32.gmra.mrb[0].mxu0 %v5797
      %v6018 = vpop.f32.mrb[0].mxu0
      %v6019 = vadd.f32 0.0, %v6018
      %v6020 = vpop.f32.mrb[0].mxu0
      %6021 = vmatprep.mubr.f32.mxu0 0.0
      %6022 = vmatmul.mubr.f32.gmra.mrb[0].mxu0 %v5800
      %v6023 = vpop.f32.mrb[0].mxu0
      %v6024 = vadd.f32 0.0, %v6023
      %v6025 = vpop.f32.mrb[0].mxu0
      %6026 = vdwg.mxu0
      %v6027 = vmul.f32 %v5869, %v5869
      %v6028 = vmul.f32 %v5874, %v5874
      %v6029 = vmul.f32 %v5879, %v5879
      %v6030 = vmul.f32 %v5884, %v5884
      %v6031 = vmul.f32 %v5889, %v5889
      %v6032 = vmul.f32 %v5894, %v5894
      %v6033 = vmul.f32 %v5899, %v5899
      %v6034 = vmul.f32 %v5904, %v5904
      %v6035 = vmul.f32 %v5909, %v5909
      %v6036 = vmul.f32 %v5914, %v5914
      %v6037 = vmul.f32 %v5919, %v5919
      %v6038 = vmul.f32 %v5924, %v5924
      %v6039 = vmul.f32 %v5929, %v5929
      %v6040 = vmul.f32 %v5934, %v5934
      %v6041 = vmul.f32 %v5939, %v5939
      %v6042 = vmul.f32 %v5944, %v5944
      %v6043 = vmul.f32 %v5949, %v5949
      %v6044 = vmul.f32 %v5954, %v5954
      %v6045 = vmul.f32 %v5959, %v5959
      %v6046 = vmul.f32 %v5964, %v5964
      %v6047 = vmul.f32 %v5969, %v5969
      %v6048 = vmul.f32 %v5974, %v5974
      %v6049 = vmul.f32 %v5979, %v5979
      %v6050 = vmul.f32 %v5984, %v5984
      %v6051 = vmul.f32 %v5989, %v5989
      %v6052 = vmul.f32 %v5994, %v5994
      %v6053 = vmul.f32 %v5999, %v5999
      %v6054 = vmul.f32 %v6004, %v6004
      %v6055 = vmul.f32 %v6009, %v6009
      %v6056 = vmul.f32 %v6014, %v6014
      %v6057 = vmul.f32 %v6019, %v6019
      %v6058 = vmul.f32 %v6024, %v6024
      %v6059 = vsel %vm5705, %v6027, 0.0
      %6060 = vadd.xlane.f32.xlu0 %v6059
      %v6061 = vpop.xlane.xlu0 %6060
      %v6062 = vsel %vm5705, %v6028, 0.0
      %6063 = vadd.xlane.f32.xlu0 %v6062
      %v6064 = vpop.xlane.xlu0 %6063
      %v6065 = vsel %vm5705, %v6029, 0.0
      %6066 = vadd.xlane.f32.xlu0 %v6065
      %v6067 = vpop.xlane.xlu0 %6066
      %v6068 = vsel %vm5705, %v6030, 0.0
      %6069 = vadd.xlane.f32.xlu0 %v6068
      %v6070 = vpop.xlane.xlu0 %6069
      %v6071 = vsel %vm5705, %v6031, 0.0
      %6072 = vadd.xlane.f32.xlu0 %v6071
      %v6073 = vpop.xlane.xlu0 %6072
      %v6074 = vsel %vm5705, %v6032, 0.0
      %6075 = vadd.xlane.f32.xlu0 %v6074
      %v6076 = vpop.xlane.xlu0 %6075
      %v6077 = vsel %vm5705, %v6033, 0.0
      %6078 = vadd.xlane.f32.xlu0 %v6077
      %v6079 = vpop.xlane.xlu0 %6078
      %v6080 = vsel %vm5705, %v6034, 0.0
      %6081 = vadd.xlane.f32.xlu0 %v6080
      %v6082 = vpop.xlane.xlu0 %6081
      %v6083 = vsel %vm5705, %v6035, 0.0
      %6084 = vadd.xlane.f32.xlu0 %v6083
      %v6085 = vpop.xlane.xlu0 %6084
      %v6086 = vsel %vm5705, %v6036, 0.0
      %6087 = vadd.xlane.f32.xlu0 %v6086
      %v6088 = vpop.xlane.xlu0 %6087
      %v6089 = vsel %vm5705, %v6037, 0.0
      %6090 = vadd.xlane.f32.xlu0 %v6089
      %v6091 = vpop.xlane.xlu0 %6090
      %v6092 = vsel %vm5705, %v6038, 0.0
      %6093 = vadd.xlane.f32.xlu0 %v6092
      %v6094 = vpop.xlane.xlu0 %6093
      %v6095 = vsel %vm5705, %v6039, 0.0
      %6096 = vadd.xlane.f32.xlu0 %v6095
      %v6097 = vpop.xlane.xlu0 %6096
      %v6098 = vsel %vm5705, %v6040, 0.0
      %6099 = vadd.xlane.f32.xlu0 %v6098
      %v6100 = vpop.xlane.xlu0 %6099
      %v6101 = vsel %vm5705, %v6041, 0.0
      %6102 = vadd.xlane.f32.xlu0 %v6101
      %v6103 = vpop.xlane.xlu0 %6102
      %v6104 = vsel %vm5705, %v6042, 0.0
      %6105 = vadd.xlane.f32.xlu0 %v6104
      %v6106 = vpop.xlane.xlu0 %6105
      %v6107 = vsel %vm5705, %v6043, 0.0
      %6108 = vadd.xlane.f32.xlu0 %v6107
      %v6109 = vpop.xlane.xlu0 %6108
      %v6110 = vsel %vm5705, %v6044, 0.0
      %6111 = vadd.xlane.f32.xlu0 %v6110
      %v6112 = vpop.xlane.xlu0 %6111
      %v6113 = vsel %vm5705, %v6045, 0.0
      %6114 = vadd.xlane.f32.xlu0 %v6113
      %v6115 = vpop.xlane.xlu0 %6114
      %v6116 = vsel %vm5705, %v6046, 0.0
      %6117 = vadd.xlane.f32.xlu0 %v6116
      %v6118 = vpop.xlane.xlu0 %6117
      %v6119 = vsel %vm5705, %v6047, 0.0
      %6120 = vadd.xlane.f32.xlu0 %v6119
      %v6121 = vpop.xlane.xlu0 %6120
      %v6122 = vsel %vm5705, %v6048, 0.0
      %6123 = vadd.xlane.f32.xlu0 %v6122
      %v6124 = vpop.xlane.xlu0 %6123
      %v6125 = vsel %vm5705, %v6049, 0.0
      %6126 = vadd.xlane.f32.xlu0 %v6125
      %v6127 = vpop.xlane.xlu0 %6126
      %v6128 = vsel %vm5705, %v6050, 0.0
      %6129 = vadd.xlane.f32.xlu0 %v6128
      %v6130 = vpop.xlane.xlu0 %6129
      %v6131 = vsel %vm5705, %v6051, 0.0
      %6132 = vadd.xlane.f32.xlu0 %v6131
      %v6133 = vpop.xlane.xlu0 %6132
      %v6134 = vsel %vm5705, %v6052, 0.0
      %6135 = vadd.xlane.f32.xlu0 %v6134
      %v6136 = vpop.xlane.xlu0 %6135
      %v6137 = vsel %vm5705, %v6053, 0.0
      %6138 = vadd.xlane.f32.xlu0 %v6137
      %v6139 = vpop.xlane.xlu0 %6138
      %v6140 = vsel %vm5705, %v6054, 0.0
      %6141 = vadd.xlane.f32.xlu0 %v6140
      %v6142 = vpop.xlane.xlu0 %6141
      %v6143 = vsel %vm5705, %v6055, 0.0
      %6144 = vadd.xlane.f32.xlu0 %v6143
      %v6145 = vpop.xlane.xlu0 %6144
      %v6146 = vsel %vm5705, %v6056, 0.0
      %6147 = vadd.xlane.f32.xlu0 %v6146
      %v6148 = vpop.xlane.xlu0 %6147
      %v6149 = vsel %vm5705, %v6057, 0.0
      %6150 = vadd.xlane.f32.xlu0 %v6149
      %v6151 = vpop.xlane.xlu0 %6150
      %v6152 = vsel %vm5705, %v6058, 0.0
      %6153 = vadd.xlane.f32.xlu0 %v6152
      %v6154 = vpop.xlane.xlu0 %6153
      %v6155 = vrsqrt.pop %v6061
      %v6156 = vmul.f32 %v6061, %v6155
      %vm6157 = vcmp.eq.f32.partialorder %v6061, inf
      %v6158 = vsel %vm6157, %v6061, %v6156
      %vm6159 = vcmp.eq.f32.partialorder %v6061, 0.0
      %v6160 = vand.u32 %v6061, 2147483648
      %v6161 = vsel %vm6159, %v6160, %v6158
      %v6162 = vrsqrt.pop %v6064
      %v6163 = vmul.f32 %v6064, %v6162
      %vm6164 = vcmp.eq.f32.partialorder %v6064, inf
      %v6165 = vsel %vm6164, %v6064, %v6163
      %vm6166 = vcmp.eq.f32.partialorder %v6064, 0.0
      %v6167 = vand.u32 %v6064, 2147483648
      %v6168 = vsel %vm6166, %v6167, %v6165
      %v6169 = vrsqrt.pop %v6067
      %v6170 = vmul.f32 %v6067, %v6169
      %vm6171 = vcmp.eq.f32.partialorder %v6067, inf
      %v6172 = vsel %vm6171, %v6067, %v6170
      %vm6173 = vcmp.eq.f32.partialorder %v6067, 0.0
      %v6174 = vand.u32 %v6067, 2147483648
      %v6175 = vsel %vm6173, %v6174, %v6172
      %v6176 = vrsqrt.pop %v6070
      %v6177 = vmul.f32 %v6070, %v6176
      %vm6178 = vcmp.eq.f32.partialorder %v6070, inf
      %v6179 = vsel %vm6178, %v6070, %v6177
      %vm6180 = vcmp.eq.f32.partialorder %v6070, 0.0
      %v6181 = vand.u32 %v6070, 2147483648
      %v6182 = vsel %vm6180, %v6181, %v6179
      %v6183 = vrsqrt.pop %v6073
      %v6184 = vmul.f32 %v6073, %v6183
      %vm6185 = vcmp.eq.f32.partialorder %v6073, inf
      %v6186 = vsel %vm6185, %v6073, %v6184
      %vm6187 = vcmp.eq.f32.partialorder %v6073, 0.0
      %v6188 = vand.u32 %v6073, 2147483648
      %v6189 = vsel %vm6187, %v6188, %v6186
      %v6190 = vrsqrt.pop %v6076
      %v6191 = vmul.f32 %v6076, %v6190
      %vm6192 = vcmp.eq.f32.partialorder %v6076, inf
      %v6193 = vsel %vm6192, %v6076, %v6191
      %vm6194 = vcmp.eq.f32.partialorder %v6076, 0.0
      %v6195 = vand.u32 %v6076, 2147483648
      %v6196 = vsel %vm6194, %v6195, %v6193
      %v6197 = vrsqrt.pop %v6079
      %v6198 = vmul.f32 %v6079, %v6197
      %vm6199 = vcmp.eq.f32.partialorder %v6079, inf
      %v6200 = vsel %vm6199, %v6079, %v6198
      %vm6201 = vcmp.eq.f32.partialorder %v6079, 0.0
      %v6202 = vand.u32 %v6079, 2147483648
      %v6203 = vsel %vm6201, %v6202, %v6200
      %v6204 = vrsqrt.pop %v6082
      %v6205 = vmul.f32 %v6082, %v6204
      %vm6206 = vcmp.eq.f32.partialorder %v6082, inf
      %v6207 = vsel %vm6206, %v6082, %v6205
      %vm6208 = vcmp.eq.f32.partialorder %v6082, 0.0
      %v6209 = vand.u32 %v6082, 2147483648
      %v6210 = vsel %vm6208, %v6209, %v6207
      %v6211 = vrsqrt.pop %v6085
      %v6212 = vmul.f32 %v6085, %v6211
      %vm6213 = vcmp.eq.f32.partialorder %v6085, inf
      %v6214 = vsel %vm6213, %v6085, %v6212
      %vm6215 = vcmp.eq.f32.partialorder %v6085, 0.0
      %v6216 = vand.u32 %v6085, 2147483648
      %v6217 = vsel %vm6215, %v6216, %v6214
      %v6218 = vrsqrt.pop %v6088
      %v6219 = vmul.f32 %v6088, %v6218
      %vm6220 = vcmp.eq.f32.partialorder %v6088, inf
      %v6221 = vsel %vm6220, %v6088, %v6219
      %vm6222 = vcmp.eq.f32.partialorder %v6088, 0.0
      %v6223 = vand.u32 %v6088, 2147483648
      %v6224 = vsel %vm6222, %v6223, %v6221
      %v6225 = vrsqrt.pop %v6091
      %v6226 = vmul.f32 %v6091, %v6225
      %vm6227 = vcmp.eq.f32.partialorder %v6091, inf
      %v6228 = vsel %vm6227, %v6091, %v6226
      %vm6229 = vcmp.eq.f32.partialorder %v6091, 0.0
      %v6230 = vand.u32 %v6091, 2147483648
      %v6231 = vsel %vm6229, %v6230, %v6228
      %v6232 = vrsqrt.pop %v6094
      %v6233 = vmul.f32 %v6094, %v6232
      %vm6234 = vcmp.eq.f32.partialorder %v6094, inf
      %v6235 = vsel %vm6234, %v6094, %v6233
      %vm6236 = vcmp.eq.f32.partialorder %v6094, 0.0
      %v6237 = vand.u32 %v6094, 2147483648
      %v6238 = vsel %vm6236, %v6237, %v6235
      %v6239 = vrsqrt.pop %v6097
      %v6240 = vmul.f32 %v6097, %v6239
      %vm6241 = vcmp.eq.f32.partialorder %v6097, inf
      %v6242 = vsel %vm6241, %v6097, %v6240
      %vm6243 = vcmp.eq.f32.partialorder %v6097, 0.0
      %v6244 = vand.u32 %v6097, 2147483648
      %v6245 = vsel %vm6243, %v6244, %v6242
      %v6246 = vrsqrt.pop %v6100
      %v6247 = vmul.f32 %v6100, %v6246
      %vm6248 = vcmp.eq.f32.partialorder %v6100, inf
      %v6249 = vsel %vm6248, %v6100, %v6247
      %vm6250 = vcmp.eq.f32.partialorder %v6100, 0.0
      %v6251 = vand.u32 %v6100, 2147483648
      %v6252 = vsel %vm6250, %v6251, %v6249
      %v6253 = vrsqrt.pop %v6103
      %v6254 = vmul.f32 %v6103, %v6253
      %vm6255 = vcmp.eq.f32.partialorder %v6103, inf
      %v6256 = vsel %vm6255, %v6103, %v6254
      %vm6257 = vcmp.eq.f32.partialorder %v6103, 0.0
      %v6258 = vand.u32 %v6103, 2147483648
      %v6259 = vsel %vm6257, %v6258, %v6256
      %v6260 = vrsqrt.pop %v6106
      %v6261 = vmul.f32 %v6106, %v6260
      %vm6262 = vcmp.eq.f32.partialorder %v6106, inf
      %v6263 = vsel %vm6262, %v6106, %v6261
      %vm6264 = vcmp.eq.f32.partialorder %v6106, 0.0
      %v6265 = vand.u32 %v6106, 2147483648
      %v6266 = vsel %vm6264, %v6265, %v6263
      %v6267 = vrsqrt.pop %v6109
      %v6268 = vmul.f32 %v6109, %v6267
      %vm6269 = vcmp.eq.f32.partialorder %v6109, inf
      %v6270 = vsel %vm6269, %v6109, %v6268
      %vm6271 = vcmp.eq.f32.partialorder %v6109, 0.0
      %v6272 = vand.u32 %v6109, 2147483648
      %v6273 = vsel %vm6271, %v6272, %v6270
      %v6274 = vrsqrt.pop %v6112
      %v6275 = vmul.f32 %v6112, %v6274
      %vm6276 = vcmp.eq.f32.partialorder %v6112, inf
      %v6277 = vsel %vm6276, %v6112, %v6275
      %vm6278 = vcmp.eq.f32.partialorder %v6112, 0.0
      %v6279 = vand.u32 %v6112, 2147483648
      %v6280 = vsel %vm6278, %v6279, %v6277
      %v6281 = vrsqrt.pop %v6115
      %v6282 = vmul.f32 %v6115, %v6281
      %vm6283 = vcmp.eq.f32.partialorder %v6115, inf
      %v6284 = vsel %vm6283, %v6115, %v6282
      %vm6285 = vcmp.eq.f32.partialorder %v6115, 0.0
      %v6286 = vand.u32 %v6115, 2147483648
      %v6287 = vsel %vm6285, %v6286, %v6284
      %v6288 = vrsqrt.pop %v6118
      %v6289 = vmul.f32 %v6118, %v6288
      %vm6290 = vcmp.eq.f32.partialorder %v6118, inf
      %v6291 = vsel %vm6290, %v6118, %v6289
      %vm6292 = vcmp.eq.f32.partialorder %v6118, 0.0
      %v6293 = vand.u32 %v6118, 2147483648
      %v6294 = vsel %vm6292, %v6293, %v6291
      %v6295 = vrsqrt.pop %v6121
      %v6296 = vmul.f32 %v6121, %v6295
      %vm6297 = vcmp.eq.f32.partialorder %v6121, inf
      %v6298 = vsel %vm6297, %v6121, %v6296
      %vm6299 = vcmp.eq.f32.partialorder %v6121, 0.0
      %v6300 = vand.u32 %v6121, 2147483648
      %v6301 = vsel %vm6299, %v6300, %v6298
      %v6302 = vrsqrt.pop %v6124
      %v6303 = vmul.f32 %v6124, %v6302
      %vm6304 = vcmp.eq.f32.partialorder %v6124, inf
      %v6305 = vsel %vm6304, %v6124, %v6303
      %vm6306 = vcmp.eq.f32.partialorder %v6124, 0.0
      %v6307 = vand.u32 %v6124, 2147483648
      %v6308 = vsel %vm6306, %v6307, %v6305
      %v6309 = vrsqrt.pop %v6127
      %v6310 = vmul.f32 %v6127, %v6309
      %vm6311 = vcmp.eq.f32.partialorder %v6127, inf
      %v6312 = vsel %vm6311, %v6127, %v6310
      %vm6313 = vcmp.eq.f32.partialorder %v6127, 0.0
      %v6314 = vand.u32 %v6127, 2147483648
      %v6315 = vsel %vm6313, %v6314, %v6312
      %v6316 = vrsqrt.pop %v6130
      %v6317 = vmul.f32 %v6130, %v6316
      %vm6318 = vcmp.eq.f32.partialorder %v6130, inf
      %v6319 = vsel %vm6318, %v6130, %v6317
      %vm6320 = vcmp.eq.f32.partialorder %v6130, 0.0
      %v6321 = vand.u32 %v6130, 2147483648
      %v6322 = vsel %vm6320, %v6321, %v6319
      %v6323 = vrsqrt.pop %v6133
      %v6324 = vmul.f32 %v6133, %v6323
      %vm6325 = vcmp.eq.f32.partialorder %v6133, inf
      %v6326 = vsel %vm6325, %v6133, %v6324
      %vm6327 = vcmp.eq.f32.partialorder %v6133, 0.0
      %v6328 = vand.u32 %v6133, 2147483648
      %v6329 = vsel %vm6327, %v6328, %v6326
      %v6330 = vrsqrt.pop %v6136
      %v6331 = vmul.f32 %v6136, %v6330
      %vm6332 = vcmp.eq.f32.partialorder %v6136, inf
      %v6333 = vsel %vm6332, %v6136, %v6331
      %vm6334 = vcmp.eq.f32.partialorder %v6136, 0.0
      %v6335 = vand.u32 %v6136, 2147483648
      %v6336 = vsel %vm6334, %v6335, %v6333
      %v6337 = vrsqrt.pop %v6139
      %v6338 = vmul.f32 %v6139, %v6337
      %vm6339 = vcmp.eq.f32.partialorder %v6139, inf
      %v6340 = vsel %vm6339, %v6139, %v6338
      %vm6341 = vcmp.eq.f32.partialorder %v6139, 0.0
      %v6342 = vand.u32 %v6139, 2147483648
      %v6343 = vsel %vm6341, %v6342, %v6340
      %v6344 = vrsqrt.pop %v6142
      %v6345 = vmul.f32 %v6142, %v6344
      %vm6346 = vcmp.eq.f32.partialorder %v6142, inf
      %v6347 = vsel %vm6346, %v6142, %v6345
      %vm6348 = vcmp.eq.f32.partialorder %v6142, 0.0
      %v6349 = vand.u32 %v6142, 2147483648
      %v6350 = vsel %vm6348, %v6349, %v6347
      %v6351 = vrsqrt.pop %v6145
      %v6352 = vmul.f32 %v6145, %v6351
      %vm6353 = vcmp.eq.f32.partialorder %v6145, inf
      %v6354 = vsel %vm6353, %v6145, %v6352
      %vm6355 = vcmp.eq.f32.partialorder %v6145, 0.0
      %v6356 = vand.u32 %v6145, 2147483648
      %v6357 = vsel %vm6355, %v6356, %v6354
      %v6358 = vrsqrt.pop %v6148
      %v6359 = vmul.f32 %v6148, %v6358
      %vm6360 = vcmp.eq.f32.partialorder %v6148, inf
      %v6361 = vsel %vm6360, %v6148, %v6359
      %vm6362 = vcmp.eq.f32.partialorder %v6148, 0.0
      %v6363 = vand.u32 %v6148, 2147483648
      %v6364 = vsel %vm6362, %v6363, %v6361
      %v6365 = vrsqrt.pop %v6151
      %v6366 = vmul.f32 %v6151, %v6365
      %vm6367 = vcmp.eq.f32.partialorder %v6151, inf
      %v6368 = vsel %vm6367, %v6151, %v6366
      %vm6369 = vcmp.eq.f32.partialorder %v6151, 0.0
      %v6370 = vand.u32 %v6151, 2147483648
      %v6371 = vsel %vm6369, %v6370, %v6368
      %v6372 = vrsqrt.pop %v6154
      %v6373 = vmul.f32 %v6154, %v6372
      %vm6374 = vcmp.eq.f32.partialorder %v6154, inf
      %v6375 = vsel %vm6374, %v6154, %v6373
      %vm6376 = vcmp.eq.f32.partialorder %v6154, 0.0
      %v6377 = vand.u32 %v6154, 2147483648
      %v6378 = vsel %vm6376, %v6377, %v6375
      %v6379 = vadd.f32 %v6161, 1e-10
      %v6380 = vadd.f32 %v6168, 1e-10
      %v6381 = vadd.f32 %v6175, 1e-10
      %v6382 = vadd.f32 %v6182, 1e-10
      %v6383 = vadd.f32 %v6189, 1e-10
      %v6384 = vadd.f32 %v6196, 1e-10
      %v6385 = vadd.f32 %v6203, 1e-10
      %v6386 = vadd.f32 %v6210, 1e-10
      %v6387 = vadd.f32 %v6217, 1e-10
      %v6388 = vadd.f32 %v6224, 1e-10
      %v6389 = vadd.f32 %v6231, 1e-10
      %v6390 = vadd.f32 %v6238, 1e-10
      %v6391 = vadd.f32 %v6245, 1e-10
      %v6392 = vadd.f32 %v6252, 1e-10
      %v6393 = vadd.f32 %v6259, 1e-10
      %v6394 = vadd.f32 %v6266, 1e-10
      %v6395 = vadd.f32 %v6273, 1e-10
      %v6396 = vadd.f32 %v6280, 1e-10
      %v6397 = vadd.f32 %v6287, 1e-10
      %v6398 = vadd.f32 %v6294, 1e-10
      %v6399 = vadd.f32 %v6301, 1e-10
      %v6400 = vadd.f32 %v6308, 1e-10
      %v6401 = vadd.f32 %v6315, 1e-10
      %v6402 = vadd.f32 %v6322, 1e-10
      %v6403 = vadd.f32 %v6329, 1e-10
      %v6404 = vadd.f32 %v6336, 1e-10
      %v6405 = vadd.f32 %v6343, 1e-10
      %v6406 = vadd.f32 %v6350, 1e-10
      %v6407 = vadd.f32 %v6357, 1e-10
      %v6408 = vadd.f32 %v6364, 1e-10
      %v6409 = vadd.f32 %v6371, 1e-10
      %v6410 = vadd.f32 %v6378, 1e-10
      %v6411 = vrcp.pop %v6379
      %v6412 = vmul.f32 1.0, %v6411
      %v6413 = vrcp.pop %v6380
      %v6414 = vmul.f32 1.0, %v6413
      %v6415 = vrcp.pop %v6381
      %v6416 = vmul.f32 1.0, %v6415
      %v6417 = vrcp.pop %v6382
      %v6418 = vmul.f32 1.0, %v6417
      %v6419 = vrcp.pop %v6383
      %v6420 = vmul.f32 1.0, %v6419
      %v6421 = vrcp.pop %v6384
      %v6422 = vmul.f32 1.0, %v6421
      %v6423 = vrcp.pop %v6385
      %v6424 = vmul.f32 1.0, %v6423
      %v6425 = vrcp.pop %v6386
      %v6426 = vmul.f32 1.0, %v6425
      %v6427 = vrcp.pop %v6387
      %v6428 = vmul.f32 1.0, %v6427
      %v6429 = vrcp.pop %v6388
      %v6430 = vmul.f32 1.0, %v6429
      %v6431 = vrcp.pop %v6389
      %v6432 = vmul.f32 1.0, %v6431
      %v6433 = vrcp.pop %v6390
      %v6434 = vmul.f32 1.0, %v6433
      %v6435 = vrcp.pop %v6391
      %v6436 = vmul.f32 1.0, %v6435
      %v6437 = vrcp.pop %v6392
      %v6438 = vmul.f32 1.0, %v6437
      %v6439 = vrcp.pop %v6393
      %v6440 = vmul.f32 1.0, %v6439
      %v6441 = vrcp.pop %v6394
      %v6442 = vmul.f32 1.0, %v6441
      %v6443 = vrcp.pop %v6395
      %v6444 = vmul.f32 1.0, %v6443
      %v6445 = vrcp.pop %v6396
      %v6446 = vmul.f32 1.0, %v6445
      %v6447 = vrcp.pop %v6397
      %v6448 = vmul.f32 1.0, %v6447
      %v6449 = vrcp.pop %v6398
      %v6450 = vmul.f32 1.0, %v6449
      %v6451 = vrcp.pop %v6399
      %v6452 = vmul.f32 1.0, %v6451
      %v6453 = vrcp.pop %v6400
      %v6454 = vmul.f32 1.0, %v6453
      %v6455 = vrcp.pop %v6401
      %v6456 = vmul.f32 1.0, %v6455
      %v6457 = vrcp.pop %v6402
      %v6458 = vmul.f32 1.0, %v6457
      %v6459 = vrcp.pop %v6403
      %v6460 = vmul.f32 1.0, %v6459
      %v6461 = vrcp.pop %v6404
      %v6462 = vmul.f32 1.0, %v6461
      %v6463 = vrcp.pop %v6405
      %v6464 = vmul.f32 1.0, %v6463
      %v6465 = vrcp.pop %v6406
      %v6466 = vmul.f32 1.0, %v6465
      %v6467 = vrcp.pop %v6407
      %v6468 = vmul.f32 1.0, %v6467
      %v6469 = vrcp.pop %v6408
      %v6470 = vmul.f32 1.0, %v6469
      %v6471 = vrcp.pop %v6409
      %v6472 = vmul.f32 1.0, %v6471
      %v6473 = vrcp.pop %v6410
      %v6474 = vmul.f32 1.0, %v6473
      %v6475 = vmul.f32 %v5869, %v6412
      %v6476 = vmul.f32 %v5874, %v6414
      %v6477 = vmul.f32 %v5879, %v6416
      %v6478 = vmul.f32 %v5884, %v6418
      %v6479 = vmul.f32 %v5889, %v6420
      %v6480 = vmul.f32 %v5894, %v6422
      %v6481 = vmul.f32 %v5899, %v6424
      %v6482 = vmul.f32 %v5904, %v6426
      %v6483 = vmul.f32 %v5909, %v6428
      %v6484 = vmul.f32 %v5914, %v6430
      %v6485 = vmul.f32 %v5919, %v6432
      %v6486 = vmul.f32 %v5924, %v6434
      %v6487 = vmul.f32 %v5929, %v6436
      %v6488 = vmul.f32 %v5934, %v6438
      %v6489 = vmul.f32 %v5939, %v6440
      %v6490 = vmul.f32 %v5944, %v6442
      %v6491 = vmul.f32 %v5949, %v6444
      %v6492 = vmul.f32 %v5954, %v6446
      %v6493 = vmul.f32 %v5959, %v6448
      %v6494 = vmul.f32 %v5964, %v6450
      %v6495 = vmul.f32 %v5969, %v6452
      %v6496 = vmul.f32 %v5974, %v6454
      %v6497 = vmul.f32 %v5979, %v6456
      %v6498 = vmul.f32 %v5984, %v6458
      %v6499 = vmul.f32 %v5989, %v6460
      %v6500 = vmul.f32 %v5994, %v6462
      %v6501 = vmul.f32 %v5999, %v6464
      %v6502 = vmul.f32 %v6004, %v6466
      %v6503 = vmul.f32 %v6009, %v6468
      %v6504 = vmul.f32 %v6014, %v6470
      %v6505 = vmul.f32 %v6019, %v6472
      %v6506 = vmul.f32 %v6024, %v6474
      %6507 = vst.msk [vmem:[#allocation4] sm:$0xff] %vm5705, 0.0
      %6508 = vst.msk [vmem:[#allocation4 + $0x8] sm:$0xff] %vm5705, 0.0
      %6509 = vst.msk [vmem:[#allocation4 + $0x10] sm:$0xff] %vm5705, 0.0
      %6510 = vst.msk [vmem:[#allocation4 + $0x18] sm:$0xff] %vm5705, 0.0
      %6511 = vst.msk [vmem:[#allocation4 + $0x20] sm:$0xff] %vm5705, 0.0
      %6512 = vst.msk [vmem:[#allocation4 + $0x28] sm:$0xff] %vm5705, 0.0
      %6513 = vst.msk [vmem:[#allocation4 + $0x30] sm:$0xff] %vm5705, 0.0
      %6514 = vst.msk [vmem:[#allocation4 + $0x38] sm:$0xff] %vm5705, 0.0
      %6515 = vst.msk [vmem:[#allocation4 + $0x40] sm:$0xff] %vm5705, 0.0
      %6516 = vst.msk [vmem:[#allocation4 + $0x48] sm:$0xff] %vm5705, 0.0
      %6517 = vst.msk [vmem:[#allocation4 + $0x50] sm:$0xff] %vm5705, 0.0
      %6518 = vst.msk [vmem:[#allocation4 + $0x58] sm:$0xff] %vm5705, 0.0
      %s6519 = scalar_lea.vmem [#allocation4], 480
      %6520 = vst.msk [vmem:[%s6519] sm:$0xff] %vm5705, 0.0
      %6521 = vst.msk [vmem:[%s6519 + $0x8] sm:$0xff] %vm5705, 0.0
      %6522 = vst.msk [vmem:[%s6519 + $0x10] sm:$0xff] %vm5705, 0.0
      %6523 = vst.msk [vmem:[%s6519 + $0x18] sm:$0xff] %vm5705, 0.0
      %6524 = vst.msk [vmem:[%s6519 + $0x20] sm:$0xff] %vm5705, 0.0
      %6525 = vst.msk [vmem:[%s6519 + $0x28] sm:$0xff] %vm5705, 0.0
      %6526 = vst.msk [vmem:[%s6519 + $0x30] sm:$0xff] %vm5705, 0.0
      %6527 = vst.msk [vmem:[%s6519 + $0x38] sm:$0xff] %vm5705, 0.0
      %6528 = vst.msk [vmem:[%s6519 + $0x40] sm:$0xff] %vm5705, 0.0
      %6529 = vst.msk [vmem:[%s6519 + $0x48] sm:$0xff] %vm5705, 0.0
      %6530 = vst.msk [vmem:[%s6519 + $0x50] sm:$0xff] %vm5705, 0.0
      %6531 = vst.msk [vmem:[%s6519 + $0x58] sm:$0xff] %vm5705, 0.0
      %s6532 = scalar_lea.vmem [#allocation4], 96
      %vm6533 = vcmask 125952
      %6534 = vst.msk [vmem:[%s6532] sm:$0xf] %vm6533, 0.0
      %6535 = vst.msk [vmem:[%s6532 + $0x18] sm:$0xf] %vm6533, 0.0
      %6536 = vst.msk [vmem:[%s6532 + $0x30] sm:$0xf] %vm6533, 0.0
      %6537 = vst.msk [vmem:[%s6532 + $0x48] sm:$0xf] %vm6533, 0.0
      %6538 = vst.msk [vmem:[%s6532 + $0x60] sm:$0xf] %vm6533, 0.0
      %6539 = vst.msk [vmem:[%s6532 + $0x78] sm:$0xf] %vm6533, 0.0
      %6540 = vst.msk [vmem:[%s6532 + $0x90] sm:$0xf] %vm6533, 0.0
      %6541 = vst.msk [vmem:[%s6532 + $0xa8] sm:$0xf] %vm6533, 0.0
      %6542 = vst.msk [vmem:[%s6532 + $0xc0] sm:$0xf] %vm6533, 0.0
      %6543 = vst.msk [vmem:[%s6532 + $0xd8] sm:$0xf] %vm6533, 0.0
      %6544 = vst.msk [vmem:[%s6532 + $0xf0] sm:$0xf] %vm6533, 0.0
      %6545 = vst.msk [vmem:[%s6532 + $0x108] sm:$0xf] %vm6533, 0.0
      %6546 = vst.msk [vmem:[%s6532 + $0x120] sm:$0xf] %vm6533, 0.0
      %6547 = vst.msk [vmem:[%s6532 + $0x138] sm:$0xf] %vm6533, 0.0
      %6548 = vst.msk [vmem:[%s6532 + $0x150] sm:$0xf] %vm6533, 0.0
      %6549 = vst.msk [vmem:[%s6532 + $0x168] sm:$0xf] %vm6533, 0.0
      %6550 = vst.msk [vmem:[%s6532 + $0x14] sm:$0xf] %vm6533, 0.0
      %6551 = vst.msk [vmem:[%s6532 + $0x2c] sm:$0xf] %vm6533, 0.0
      %6552 = vst.msk [vmem:[%s6532 + $0x44] sm:$0xf] %vm6533, 0.0
      %6553 = vst.msk [vmem:[%s6532 + $0x5c] sm:$0xf] %vm6533, 0.0
      %6554 = vst.msk [vmem:[%s6532 + $0x74] sm:$0xf] %vm6533, 0.0
      %6555 = vst.msk [vmem:[%s6532 + $0x8c] sm:$0xf] %vm6533, 0.0
      %6556 = vst.msk [vmem:[%s6532 + $0xa4] sm:$0xf] %vm6533, 0.0
      %6557 = vst.msk [vmem:[%s6532 + $0xbc] sm:$0xf] %vm6533, 0.0
      %6558 = vst.msk [vmem:[%s6532 + $0xd4] sm:$0xf] %vm6533, 0.0
      %6559 = vst.msk [vmem:[%s6532 + $0xec] sm:$0xf] %vm6533, 0.0
      %6560 = vst.msk [vmem:[%s6532 + $0x104] sm:$0xf] %vm6533, 0.0
      %6561 = vst.msk [vmem:[%s6532 + $0x11c] sm:$0xf] %vm6533, 0.0
      %6562 = vst.msk [vmem:[%s6532 + $0x134] sm:$0xf] %vm6533, 0.0
      %6563 = vst.msk [vmem:[%s6532 + $0x14c] sm:$0xf] %vm6533, 0.0
      %6564 = vst.msk [vmem:[%s6532 + $0x164] sm:$0xf] %vm6533, 0.0
      %6565 = vst.msk [vmem:[%s6532 + $0x17c] sm:$0xf] %vm6533, 0.0
      %6566 = vst.msk [vmem:[%s6532 + $0x4] sm:$0xff] %vm5705, %v6475
      %6567 = vst.msk [vmem:[%s6532 + $0xc] sm:$0xff] %vm5705, %v6476
      %6568 = vst.msk [vmem:[%s6532 + $0x1c] sm:$0xff] %vm5705, %v6477
      %6569 = vst.msk [vmem:[%s6532 + $0x24] sm:$0xff] %vm5705, %v6478
      %6570 = vst.msk [vmem:[%s6532 + $0x34] sm:$0xff] %vm5705, %v6479
      %6571 = vst.msk [vmem:[%s6532 + $0x3c] sm:$0xff] %vm5705, %v6480
      %6572 = vst.msk [vmem:[%s6532 + $0x4c] sm:$0xff] %vm5705, %v6481
      %6573 = vst.msk [vmem:[%s6532 + $0x54] sm:$0xff] %vm5705, %v6482
      %6574 = vst.msk [vmem:[%s6532 + $0x64] sm:$0xff] %vm5705, %v6483
      %6575 = vst.msk [vmem:[%s6532 + $0x6c] sm:$0xff] %vm5705, %v6484
      %6576 = vst.msk [vmem:[%s6532 + $0x7c] sm:$0xff] %vm5705, %v6485
      %6577 = vst.msk [vmem:[%s6532 + $0x84] sm:$0xff] %vm5705, %v6486
      %6578 = vst.msk [vmem:[%s6532 + $0x94] sm:$0xff] %vm5705, %v6487
      %6579 = vst.msk [vmem:[%s6532 + $0x9c] sm:$0xff] %vm5705, %v6488
      %6580 = vst.msk [vmem:[%s6532 + $0xac] sm:$0xff] %vm5705, %v6489
      %6581 = vst.msk [vmem:[%s6532 + $0xb4] sm:$0xff] %vm5705, %v6490
      %6582 = vst.msk [vmem:[%s6532 + $0xc4] sm:$0xff] %vm5705, %v6491
      %6583 = vst.msk [vmem:[%s6532 + $0xcc] sm:$0xff] %vm5705, %v6492
      %6584 = vst.msk [vmem:[%s6532 + $0xdc] sm:$0xff] %vm5705, %v6493
      %6585 = vst.msk [vmem:[%s6532 + $0xe4] sm:$0xff] %vm5705, %v6494
      %6586 = vst.msk [vmem:[%s6532 + $0xf4] sm:$0xff] %vm5705, %v6495
      %6587 = vst.msk [vmem:[%s6532 + $0xfc] sm:$0xff] %vm5705, %v6496
      %6588 = vst.msk [vmem:[%s6532 + $0x10c] sm:$0xff] %vm5705, %v6497
      %6589 = vst.msk [vmem:[%s6532 + $0x114] sm:$0xff] %vm5705, %v6498
      %6590 = vst.msk [vmem:[%s6532 + $0x124] sm:$0xff] %vm5705, %v6499
      %6591 = vst.msk [vmem:[%s6532 + $0x12c] sm:$0xff] %vm5705, %v6500
      %6592 = vst.msk [vmem:[%s6532 + $0x13c] sm:$0xff] %vm5705, %v6501
      %6593 = vst.msk [vmem:[%s6532 + $0x144] sm:$0xff] %vm5705, %v6502
      %6594 = vst.msk [vmem:[%s6532 + $0x154] sm:$0xff] %vm5705, %v6503
      %6595 = vst.msk [vmem:[%s6532 + $0x15c] sm:$0xff] %vm5705, %v6504
      %6596 = vst.msk [vmem:[%s6532 + $0x16c] sm:$0xff] %vm5705, %v6505
      %6597 = vst.msk [vmem:[%s6532 + $0x174] sm:$0xff] %vm5705, %v6506
      %v6598 = vld [vmem:[%s10] sm:$0xff]
      %v6599 = vld [vmem:[%s10 + $0x8] sm:$0xff]
      %6601 = vset.pattern.permute.xlu0 0
      %6602 = vperm.xlu0 %6601, %v6598
      %v6603 = vpop.permute.xlu0 %6602
      %6606 = vset.pattern.permute.xlu0 0
      %6607 = vperm.xlu0 %6606, %v6599
      %v6608 = vpop.permute.xlu0 %6607
      %v6610 = vadd.f32 %v6603, 0.0
      %v6611 = vadd.f32 %v6608, 0.0
      %v6612 = vld [vmem:[#allocation4] sm:$0xff]
      %v6613 = vld [vmem:[#allocation4 + $0x8] sm:$0xff]
      %v6614 = vld [vmem:[#allocation4 + $0x18] sm:$0xff]
      %v6615 = vld [vmem:[#allocation4 + $0x20] sm:$0xff]
      %v6616 = vld [vmem:[#allocation4 + $0x30] sm:$0xff]
      %v6617 = vld [vmem:[#allocation4 + $0x38] sm:$0xff]
      %v6618 = vld [vmem:[#allocation4 + $0x48] sm:$0xff]
      %v6619 = vld [vmem:[#allocation4 + $0x50] sm:$0xff]
      %v6620 = vld [vmem:[#allocation4 + $0x60] sm:$0xff]
      %v6621 = vld [vmem:[#allocation4 + $0x68] sm:$0xff]
      %v6622 = vld [vmem:[#allocation4 + $0x78] sm:$0xff]
      %v6623 = vld [vmem:[#allocation4 + $0x80] sm:$0xff]
      %v6624 = vld [vmem:[#allocation4 + $0x90] sm:$0xff]
      %v6625 = vld [vmem:[#allocation4 + $0x98] sm:$0xff]
      %v6626 = vld [vmem:[#allocation4 + $0xa8] sm:$0xff]
      %v6627 = vld [vmem:[#allocation4 + $0xb0] sm:$0xff]
      %v6628 = vld [vmem:[#allocation4 + $0xc0] sm:$0xff]
      %v6629 = vld [vmem:[#allocation4 + $0xc8] sm:$0xff]
      %v6630 = vld [vmem:[#allocation4 + $0xd8] sm:$0xff]
      %v6631 = vld [vmem:[#allocation4 + $0xe0] sm:$0xff]
      %v6632 = vld [vmem:[#allocation4 + $0xf0] sm:$0xff]
      %v6633 = vld [vmem:[#allocation4 + $0xf8] sm:$0xff]
      %v6634 = vld [vmem:[#allocation4 + $0x108] sm:$0xff]
      %v6635 = vld [vmem:[#allocation4 + $0x110] sm:$0xff]
      %v6636 = vld [vmem:[#allocation4 + $0x120] sm:$0xff]
      %v6637 = vld [vmem:[#allocation4 + $0x128] sm:$0xff]
      %v6638 = vld [vmem:[#allocation4 + $0x138] sm:$0xff]
      %v6639 = vld [vmem:[#allocation4 + $0x140] sm:$0xff]
      %v6640 = vld [vmem:[#allocation4 + $0x150] sm:$0xff]
      %v6641 = vld [vmem:[#allocation4 + $0x158] sm:$0xff]
      %v6642 = vld [vmem:[#allocation4 + $0x168] sm:$0xff]
      %v6643 = vld [vmem:[#allocation4 + $0x170] sm:$0xff]
      %v6644 = vld [vmem:[%s7] sm:$0xff]
      %v6645 = vld [vmem:[%s7 + $0x8] sm:$0xff]
      %v6647 = vsel %vm5705, %v6644, 0
      %v6650 = vsel %vm5705, %v6645, 0
      %v6653 = vsel %vm5705, %v6612, 0
      %v6656 = vsel %vm5705, %v6613, 0
      %v6659 = vsel %vm5705, %v6614, 0
      %v6662 = vsel %vm5705, %v6615, 0
      %v6665 = vsel %vm5705, %v6616, 0
      %v6668 = vsel %vm5705, %v6617, 0
      %v6671 = vsel %vm5705, %v6618, 0
      %v6674 = vsel %vm5705, %v6619, 0
      %v6677 = vsel %vm5705, %v6620, 0
      %v6680 = vsel %vm5705, %v6621, 0
      %v6683 = vsel %vm5705, %v6622, 0
      %v6686 = vsel %vm5705, %v6623, 0
      %v6689 = vsel %vm5705, %v6624, 0
      %v6692 = vsel %vm5705, %v6625, 0
      %v6695 = vsel %vm5705, %v6626, 0
      %v6698 = vsel %vm5705, %v6627, 0
      %v6701 = vsel %vm5705, %v6628, 0
      %v6704 = vsel %vm5705, %v6629, 0
      %v6707 = vsel %vm5705, %v6630, 0
      %v6710 = vsel %vm5705, %v6631, 0
      %v6713 = vsel %vm5705, %v6632, 0
      %v6716 = vsel %vm5705, %v6633, 0
      %v6719 = vsel %vm5705, %v6634, 0
      %v6722 = vsel %vm5705, %v6635, 0
      %v6725 = vsel %vm5705, %v6636, 0
      %v6728 = vsel %vm5705, %v6637, 0
      %v6731 = vsel %vm5705, %v6638, 0
      %v6734 = vsel %vm5705, %v6639, 0
      %v6737 = vsel %vm5705, %v6640, 0
      %v6740 = vsel %vm5705, %v6641, 0
      %v6743 = vsel %vm5705, %v6642, 0
      %v6746 = vsel %vm5705, %v6643, 0
      %6748 = vmatprep.subr.mxu0 0.0
      %6749 = vmatpush1.xpose.msra.mxu0 %v6653
      %6750 = vmatprep.subr.mxu0 0.0
      %6751 = vmatpush1.xpose.msra.mxu0 %v6656
      %6752 = vmatprep.subr.mxu0 0.0
      %6753 = vmatpush1.xpose.msra.mxu0 %v6659
      %6754 = vmatprep.subr.mxu0 0.0
      %6755 = vmatpush1.xpose.msra.mxu0 %v6662
      %6756 = vmatprep.subr.mxu0 0.0
      %6757 = vmatpush1.xpose.msra.mxu0 %v6665
      %6758 = vmatprep.subr.mxu0 0.0
      %6759 = vmatpush1.xpose.msra.mxu0 %v6668
      %6760 = vmatprep.subr.mxu0 0.0
      %6761 = vmatpush1.xpose.msra.mxu0 %v6671
      %6762 = vmatprep.subr.mxu0 0.0
      %6763 = vmatpush1.xpose.msra.mxu0 %v6674
      %6764 = vmatprep.subr.mxu0 0.0
      %6765 = vmatpush1.xpose.msra.mxu0 %v6677
      %6766 = vmatprep.subr.mxu0 0.0
      %6767 = vmatpush1.xpose.msra.mxu0 %v6680
      %6768 = vmatprep.subr.mxu0 0.0
      %6769 = vmatpush1.xpose.msra.mxu0 %v6683
      %6770 = vmatprep.subr.mxu0 0.0
      %6771 = vmatpush1.xpose.msra.mxu0 %v6686
      %6772 = vmatprep.subr.mxu0 0.0
      %6773 = vmatpush1.xpose.msra.mxu0 %v6689
      %6774 = vmatprep.subr.mxu0 0.0
      %6775 = vmatpush1.xpose.msra.mxu0 %v6692
      %6776 = vmatprep.subr.mxu0 0.0
      %6777 = vmatpush1.xpose.msra.mxu0 %v6695
      %6778 = vmatprep.subr.mxu0 0.0
      %6779 = vmatpush1.xpose.msra.mxu0 %v6698
      %6780 = vmatprep.subr.mxu0 0.0
      %6781 = vmatpush1.xpose.msra.mxu0 %v6701
      %6782 = vmatprep.subr.mxu0 0.0
      %6783 = vmatpush1.xpose.msra.mxu0 %v6704
      %6784 = vmatprep.subr.mxu0 0.0
      %6785 = vmatpush1.xpose.msra.mxu0 %v6707
      %6786 = vmatprep.subr.mxu0 0.0
      %6787 = vmatpush1.xpose.msra.mxu0 %v6710
      %6788 = vmatprep.subr.mxu0 0.0
      %6789 = vmatpush1.xpose.msra.mxu0 %v6713
      %6790 = vmatprep.subr.mxu0 0.0
      %6791 = vmatpush1.xpose.msra.mxu0 %v6716
      %6792 = vmatprep.subr.mxu0 0.0
      %6793 = vmatpush1.xpose.msra.mxu0 %v6719
      %6794 = vmatprep.subr.mxu0 0.0
      %6795 = vmatpush1.xpose.msra.mxu0 %v6722
      %6796 = vmatprep.subr.mxu0 0.0
      %6797 = vmatpush1.xpose.msra.mxu0 %v6725
      %6798 = vmatprep.subr.mxu0 0.0
      %6799 = vmatpush1.xpose.msra.mxu0 %v6728
      %6800 = vmatprep.subr.mxu0 0.0
      %6801 = vmatpush1.xpose.msra.mxu0 %v6731
      %6802 = vmatprep.subr.mxu0 0.0
      %6803 = vmatpush1.xpose.msra.mxu0 %v6734
      %6804 = vmatprep.subr.mxu0 0.0
      %6805 = vmatpush1.xpose.msra.mxu0 %v6737
      %6806 = vmatprep.subr.mxu0 0.0
      %6807 = vmatpush1.xpose.msra.mxu0 %v6740
      %6808 = vmatprep.subr.mxu0 0.0
      %6809 = vmatpush1.xpose.msra.mxu0 %v6743
      %6810 = vmatprep.subr.mxu0 0.0
      %6811 = vmatpush1.xpose.msra.mxu0 %v6746
      %6812 = vmatprep.mubr.f32.mxu0 0.0
      %6813 = vmatmul.mubr.f32.gmra.mrb[0].mxu0 %v6647
      %v6814 = vpop.f32.mrb[0].mxu0
      %v6815 = vadd.f32 0.0, %v6814
      %v6816 = vpop.f32.mrb[0].mxu0
      %v6817 = vadd.f32 0.0, %v6816
      %6818 = vmatprep.mubr.f32.mxu0 0.0
      %6819 = vmatmul.mubr.f32.gmra.mrb[0].mxu0 %v6650
      %v6820 = vpop.f32.mrb[0].mxu0
      %v6821 = vadd.f32 0.0, %v6820
      %v6822 = vpop.f32.mrb[0].mxu0
      %v6823 = vadd.f32 0.0, %v6822
      %6824 = vdwg.mxu0
      %v6825 = vadd.f32 %v6610, %v6815
      %v6826 = vadd.f32 %v6610, %v6817
      %v6827 = vadd.f32 %v6611, %v6821
      %v6828 = vadd.f32 %v6611, %v6823
      %v6829 = vld [vmem:[#allocation4 + $0x4] sm:$0xff]
      %v6830 = vld [vmem:[#allocation4 + $0xc] sm:$0xff]
      %v6831 = vld [vmem:[#allocation4 + $0x1c] sm:$0xff]
      %v6832 = vld [vmem:[#allocation4 + $0x24] sm:$0xff]
      %v6833 = vld [vmem:[#allocation4 + $0x34] sm:$0xff]
      %v6834 = vld [vmem:[#allocation4 + $0x3c] sm:$0xff]
      %v6835 = vld [vmem:[#allocation4 + $0x4c] sm:$0xff]
      %v6836 = vld [vmem:[#allocation4 + $0x54] sm:$0xff]
      %v6837 = vld [vmem:[#allocation4 + $0x64] sm:$0xff]
      %v6838 = vld [vmem:[#allocation4 + $0x6c] sm:$0xff]
      %v6839 = vld [vmem:[#allocation4 + $0x7c] sm:$0xff]
      %v6840 = vld [vmem:[#allocation4 + $0x84] sm:$0xff]
      %v6841 = vld [vmem:[#allocation4 + $0x94] sm:$0xff]
      %v6842 = vld [vmem:[#allocation4 + $0x9c] sm:$0xff]
      %v6843 = vld [vmem:[#allocation4 + $0xac] sm:$0xff]
      %v6844 = vld [vmem:[#allocation4 + $0xb4] sm:$0xff]
      %v6845 = vld [vmem:[#allocation4 + $0xc4] sm:$0xff]
      %v6846 = vld [vmem:[#allocation4 + $0xcc] sm:$0xff]
      %v6847 = vld [vmem:[#allocation4 + $0xdc] sm:$0xff]
      %v6848 = vld [vmem:[#allocation4 + $0xe4] sm:$0xff]
      %v6849 = vld [vmem:[#allocation4 + $0xf4] sm:$0xff]
      %v6850 = vld [vmem:[#allocation4 + $0xfc] sm:$0xff]
      %v6851 = vld [vmem:[#allocation4 + $0x10c] sm:$0xff]
      %v6852 = vld [vmem:[#allocation4 + $0x114] sm:$0xff]
      %v6853 = vld [vmem:[#allocation4 + $0x124] sm:$0xff]
      %v6854 = vld [vmem:[#allocation4 + $0x12c] sm:$0xff]
      %v6855 = vld [vmem:[#allocation4 + $0x13c] sm:$0xff]
      %v6856 = vld [vmem:[#allocation4 + $0x144] sm:$0xff]
      %v6857 = vld [vmem:[#allocation4 + $0x154] sm:$0xff]
      %v6858 = vld [vmem:[#allocation4 + $0x15c] sm:$0xff]
      %v6859 = vld [vmem:[#allocation4 + $0x16c] sm:$0xff]
      %v6860 = vld [vmem:[#allocation4 + $0x174] sm:$0xff]
      %s6861 = scalar_lea.vmem %s7, 16
      %v6862 = vld [vmem:[%s6861] sm:$0xff]
      %v6863 = vld [vmem:[%s6861 + $0x8] sm:$0xff]
      %v6865 = vsel %vm5705, %v6862, 0
      %v6868 = vsel %vm5705, %v6863, 0
      %v6871 = vsel %vm5705, %v6829, 0
      %v6874 = vsel %vm5705, %v6830, 0
      %v6877 = vsel %vm5705, %v6831, 0
      %v6880 = vsel %vm5705, %v6832, 0
      %v6883 = vsel %vm5705, %v6833, 0
      %v6886 = vsel %vm5705, %v6834, 0
      %v6889 = vsel %vm5705, %v6835, 0
      %v6892 = vsel %vm5705, %v6836, 0
      %v6895 = vsel %vm5705, %v6837, 0
      %v6898 = vsel %vm5705, %v6838, 0
      %v6901 = vsel %vm5705, %v6839, 0
      %v6904 = vsel %vm5705, %v6840, 0
      %v6907 = vsel %vm5705, %v6841, 0
      %v6910 = vsel %vm5705, %v6842, 0
      %v6913 = vsel %vm5705, %v6843, 0
      %v6916 = vsel %vm5705, %v6844, 0
      %v6919 = vsel %vm5705, %v6845, 0
      %v6922 = vsel %vm5705, %v6846, 0
      %v6925 = vsel %vm5705, %v6847, 0
      %v6928 = vsel %vm5705, %v6848, 0
      %v6931 = vsel %vm5705, %v6849, 0
      %v6934 = vsel %vm5705, %v6850, 0
      %v6937 = vsel %vm5705, %v6851, 0
      %v6940 = vsel %vm5705, %v6852, 0
      %v6943 = vsel %vm5705, %v6853, 0
      %v6946 = vsel %vm5705, %v6854, 0
      %v6949 = vsel %vm5705, %v6855, 0
      %v6952 = vsel %vm5705, %v6856, 0
      %v6955 = vsel %vm5705, %v6857, 0
      %v6958 = vsel %vm5705, %v6858, 0
      %v6961 = vsel %vm5705, %v6859, 0
      %v6964 = vsel %vm5705, %v6860, 0
      %6966 = vmatprep.subr.mxu0 0.0
      %6967 = vmatpush1.xpose.msra.mxu0 %v6871
      %6968 = vmatprep.subr.mxu0 0.0
      %6969 = vmatpush1.xpose.msra.mxu0 %v6874
      %6970 = vmatprep.subr.mxu0 0.0
      %6971 = vmatpush1.xpose.msra.mxu0 %v6877
      %6972 = vmatprep.subr.mxu0 0.0
      %6973 = vmatpush1.xpose.msra.mxu0 %v6880
      %6974 = vmatprep.subr.mxu0 0.0
      %6975 = vmatpush1.xpose.msra.mxu0 %v6883
      %6976 = vmatprep.subr.mxu0 0.0
      %6977 = vmatpush1.xpose.msra.mxu0 %v6886
      %6978 = vmatprep.subr.mxu0 0.0
      %6979 = vmatpush1.xpose.msra.mxu0 %v6889
      %6980 = vmatprep.subr.mxu0 0.0
      %6981 = vmatpush1.xpose.msra.mxu0 %v6892
      %6982 = vmatprep.subr.mxu0 0.0
      %6983 = vmatpush1.xpose.msra.mxu0 %v6895
      %6984 = vmatprep.subr.mxu0 0.0
      %6985 = vmatpush1.xpose.msra.mxu0 %v6898
      %6986 = vmatprep.subr.mxu0 0.0
      %6987 = vmatpush1.xpose.msra.mxu0 %v6901
      %6988 = vmatprep.subr.mxu0 0.0
      %6989 = vmatpush1.xpose.msra.mxu0 %v6904
      %6990 = vmatprep.subr.mxu0 0.0
      %6991 = vmatpush1.xpose.msra.mxu0 %v6907
      %6992 = vmatprep.subr.mxu0 0.0
      %6993 = vmatpush1.xpose.msra.mxu0 %v6910
      %6994 = vmatprep.subr.mxu0 0.0
      %6995 = vmatpush1.xpose.msra.mxu0 %v6913
      %6996 = vmatprep.subr.mxu0 0.0
      %6997 = vmatpush1.xpose.msra.mxu0 %v6916
      %6998 = vmatprep.subr.mxu0 0.0
      %6999 = vmatpush1.xpose.msra.mxu0 %v6919
      %7000 = vmatprep.subr.mxu0 0.0
      %7001 = vmatpush1.xpose.msra.mxu0 %v6922
      %7002 = vmatprep.subr.mxu0 0.0
      %7003 = vmatpush1.xpose.msra.mxu0 %v6925
      %7004 = vmatprep.subr.mxu0 0.0
      %7005 = vmatpush1.xpose.msra.mxu0 %v6928
      %7006 = vmatprep.subr.mxu0 0.0
      %7007 = vmatpush1.xpose.msra.mxu0 %v6931
      %7008 = vmatprep.subr.mxu0 0.0
      %7009 = vmatpush1.xpose.msra.mxu0 %v6934
      %7010 = vmatprep.subr.mxu0 0.0
      %7011 = vmatpush1.xpose.msra.mxu0 %v6937
      %7012 = vmatprep.subr.mxu0 0.0
      %7013 = vmatpush1.xpose.msra.mxu0 %v6940
      %7014 = vmatprep.subr.mxu0 0.0
      %7015 = vmatpush1.xpose.msra.mxu0 %v6943
      %7016 = vmatprep.subr.mxu0 0.0
      %7017 = vmatpush1.xpose.msra.mxu0 %v6946
      %7018 = vmatprep.subr.mxu0 0.0
      %7019 = vmatpush1.xpose.msra.mxu0 %v6949
      %7020 = vmatprep.subr.mxu0 0.0
      %7021 = vmatpush1.xpose.msra.mxu0 %v6952
      %7022 = vmatprep.subr.mxu0 0.0
      %7023 = vmatpush1.xpose.msra.mxu0 %v6955
      %7024 = vmatprep.subr.mxu0 0.0
      %7025 = vmatpush1.xpose.msra.mxu0 %v6958
      %7026 = vmatprep.subr.mxu0 0.0
      %7027 = vmatpush1.xpose.msra.mxu0 %v6961
      %7028 = vmatprep.subr.mxu0 0.0
      %7029 = vmatpush1.xpose.msra.mxu0 %v6964
      %7030 = vmatprep.mubr.f32.mxu0 0.0
      %7031 = vmatmul.mubr.f32.gmra.mrb[0].mxu0 %v6865
      %v7032 = vpop.f32.mrb[0].mxu0
      %v7033 = vadd.f32 0.0, %v7032
      %v7034 = vpop.f32.mrb[0].mxu0
      %v7035 = vadd.f32 0.0, %v7034
      %7036 = vmatprep.mubr.f32.mxu0 0.0
      %7037 = vmatmul.mubr.f32.gmra.mrb[0].mxu0 %v6868
      %v7038 = vpop.f32.mrb[0].mxu0
      %v7039 = vadd.f32 0.0, %v7038
      %v7040 = vpop.f32.mrb[0].mxu0
      %v7041 = vadd.f32 0.0, %v7040
      %7042 = vdwg.mxu0
      %v7043 = vadd.f32 %v6825, %v7033
      %v7044 = vadd.f32 %v6826, %v7035
      %v7045 = vadd.f32 %v6827, %v7039
      %v7046 = vadd.f32 %v6828, %v7041
      %v7047 = vld [vmem:[#allocation4 + $0x8] sm:$0xff]
      %v7048 = vld [vmem:[#allocation4 + $0x10] sm:$0xff]
      %v7049 = vld [vmem:[#allocation4 + $0x20] sm:$0xff]
      %v7050 = vld [vmem:[#allocation4 + $0x28] sm:$0xff]
      %v7051 = vld [vmem:[#allocation4 + $0x38] sm:$0xff]
      %v7052 = vld [vmem:[#allocation4 + $0x40] sm:$0xff]
      %v7053 = vld [vmem:[#allocation4 + $0x50] sm:$0xff]
      %v7054 = vld [vmem:[#allocation4 + $0x58] sm:$0xff]
      %v7055 = vld [vmem:[#allocation4 + $0x68] sm:$0xff]
      %v7056 = vld [vmem:[#allocation4 + $0x70] sm:$0xff]
      %v7057 = vld [vmem:[#allocation4 + $0x80] sm:$0xff]
      %v7058 = vld [vmem:[#allocation4 + $0x88] sm:$0xff]
      %v7059 = vld [vmem:[#allocation4 + $0x98] sm:$0xff]
      %v7060 = vld [vmem:[#allocation4 + $0xa0] sm:$0xff]
      %v7061 = vld [vmem:[#allocation4 + $0xb0] sm:$0xff]
      %v7062 = vld [vmem:[#allocation4 + $0xb8] sm:$0xff]
      %v7063 = vld [vmem:[#allocation4 + $0xc8] sm:$0xff]
      %v7064 = vld [vmem:[#allocation4 + $0xd0] sm:$0xff]
      %v7065 = vld [vmem:[#allocation4 + $0xe0] sm:$0xff]
      %v7066 = vld [vmem:[#allocation4 + $0xe8] sm:$0xff]
      %v7067 = vld [vmem:[#allocation4 + $0xf8] sm:$0xff]
      %v7068 = vld [vmem:[#allocation4 + $0x100] sm:$0xff]
      %v7069 = vld [vmem:[#allocation4 + $0x110] sm:$0xff]
      %v7070 = vld [vmem:[#allocation4 + $0x118] sm:$0xff]
      %v7071 = vld [vmem:[#allocation4 + $0x128] sm:$0xff]
      %v7072 = vld [vmem:[#allocation4 + $0x130] sm:$0xff]
      %v7073 = vld [vmem:[#allocation4 + $0x140] sm:$0xff]
      %v7074 = vld [vmem:[#allocation4 + $0x148] sm:$0xff]
      %v7075 = vld [vmem:[#allocation4 + $0x158] sm:$0xff]
      %v7076 = vld [vmem:[#allocation4 + $0x160] sm:$0xff]
      %v7077 = vld [vmem:[#allocation4 + $0x170] sm:$0xff]
      %v7078 = vld [vmem:[#allocation4 + $0x178] sm:$0xff]
      %s7079 = scalar_lea.vmem %s7, 32
      %v7080 = vld [vmem:[%s7079] sm:$0xff]
      %v7081 = vld [vmem:[%s7079 + $0x8] sm:$0xff]
      %v7083 = vsel %vm5705, %v7080, 0
      %v7086 = vsel %vm5705, %v7081, 0
      %v7089 = vsel %vm5705, %v7047, 0
      %v7092 = vsel %vm5705, %v7048, 0
      %v7095 = vsel %vm5705, %v7049, 0
      %v7098 = vsel %vm5705, %v7050, 0
      %v7101 = vsel %vm5705, %v7051, 0
      %v7104 = vsel %vm5705, %v7052, 0
      %v7107 = vsel %vm5705, %v7053, 0
      %v7110 = vsel %vm5705, %v7054, 0
      %v7113 = vsel %vm5705, %v7055, 0
      %v7116 = vsel %vm5705, %v7056, 0
      %v7119 = vsel %vm5705, %v7057, 0
      %v7122 = vsel %vm5705, %v7058, 0
      %v7125 = vsel %vm5705, %v7059, 0
      %v7128 = vsel %vm5705, %v7060, 0
      %v7131 = vsel %vm5705, %v7061, 0
      %v7134 = vsel %vm5705, %v7062, 0
      %v7137 = vsel %vm5705, %v7063, 0
      %v7140 = vsel %vm5705, %v7064, 0
      %v7143 = vsel %vm5705, %v7065, 0
      %v7146 = vsel %vm5705, %v7066, 0
      %v7149 = vsel %vm5705, %v7067, 0
      %v7152 = vsel %vm5705, %v7068, 0
      %v7155 = vsel %vm5705, %v7069, 0
      %v7158 = vsel %vm5705, %v7070, 0
      %v7161 = vsel %vm5705, %v7071, 0
      %v7164 = vsel %vm5705, %v7072, 0
      %v7167 = vsel %vm5705, %v7073, 0
      %v7170 = vsel %vm5705, %v7074, 0
      %v7173 = vsel %vm5705, %v7075, 0
      %v7176 = vsel %vm5705, %v7076, 0
      %v7179 = vsel %vm5705, %v7077, 0
      %v7182 = vsel %vm5705, %v7078, 0
      %7184 = vmatprep.subr.mxu0 0.0
      %7185 = vmatpush1.xpose.msra.mxu0 %v7089
      %7186 = vmatprep.subr.mxu0 0.0
      %7187 = vmatpush1.xpose.msra.mxu0 %v7092
      %7188 = vmatprep.subr.mxu0 0.0
      %7189 = vmatpush1.xpose.msra.mxu0 %v7095
      %7190 = vmatprep.subr.mxu0 0.0
      %7191 = vmatpush1.xpose.msra.mxu0 %v7098
      %7192 = vmatprep.subr.mxu0 0.0
      %7193 = vmatpush1.xpose.msra.mxu0 %v7101
      %7194 = vmatprep.subr.mxu0 0.0
      %7195 = vmatpush1.xpose.msra.mxu0 %v7104
      %7196 = vmatprep.subr.mxu0 0.0
      %7197 = vmatpush1.xpose.msra.mxu0 %v7107
      %7198 = vmatprep.subr.mxu0 0.0
      %7199 = vmatpush1.xpose.msra.mxu0 %v7110
      %7200 = vmatprep.subr.mxu0 0.0
      %7201 = vmatpush1.xpose.msra.mxu0 %v7113
      %7202 = vmatprep.subr.mxu0 0.0
      %7203 = vmatpush1.xpose.msra.mxu0 %v7116
      %7204 = vmatprep.subr.mxu0 0.0
      %7205 = vmatpush1.xpose.msra.mxu0 %v7119
      %7206 = vmatprep.subr.mxu0 0.0
      %7207 = vmatpush1.xpose.msra.mxu0 %v7122
      %7208 = vmatprep.subr.mxu0 0.0
      %7209 = vmatpush1.xpose.msra.mxu0 %v7125
      %7210 = vmatprep.subr.mxu0 0.0
      %7211 = vmatpush1.xpose.msra.mxu0 %v7128
      %7212 = vmatprep.subr.mxu0 0.0
      %7213 = vmatpush1.xpose.msra.mxu0 %v7131
      %7214 = vmatprep.subr.mxu0 0.0
      %7215 = vmatpush1.xpose.msra.mxu0 %v7134
      %7216 = vmatprep.subr.mxu0 0.0
      %7217 = vmatpush1.xpose.msra.mxu0 %v7137
      %7218 = vmatprep.subr.mxu0 0.0
      %7219 = vmatpush1.xpose.msra.mxu0 %v7140
      %7220 = vmatprep.subr.mxu0 0.0
      %7221 = vmatpush1.xpose.msra.mxu0 %v7143
      %7222 = vmatprep.subr.mxu0 0.0
      %7223 = vmatpush1.xpose.msra.mxu0 %v7146
      %7224 = vmatprep.subr.mxu0 0.0
      %7225 = vmatpush1.xpose.msra.mxu0 %v7149
      %7226 = vmatprep.subr.mxu0 0.0
      %7227 = vmatpush1.xpose.msra.mxu0 %v7152
      %7228 = vmatprep.subr.mxu0 0.0
      %7229 = vmatpush1.xpose.msra.mxu0 %v7155
      %7230 = vmatprep.subr.mxu0 0.0
      %7231 = vmatpush1.xpose.msra.mxu0 %v7158
      %7232 = vmatprep.subr.mxu0 0.0
      %7233 = vmatpush1.xpose.msra.mxu0 %v7161
      %7234 = vmatprep.subr.mxu0 0.0
      %7235 = vmatpush1.xpose.msra.mxu0 %v7164
      %7236 = vmatprep.subr.mxu0 0.0
      %7237 = vmatpush1.xpose.msra.mxu0 %v7167
      %7238 = vmatprep.subr.mxu0 0.0
      %7239 = vmatpush1.xpose.msra.mxu0 %v7170
      %7240 = vmatprep.subr.mxu0 0.0
      %7241 = vmatpush1.xpose.msra.mxu0 %v7173
      %7242 = vmatprep.subr.mxu0 0.0
      %7243 = vmatpush1.xpose.msra.mxu0 %v7176
      %7244 = vmatprep.subr.mxu0 0.0
      %7245 = vmatpush1.xpose.msra.mxu0 %v7179
      %7246 = vmatprep.subr.mxu0 0.0
      %7247 = vmatpush1.xpose.msra.mxu0 %v7182
      %7248 = vmatprep.mubr.f32.mxu0 0.0
      %7249 = vmatmul.mubr.f32.gmra.mrb[0].mxu0 %v7083
      %v7250 = vpop.f32.mrb[0].mxu0
      %v7251 = vadd.f32 0.0, %v7250
      %v7252 = vpop.f32.mrb[0].mxu0
      %v7253 = vadd.f32 0.0, %v7252
      %7254 = vmatprep.mubr.f32.mxu0 0.0
      %7255 = vmatmul.mubr.f32.gmra.mrb[0].mxu0 %v7086
      %v7256 = vpop.f32.mrb[0].mxu0
      %v7257 = vadd.f32 0.0, %v7256
      %v7258 = vpop.f32.mrb[0].mxu0
      %v7259 = vadd.f32 0.0, %v7258
      %7260 = vdwg.mxu0
      %v7261 = vadd.f32 %v7043, %v7251
      %v7262 = vadd.f32 %v7044, %v7253
      %v7263 = vadd.f32 %v7045, %v7257
      %v7264 = vadd.f32 %v7046, %v7259
      %v7265 = vld [vmem:[%s6532] sm:$0xff]
      %v7266 = vld [vmem:[%s6532 + $0x8] sm:$0xff]
      %v7267 = vld [vmem:[%s6532 + $0x18] sm:$0xff]
      %v7268 = vld [vmem:[%s6532 + $0x20] sm:$0xff]
      %v7269 = vld [vmem:[%s6532 + $0x30] sm:$0xff]
      %v7270 = vld [vmem:[%s6532 + $0x38] sm:$0xff]
      %v7271 = vld [vmem:[%s6532 + $0x48] sm:$0xff]
      %v7272 = vld [vmem:[%s6532 + $0x50] sm:$0xff]
      %v7273 = vld [vmem:[%s6532 + $0x60] sm:$0xff]
      %v7274 = vld [vmem:[%s6532 + $0x68] sm:$0xff]
      %v7275 = vld [vmem:[%s6532 + $0x78] sm:$0xff]
      %v7276 = vld [vmem:[%s6532 + $0x80] sm:$0xff]
      %v7277 = vld [vmem:[%s6532 + $0x90] sm:$0xff]
      %v7278 = vld [vmem:[%s6532 + $0x98] sm:$0xff]
      %v7279 = vld [vmem:[%s6532 + $0xa8] sm:$0xff]
      %v7280 = vld [vmem:[%s6532 + $0xb0] sm:$0xff]
      %v7281 = vld [vmem:[%s6532 + $0xc0] sm:$0xff]
      %v7282 = vld [vmem:[%s6532 + $0xc8] sm:$0xff]
      %v7283 = vld [vmem:[%s6532 + $0xd8] sm:$0xff]
      %v7284 = vld [vmem:[%s6532 + $0xe0] sm:$0xff]
      %v7285 = vld [vmem:[%s6532 + $0xf0] sm:$0xff]
      %v7286 = vld [vmem:[%s6532 + $0xf8] sm:$0xff]
      %v7287 = vld [vmem:[%s6532 + $0x108] sm:$0xff]
      %v7288 = vld [vmem:[%s6532 + $0x110] sm:$0xff]
      %v7289 = vld [vmem:[%s6532 + $0x120] sm:$0xff]
      %v7290 = vld [vmem:[%s6532 + $0x128] sm:$0xff]
      %v7291 = vld [vmem:[%s6532 + $0x138] sm:$0xff]
      %v7292 = vld [vmem:[%s6532 + $0x140] sm:$0xff]
      %v7293 = vld [vmem:[%s6532 + $0x150] sm:$0xff]
      %v7294 = vld [vmem:[%s6532 + $0x158] sm:$0xff]
      %v7295 = vld [vmem:[%s6532 + $0x168] sm:$0xff]
      %v7296 = vld [vmem:[%s6532 + $0x170] sm:$0xff]
      %s7297 = scalar_lea.vmem %s7, 48
      %v7298 = vld [vmem:[%s7297] sm:$0xff]
      %v7299 = vld [vmem:[%s7297 + $0x8] sm:$0xff]
      %v7301 = vsel %vm5705, %v7298, 0
      %v7304 = vsel %vm5705, %v7299, 0
      %v7307 = vsel %vm5705, %v7265, 0
      %v7310 = vsel %vm5705, %v7266, 0
      %v7313 = vsel %vm5705, %v7267, 0
      %v7316 = vsel %vm5705, %v7268, 0
      %v7319 = vsel %vm5705, %v7269, 0
      %v7322 = vsel %vm5705, %v7270, 0
      %v7325 = vsel %vm5705, %v7271, 0
      %v7328 = vsel %vm5705, %v7272, 0
      %v7331 = vsel %vm5705, %v7273, 0
      %v7334 = vsel %vm5705, %v7274, 0
      %v7337 = vsel %vm5705, %v7275, 0
      %v7340 = vsel %vm5705, %v7276, 0
      %v7343 = vsel %vm5705, %v7277, 0
      %v7346 = vsel %vm5705, %v7278, 0
      %v7349 = vsel %vm5705, %v7279, 0
      %v7352 = vsel %vm5705, %v7280, 0
      %v7355 = vsel %vm5705, %v7281, 0
      %v7358 = vsel %vm5705, %v7282, 0
      %v7361 = vsel %vm5705, %v7283, 0
      %v7364 = vsel %vm5705, %v7284, 0
      %v7367 = vsel %vm5705, %v7285, 0
      %v7370 = vsel %vm5705, %v7286, 0
      %v7373 = vsel %vm5705, %v7287, 0
      %v7376 = vsel %vm5705, %v7288, 0
      %v7379 = vsel %vm5705, %v7289, 0
      %v7382 = vsel %vm5705, %v7290, 0
      %v7385 = vsel %vm5705, %v7291, 0
      %v7388 = vsel %vm5705, %v7292, 0
      %v7391 = vsel %vm5705, %v7293, 0
      %v7394 = vsel %vm5705, %v7294, 0
      %v7397 = vsel %vm5705, %v7295, 0
      %v7400 = vsel %vm5705, %v7296, 0
      %7402 = vmatprep.subr.mxu0 0.0
      %7403 = vmatpush1.xpose.msra.mxu0 %v7307
      %7404 = vmatprep.subr.mxu0 0.0
      %7405 = vmatpush1.xpose.msra.mxu0 %v7310
      %7406 = vmatprep.subr.mxu0 0.0
      %7407 = vmatpush1.xpose.msra.mxu0 %v7313
      %7408 = vmatprep.subr.mxu0 0.0
      %7409 = vmatpush1.xpose.msra.mxu0 %v7316
      %7410 = vmatprep.subr.mxu0 0.0
      %7411 = vmatpush1.xpose.msra.mxu0 %v7319
      %7412 = vmatprep.subr.mxu0 0.0
      %7413 = vmatpush1.xpose.msra.mxu0 %v7322
      %7414 = vmatprep.subr.mxu0 0.0
      %7415 = vmatpush1.xpose.msra.mxu0 %v7325
      %7416 = vmatprep.subr.mxu0 0.0
      %7417 = vmatpush1.xpose.msra.mxu0 %v7328
      %7418 = vmatprep.subr.mxu0 0.0
      %7419 = vmatpush1.xpose.msra.mxu0 %v7331
      %7420 = vmatprep.subr.mxu0 0.0
      %7421 = vmatpush1.xpose.msra.mxu0 %v7334
      %7422 = vmatprep.subr.mxu0 0.0
      %7423 = vmatpush1.xpose.msra.mxu0 %v7337
      %7424 = vmatprep.subr.mxu0 0.0
      %7425 = vmatpush1.xpose.msra.mxu0 %v7340
      %7426 = vmatprep.subr.mxu0 0.0
      %7427 = vmatpush1.xpose.msra.mxu0 %v7343
      %7428 = vmatprep.subr.mxu0 0.0
      %7429 = vmatpush1.xpose.msra.mxu0 %v7346
      %7430 = vmatprep.subr.mxu0 0.0
      %7431 = vmatpush1.xpose.msra.mxu0 %v7349
      %7432 = vmatprep.subr.mxu0 0.0
      %7433 = vmatpush1.xpose.msra.mxu0 %v7352
      %7434 = vmatprep.subr.mxu0 0.0
      %7435 = vmatpush1.xpose.msra.mxu0 %v7355
      %7436 = vmatprep.subr.mxu0 0.0
      %7437 = vmatpush1.xpose.msra.mxu0 %v7358
      %7438 = vmatprep.subr.mxu0 0.0
      %7439 = vmatpush1.xpose.msra.mxu0 %v7361
      %7440 = vmatprep.subr.mxu0 0.0
      %7441 = vmatpush1.xpose.msra.mxu0 %v7364
      %7442 = vmatprep.subr.mxu0 0.0
      %7443 = vmatpush1.xpose.msra.mxu0 %v7367
      %7444 = vmatprep.subr.mxu0 0.0
      %7445 = vmatpush1.xpose.msra.mxu0 %v7370
      %7446 = vmatprep.subr.mxu0 0.0
      %7447 = vmatpush1.xpose.msra.mxu0 %v7373
      %7448 = vmatprep.subr.mxu0 0.0
      %7449 = vmatpush1.xpose.msra.mxu0 %v7376
      %7450 = vmatprep.subr.mxu0 0.0
      %7451 = vmatpush1.xpose.msra.mxu0 %v7379
      %7452 = vmatprep.subr.mxu0 0.0
      %7453 = vmatpush1.xpose.msra.mxu0 %v7382
      %7454 = vmatprep.subr.mxu0 0.0
      %7455 = vmatpush1.xpose.msra.mxu0 %v7385
      %7456 = vmatprep.subr.mxu0 0.0
      %7457 = vmatpush1.xpose.msra.mxu0 %v7388
      %7458 = vmatprep.subr.mxu0 0.0
      %7459 = vmatpush1.xpose.msra.mxu0 %v7391
      %7460 = vmatprep.subr.mxu0 0.0
      %7461 = vmatpush1.xpose.msra.mxu0 %v7394
      %7462 = vmatprep.subr.mxu0 0.0
      %7463 = vmatpush1.xpose.msra.mxu0 %v7397
      %7464 = vmatprep.subr.mxu0 0.0
      %7465 = vmatpush1.xpose.msra.mxu0 %v7400
      %7466 = vmatprep.mubr.f32.mxu0 0.0
      %7467 = vmatmul.mubr.f32.gmra.mrb[0].mxu0 %v7301
      %v7468 = vpop.f32.mrb[0].mxu0
      %v7469 = vadd.f32 0.0, %v7468
      %v7470 = vpop.f32.mrb[0].mxu0
      %v7471 = vadd.f32 0.0, %v7470
      %7472 = vmatprep.mubr.f32.mxu0 0.0
      %7473 = vmatmul.mubr.f32.gmra.mrb[0].mxu0 %v7304
      %v7474 = vpop.f32.mrb[0].mxu0
      %v7475 = vadd.f32 0.0, %v7474
      %v7476 = vpop.f32.mrb[0].mxu0
      %v7477 = vadd.f32 0.0, %v7476
      %7478 = vdwg.mxu0
      %v7479 = vadd.f32 %v7261, %v7469
      %v7480 = vadd.f32 %v7262, %v7471
      %v7481 = vadd.f32 %v7263, %v7475
      %v7482 = vadd.f32 %v7264, %v7477
      %v7483 = vld [vmem:[%s6532 + $0x4] sm:$0xff]
      %v7484 = vld [vmem:[%s6532 + $0xc] sm:$0xff]
      %v7485 = vld [vmem:[%s6532 + $0x1c] sm:$0xff]
      %v7486 = vld [vmem:[%s6532 + $0x24] sm:$0xff]
      %v7487 = vld [vmem:[%s6532 + $0x34] sm:$0xff]
      %v7488 = vld [vmem:[%s6532 + $0x3c] sm:$0xff]
      %v7489 = vld [vmem:[%s6532 + $0x4c] sm:$0xff]
      %v7490 = vld [vmem:[%s6532 + $0x54] sm:$0xff]
      %v7491 = vld [vmem:[%s6532 + $0x64] sm:$0xff]
      %v7492 = vld [vmem:[%s6532 + $0x6c] sm:$0xff]
      %v7493 = vld [vmem:[%s6532 + $0x7c] sm:$0xff]
      %v7494 = vld [vmem:[%s6532 + $0x84] sm:$0xff]
      %v7495 = vld [vmem:[%s6532 + $0x94] sm:$0xff]
      %v7496 = vld [vmem:[%s6532 + $0x9c] sm:$0xff]
      %v7497 = vld [vmem:[%s6532 + $0xac] sm:$0xff]
      %v7498 = vld [vmem:[%s6532 + $0xb4] sm:$0xff]
      %v7499 = vld [vmem:[%s6532 + $0xc4] sm:$0xff]
      %v7500 = vld [vmem:[%s6532 + $0xcc] sm:$0xff]
      %v7501 = vld [vmem:[%s6532 + $0xdc] sm:$0xff]
      %v7502 = vld [vmem:[%s6532 + $0xe4] sm:$0xff]
      %v7503 = vld [vmem:[%s6532 + $0xf4] sm:$0xff]
      %v7504 = vld [vmem:[%s6532 + $0xfc] sm:$0xff]
      %v7505 = vld [vmem:[%s6532 + $0x10c] sm:$0xff]
      %v7506 = vld [vmem:[%s6532 + $0x114] sm:$0xff]
      %v7507 = vld [vmem:[%s6532 + $0x124] sm:$0xff]
      %v7508 = vld [vmem:[%s6532 + $0x12c] sm:$0xff]
      %v7509 = vld [vmem:[%s6532 + $0x13c] sm:$0xff]
      %v7510 = vld [vmem:[%s6532 + $0x144] sm:$0xff]
      %v7511 = vld [vmem:[%s6532 + $0x154] sm:$0xff]
      %v7512 = vld [vmem:[%s6532 + $0x15c] sm:$0xff]
      %v7513 = vld [vmem:[%s6532 + $0x16c] sm:$0xff]
      %v7514 = vld [vmem:[%s6532 + $0x174] sm:$0xff]
      %s7515 = scalar_lea.vmem %s7, 64
      %v7516 = vld [vmem:[%s7515] sm:$0xff]
      %v7517 = vld [vmem:[%s7515 + $0x8] sm:$0xff]
      %v7519 = vsel %vm5705, %v7516, 0
      %v7522 = vsel %vm5705, %v7517, 0
      %v7525 = vsel %vm5705, %v7483, 0
      %v7528 = vsel %vm5705, %v7484, 0
      %v7531 = vsel %vm5705, %v7485, 0
      %v7534 = vsel %vm5705, %v7486, 0
      %v7537 = vsel %vm5705, %v7487, 0
      %v7540 = vsel %vm5705, %v7488, 0
      %v7543 = vsel %vm5705, %v7489, 0
      %v7546 = vsel %vm5705, %v7490, 0
      %v7549 = vsel %vm5705, %v7491, 0
      %v7552 = vsel %vm5705, %v7492, 0
      %v7555 = vsel %vm5705, %v7493, 0
      %v7558 = vsel %vm5705, %v7494, 0
      %v7561 = vsel %vm5705, %v7495, 0
      %v7564 = vsel %vm5705, %v7496, 0
      %v7567 = vsel %vm5705, %v7497, 0
      %v7570 = vsel %vm5705, %v7498, 0
      %v7573 = vsel %vm5705, %v7499, 0
      %v7576 = vsel %vm5705, %v7500, 0
      %v7579 = vsel %vm5705, %v7501, 0
      %v7582 = vsel %vm5705, %v7502, 0
      %v7585 = vsel %vm5705, %v7503, 0
      %v7588 = vsel %vm5705, %v7504, 0
      %v7591 = vsel %vm5705, %v7505, 0
      %v7594 = vsel %vm5705, %v7506, 0
      %v7597 = vsel %vm5705, %v7507, 0
      %v7600 = vsel %vm5705, %v7508, 0
      %v7603 = vsel %vm5705, %v7509, 0
      %v7606 = vsel %vm5705, %v7510, 0
      %v7609 = vsel %vm5705, %v7511, 0
      %v7612 = vsel %vm5705, %v7512, 0
      %v7615 = vsel %vm5705, %v7513, 0
      %v7618 = vsel %vm5705, %v7514, 0
      %7620 = vmatprep.subr.mxu0 0.0
      %7621 = vmatpush1.xpose.msra.mxu0 %v7525
      %7622 = vmatprep.subr.mxu0 0.0
      %7623 = vmatpush1.xpose.msra.mxu0 %v7528
      %7624 = vmatprep.subr.mxu0 0.0
      %7625 = vmatpush1.xpose.msra.mxu0 %v7531
      %7626 = vmatprep.subr.mxu0 0.0
      %7627 = vmatpush1.xpose.msra.mxu0 %v7534
      %7628 = vmatprep.subr.mxu0 0.0
      %7629 = vmatpush1.xpose.msra.mxu0 %v7537
      %7630 = vmatprep.subr.mxu0 0.0
      %7631 = vmatpush1.xpose.msra.mxu0 %v7540
      %7632 = vmatprep.subr.mxu0 0.0
      %7633 = vmatpush1.xpose.msra.mxu0 %v7543
      %7634 = vmatprep.subr.mxu0 0.0
      %7635 = vmatpush1.xpose.msra.mxu0 %v7546
      %7636 = vmatprep.subr.mxu0 0.0
      %7637 = vmatpush1.xpose.msra.mxu0 %v7549
      %7638 = vmatprep.subr.mxu0 0.0
      %7639 = vmatpush1.xpose.msra.mxu0 %v7552
      %7640 = vmatprep.subr.mxu0 0.0
      %7641 = vmatpush1.xpose.msra.mxu0 %v7555
      %7642 = vmatprep.subr.mxu0 0.0
      %7643 = vmatpush1.xpose.msra.mxu0 %v7558
      %7644 = vmatprep.subr.mxu0 0.0
      %7645 = vmatpush1.xpose.msra.mxu0 %v7561
      %7646 = vmatprep.subr.mxu0 0.0
      %7647 = vmatpush1.xpose.msra.mxu0 %v7564
      %7648 = vmatprep.subr.mxu0 0.0
      %7649 = vmatpush1.xpose.msra.mxu0 %v7567
      %7650 = vmatprep.subr.mxu0 0.0
      %7651 = vmatpush1.xpose.msra.mxu0 %v7570
      %7652 = vmatprep.subr.mxu0 0.0
      %7653 = vmatpush1.xpose.msra.mxu0 %v7573
      %7654 = vmatprep.subr.mxu0 0.0
      %7655 = vmatpush1.xpose.msra.mxu0 %v7576
      %7656 = vmatprep.subr.mxu0 0.0
      %7657 = vmatpush1.xpose.msra.mxu0 %v7579
      %7658 = vmatprep.subr.mxu0 0.0
      %7659 = vmatpush1.xpose.msra.mxu0 %v7582
      %7660 = vmatprep.subr.mxu0 0.0
      %7661 = vmatpush1.xpose.msra.mxu0 %v7585
      %7662 = vmatprep.subr.mxu0 0.0
      %7663 = vmatpush1.xpose.msra.mxu0 %v7588
      %7664 = vmatprep.subr.mxu0 0.0
      %7665 = vmatpush1.xpose.msra.mxu0 %v7591
      %7666 = vmatprep.subr.mxu0 0.0
      %7667 = vmatpush1.xpose.msra.mxu0 %v7594
      %7668 = vmatprep.subr.mxu0 0.0
      %7669 = vmatpush1.xpose.msra.mxu0 %v7597
      %7670 = vmatprep.subr.mxu0 0.0
      %7671 = vmatpush1.xpose.msra.mxu0 %v7600
      %7672 = vmatprep.subr.mxu0 0.0
      %7673 = vmatpush1.xpose.msra.mxu0 %v7603
      %7674 = vmatprep.subr.mxu0 0.0
      %7675 = vmatpush1.xpose.msra.mxu0 %v7606
      %7676 = vmatprep.subr.mxu0 0.0
      %7677 = vmatpush1.xpose.msra.mxu0 %v7609
      %7678 = vmatprep.subr.mxu0 0.0
      %7679 = vmatpush1.xpose.msra.mxu0 %v7612
      %7680 = vmatprep.subr.mxu0 0.0
      %7681 = vmatpush1.xpose.msra.mxu0 %v7615
      %7682 = vmatprep.subr.mxu0 0.0
      %7683 = vmatpush1.xpose.msra.mxu0 %v7618
      %7684 = vmatprep.mubr.f32.mxu0 0.0
      %7685 = vmatmul.mubr.f32.gmra.mrb[0].mxu0 %v7519
      %v7686 = vpop.f32.mrb[0].mxu0
      %v7687 = vadd.f32 0.0, %v7686
      %v7688 = vpop.f32.mrb[0].mxu0
      %v7689 = vadd.f32 0.0, %v7688
      %7690 = vmatprep.mubr.f32.mxu0 0.0
      %7691 = vmatmul.mubr.f32.gmra.mrb[0].mxu0 %v7522
      %v7692 = vpop.f32.mrb[0].mxu0
      %v7693 = vadd.f32 0.0, %v7692
      %v7694 = vpop.f32.mrb[0].mxu0
      %v7695 = vadd.f32 0.0, %v7694
      %7696 = vdwg.mxu0
      %v7697 = vadd.f32 %v7479, %v7687
      %v7698 = vadd.f32 %v7480, %v7689
      %v7699 = vadd.f32 %v7481, %v7693
      %v7700 = vadd.f32 %v7482, %v7695
      %v7701 = vld [vmem:[%s6532 + $0x8] sm:$0xff]
      %v7702 = vld [vmem:[%s6532 + $0x10] sm:$0xff]
      %v7703 = vld [vmem:[%s6532 + $0x20] sm:$0xff]
      %v7704 = vld [vmem:[%s6532 + $0x28] sm:$0xff]
      %v7705 = vld [vmem:[%s6532 + $0x38] sm:$0xff]
      %v7706 = vld [vmem:[%s6532 + $0x40] sm:$0xff]
      %v7707 = vld [vmem:[%s6532 + $0x50] sm:$0xff]
      %v7708 = vld [vmem:[%s6532 + $0x58] sm:$0xff]
      %v7709 = vld [vmem:[%s6532 + $0x68] sm:$0xff]
      %v7710 = vld [vmem:[%s6532 + $0x70] sm:$0xff]
      %v7711 = vld [vmem:[%s6532 + $0x80] sm:$0xff]
      %v7712 = vld [vmem:[%s6532 + $0x88] sm:$0xff]
      %v7713 = vld [vmem:[%s6532 + $0x98] sm:$0xff]
      %v7714 = vld [vmem:[%s6532 + $0xa0] sm:$0xff]
      %v7715 = vld [vmem:[%s6532 + $0xb0] sm:$0xff]
      %v7716 = vld [vmem:[%s6532 + $0xb8] sm:$0xff]
      %v7717 = vld [vmem:[%s6532 + $0xc8] sm:$0xff]
      %v7718 = vld [vmem:[%s6532 + $0xd0] sm:$0xff]
      %v7719 = vld [vmem:[%s6532 + $0xe0] sm:$0xff]
      %v7720 = vld [vmem:[%s6532 + $0xe8] sm:$0xff]
      %v7721 = vld [vmem:[%s6532 + $0xf8] sm:$0xff]
      %v7722 = vld [vmem:[%s6532 + $0x100] sm:$0xff]
      %v7723 = vld [vmem:[%s6532 + $0x110] sm:$0xff]
      %v7724 = vld [vmem:[%s6532 + $0x118] sm:$0xff]
      %v7725 = vld [vmem:[%s6532 + $0x128] sm:$0xff]
      %v7726 = vld [vmem:[%s6532 + $0x130] sm:$0xff]
      %v7727 = vld [vmem:[%s6532 + $0x140] sm:$0xff]
      %v7728 = vld [vmem:[%s6532 + $0x148] sm:$0xff]
      %v7729 = vld [vmem:[%s6532 + $0x158] sm:$0xff]
      %v7730 = vld [vmem:[%s6532 + $0x160] sm:$0xff]
      %v7731 = vld [vmem:[%s6532 + $0x170] sm:$0xff]
      %v7732 = vld [vmem:[%s6532 + $0x178] sm:$0xff]
      %s7733 = scalar_lea.vmem %s7, 80
      %v7734 = vld [vmem:[%s7733] sm:$0xff]
      %v7735 = vld [vmem:[%s7733 + $0x8] sm:$0xff]
      %v7737 = vsel %vm5705, %v7734, 0
      %v7740 = vsel %vm5705, %v7735, 0
      %v7743 = vsel %vm5705, %v7701, 0
      %v7746 = vsel %vm5705, %v7702, 0
      %v7749 = vsel %vm5705, %v7703, 0
      %v7752 = vsel %vm5705, %v7704, 0
      %v7755 = vsel %vm5705, %v7705, 0
      %v7758 = vsel %vm5705, %v7706, 0
      %v7761 = vsel %vm5705, %v7707, 0
      %v7764 = vsel %vm5705, %v7708, 0
      %v7767 = vsel %vm5705, %v7709, 0
      %v7770 = vsel %vm5705, %v7710, 0
      %v7773 = vsel %vm5705, %v7711, 0
      %v7776 = vsel %vm5705, %v7712, 0
      %v7779 = vsel %vm5705, %v7713, 0
      %v7782 = vsel %vm5705, %v7714, 0
      %v7785 = vsel %vm5705, %v7715, 0
      %v7788 = vsel %vm5705, %v7716, 0
      %v7791 = vsel %vm5705, %v7717, 0
      %v7794 = vsel %vm5705, %v7718, 0
      %v7797 = vsel %vm5705, %v7719, 0
      %v7800 = vsel %vm5705, %v7720, 0
      %v7803 = vsel %vm5705, %v7721, 0
      %v7806 = vsel %vm5705, %v7722, 0
      %v7809 = vsel %vm5705, %v7723, 0
      %v7812 = vsel %vm5705, %v7724, 0
      %v7815 = vsel %vm5705, %v7725, 0
      %v7818 = vsel %vm5705, %v7726, 0
      %v7821 = vsel %vm5705, %v7727, 0
      %v7824 = vsel %vm5705, %v7728, 0
      %v7827 = vsel %vm5705, %v7729, 0
      %v7830 = vsel %vm5705, %v7730, 0
      %v7833 = vsel %vm5705, %v7731, 0
      %v7836 = vsel %vm5705, %v7732, 0
      %7838 = vmatprep.subr.mxu0 0.0
      %7839 = vmatpush1.xpose.msra.mxu0 %v7743
      %7840 = vmatprep.subr.mxu0 0.0
      %7841 = vmatpush1.xpose.msra.mxu0 %v7746
      %7842 = vmatprep.subr.mxu0 0.0
      %7843 = vmatpush1.xpose.msra.mxu0 %v7749
      %7844 = vmatprep.subr.mxu0 0.0
      %7845 = vmatpush1.xpose.msra.mxu0 %v7752
      %7846 = vmatprep.subr.mxu0 0.0
      %7847 = vmatpush1.xpose.msra.mxu0 %v7755
      %7848 = vmatprep.subr.mxu0 0.0
      %7849 = vmatpush1.xpose.msra.mxu0 %v7758
      %7850 = vmatprep.subr.mxu0 0.0
      %7851 = vmatpush1.xpose.msra.mxu0 %v7761
      %7852 = vmatprep.subr.mxu0 0.0
      %7853 = vmatpush1.xpose.msra.mxu0 %v7764
      %7854 = vmatprep.subr.mxu0 0.0
      %7855 = vmatpush1.xpose.msra.mxu0 %v7767
      %7856 = vmatprep.subr.mxu0 0.0
      %7857 = vmatpush1.xpose.msra.mxu0 %v7770
      %7858 = vmatprep.subr.mxu0 0.0
      %7859 = vmatpush1.xpose.msra.mxu0 %v7773
      %7860 = vmatprep.subr.mxu0 0.0
      %7861 = vmatpush1.xpose.msra.mxu0 %v7776
      %7862 = vmatprep.subr.mxu0 0.0
      %7863 = vmatpush1.xpose.msra.mxu0 %v7779
      %7864 = vmatprep.subr.mxu0 0.0
      %7865 = vmatpush1.xpose.msra.mxu0 %v7782
      %7866 = vmatprep.subr.mxu0 0.0
      %7867 = vmatpush1.xpose.msra.mxu0 %v7785
      %7868 = vmatprep.subr.mxu0 0.0
      %7869 = vmatpush1.xpose.msra.mxu0 %v7788
      %7870 = vmatprep.subr.mxu0 0.0
      %7871 = vmatpush1.xpose.msra.mxu0 %v7791
      %7872 = vmatprep.subr.mxu0 0.0
      %7873 = vmatpush1.xpose.msra.mxu0 %v7794
      %7874 = vmatprep.subr.mxu0 0.0
      %7875 = vmatpush1.xpose.msra.mxu0 %v7797
      %7876 = vmatprep.subr.mxu0 0.0
      %7877 = vmatpush1.xpose.msra.mxu0 %v7800
      %7878 = vmatprep.subr.mxu0 0.0
      %7879 = vmatpush1.xpose.msra.mxu0 %v7803
      %7880 = vmatprep.subr.mxu0 0.0
      %7881 = vmatpush1.xpose.msra.mxu0 %v7806
      %7882 = vmatprep.subr.mxu0 0.0
      %7883 = vmatpush1.xpose.msra.mxu0 %v7809
      %7884 = vmatprep.subr.mxu0 0.0
      %7885 = vmatpush1.xpose.msra.mxu0 %v7812
      %7886 = vmatprep.subr.mxu0 0.0
      %7887 = vmatpush1.xpose.msra.mxu0 %v7815
      %7888 = vmatprep.subr.mxu0 0.0
      %7889 = vmatpush1.xpose.msra.mxu0 %v7818
      %7890 = vmatprep.subr.mxu0 0.0
      %7891 = vmatpush1.xpose.msra.mxu0 %v7821
      %7892 = vmatprep.subr.mxu0 0.0
      %7893 = vmatpush1.xpose.msra.mxu0 %v7824
      %7894 = vmatprep.subr.mxu0 0.0
      %7895 = vmatpush1.xpose.msra.mxu0 %v7827
      %7896 = vmatprep.subr.mxu0 0.0
      %7897 = vmatpush1.xpose.msra.mxu0 %v7830
      %7898 = vmatprep.subr.mxu0 0.0
      %7899 = vmatpush1.xpose.msra.mxu0 %v7833
      %7900 = vmatprep.subr.mxu0 0.0
      %7901 = vmatpush1.xpose.msra.mxu0 %v7836
      %7902 = vmatprep.mubr.f32.mxu0 0.0
      %7903 = vmatmul.mubr.f32.gmra.mrb[0].mxu0 %v7737
      %v7904 = vpop.f32.mrb[0].mxu0
      %v7905 = vadd.f32 0.0, %v7904
      %v7906 = vpop.f32.mrb[0].mxu0
      %v7907 = vadd.f32 0.0, %v7906
      %7908 = vmatprep.mubr.f32.mxu0 0.0
      %7909 = vmatmul.mubr.f32.gmra.mrb[0].mxu0 %v7740
      %v7910 = vpop.f32.mrb[0].mxu0
      %v7911 = vadd.f32 0.0, %v7910
      %v7912 = vpop.f32.mrb[0].mxu0
      %v7913 = vadd.f32 0.0, %v7912
      %7914 = vdwg.mxu0
      %v7915 = vadd.f32 %v7697, %v7905
      %v7916 = vadd.f32 %v7698, %v7907
      %v7917 = vadd.f32 %v7699, %v7911
      %v7918 = vadd.f32 %v7700, %v7913
      %s7919 = scalar_lea.vmem [#allocation4], 192
      %v7920 = vld [vmem:[%s7919] sm:$0xff]
      %v7921 = vld [vmem:[%s7919 + $0x8] sm:$0xff]
      %v7922 = vld [vmem:[%s7919 + $0x18] sm:$0xff]
      %v7923 = vld [vmem:[%s7919 + $0x20] sm:$0xff]
      %v7924 = vld [vmem:[%s7919 + $0x30] sm:$0xff]
      %v7925 = vld [vmem:[%s7919 + $0x38] sm:$0xff]
      %v7926 = vld [vmem:[%s7919 + $0x48] sm:$0xff]
      %v7927 = vld [vmem:[%s7919 + $0x50] sm:$0xff]
      %v7928 = vld [vmem:[%s7919 + $0x60] sm:$0xff]
      %v7929 = vld [vmem:[%s7919 + $0x68] sm:$0xff]
      %v7930 = vld [vmem:[%s7919 + $0x78] sm:$0xff]
      %v7931 = vld [vmem:[%s7919 + $0x80] sm:$0xff]
      %v7932 = vld [vmem:[%s7919 + $0x90] sm:$0xff]
      %v7933 = vld [vmem:[%s7919 + $0x98] sm:$0xff]
      %v7934 = vld [vmem:[%s7919 + $0xa8] sm:$0xff]
      %v7935 = vld [vmem:[%s7919 + $0xb0] sm:$0xff]
      %v7936 = vld [vmem:[%s7919 + $0xc0] sm:$0xff]
      %v7937 = vld [vmem:[%s7919 + $0xc8] sm:$0xff]
      %v7938 = vld [vmem:[%s7919 + $0xd8] sm:$0xff]
      %v7939 = vld [vmem:[%s7919 + $0xe0] sm:$0xff]
      %v7940 = vld [vmem:[%s7919 + $0xf0] sm:$0xff]
      %v7941 = vld [vmem:[%s7919 + $0xf8] sm:$0xff]
      %v7942 = vld [vmem:[%s7919 + $0x108] sm:$0xff]
      %v7943 = vld [vmem:[%s7919 + $0x110] sm:$0xff]
      %v7944 = vld [vmem:[%s7919 + $0x120] sm:$0xff]
      %v7945 = vld [vmem:[%s7919 + $0x128] sm:$0xff]
      %v7946 = vld [vmem:[%s7919 + $0x138] sm:$0xff]
      %v7947 = vld [vmem:[%s7919 + $0x140] sm:$0xff]
      %v7948 = vld [vmem:[%s7919 + $0x150] sm:$0xff]
      %v7949 = vld [vmem:[%s7919 + $0x158] sm:$0xff]
      %v7950 = vld [vmem:[%s7919 + $0x168] sm:$0xff]
      %v7951 = vld [vmem:[%s7919 + $0x170] sm:$0xff]
      %s7952 = scalar_lea.vmem %s7, 96
      %v7953 = vld [vmem:[%s7952] sm:$0xff]
      %v7954 = vld [vmem:[%s7952 + $0x8] sm:$0xff]
      %v7956 = vsel %vm5705, %v7953, 0
      %v7959 = vsel %vm5705, %v7954, 0
      %v7962 = vsel %vm5705, %v7920, 0
      %v7965 = vsel %vm5705, %v7921, 0
      %v7968 = vsel %vm5705, %v7922, 0
      %v7971 = vsel %vm5705, %v7923, 0
      %v7974 = vsel %vm5705, %v7924, 0
      %v7977 = vsel %vm5705, %v7925, 0
      %v7980 = vsel %vm5705, %v7926, 0
      %v7983 = vsel %vm5705, %v7927, 0
      %v7986 = vsel %vm5705, %v7928, 0
      %v7989 = vsel %vm5705, %v7929, 0
      %v7992 = vsel %vm5705, %v7930, 0
      %v7995 = vsel %vm5705, %v7931, 0
      %v7998 = vsel %vm5705, %v7932, 0
      %v8001 = vsel %vm5705, %v7933, 0
      %v8004 = vsel %vm5705, %v7934, 0
      %v8007 = vsel %vm5705, %v7935, 0
      %v8010 = vsel %vm5705, %v7936, 0
      %v8013 = vsel %vm5705, %v7937, 0
      %v8016 = vsel %vm5705, %v7938, 0
      %v8019 = vsel %vm5705, %v7939, 0
      %v8022 = vsel %vm5705, %v7940, 0
      %v8025 = vsel %vm5705, %v7941, 0
      %v8028 = vsel %vm5705, %v7942, 0
      %v8031 = vsel %vm5705, %v7943, 0
      %v8034 = vsel %vm5705, %v7944, 0
      %v8037 = vsel %vm5705, %v7945, 0
      %v8040 = vsel %vm5705, %v7946, 0
      %v8043 = vsel %vm5705, %v7947, 0
      %v8046 = vsel %vm5705, %v7948, 0
      %v8049 = vsel %vm5705, %v7949, 0
      %v8052 = vsel %vm5705, %v7950, 0
      %v8055 = vsel %vm5705, %v7951, 0
      %8057 = vmatprep.subr.mxu0 0.0
      %8058 = vmatpush1.xpose.msra.mxu0 %v7962
      %8059 = vmatprep.subr.mxu0 0.0
      %8060 = vmatpush1.xpose.msra.mxu0 %v7965
      %8061 = vmatprep.subr.mxu0 0.0
      %8062 = vmatpush1.xpose.msra.mxu0 %v7968
      %8063 = vmatprep.subr.mxu0 0.0
      %8064 = vmatpush1.xpose.msra.mxu0 %v7971
      %8065 = vmatprep.subr.mxu0 0.0
      %8066 = vmatpush1.xpose.msra.mxu0 %v7974
      %8067 = vmatprep.subr.mxu0 0.0
      %8068 = vmatpush1.xpose.msra.mxu0 %v7977
      %8069 = vmatprep.subr.mxu0 0.0
      %8070 = vmatpush1.xpose.msra.mxu0 %v7980
      %8071 = vmatprep.subr.mxu0 0.0
      %8072 = vmatpush1.xpose.msra.mxu0 %v7983
      %8073 = vmatprep.subr.mxu0 0.0
      %8074 = vmatpush1.xpose.msra.mxu0 %v7986
      %8075 = vmatprep.subr.mxu0 0.0
      %8076 = vmatpush1.xpose.msra.mxu0 %v7989
      %8077 = vmatprep.subr.mxu0 0.0
      %8078 = vmatpush1.xpose.msra.mxu0 %v7992
      %8079 = vmatprep.subr.mxu0 0.0
      %8080 = vmatpush1.xpose.msra.mxu0 %v7995
      %8081 = vmatprep.subr.mxu0 0.0
      %8082 = vmatpush1.xpose.msra.mxu0 %v7998
      %8083 = vmatprep.subr.mxu0 0.0
      %8084 = vmatpush1.xpose.msra.mxu0 %v8001
      %8085 = vmatprep.subr.mxu0 0.0
      %8086 = vmatpush1.xpose.msra.mxu0 %v8004
      %8087 = vmatprep.subr.mxu0 0.0
      %8088 = vmatpush1.xpose.msra.mxu0 %v8007
      %8089 = vmatprep.subr.mxu0 0.0
      %8090 = vmatpush1.xpose.msra.mxu0 %v8010
      %8091 = vmatprep.subr.mxu0 0.0
      %8092 = vmatpush1.xpose.msra.mxu0 %v8013
      %8093 = vmatprep.subr.mxu0 0.0
      %8094 = vmatpush1.xpose.msra.mxu0 %v8016
      %8095 = vmatprep.subr.mxu0 0.0
      %8096 = vmatpush1.xpose.msra.mxu0 %v8019
      %8097 = vmatprep.subr.mxu0 0.0
      %8098 = vmatpush1.xpose.msra.mxu0 %v8022
      %8099 = vmatprep.subr.mxu0 0.0
      %8100 = vmatpush1.xpose.msra.mxu0 %v8025
      %8101 = vmatprep.subr.mxu0 0.0
      %8102 = vmatpush1.xpose.msra.mxu0 %v8028
      %8103 = vmatprep.subr.mxu0 0.0
      %8104 = vmatpush1.xpose.msra.mxu0 %v8031
      %8105 = vmatprep.subr.mxu0 0.0
      %8106 = vmatpush1.xpose.msra.mxu0 %v8034
      %8107 = vmatprep.subr.mxu0 0.0
      %8108 = vmatpush1.xpose.msra.mxu0 %v8037
      %8109 = vmatprep.subr.mxu0 0.0
      %8110 = vmatpush1.xpose.msra.mxu0 %v8040
      %8111 = vmatprep.subr.mxu0 0.0
      %8112 = vmatpush1.xpose.msra.mxu0 %v8043
      %8113 = vmatprep.subr.mxu0 0.0
      %8114 = vmatpush1.xpose.msra.mxu0 %v8046
      %8115 = vmatprep.subr.mxu0 0.0
      %8116 = vmatpush1.xpose.msra.mxu0 %v8049
      %8117 = vmatprep.subr.mxu0 0.0
      %8118 = vmatpush1.xpose.msra.mxu0 %v8052
      %8119 = vmatprep.subr.mxu0 0.0
      %8120 = vmatpush1.xpose.msra.mxu0 %v8055
      %8121 = vmatprep.mubr.f32.mxu0 0.0
      %8122 = vmatmul.mubr.f32.gmra.mrb[0].mxu0 %v7956
      %v8123 = vpop.f32.mrb[0].mxu0
      %v8124 = vadd.f32 0.0, %v8123
      %v8125 = vpop.f32.mrb[0].mxu0
      %v8126 = vadd.f32 0.0, %v8125
      %8127 = vmatprep.mubr.f32.mxu0 0.0
      %8128 = vmatmul.mubr.f32.gmra.mrb[0].mxu0 %v7959
      %v8129 = vpop.f32.mrb[0].mxu0
      %v8130 = vadd.f32 0.0, %v8129
      %v8131 = vpop.f32.mrb[0].mxu0
      %v8132 = vadd.f32 0.0, %v8131
      %8133 = vdwg.mxu0
      %v8134 = vadd.f32 %v7915, %v8124
      %v8135 = vadd.f32 %v7916, %v8126
      %v8136 = vadd.f32 %v7917, %v8130
      %v8137 = vadd.f32 %v7918, %v8132
      %v8138 = vld [vmem:[%s7919 + $0x4] sm:$0xff]
      %v8139 = vld [vmem:[%s7919 + $0xc] sm:$0xff]
      %v8140 = vld [vmem:[%s7919 + $0x1c] sm:$0xff]
      %v8141 = vld [vmem:[%s7919 + $0x24] sm:$0xff]
      %v8142 = vld [vmem:[%s7919 + $0x34] sm:$0xff]
      %v8143 = vld [vmem:[%s7919 + $0x3c] sm:$0xff]
      %v8144 = vld [vmem:[%s7919 + $0x4c] sm:$0xff]
      %v8145 = vld [vmem:[%s7919 + $0x54] sm:$0xff]
      %v8146 = vld [vmem:[%s7919 + $0x64] sm:$0xff]
      %v8147 = vld [vmem:[%s7919 + $0x6c] sm:$0xff]
      %v8148 = vld [vmem:[%s7919 + $0x7c] sm:$0xff]
      %v8149 = vld [vmem:[%s7919 + $0x84] sm:$0xff]
      %v8150 = vld [vmem:[%s7919 + $0x94] sm:$0xff]
      %v8151 = vld [vmem:[%s7919 + $0x9c] sm:$0xff]
      %v8152 = vld [vmem:[%s7919 + $0xac] sm:$0xff]
      %v8153 = vld [vmem:[%s7919 + $0xb4] sm:$0xff]
      %v8154 = vld [vmem:[%s7919 + $0xc4] sm:$0xff]
      %v8155 = vld [vmem:[%s7919 + $0xcc] sm:$0xff]
      %v8156 = vld [vmem:[%s7919 + $0xdc] sm:$0xff]
      %v8157 = vld [vmem:[%s7919 + $0xe4] sm:$0xff]
      %v8158 = vld [vmem:[%s7919 + $0xf4] sm:$0xff]
      %v8159 = vld [vmem:[%s7919 + $0xfc] sm:$0xff]
      %v8160 = vld [vmem:[%s7919 + $0x10c] sm:$0xff]
      %v8161 = vld [vmem:[%s7919 + $0x114] sm:$0xff]
      %v8162 = vld [vmem:[%s7919 + $0x124] sm:$0xff]
      %v8163 = vld [vmem:[%s7919 + $0x12c] sm:$0xff]
      %v8164 = vld [vmem:[%s7919 + $0x13c] sm:$0xff]
      %v8165 = vld [vmem:[%s7919 + $0x144] sm:$0xff]
      %v8166 = vld [vmem:[%s7919 + $0x154] sm:$0xff]
      %v8167 = vld [vmem:[%s7919 + $0x15c] sm:$0xff]
      %v8168 = vld [vmem:[%s7919 + $0x16c] sm:$0xff]
      %v8169 = vld [vmem:[%s7919 + $0x174] sm:$0xff]
      %s8170 = scalar_lea.vmem %s7, 112
      %v8171 = vld [vmem:[%s8170] sm:$0xff]
      %v8172 = vld [vmem:[%s8170 + $0x8] sm:$0xff]
      %v8174 = vsel %vm5705, %v8171, 0
      %v8177 = vsel %vm5705, %v8172, 0
      %v8180 = vsel %vm5705, %v8138, 0
      %v8183 = vsel %vm5705, %v8139, 0
      %v8186 = vsel %vm5705, %v8140, 0
      %v8189 = vsel %vm5705, %v8141, 0
      %v8192 = vsel %vm5705, %v8142, 0
      %v8195 = vsel %vm5705, %v8143, 0
      %v8198 = vsel %vm5705, %v8144, 0
      %v8201 = vsel %vm5705, %v8145, 0
      %v8204 = vsel %vm5705, %v8146, 0
      %v8207 = vsel %vm5705, %v8147, 0
      %v8210 = vsel %vm5705, %v8148, 0
      %v8213 = vsel %vm5705, %v8149, 0
      %v8216 = vsel %vm5705, %v8150, 0
      %v8219 = vsel %vm5705, %v8151, 0
      %v8222 = vsel %vm5705, %v8152, 0
      %v8225 = vsel %vm5705, %v8153, 0
      %v8228 = vsel %vm5705, %v8154, 0
      %v8231 = vsel %vm5705, %v8155, 0
      %v8234 = vsel %vm5705, %v8156, 0
      %v8237 = vsel %vm5705, %v8157, 0
      %v8240 = vsel %vm5705, %v8158, 0
      %v8243 = vsel %vm5705, %v8159, 0
      %v8246 = vsel %vm5705, %v8160, 0
      %v8249 = vsel %vm5705, %v8161, 0
      %v8252 = vsel %vm5705, %v8162, 0
      %v8255 = vsel %vm5705, %v8163, 0
      %v8258 = vsel %vm5705, %v8164, 0
      %v8261 = vsel %vm5705, %v8165, 0
      %v8264 = vsel %vm5705, %v8166, 0
      %v8267 = vsel %vm5705, %v8167, 0
      %v8270 = vsel %vm5705, %v8168, 0
      %v8273 = vsel %vm5705, %v8169, 0
      %8275 = vmatprep.subr.mxu0 0.0
      %8276 = vmatpush1.xpose.msra.mxu0 %v8180
      %8277 = vmatprep.subr.mxu0 0.0
      %8278 = vmatpush1.xpose.msra.mxu0 %v8183
      %8279 = vmatprep.subr.mxu0 0.0
      %8280 = vmatpush1.xpose.msra.mxu0 %v8186
      %8281 = vmatprep.subr.mxu0 0.0
      %8282 = vmatpush1.xpose.msra.mxu0 %v8189
      %8283 = vmatprep.subr.mxu0 0.0
      %8284 = vmatpush1.xpose.msra.mxu0 %v8192
      %8285 = vmatprep.subr.mxu0 0.0
      %8286 = vmatpush1.xpose.msra.mxu0 %v8195
      %8287 = vmatprep.subr.mxu0 0.0
      %8288 = vmatpush1.xpose.msra.mxu0 %v8198
      %8289 = vmatprep.subr.mxu0 0.0
      %8290 = vmatpush1.xpose.msra.mxu0 %v8201
      %8291 = vmatprep.subr.mxu0 0.0
      %8292 = vmatpush1.xpose.msra.mxu0 %v8204
      %8293 = vmatprep.subr.mxu0 0.0
      %8294 = vmatpush1.xpose.msra.mxu0 %v8207
      %8295 = vmatprep.subr.mxu0 0.0
      %8296 = vmatpush1.xpose.msra.mxu0 %v8210
      %8297 = vmatprep.subr.mxu0 0.0
      %8298 = vmatpush1.xpose.msra.mxu0 %v8213
      %8299 = vmatprep.subr.mxu0 0.0
      %8300 = vmatpush1.xpose.msra.mxu0 %v8216
      %8301 = vmatprep.subr.mxu0 0.0
      %8302 = vmatpush1.xpose.msra.mxu0 %v8219
      %8303 = vmatprep.subr.mxu0 0.0
      %8304 = vmatpush1.xpose.msra.mxu0 %v8222
      %8305 = vmatprep.subr.mxu0 0.0
      %8306 = vmatpush1.xpose.msra.mxu0 %v8225
      %8307 = vmatprep.subr.mxu0 0.0
      %8308 = vmatpush1.xpose.msra.mxu0 %v8228
      %8309 = vmatprep.subr.mxu0 0.0
      %8310 = vmatpush1.xpose.msra.mxu0 %v8231
      %8311 = vmatprep.subr.mxu0 0.0
      %8312 = vmatpush1.xpose.msra.mxu0 %v8234
      %8313 = vmatprep.subr.mxu0 0.0
      %8314 = vmatpush1.xpose.msra.mxu0 %v8237
      %8315 = vmatprep.subr.mxu0 0.0
      %8316 = vmatpush1.xpose.msra.mxu0 %v8240
      %8317 = vmatprep.subr.mxu0 0.0
      %8318 = vmatpush1.xpose.msra.mxu0 %v8243
      %8319 = vmatprep.subr.mxu0 0.0
      %8320 = vmatpush1.xpose.msra.mxu0 %v8246
      %8321 = vmatprep.subr.mxu0 0.0
      %8322 = vmatpush1.xpose.msra.mxu0 %v8249
      %8323 = vmatprep.subr.mxu0 0.0
      %8324 = vmatpush1.xpose.msra.mxu0 %v8252
      %8325 = vmatprep.subr.mxu0 0.0
      %8326 = vmatpush1.xpose.msra.mxu0 %v8255
      %8327 = vmatprep.subr.mxu0 0.0
      %8328 = vmatpush1.xpose.msra.mxu0 %v8258
      %8329 = vmatprep.subr.mxu0 0.0
      %8330 = vmatpush1.xpose.msra.mxu0 %v8261
      %8331 = vmatprep.subr.mxu0 0.0
      %8332 = vmatpush1.xpose.msra.mxu0 %v8264
      %8333 = vmatprep.subr.mxu0 0.0
      %8334 = vmatpush1.xpose.msra.mxu0 %v8267
      %8335 = vmatprep.subr.mxu0 0.0
      %8336 = vmatpush1.xpose.msra.mxu0 %v8270
      %8337 = vmatprep.subr.mxu0 0.0
      %8338 = vmatpush1.xpose.msra.mxu0 %v8273
      %8339 = vmatprep.mubr.f32.mxu0 0.0
      %8340 = vmatmul.mubr.f32.gmra.mrb[0].mxu0 %v8174
      %v8341 = vpop.f32.mrb[0].mxu0
      %v8342 = vadd.f32 0.0, %v8341
      %v8343 = vpop.f32.mrb[0].mxu0
      %v8344 = vadd.f32 0.0, %v8343
      %8345 = vmatprep.mubr.f32.mxu0 0.0
      %8346 = vmatmul.mubr.f32.gmra.mrb[0].mxu0 %v8177
      %v8347 = vpop.f32.mrb[0].mxu0
      %v8348 = vadd.f32 0.0, %v8347
      %v8349 = vpop.f32.mrb[0].mxu0
      %v8350 = vadd.f32 0.0, %v8349
      %8351 = vdwg.mxu0
      %v8352 = vadd.f32 %v8134, %v8342
      %v8353 = vadd.f32 %v8135, %v8344
      %v8354 = vadd.f32 %v8136, %v8348
      %v8355 = vadd.f32 %v8137, %v8350
      %v8356 = vld [vmem:[%s7919 + $0x8] sm:$0xff]
      %v8357 = vld [vmem:[%s7919 + $0x10] sm:$0xff]
      %v8358 = vld [vmem:[%s7919 + $0x20] sm:$0xff]
      %v8359 = vld [vmem:[%s7919 + $0x28] sm:$0xff]
      %v8360 = vld [vmem:[%s7919 + $0x38] sm:$0xff]
      %v8361 = vld [vmem:[%s7919 + $0x40] sm:$0xff]
      %v8362 = vld [vmem:[%s7919 + $0x50] sm:$0xff]
      %v8363 = vld [vmem:[%s7919 + $0x58] sm:$0xff]
      %v8364 = vld [vmem:[%s7919 + $0x68] sm:$0xff]
      %v8365 = vld [vmem:[%s7919 + $0x70] sm:$0xff]
      %v8366 = vld [vmem:[%s7919 + $0x80] sm:$0xff]
      %v8367 = vld [vmem:[%s7919 + $0x88] sm:$0xff]
      %v8368 = vld [vmem:[%s7919 + $0x98] sm:$0xff]
      %v8369 = vld [vmem:[%s7919 + $0xa0] sm:$0xff]
      %v8370 = vld [vmem:[%s7919 + $0xb0] sm:$0xff]
      %v8371 = vld [vmem:[%s7919 + $0xb8] sm:$0xff]
      %v8372 = vld [vmem:[%s7919 + $0xc8] sm:$0xff]
      %v8373 = vld [vmem:[%s7919 + $0xd0] sm:$0xff]
      %v8374 = vld [vmem:[%s7919 + $0xe0] sm:$0xff]
      %v8375 = vld [vmem:[%s7919 + $0xe8] sm:$0xff]
      %v8376 = vld [vmem:[%s7919 + $0xf8] sm:$0xff]
      %v8377 = vld [vmem:[%s7919 + $0x100] sm:$0xff]
      %v8378 = vld [vmem:[%s7919 + $0x110] sm:$0xff]
      %v8379 = vld [vmem:[%s7919 + $0x118] sm:$0xff]
      %v8380 = vld [vmem:[%s7919 + $0x128] sm:$0xff]
      %v8381 = vld [vmem:[%s7919 + $0x130] sm:$0xff]
      %v8382 = vld [vmem:[%s7919 + $0x140] sm:$0xff]
      %v8383 = vld [vmem:[%s7919 + $0x148] sm:$0xff]
      %v8384 = vld [vmem:[%s7919 + $0x158] sm:$0xff]
      %v8385 = vld [vmem:[%s7919 + $0x160] sm:$0xff]
      %v8386 = vld [vmem:[%s7919 + $0x170] sm:$0xff]
      %v8387 = vld [vmem:[%s7919 + $0x178] sm:$0xff]
      %s8388 = scalar_lea.vmem %s7, 128
      %v8389 = vld [vmem:[%s8388] sm:$0xff]
      %v8390 = vld [vmem:[%s8388 + $0x8] sm:$0xff]
      %v8392 = vsel %vm5705, %v8389, 0
      %v8395 = vsel %vm5705, %v8390, 0
      %v8398 = vsel %vm5705, %v8356, 0
      %v8401 = vsel %vm5705, %v8357, 0
      %v8404 = vsel %vm5705, %v8358, 0
      %v8407 = vsel %vm5705, %v8359, 0
      %v8410 = vsel %vm5705, %v8360, 0
      %v8413 = vsel %vm5705, %v8361, 0
      %v8416 = vsel %vm5705, %v8362, 0
      %v8419 = vsel %vm5705, %v8363, 0
      %v8422 = vsel %vm5705, %v8364, 0
      %v8425 = vsel %vm5705, %v8365, 0
      %v8428 = vsel %vm5705, %v8366, 0
      %v8431 = vsel %vm5705, %v8367, 0
      %v8434 = vsel %vm5705, %v8368, 0
      %v8437 = vsel %vm5705, %v8369, 0
      %v8440 = vsel %vm5705, %v8370, 0
      %v8443 = vsel %vm5705, %v8371, 0
      %v8446 = vsel %vm5705, %v8372, 0
      %v8449 = vsel %vm5705, %v8373, 0
      %v8452 = vsel %vm5705, %v8374, 0
      %v8455 = vsel %vm5705, %v8375, 0
      %v8458 = vsel %vm5705, %v8376, 0
      %v8461 = vsel %vm5705, %v8377, 0
      %v8464 = vsel %vm5705, %v8378, 0
      %v8467 = vsel %vm5705, %v8379, 0
      %v8470 = vsel %vm5705, %v8380, 0
      %v8473 = vsel %vm5705, %v8381, 0
      %v8476 = vsel %vm5705, %v8382, 0
      %v8479 = vsel %vm5705, %v8383, 0
      %v8482 = vsel %vm5705, %v8384, 0
      %v8485 = vsel %vm5705, %v8385, 0
      %v8488 = vsel %vm5705, %v8386, 0
      %v8491 = vsel %vm5705, %v8387, 0
      %8493 = vmatprep.subr.mxu0 0.0
      %8494 = vmatpush1.xpose.msra.mxu0 %v8398
      %8495 = vmatprep.subr.mxu0 0.0
      %8496 = vmatpush1.xpose.msra.mxu0 %v8401
      %8497 = vmatprep.subr.mxu0 0.0
      %8498 = vmatpush1.xpose.msra.mxu0 %v8404
      %8499 = vmatprep.subr.mxu0 0.0
      %8500 = vmatpush1.xpose.msra.mxu0 %v8407
      %8501 = vmatprep.subr.mxu0 0.0
      %8502 = vmatpush1.xpose.msra.mxu0 %v8410
      %8503 = vmatprep.subr.mxu0 0.0
      %8504 = vmatpush1.xpose.msra.mxu0 %v8413
      %8505 = vmatprep.subr.mxu0 0.0
      %8506 = vmatpush1.xpose.msra.mxu0 %v8416
      %8507 = vmatprep.subr.mxu0 0.0
      %8508 = vmatpush1.xpose.msra.mxu0 %v8419
      %8509 = vmatprep.subr.mxu0 0.0
      %8510 = vmatpush1.xpose.msra.mxu0 %v8422
      %8511 = vmatprep.subr.mxu0 0.0
      %8512 = vmatpush1.xpose.msra.mxu0 %v8425
      %8513 = vmatprep.subr.mxu0 0.0
      %8514 = vmatpush1.xpose.msra.mxu0 %v8428
      %8515 = vmatprep.subr.mxu0 0.0
      %8516 = vmatpush1.xpose.msra.mxu0 %v8431
      %8517 = vmatprep.subr.mxu0 0.0
      %8518 = vmatpush1.xpose.msra.mxu0 %v8434
      %8519 = vmatprep.subr.mxu0 0.0
      %8520 = vmatpush1.xpose.msra.mxu0 %v8437
      %8521 = vmatprep.subr.mxu0 0.0
      %8522 = vmatpush1.xpose.msra.mxu0 %v8440
      %8523 = vmatprep.subr.mxu0 0.0
      %8524 = vmatpush1.xpose.msra.mxu0 %v8443
      %8525 = vmatprep.subr.mxu0 0.0
      %8526 = vmatpush1.xpose.msra.mxu0 %v8446
      %8527 = vmatprep.subr.mxu0 0.0
      %8528 = vmatpush1.xpose.msra.mxu0 %v8449
      %8529 = vmatprep.subr.mxu0 0.0
      %8530 = vmatpush1.xpose.msra.mxu0 %v8452
      %8531 = vmatprep.subr.mxu0 0.0
      %8532 = vmatpush1.xpose.msra.mxu0 %v8455
      %8533 = vmatprep.subr.mxu0 0.0
      %8534 = vmatpush1.xpose.msra.mxu0 %v8458
      %8535 = vmatprep.subr.mxu0 0.0
      %8536 = vmatpush1.xpose.msra.mxu0 %v8461
      %8537 = vmatprep.subr.mxu0 0.0
      %8538 = vmatpush1.xpose.msra.mxu0 %v8464
      %8539 = vmatprep.subr.mxu0 0.0
      %8540 = vmatpush1.xpose.msra.mxu0 %v8467
      %8541 = vmatprep.subr.mxu0 0.0
      %8542 = vmatpush1.xpose.msra.mxu0 %v8470
      %8543 = vmatprep.subr.mxu0 0.0
      %8544 = vmatpush1.xpose.msra.mxu0 %v8473
      %8545 = vmatprep.subr.mxu0 0.0
      %8546 = vmatpush1.xpose.msra.mxu0 %v8476
      %8547 = vmatprep.subr.mxu0 0.0
      %8548 = vmatpush1.xpose.msra.mxu0 %v8479
      %8549 = vmatprep.subr.mxu0 0.0
      %8550 = vmatpush1.xpose.msra.mxu0 %v8482
      %8551 = vmatprep.subr.mxu0 0.0
      %8552 = vmatpush1.xpose.msra.mxu0 %v8485
      %8553 = vmatprep.subr.mxu0 0.0
      %8554 = vmatpush1.xpose.msra.mxu0 %v8488
      %8555 = vmatprep.subr.mxu0 0.0
      %8556 = vmatpush1.xpose.msra.mxu0 %v8491
      %8557 = vmatprep.mubr.f32.mxu0 0.0
      %8558 = vmatmul.mubr.f32.gmra.mrb[0].mxu0 %v8392
      %v8559 = vpop.f32.mrb[0].mxu0
      %v8560 = vadd.f32 0.0, %v8559
      %v8561 = vpop.f32.mrb[0].mxu0
      %v8562 = vadd.f32 0.0, %v8561
      %8563 = vmatprep.mubr.f32.mxu0 0.0
      %8564 = vmatmul.mubr.f32.gmra.mrb[0].mxu0 %v8395
      %v8565 = vpop.f32.mrb[0].mxu0
      %v8566 = vadd.f32 0.0, %v8565
      %v8567 = vpop.f32.mrb[0].mxu0
      %v8568 = vadd.f32 0.0, %v8567
      %8569 = vdwg.mxu0
      %v8570 = vadd.f32 %v8352, %v8560
      %v8571 = vadd.f32 %v8353, %v8562
      %v8572 = vadd.f32 %v8354, %v8566
      %v8573 = vadd.f32 %v8355, %v8568
      %vm8578 = vcmask 1043456
      %v8579 = vrot.slane %v8570, 4
      %v8580 = vrot.slane %v8571, 4
      %v8581 = vrot.slane %v8572, 4
      %v8582 = vsel %vm8578, %v8579, %v8581
      %v8583 = vrot.slane %v8573, 4
      %v8584 = vsel %vm8578, %v8580, %v8583
      %8591 = vst [vmem:[%s426 + $0x10] sm:$0xf0] %v8579
      %8592 = vst [vmem:[%s426 + $0x18] sm:$0xf0] %v8580
      %8593 = vst [vmem:[%s426 + $0x20] sm:$0xff] %v8582
      %8594 = vst [vmem:[%s426 + $0x28] sm:$0xff] %v8584
      %8595 = vst [vmem:[%s426 + $0x30] sm:$0xf] %v8581
      %8596 = vst [vmem:[%s426 + $0x38] sm:$0xf] %v8583
      %p8597 = scmp.lt.s32.totalorder %s22, 1
      %s8598 = scalar_select %p8597, %s22, 1
      %s8599 = smul.addr %s8598, 8
      %s8600 = smul.addr %s8599, 8
      %s8601 = scalar_lea.vmem %s11, %s8600
      // Predicated region
      $region65: #{tpu_custom_call.1} parent=63 // pred_check
        %p8602 = pneg %p286
      $region66: #{tpu_custom_call.1} parent=63 // pred_check_branch
        %8604 = sbr.rel (%p8602) target = $region68
      $region67: #{tpu_custom_call.1} parent=63 // pred_region
        _
      $region68: #{tpu_custom_call.1} parent=63 // pred_fallthru
        _
    $region64: #{tpu_custom_call.1} parent=5 // pred_fallthru
      _
    %p8605 = scmp.le.s32.totalorder 2, %s17
    // Predicated region
    $region69: #{tpu_custom_call.1} parent=5 // pred_check
      %p8606 = pneg %p8605
    $region70: #{tpu_custom_call.1} parent=5 // pred_check_branch
      %8608 = sbr.rel (%p8606) target = $region72
    $region71: #{tpu_custom_call.1} parent=5 // pred_region
      %s8609 = ssub.s32 %s17, 2
      // Predicated region
      $region73: #{tpu_custom_call.1} parent=71 // pred_check
        %p8610 = pneg %p292
      $region74: #{tpu_custom_call.1} parent=71 // pred_check_branch
        %8612 = sbr.rel (%p8610) target = $region76
      $region75: #{tpu_custom_call.1} parent=71 // pred_region
        %p8613 = scmp.lt.s32.totalorder %s23, 1
        %s8614 = scalar_select %p8613, %s23, 1
        %s8615 = smul.addr %s8614, 8
        %s8616 = smul.addr %s8615, 8
        %s8617 = scalar_lea.vmem %s11, %s8616
      $region76: #{tpu_custom_call.1} parent=71 // pred_fallthru
        _
    $region72: #{tpu_custom_call.1} parent=5 // pred_fallthru
      _
  $region6: #{tpu_custom_call.1} parent=0 // loop_footer
    %s21 = sadd.s32 1, %s17
  $region7: #{tpu_custom_call.1} parent=0 // loop_footer_branch
    %16 = sbr.rel target = $region3
  $region8: #{tpu_custom_call.1} parent=0 // loop_exit
    _

</llo_original>
